<compile_context>
chip_gen: v6e
topology: v6e:2x2x1
jax: 0.10.0
libtpu: 0.0.40
codegen_flags: <defaults>
</compile_context>

<pallas_src>
import math
import functools

import jax
import jax.numpy as jnp
import numpy as np
from jax.experimental import pallas as pl
from jax.experimental.pallas import tpu as pltpu

EPS = 1e-6
GELU_C = math.sqrt(2.0 / math.pi)
MASK_NEG = -1e9  # large finite; avoids (-inf) - (-inf) = NaN on fully masked rows


# ----------------------------------------------------------------------------
# Glue: T5 relative position bias (tiny integer/bucket math + embedding lookup)
# ----------------------------------------------------------------------------
def t5_rel_pos_bias(emb_weight, lq, lk, num_buckets, max_dist=128):
    """Bidirectional T5 relative position bias -> [num_heads, lq, lk] (f32)."""
    rel_pos = jnp.arange(lk)[None, :] - jnp.arange(lq)[:, None]          # [lq, lk]
    nb = num_buckets // 2
    rel_buckets = (rel_pos > 0).astype(jnp.int32) * nb
    rel_abs = jnp.abs(rel_pos)
    max_exact = nb // 2
    val = (jnp.log(jnp.maximum(rel_abs, 1).astype(jnp.float32) / max_exact)
           / math.log(max_dist / max_exact) * (nb - max_exact))
    rel_large = max_exact + val.astype(jnp.int32)     # trunc toward 0 (val >= 0 where used)
    rel_large = jnp.minimum(rel_large, nb - 1)
    rel_buckets = rel_buckets + jnp.where(rel_abs < max_exact, rel_abs, rel_large)
    emb = emb_weight[rel_buckets]                                        # [lq, lk, N]
    return jnp.transpose(emb, (2, 0, 1)).astype(jnp.float32)             # [N, lq, lk]


# ----------------------------------------------------------------------------
# Fused Pallas kernel, phase grid:
#   phases [0, HG)         : attention, one head group per step (accumulate)
#   phase  HG-1 (epilogue) : residual + second RMS-norm, reset accumulator
#   phases [HG, HG+FT)     : FFN, one dim_ffn tile per step (accumulate)
#   last phase             : second residual + write output
# ----------------------------------------------------------------------------
def _rms_norm(x, w):
    # T5LayerNorm: x * rsqrt(mean(x^2) + eps) * weight (no mean subtraction), f32
    var = jnp.mean(x * x, axis=-1, keepdims=True)
    return (x * jax.lax.rsqrt(var + EPS)) * w


def t5_block_kernel(x_ref, ln1_ref, wq_ref, wk_ref, wv_ref, wo_ref,
                    pos_ref, mask_ref, ln2_ref, wfc1_ref, wgate_ref, wfc2_ref,
                    o_ref,
                    acc_ref, xn_ref, x1_ref,
                    *, heads_per_group, head_dim, num_head_groups, num_ffn_tiles):
    p = pl.program_id(1)
    L = x_ref.shape[1]
    dg = heads_per_group * head_dim

    # ---------------- phase 0: norm the resident x block, zero accumulator
    @pl.when(p == 0)
    def _init():
        xn_ref[...] = _rms_norm(x_ref[0], ln1_ref[...]).astype(jnp.bfloat16)
        acc_ref[...] = jnp.zeros_like(acc_ref)

    # ---------------- attention phases: one head group per step
    @pl.when(p < num_head_groups)
    def _attn_group():
        xn = xn_ref[...]                                                  # [L, C] bf16
        q = jnp.dot(xn, wq_ref[...], preferred_element_type=jnp.float32)  # [L, Dg] f32
        k = jnp.dot(xn, wk_ref[...], preferred_element_type=jnp.float32)
        v = jnp.dot(xn, wv_ref[...], preferred_element_type=jnp.float32)

        def to_heads(t):
            # bf16 BEFORE the relayout (half the bytes through the transpose)
            t = t.astype(jnp.bfloat16)
            return jnp.swapaxes(t.reshape(L, heads_per_group, head_dim), 0, 1)

        qh, kh, vh = to_heads(q), to_heads(k), to_heads(v)                # [nhg, L, hd]

        # batched per-head scores [nhg, L, L], f32 MXU accumulation (no 1/sqrt(d) in T5)
        s = jnp.einsum('nqd,nkd->nqk', qh, kh, preferred_element_type=jnp.float32)
        s = s + pos_ref[...].astype(jnp.float32)
        keep = mask_ref[0] != 0.0                                         # [1, L]
        s = jnp.where(keep[None, :, :], s, MASK_NEG)                      # finite masking

        # softmax in f32; reciprocal on the EUP
        s_max = jnp.max(s, axis=-1, keepdims=True)
        pr = jnp.exp(s - s_max)
        pr = pr * pl.reciprocal(jnp.sum(pr, axis=-1, keepdims=True), approx=True)

        ctx = jnp.einsum('nqk,nkd->nqd', pr.astype(jnp.bfloat16), vh,
                         preferred_element_type=jnp.float32)              # [nhg, L, hd]
        ctx = jnp.swapaxes(ctx.astype(jnp.bfloat16), 0, 1).reshape(L, dg)  # [L, Dg]
        # partial output projection with this head group's Wo slice
        acc_ref[...] += jnp.dot(ctx, wo_ref[...], preferred_element_type=jnp.float32)

    # ---------------- end of attention: residual + second norm, reset accumulator
    @pl.when(p == num_head_groups - 1)
    def _end_attention():
        x1 = x_ref[0] + acc_ref[...]        # dropout = identity; fp16-clamp no-op in f32
        x1_ref[...] = x1
        xn_ref[...] = _rms_norm(x1, ln2_ref[...]).astype(jnp.bfloat16)
        acc_ref[...] = jnp.zeros_like(acc_ref)

    # ---------------- FFN phases: one dim_ffn tile per step
    @pl.when(p >= num_head_groups)
    def _ffn_tile():
        xn2 = xn_ref[...]                                                 # [L, C] bf16
        h1 = jnp.dot(xn2, wfc1_ref[...], preferred_element_type=jnp.float32)
        g = jnp.dot(xn2, wgate_ref[...], preferred_element_type=jnp.float32)
        # tanh-GELU in f32 (TODO(synk): bf16 on v6e/v7x; keep f32 on v5e)
        g = 0.5 * g * (1.0 + jnp.tanh(GELU_C * (g + 0.044715 * (g * g * g))))
        h = (h1 * g).astype(jnp.bfloat16)
        acc_ref[...] += jnp.dot(h, wfc2_ref[...], preferred_element_type=jnp.float32)

    # ---------------- final phase: second residual, write the output block
    @pl.when(p == num_head_groups + num_ffn_tiles - 1)
    def _finalize():
        o_ref[0] = x1_ref[...] + acc_ref[...]


# ----------------------------------------------------------------------------
# Tile pickers / VMEM limit
# ----------------------------------------------------------------------------
def _pick_heads_per_group(num_heads, head_dim, target_width=512):
    """Largest head group whose lane width is a multiple of 128 and <= target."""
    best = num_heads  # fallback: full attention width (always a legal block)
    for g in range(1, num_heads + 1):
        if num_heads % g:
            continue
        width = g * head_dim
        if width % 128 == 0 and width <= target_width:
            best = g
    return best


def _pick_dffn_tile(dim_ffn, target=1024):
    """Largest multiple of 128 dividing dim_ffn and <= target (falls back to full)."""
    best = None
    t = 128
    while t <= min(dim_ffn, target):
        if dim_ffn % t == 0:
            best = t
        t += 128
    return best if best is not None else dim_ffn


def _vmem_limit_bytes():
    # ~85% of physical VMEM: ~109 MiB on v5e/v6e, ~54 MiB on v7x.
    try:
        cap = pltpu.get_tpu_info().vmem_capacity_bytes
    except Exception:
        cap = 64 << 20
    return int(cap * 0.85)


# ----------------------------------------------------------------------------
# Wrapper
# ----------------------------------------------------------------------------
def t5_self_attention_forward(x, mask, params, *, num_heads, num_buckets,
                              heads_per_group=None, dffn_tile=None):
    B, L, C = x.shape
    Da = params["wq"].shape[1]
    Dffn = params["w_fc1"].shape[1]
    assert Da % num_heads == 0
    head_dim = Da // num_heads

    if heads_per_group is None:
        heads_per_group = _pick_heads_per_group(num_heads, head_dim)
    if dffn_tile is None:
        dffn_tile = _pick_dffn_tile(Dffn)
    assert num_heads % heads_per_group == 0
    assert Dffn % dffn_tile == 0
    num_hg = num_heads // heads_per_group
    num_ft = Dffn // dffn_tile
    dg = heads_per_group * head_dim
    phases = num_hg + num_ft

    # shared_pos=False path: relative position bias [N, L, L]; streamed in bf16
    pos_bias = t5_rel_pos_bias(params["rel_emb"], L, L, num_buckets).astype(jnp.bfloat16)
    mask3 = mask.reshape(B, 1, L).astype(jnp.float32)

    # cast weights to bf16 once (halves weight DMA / VMEM; MXU fast path)
    bf = jnp.bfloat16
    wq, wk, wv, wo = (params[n].astype(bf) for n in ("wq", "wk", "wv", "wo"))
    wfc1, wgate, wfc2 = (params[n].astype(bf) for n in ("w_fc1", "w_gate", "w_fc2"))

    kernel = functools.partial(
        t5_block_kernel, heads_per_group=heads_per_group, head_dim=head_dim,
        num_head_groups=num_hg, num_ffn_tiles=num_ft)

    # Clamped index_maps: the inactive operand's block index stays constant across
    # the other phase range, so the pipeline never re-fetches it.
    hg_idx = lambda p: jnp.minimum(p, num_hg - 1)
    ft_idx = lambda p: jnp.maximum(p - num_hg, 0)

    fn = pl.pallas_call(
        kernel,
        out_shape=jax.ShapeDtypeStruct((B, L, C), jnp.float32),
        grid=(B, phases),
        in_specs=[
            pl.BlockSpec((1, L, C), lambda b, p: (b, 0, 0)),                     # x (resident per b)
            pl.BlockSpec((1, C), lambda b, p: (0, 0),
                         pipeline_mode=pl.Buffered(1)),                          # ln1 (grid-invariant)
            pl.BlockSpec((C, dg), lambda b, p: (0, hg_idx(p))),                  # Wq group slice
            pl.BlockSpec((C, dg), lambda b, p: (0, hg_idx(p))),                  # Wk group slice
            pl.BlockSpec((C, dg), lambda b, p: (0, hg_idx(p))),                  # Wv group slice
            pl.BlockSpec((dg, C), lambda b, p: (hg_idx(p), 0)),                  # Wo group slice
            pl.BlockSpec((heads_per_group, L, L), lambda b, p: (hg_idx(p), 0, 0)),  # pos bias (bf16)
            pl.BlockSpec((1, 1, L), lambda b, p: (b, 0, 0)),                     # key-padding mask
            pl.BlockSpec((1, C), lambda b, p: (0, 0),
                         pipeline_mode=pl.Buffered(1)),                          # ln2 (grid-invariant)
            pl.BlockSpec((C, dffn_tile), lambda b, p: (0, ft_idx(p))),           # fc1 tile
            pl.BlockSpec((C, dffn_tile), lambda b, p: (0, ft_idx(p))),           # gate tile
            pl.BlockSpec((dffn_tile, C), lambda b, p: (ft_idx(p), 0)),           # fc2 tile
        ],
        out_specs=pl.BlockSpec((1, L, C), lambda b, p: (b, 0, 0)),
        scratch_shapes=[
            pltpu.VMEM((L, C), jnp.float32),    # shared accumulator (attn proj / fc2)
            pltpu.VMEM((L, C), jnp.bfloat16),   # normed input (reused for norm2 output)
            pltpu.VMEM((L, C), jnp.float32),    # x1 = x + attn (first residual)
        ],
        compiler_params=pltpu.CompilerParams(
            dimension_semantics=("parallel", "arbitrary"),   # batch parallel, phase is a carry
            vmem_limit_bytes=_vmem_limit_bytes()),
    )
    return fn(x.astype(jnp.float32), params["ln1"], wq, wk, wv, wo,
              pos_bias, mask3, params["ln2"], wfc1, wgate, wfc2)


# ----------------------------------------------------------------------------
# Pure-JAX reference (mirrors the PyTorch forward exactly, f32)
# ----------------------------------------------------------------------------
def reference_forward(x, mask, params, *, num_heads, num_buckets):
    B, L, C = x.shape
    Da = params["wq"].shape[1]
    Hd = Da // num_heads

    def rmsnorm(v, w):
        var = jnp.mean(v * v, axis=-1, keepdims=True)
        return w * (v * jax.lax.rsqrt(var + EPS))

    pos = t5_rel_pos_bias(params["rel_emb"], L, L, num_buckets)          # [N, L, L]

    xn = rmsnorm(x, params["ln1"][0])
    q = (xn @ params["wq"]).reshape(B, L, num_heads, Hd)
    k = (xn @ params["wk"]).reshape(B, L, num_heads, Hd)
    v = (xn @ params["wv"]).reshape(B, L, num_heads, Hd)
    bias = jnp.broadcast_to(pos[None], (B, num_heads, L, L))
    bias = jnp.where(mask.reshape(B, 1, 1, L) == 0, jnp.finfo(jnp.float32).min, bias)
    attn = jnp.einsum("binc,bjnc->bnij", q, k) + bias
    attn = jax.nn.softmax(attn, axis=-1)
    o = jnp.einsum("bnij,bjnc->binc", attn, v).reshape(B, L, Da) @ params["wo"]
    x = x + o

    xn2 = rmsnorm(x, params["ln2"][0])
    h1 = xn2 @ params["w_fc1"]
    g = xn2 @ params["w_gate"]
    g = 0.5 * g * (1.0 + jnp.tanh(GELU_C * (g + 0.044715 * g ** 3)))
    x = x + (h1 * g) @ params["w_fc2"]
    return x


# ----------------------------------------------------------------------------
if __name__ == "__main__":
    # Small but tiling-exercising dims: 2 head groups x 2 FFN tiles per batch item.
    B, L = 2, 128
    dim, dim_attn, dim_ffn = 128, 256, 256
    num_heads, num_buckets = 4, 32

    key = jax.random.PRNGKey(0)
    ks = jax.random.split(key, 8)
    scale = 0.05
    params = {
        "ln1": jnp.ones((1, dim), jnp.float32),                           # T5LayerNorm init = ones
        "ln2": jnp.ones((1, dim), jnp.float32),
        "wq": scale * jax.random.normal(ks[0], (dim, dim_attn), jnp.float32),
        "wk": scale * jax.random.normal(ks[1], (dim, dim_attn), jnp.float32),
        "wv": scale * jax.random.normal(ks[2], (dim, dim_attn), jnp.float32),
        "wo": scale * jax.random.normal(ks[3], (dim_attn, dim), jnp.float32),
        "w_fc1": scale * jax.random.normal(ks[4], (dim, dim_ffn), jnp.float32),
        "w_gate": scale * jax.random.normal(ks[5], (dim, dim_ffn), jnp.float32),
        "w_fc2": scale * jax.random.normal(ks[6], (dim_ffn, dim), jnp.float32),
        "rel_emb": 0.1 * jax.random.normal(ks[7], (num_buckets, num_heads), jnp.float32),
    }

    x = jax.random.normal(jax.random.PRNGKey(1), (B, L, dim), jnp.float32)
    # mask [B, L]: 1 = attend, 0 = masked out (exercise the mask path on batch 1)
    mask = jnp.ones((B, L), jnp.float32).at[1, -17:].set(0.0)

    out = t5_self_attention_forward(x, mask, params,
                                    num_heads=num_heads, num_buckets=num_buckets,
                                    heads_per_group=2, dffn_tile=128)
    out = jax.block_until_ready(out)

    ref = reference_forward(x, mask, params,
                            num_heads=num_heads, num_buckets=num_buckets)
    # bf16 matmul inputs / bf16 bias in the kernel vs f32 reference -> 2e-2 tolerance
    np.testing.assert_allclose(np.asarray(out), np.asarray(ref), rtol=2e-2, atol=2e-2)

    print("KERNEL_OK")
</pallas_src>

<mosaic_0001>
module attributes {stable_mosaic.version = 11 : i64} {
  func.func @t5_block_kernel(%arg0: i32, %arg1: i32, %arg2: memref<1x128x128xf32, #tpu.memory_space<vmem>>, %arg3: memref<1x128xf32, #tpu.memory_space<vmem>>, %arg4: memref<128x128xbf16, #tpu.memory_space<vmem>>, %arg5: memref<128x128xbf16, #tpu.memory_space<vmem>>, %arg6: memref<128x128xbf16, #tpu.memory_space<vmem>>, %arg7: memref<128x128xbf16, #tpu.memory_space<vmem>>, %arg8: memref<2x128x128xbf16, #tpu.memory_space<vmem>>, %arg9: memref<1x1x128xf32, #tpu.memory_space<vmem>>, %arg10: memref<1x128xf32, #tpu.memory_space<vmem>>, %arg11: memref<128x128xbf16, #tpu.memory_space<vmem>>, %arg12: memref<128x128xbf16, #tpu.memory_space<vmem>>, %arg13: memref<128x128xbf16, #tpu.memory_space<vmem>>, %arg14: memref<1x128x128xf32, #tpu.memory_space<vmem>>, %arg15: memref<128x128xf32, #tpu.memory_space<vmem>>, %arg16: memref<128x128xbf16, #tpu.memory_space<vmem>>, %arg17: memref<128x128xf32, #tpu.memory_space<vmem>>) attributes {dimension_semantics = [#tpu.dimension_semantics<parallel>, #tpu.dimension_semantics<arbitrary>], iteration_bounds = array<i64: 2, 4>, scalar_prefetch = 0 : i64, scratch_operands = 3 : i64, tpu.core_type = #tpu.core_type<tc>, window_params = [{transform_indices = @transform_0, window_bounds = array<i64: 1, 128, 128>}, {pipeline_mode = #tpu.pipeline_mode<synchronous>, transform_indices = @transform_1, window_bounds = array<i64: 1, 128>}, {transform_indices = @transform_2, window_bounds = array<i64: 128, 128>}, {transform_indices = @transform_3, window_bounds = array<i64: 128, 128>}, {transform_indices = @transform_4, window_bounds = array<i64: 128, 128>}, {transform_indices = @transform_5, window_bounds = array<i64: 128, 128>}, {transform_indices = @transform_6, window_bounds = array<i64: 2, 128, 128>}, {transform_indices = @transform_7, window_bounds = array<i64: 1, 1, 128>}, {pipeline_mode = #tpu.pipeline_mode<synchronous>, transform_indices = @transform_8, window_bounds = array<i64: 1, 128>}, {transform_indices = @transform_9, window_bounds = array<i64: 128, 128>}, {transform_indices = @transform_10, window_bounds = array<i64: 128, 128>}, {transform_indices = @transform_11, window_bounds = array<i64: 128, 128>}, {transform_indices = @transform_12, window_bounds = array<i64: 1, 128, 128>}]} {
    %c0_i32 = arith.constant 0 : i32
    %0 = arith.cmpi eq, %arg1, %c0_i32 : i32
    %1 = arith.extui %0 : i1 to i32
    %c0_i32_0 = arith.constant 0 : i32
    %2 = arith.cmpi ne, %1, %c0_i32_0 : i32
    scf.if %2 {
      %c0 = arith.constant 0 : index
      %c0_6 = arith.constant 0 : index
      %c0_7 = arith.constant 0 : index
      %15 = vector.load %arg2[%c0, %c0_6, %c0_7] : memref<1x128x128xf32, #tpu.memory_space<vmem>>, vector<1x128x128xf32>
      %16 = vector.shape_cast %15 : vector<1x128x128xf32> to vector<128x128xf32>
      %c0_8 = arith.constant 0 : index
      %c0_9 = arith.constant 0 : index
      %17 = vector.load %arg3[%c0_8, %c0_9] : memref<1x128xf32, #tpu.memory_space<vmem>>, vector<1x128xf32>
      %18 = arith.mulf %16, %16 : vector<128x128xf32>
      %cst = arith.constant dense<0.000000e+00> : vector<128xf32>
      %19 = vector.multi_reduction <add>, %18, %cst [1] : vector<128x128xf32> to vector<128xf32>
      %20 = vector.shape_cast %19 : vector<128xf32> to vector<128x1xf32>
      %cst_10 = arith.constant 1.280000e+02 : f32
      %21 = vector.broadcast %cst_10 : f32 to vector<128x1xf32>
      %22 = arith.divf %20, %21 : vector<128x1xf32>
      %cst_11 = arith.constant 9.99999997E-7 : f32
      %23 = vector.broadcast %cst_11 : f32 to vector<128x1xf32>
      %24 = arith.addf %22, %23 : vector<128x1xf32>
      %25 = math.rsqrt %24 : vector<128x1xf32>
      %26 = vector.broadcast %25 : vector<128x1xf32> to vector<128x128xf32>
      %27 = arith.mulf %16, %26 : vector<128x128xf32>
      %28 = vector.broadcast %17 : vector<1x128xf32> to vector<128x128xf32>
      %29 = arith.mulf %27, %28 : vector<128x128xf32>
      %30 = arith.truncf %29 : vector<128x128xf32> to vector<128x128xbf16>
      %c0_12 = arith.constant 0 : index
      %c0_13 = arith.constant 0 : index
      %31 = vector.load %arg16[%c0_12, %c0_13] : memref<128x128xbf16, #tpu.memory_space<vmem>>, vector<128x128xbf16>
      tpu.vector_store %arg16[%c0_12, %c0_13], %30 {strides = array<i32>} : memref<128x128xbf16, #tpu.memory_space<vmem>>, vector<128x128xbf16>,
      %cst_14 = arith.constant 0.000000e+00 : f32
      %32 = vector.broadcast %cst_14 : f32 to vector<128x128xf32>
      %c0_15 = arith.constant 0 : index
      %c0_16 = arith.constant 0 : index
      %33 = vector.load %arg15[%c0_15, %c0_16] : memref<128x128xf32, #tpu.memory_space<vmem>>, vector<128x128xf32>
      tpu.vector_store %arg15[%c0_15, %c0_16], %32 {strides = array<i32>} : memref<128x128xf32, #tpu.memory_space<vmem>>, vector<128x128xf32>,
    } else {
    }
    %c2_i32 = arith.constant 2 : i32
    %3 = arith.cmpi slt, %arg1, %c2_i32 : i32
    %4 = arith.extui %3 : i1 to i32
    %c0_i32_1 = arith.constant 0 : i32
    %5 = arith.cmpi ne, %4, %c0_i32_1 : i32
    scf.if %5 {
      %c0 = arith.constant 0 : index
      %c0_6 = arith.constant 0 : index
      %15 = vector.load %arg16[%c0, %c0_6] : memref<128x128xbf16, #tpu.memory_space<vmem>>, vector<128x128xbf16>
      %c0_7 = arith.constant 0 : index
      %c0_8 = arith.constant 0 : index
      %16 = vector.load %arg4[%c0_7, %c0_8] : memref<128x128xbf16, #tpu.memory_space<vmem>>, vector<128x128xbf16>
      %cst = arith.constant dense<0.000000e+00> : vector<128x128xf32>
      %17 = tpu.matmul %15, %16, %cst {dimension_numbers = #tpu.dot_dimension_numbers<[1], [0], [0], [1], [0, 0, 1, 1], [], []>} : vector<128x128xbf16>, vector<128x128xbf16>, vector<128x128xf32> -> vector<128x128xf32>
      %c0_9 = arith.constant 0 : index
      %c0_10 = arith.constant 0 : index
      %18 = vector.load %arg5[%c0_9, %c0_10] : memref<128x128xbf16, #tpu.memory_space<vmem>>, vector<128x128xbf16>
      %cst_11 = arith.constant dense<0.000000e+00> : vector<128x128xf32>
      %19 = tpu.matmul %15, %18, %cst_11 {dimension_numbers = #tpu.dot_dimension_numbers<[1], [0], [0], [1], [0, 0, 1, 1], [], []>} : vector<128x128xbf16>, vector<128x128xbf16>, vector<128x128xf32> -> vector<128x128xf32>
      %c0_12 = arith.constant 0 : index
      %c0_13 = arith.constant 0 : index
      %20 = vector.load %arg6[%c0_12, %c0_13] : memref<128x128xbf16, #tpu.memory_space<vmem>>, vector<128x128xbf16>
      %cst_14 = arith.constant dense<0.000000e+00> : vector<128x128xf32>
      %21 = tpu.matmul %15, %20, %cst_14 {dimension_numbers = #tpu.dot_dimension_numbers<[1], [0], [0], [1], [0, 0, 1, 1], [], []>} : vector<128x128xbf16>, vector<128x128xbf16>, vector<128x128xf32> -> vector<128x128xf32>
      %22 = arith.truncf %17 : vector<128x128xf32> to vector<128x128xbf16>
      %23 = vector.shape_cast %22 : vector<128x128xbf16> to vector<128x2x64xbf16>
      %24 = tpu.transpose %23, [1, 0, 2] : vector<128x2x64xbf16> -> vector<2x128x64xbf16>
      %25 = arith.truncf %19 : vector<128x128xf32> to vector<128x128xbf16>
      %26 = vector.shape_cast %25 : vector<128x128xbf16> to vector<128x2x64xbf16>
      %27 = tpu.transpose %26, [1, 0, 2] : vector<128x2x64xbf16> -> vector<2x128x64xbf16>
      %28 = arith.truncf %21 : vector<128x128xf32> to vector<128x128xbf16>
      %29 = vector.shape_cast %28 : vector<128x128xbf16> to vector<128x2x64xbf16>
      %30 = tpu.transpose %29, [1, 0, 2] : vector<128x2x64xbf16> -> vector<2x128x64xbf16>
      "tpu.trace_start"() <{level = 10 : i32, message = "nqd,nkd->nqk"}> : () -> ()
      %cst_15 = arith.constant dense<0.000000e+00> : vector<2x128x128xf32>
      %31 = tpu.matmul %24, %27, %cst_15 {dimension_numbers = #tpu.dot_dimension_numbers<[2], [2], [1], [1], [0, 0, 0, 1, 1, 1], [0], [0]>} : vector<2x128x64xbf16>, vector<2x128x64xbf16>, vector<2x128x128xf32> -> vector<2x128x128xf32>
      "tpu.trace_stop"() : () -> ()
      %c0_16 = arith.constant 0 : index
      %c0_17 = arith.constant 0 : index
      %c0_18 = arith.constant 0 : index
      %32 = vector.load %arg8[%c0_16, %c0_17, %c0_18] : memref<2x128x128xbf16, #tpu.memory_space<vmem>>, vector<2x128x128xbf16>
      %33 = arith.extf %32 : vector<2x128x128xbf16> to vector<2x128x128xf32>
      %34 = arith.addf %31, %33 : vector<2x128x128xf32>
      %c0_19 = arith.constant 0 : index
      %c0_20 = arith.constant 0 : index
      %c0_21 = arith.constant 0 : index
      %35 = vector.load %arg9[%c0_19, %c0_20, %c0_21] : memref<1x1x128xf32, #tpu.memory_space<vmem>>, vector<1x1x128xf32>
      %36 = vector.shape_cast %35 : vector<1x1x128xf32> to vector<1x128xf32>
      %cst_22 = arith.constant 0.000000e+00 : f32
      %37 = vector.broadcast %cst_22 : f32 to vector<1x128xf32>
      %38 = arith.cmpf one, %36, %37 : vector<1x128xf32>
      %39 = vector.shape_cast %38 : vector<1x128xi1> to vector<1x1x128xi1>
      %cst_23 = arith.constant -1.000000e+09 : f32
      %40 = vector.shape_cast %39 : vector<1x1x128xi1> to vector<1x1x128xi1>
      %41 = vector.broadcast %40 : vector<1x1x128xi1> to vector<2x128x128xi1>
      %42 = vector.broadcast %cst_23 : f32 to vector<2x128x128xf32>
      %43 = arith.select %41, %34, %42 : vector<2x128x128xi1>, vector<2x128x128xf32>
      %cst_24 = arith.constant dense<0xFF800000> : vector<2x128xf32>
      %44 = vector.multi_reduction <maximumf>, %43, %cst_24 [2] : vector<2x128x128xf32> to vector<2x128xf32>
      %45 = vector.shape_cast %44 : vector<2x128xf32> to vector<2x128x1xf32>
      %46 = vector.broadcast %45 : vector<2x128x1xf32> to vector<2x128x128xf32>
      %47 = arith.subf %43, %46 : vector<2x128x128xf32>
      %48 = math.exp %47 : vector<2x128x128xf32>
      %cst_25 = arith.constant dense<0.000000e+00> : vector<2x128xf32>
      %49 = vector.multi_reduction <add>, %48, %cst_25 [2] : vector<2x128x128xf32> to vector<2x128xf32>
      %50 = vector.shape_cast %49 : vector<2x128xf32> to vector<2x128x1xf32>
      %51 = tpu.reciprocal %50 {approx = true} : vector<2x128x1xf32> -> vector<2x128x1xf32>
      %52 = vector.broadcast %51 : vector<2x128x1xf32> to vector<2x128x128xf32>
      %53 = arith.mulf %48, %52 : vector<2x128x128xf32>
      %54 = arith.truncf %53 : vector<2x128x128xf32> to vector<2x128x128xbf16>
      "tpu.trace_start"() <{level = 10 : i32, message = "nqk,nkd->nqd"}> : () -> ()
      %cst_26 = arith.constant dense<0.000000e+00> : vector<2x128x64xf32>
      %55 = tpu.matmul %54, %30, %cst_26 {dimension_numbers = #tpu.dot_dimension_numbers<[2], [1], [1], [2], [0, 0, 0, 1, 1, 2], [0], [0]>} : vector<2x128x128xbf16>, vector<2x128x64xbf16>, vector<2x128x64xf32> -> vector<2x128x64xf32>
      "tpu.trace_stop"() : () -> ()
      %56 = arith.truncf %55 : vector<2x128x64xf32> to vector<2x128x64xbf16>
      %57 = tpu.transpose %56, [1, 0, 2] : vector<2x128x64xbf16> -> vector<128x2x64xbf16>
      %58 = vector.shape_cast %57 : vector<128x2x64xbf16> to vector<128x128xbf16>
      %c0_27 = arith.constant 0 : index
      %c0_28 = arith.constant 0 : index
      %59 = vector.load %arg15[%c0_27, %c0_28] : memref<128x128xf32, #tpu.memory_space<vmem>>, vector<128x128xf32>
      %c0_29 = arith.constant 0 : index
      %c0_30 = arith.constant 0 : index
      %60 = vector.load %arg7[%c0_29, %c0_30] : memref<128x128xbf16, #tpu.memory_space<vmem>>, vector<128x128xbf16>
      %cst_31 = arith.constant dense<0.000000e+00> : vector<128x128xf32>
      %61 = tpu.matmul %58, %60, %cst_31 {dimension_numbers = #tpu.dot_dimension_numbers<[1], [0], [0], [1], [0, 0, 1, 1], [], []>} : vector<128x128xbf16>, vector<128x128xbf16>, vector<128x128xf32> -> vector<128x128xf32>
      %62 = arith.addf %59, %61 : vector<128x128xf32>
      %c0_32 = arith.constant 0 : index
      %c0_33 = arith.constant 0 : index
      %63 = vector.load %arg15[%c0_32, %c0_33] : memref<128x128xf32, #tpu.memory_space<vmem>>, vector<128x128xf32>
      tpu.vector_store %arg15[%c0_32, %c0_33], %62 {strides = array<i32>} : memref<128x128xf32, #tpu.memory_space<vmem>>, vector<128x128xf32>,
    } else {
    }
    %c1_i32 = arith.constant 1 : i32
    %6 = arith.cmpi eq, %arg1, %c1_i32 : i32
    %7 = arith.extui %6 : i1 to i32
    %c0_i32_2 = arith.constant 0 : i32
    %8 = arith.cmpi ne, %7, %c0_i32_2 : i32
    scf.if %8 {
      %c0 = arith.constant 0 : index
      %c0_6 = arith.constant 0 : index
      %c0_7 = arith.constant 0 : index
      %15 = vector.load %arg2[%c0, %c0_6, %c0_7] : memref<1x128x128xf32, #tpu.memory_space<vmem>>, vector<1x128x128xf32>
      %16 = vector.shape_cast %15 : vector<1x128x128xf32> to vector<128x128xf32>
      %c0_8 = arith.constant 0 : index
      %c0_9 = arith.constant 0 : index
      %17 = vector.load %arg15[%c0_8, %c0_9] : memref<128x128xf32, #tpu.memory_space<vmem>>, vector<128x128xf32>
      %18 = arith.addf %16, %17 : vector<128x128xf32>
      %c0_10 = arith.constant 0 : index
      %c0_11 = arith.constant 0 : index
      %19 = vector.load %arg17[%c0_10, %c0_11] : memref<128x128xf32, #tpu.memory_space<vmem>>, vector<128x128xf32>
      tpu.vector_store %arg17[%c0_10, %c0_11], %18 {strides = array<i32>} : memref<128x128xf32, #tpu.memory_space<vmem>>, vector<128x128xf32>,
      %c0_12 = arith.constant 0 : index
      %c0_13 = arith.constant 0 : index
      %20 = vector.load %arg10[%c0_12, %c0_13] : memref<1x128xf32, #tpu.memory_space<vmem>>, vector<1x128xf32>
      %21 = arith.mulf %18, %18 : vector<128x128xf32>
      %cst = arith.constant dense<0.000000e+00> : vector<128xf32>
      %22 = vector.multi_reduction <add>, %21, %cst [1] : vector<128x128xf32> to vector<128xf32>
      %23 = vector.shape_cast %22 : vector<128xf32> to vector<128x1xf32>
      %cst_14 = arith.constant 1.280000e+02 : f32
      %24 = vector.broadcast %cst_14 : f32 to vector<128x1xf32>
      %25 = arith.divf %23, %24 : vector<128x1xf32>
      %cst_15 = arith.constant 9.99999997E-7 : f32
      %26 = vector.broadcast %cst_15 : f32 to vector<128x1xf32>
      %27 = arith.addf %25, %26 : vector<128x1xf32>
      %28 = math.rsqrt %27 : vector<128x1xf32>
      %29 = vector.broadcast %28 : vector<128x1xf32> to vector<128x128xf32>
      %30 = arith.mulf %18, %29 : vector<128x128xf32>
      %31 = vector.broadcast %20 : vector<1x128xf32> to vector<128x128xf32>
      %32 = arith.mulf %30, %31 : vector<128x128xf32>
      %33 = arith.truncf %32 : vector<128x128xf32> to vector<128x128xbf16>
      %c0_16 = arith.constant 0 : index
      %c0_17 = arith.constant 0 : index
      %34 = vector.load %arg16[%c0_16, %c0_17] : memref<128x128xbf16, #tpu.memory_space<vmem>>, vector<128x128xbf16>
      tpu.vector_store %arg16[%c0_16, %c0_17], %33 {strides = array<i32>} : memref<128x128xbf16, #tpu.memory_space<vmem>>, vector<128x128xbf16>,
      %cst_18 = arith.constant 0.000000e+00 : f32
      %35 = vector.broadcast %cst_18 : f32 to vector<128x128xf32>
      %c0_19 = arith.constant 0 : index
      %c0_20 = arith.constant 0 : index
      %36 = vector.load %arg15[%c0_19, %c0_20] : memref<128x128xf32, #tpu.memory_space<vmem>>, vector<128x128xf32>
      tpu.vector_store %arg15[%c0_19, %c0_20], %35 {strides = array<i32>} : memref<128x128xf32, #tpu.memory_space<vmem>>, vector<128x128xf32>,
    } else {
    }
    %c2_i32_3 = arith.constant 2 : i32
    %9 = arith.cmpi sge, %arg1, %c2_i32_3 : i32
    %10 = arith.extui %9 : i1 to i32
    %c0_i32_4 = arith.constant 0 : i32
    %11 = arith.cmpi ne, %10, %c0_i32_4 : i32
    scf.if %11 {
      %c0 = arith.constant 0 : index
      %c0_6 = arith.constant 0 : index
      %15 = vector.load %arg16[%c0, %c0_6] : memref<128x128xbf16, #tpu.memory_space<vmem>>, vector<128x128xbf16>
      %c0_7 = arith.constant 0 : index
      %c0_8 = arith.constant 0 : index
      %16 = vector.load %arg11[%c0_7, %c0_8] : memref<128x128xbf16, #tpu.memory_space<vmem>>, vector<128x128xbf16>
      %cst = arith.constant dense<0.000000e+00> : vector<128x128xf32>
      %17 = tpu.matmul %15, %16, %cst {dimension_numbers = #tpu.dot_dimension_numbers<[1], [0], [0], [1], [0, 0, 1, 1], [], []>} : vector<128x128xbf16>, vector<128x128xbf16>, vector<128x128xf32> -> vector<128x128xf32>
      %c0_9 = arith.constant 0 : index
      %c0_10 = arith.constant 0 : index
      %18 = vector.load %arg12[%c0_9, %c0_10] : memref<128x128xbf16, #tpu.memory_space<vmem>>, vector<128x128xbf16>
      %cst_11 = arith.constant dense<0.000000e+00> : vector<128x128xf32>
      %19 = tpu.matmul %15, %18, %cst_11 {dimension_numbers = #tpu.dot_dimension_numbers<[1], [0], [0], [1], [0, 0, 1, 1], [], []>} : vector<128x128xbf16>, vector<128x128xbf16>, vector<128x128xf32> -> vector<128x128xf32>
      %cst_12 = arith.constant 5.000000e-01 : f32
      %20 = vector.broadcast %cst_12 : f32 to vector<128x128xf32>
      %21 = arith.mulf %20, %19 : vector<128x128xf32>
      %22 = arith.mulf %19, %19 : vector<128x128xf32>
      %23 = arith.mulf %22, %19 : vector<128x128xf32>
      %cst_13 = arith.constant 4.471500e-02 : f32
      %24 = vector.broadcast %cst_13 : f32 to vector<128x128xf32>
      %25 = arith.mulf %24, %23 : vector<128x128xf32>
      %26 = arith.addf %19, %25 : vector<128x128xf32>
      %cst_14 = arith.constant 0.797884583 : f32
      %27 = vector.broadcast %cst_14 : f32 to vector<128x128xf32>
      %28 = arith.mulf %27, %26 : vector<128x128xf32>
      %29 = math.tanh %28 : vector<128x128xf32>
      %cst_15 = arith.constant 1.000000e+00 : f32
      %30 = vector.broadcast %cst_15 : f32 to vector<128x128xf32>
      %31 = arith.addf %30, %29 : vector<128x128xf32>
      %32 = arith.mulf %21, %31 : vector<128x128xf32>
      %33 = arith.mulf %17, %32 : vector<128x128xf32>
      %34 = arith.truncf %33 : vector<128x128xf32> to vector<128x128xbf16>
      %c0_16 = arith.constant 0 : index
      %c0_17 = arith.constant 0 : index
      %35 = vector.load %arg15[%c0_16, %c0_17] : memref<128x128xf32, #tpu.memory_space<vmem>>, vector<128x128xf32>
      %c0_18 = arith.constant 0 : index
      %c0_19 = arith.constant 0 : index
      %36 = vector.load %arg13[%c0_18, %c0_19] : memref<128x128xbf16, #tpu.memory_space<vmem>>, vector<128x128xbf16>
      %cst_20 = arith.constant dense<0.000000e+00> : vector<128x128xf32>
      %37 = tpu.matmul %34, %36, %cst_20 {dimension_numbers = #tpu.dot_dimension_numbers<[1], [0], [0], [1], [0, 0, 1, 1], [], []>} : vector<128x128xbf16>, vector<128x128xbf16>, vector<128x128xf32> -> vector<128x128xf32>
      %38 = arith.addf %35, %37 : vector<128x128xf32>
      %c0_21 = arith.constant 0 : index
      %c0_22 = arith.constant 0 : index
      %39 = vector.load %arg15[%c0_21, %c0_22] : memref<128x128xf32, #tpu.memory_space<vmem>>, vector<128x128xf32>
      tpu.vector_store %arg15[%c0_21, %c0_22], %38 {strides = array<i32>} : memref<128x128xf32, #tpu.memory_space<vmem>>, vector<128x128xf32>,
    } else {
    }
    %c3_i32 = arith.constant 3 : i32
    %12 = arith.cmpi eq, %arg1, %c3_i32 : i32
    %13 = arith.extui %12 : i1 to i32
    %c0_i32_5 = arith.constant 0 : i32
    %14 = arith.cmpi ne, %13, %c0_i32_5 : i32
    scf.if %14 {
      %c0 = arith.constant 0 : index
      %c0_6 = arith.constant 0 : index
      %15 = vector.load %arg17[%c0, %c0_6] : memref<128x128xf32, #tpu.memory_space<vmem>>, vector<128x128xf32>
      %c0_7 = arith.constant 0 : index
      %c0_8 = arith.constant 0 : index
      %16 = vector.load %arg15[%c0_7, %c0_8] : memref<128x128xf32, #tpu.memory_space<vmem>>, vector<128x128xf32>
      %17 = arith.addf %15, %16 : vector<128x128xf32>
      %c0_9 = arith.constant 0 : index
      %c0_10 = arith.constant 0 : index
      %c0_11 = arith.constant 0 : index
      %18 = vector.load %arg14[%c0_9, %c0_10, %c0_11] : memref<1x128x128xf32, #tpu.memory_space<vmem>>, vector<1x128x128xf32>
      %19 = vector.shape_cast %18 : vector<1x128x128xf32> to vector<128x128xf32>
      %20 = vector.shape_cast %17 : vector<128x128xf32> to vector<1x128x128xf32>
      tpu.vector_store %arg14[%c0_9, %c0_10, %c0_11], %20 {strides = array<i32>} : memref<1x128x128xf32, #tpu.memory_space<vmem>>, vector<1x128x128xf32>,
    } else {
    }
    return
  }
  func.func @transform_0(%arg0: i32, %arg1: i32) -> (i32, i32, i32) {
    %c0_i32 = arith.constant 0 : i32
    %c0_i32_0 = arith.constant 0 : i32
    %c0_i32_1 = arith.constant 0 : i32
    return %arg0, %c0_i32, %c0_i32_0 : i32, i32, i32
  }
  func.func @transform_1(%arg0: i32, %arg1: i32) -> (i32, i32) {
    %c0_i32 = arith.constant 0 : i32
    %c0_i32_0 = arith.constant 0 : i32
    %c0_i32_1 = arith.constant 0 : i32
    return %c0_i32, %c0_i32_0 : i32, i32
  }
  func.func @transform_2(%arg0: i32, %arg1: i32) -> (i32, i32) {
    %c1_i32 = arith.constant 1 : i32
    %0 = arith.minsi %arg1, %c1_i32 : i32
    %c0_i32 = arith.constant 0 : i32
    %c0_i32_0 = arith.constant 0 : i32
    return %c0_i32, %0 : i32, i32
  }
  func.func @transform_3(%arg0: i32, %arg1: i32) -> (i32, i32) {
    %c1_i32 = arith.constant 1 : i32
    %0 = arith.minsi %arg1, %c1_i32 : i32
    %c0_i32 = arith.constant 0 : i32
    %c0_i32_0 = arith.constant 0 : i32
    return %c0_i32, %0 : i32, i32
  }
  func.func @transform_4(%arg0: i32, %arg1: i32) -> (i32, i32) {
    %c1_i32 = arith.constant 1 : i32
    %0 = arith.minsi %arg1, %c1_i32 : i32
    %c0_i32 = arith.constant 0 : i32
    %c0_i32_0 = arith.constant 0 : i32
    return %c0_i32, %0 : i32, i32
  }
  func.func @transform_5(%arg0: i32, %arg1: i32) -> (i32, i32) {
    %c1_i32 = arith.constant 1 : i32
    %0 = arith.minsi %arg1, %c1_i32 : i32
    %c0_i32 = arith.constant 0 : i32
    %c0_i32_0 = arith.constant 0 : i32
    return %0, %c0_i32 : i32, i32
  }
  func.func @transform_6(%arg0: i32, %arg1: i32) -> (i32, i32, i32) {
    %c1_i32 = arith.constant 1 : i32
    %0 = arith.minsi %arg1, %c1_i32 : i32
    %c0_i32 = arith.constant 0 : i32
    %c0_i32_0 = arith.constant 0 : i32
    %c0_i32_1 = arith.constant 0 : i32
    return %0, %c0_i32, %c0_i32_0 : i32, i32, i32
  }
  func.func @transform_7(%arg0: i32, %arg1: i32) -> (i32, i32, i32) {
    %c0_i32 = arith.constant 0 : i32
    %c0_i32_0 = arith.constant 0 : i32
    %c0_i32_1 = arith.constant 0 : i32
    return %arg0, %c0_i32, %c0_i32_0 : i32, i32, i32
  }
  func.func @transform_8(%arg0: i32, %arg1: i32) -> (i32, i32) {
    %c0_i32 = arith.constant 0 : i32
    %c0_i32_0 = arith.constant 0 : i32
    %c0_i32_1 = arith.constant 0 : i32
    return %c0_i32, %c0_i32_0 : i32, i32
  }
  func.func @transform_9(%arg0: i32, %arg1: i32) -> (i32, i32) {
    %c2_i32 = arith.constant 2 : i32
    %0 = arith.subi %arg1, %c2_i32 : i32
    %c0_i32 = arith.constant 0 : i32
    %1 = arith.maxsi %0, %c0_i32 : i32
    %c0_i32_0 = arith.constant 0 : i32
    %c0_i32_1 = arith.constant 0 : i32
    return %c0_i32_0, %1 : i32, i32
  }
  func.func @transform_10(%arg0: i32, %arg1: i32) -> (i32, i32) {
    %c2_i32 = arith.constant 2 : i32
    %0 = arith.subi %arg1, %c2_i32 : i32
    %c0_i32 = arith.constant 0 : i32
    %1 = arith.maxsi %0, %c0_i32 : i32
    %c0_i32_0 = arith.constant 0 : i32
    %c0_i32_1 = arith.constant 0 : i32
    return %c0_i32_0, %1 : i32, i32
  }
  func.func @transform_11(%arg0: i32, %arg1: i32) -> (i32, i32) {
    %c2_i32 = arith.constant 2 : i32
    %0 = arith.subi %arg1, %c2_i32 : i32
    %c0_i32 = arith.constant 0 : i32
    %1 = arith.maxsi %0, %c0_i32 : i32
    %c0_i32_0 = arith.constant 0 : i32
    %c0_i32_1 = arith.constant 0 : i32
    return %1, %c0_i32_0 : i32, i32
  }
  func.func @transform_12(%arg0: i32, %arg1: i32) -> (i32, i32, i32) {
    %c0_i32 = arith.constant 0 : i32
    %c0_i32_0 = arith.constant 0 : i32
    %c0_i32_1 = arith.constant 0 : i32
    return %arg0, %c0_i32, %c0_i32_0 : i32, i32, i32
  }
}

</mosaic_0001>

<llo_original>
// kernel: tpu_custom_call.1
$region0: #{tpu_custom_call.1}
  #allocation0 [shape = 'u32[]', space=smem, size = 0x4, offset = 0x4, fixed_abs, tag = 'smem constant byte address 0x4 - core index']
  #allocation1 [shape = 'u32[144,128]{1,0:T(1,128)}', space=vmem, size = 0x12000, scoped, tag = 'internal scratch']
  #allocation2 [shape = 'f32[128,128]{1,0:T(8,128)}', space=vmem, size = 0x10000, scoped, tag = 'scratch operand']
  #allocation3 [shape = 'bf16[128,128]{1,0:T(8,128)(2,1)}', space=vmem, size = 0x8000, scoped, tag = 'scratch operand']
  #allocation4 [shape = 'f32[128,128]{1,0:T(8,128)}', space=vmem, size = 0x10000, scoped, tag = 'scratch operand']
  %s0 = inlined_call_operand.hbm [shape: f32[2,128,128], index: 0, kind: input, shape index: {}]
  %s1 = inlined_call_operand.vmem [shape: f32[1,128], index: 1, kind: input, shape index: {}]
  %s2 = inlined_call_operand.hbm [shape: bf16[128,256], index: 2, kind: input, shape index: {}]
  %s3 = inlined_call_operand.hbm [shape: bf16[128,256], index: 3, kind: input, shape index: {}]
  %s4 = inlined_call_operand.hbm [shape: bf16[128,256], index: 4, kind: input, shape index: {}]
  %s5 = inlined_call_operand.hbm [shape: bf16[256,128], index: 5, kind: input, shape index: {}]
  %s6 = inlined_call_operand.hbm [shape: bf16[4,128,128], index: 6, kind: input, shape index: {}]
  %s7 = inlined_call_operand.vmem [shape: f32[2,1,128], index: 7, kind: input, shape index: {}]
  %s8 = inlined_call_operand.vmem [shape: f32[1,128], index: 8, kind: input, shape index: {}]
  %s9 = inlined_call_operand.hbm [shape: bf16[128,256], index: 9, kind: input, shape index: {}]
  %s10 = inlined_call_operand.hbm [shape: bf16[128,256], index: 10, kind: input, shape index: {}]
  %s11 = inlined_call_operand.hbm [shape: bf16[256,128], index: 11, kind: input, shape index: {}]
  %s12 = inlined_call_operand.hbm [shape: f32[2,128,128], index: 12, kind: output, shape index: {}]
  %s13 = sld [smem:[#allocation0]]
  $region137: #{tpu_custom_call.1} parent=0
    _
  %s15 = ssub.s32 1, %s13
  %s16 = scalar_select 0, %s15, %s13
  $region1: #{tpu_custom_call.1} parent=0
    #allocation5 [shape = 'u8[131072]{0}', space=vmem, size = 0x20000, scoped, tag = 'input window, operand 0']
    #allocation6 [shape = 's32[2]{0}', space=sflag, size = 0x8, scoped, tag = 'scoped memory for tpu_custom_call.1']
    #allocation7 [shape = 's32[2]{0}', space=sflag, size = 0x8, scoped, tag = 'scoped memory for tpu_custom_call.1']
    #allocation8 [shape = 'u8[65536]{0}', space=vmem, size = 0x10000, scoped, tag = 'input window, operand 2']
    #allocation9 [shape = 's32[2]{0}', space=sflag, size = 0x8, scoped, tag = 'scoped memory for tpu_custom_call.1']
    #allocation10 [shape = 'u8[65536]{0}', space=vmem, size = 0x10000, scoped, tag = 'input window, operand 3']
    #allocation11 [shape = 'u8[65536]{0}', space=vmem, size = 0x10000, scoped, tag = 'input window, operand 4']
    #allocation12 [shape = 's32[2]{0}', space=sflag, size = 0x8, scoped, tag = 'scoped memory for tpu_custom_call.1']
    #allocation13 [shape = 'u8[65536]{0}', space=vmem, size = 0x10000, scoped, tag = 'input window, operand 5']
    #allocation14 [shape = 'u8[131072]{0}', space=vmem, size = 0x20000, scoped, tag = 'input window, operand 6']
    #allocation15 [shape = 's32[2]{0}', space=sflag, size = 0x8, scoped, tag = 'scoped memory for tpu_custom_call.1']
    #allocation16 [shape = 'u8[65536]{0}', space=vmem, size = 0x10000, scoped, tag = 'input window, operand 9']
    #allocation17 [shape = 'u8[65536]{0}', space=vmem, size = 0x10000, scoped, tag = 'input window, operand 10']
    #allocation18 [shape = 's32[2]{0}', space=sflag, size = 0x8, scoped, tag = 'scoped memory for tpu_custom_call.1']
    #allocation19 [shape = 'u8[65536]{0}', space=vmem, size = 0x10000, scoped, tag = 'input window, operand 11']
    #allocation20 [shape = 'u8[131072]{0}', space=vmem, size = 0x20000, scoped, tag = 'output window, operand 0']
    %17 = vsyncpa [#allocation6], 0
    %s18 = scalar_lea.sflag [#allocation6], 1
    %19 = vsyncpa %s18, 0
    %20 = vsyncpa [#allocation9], 0
    %s21 = scalar_lea.sflag [#allocation9], 1
    %22 = vsyncpa %s21, 0
    %23 = vsyncpa [#allocation12], 0
    %s24 = scalar_lea.sflag [#allocation12], 1
    %25 = vsyncpa %s24, 0
    %26 = vsyncpa [#allocation15], 0
    %s27 = scalar_lea.sflag [#allocation15], 1
    %28 = vsyncpa %s27, 0
    %29 = vsyncpa [#allocation18], 0
    %s30 = scalar_lea.sflag [#allocation18], 1
    %31 = vsyncpa %s30, 0
    %32 = vsyncpa [#allocation7], 0
    %s33 = scalar_lea.sflag [#allocation7], 1
    %34 = vsyncpa %s33, 0
    loop: start=0, step=1, limit=10
    $region2: #{tpu_custom_call.1} parent=1 // loop_pre_header
      _
    $region3: #{tpu_custom_call.1} parent=1 // loop_header
      %s36 = sphi 0, %s40
      %p37 = scmp.ge.s32.totalorder %s36, 10
      %s43 = sphi 0, %s55
      %s44 = sphi 0, %s51
      %s45 = sphi 0, %s43
      %s46 = sphi 0, %s44
      %s47 = sphi 0, %s45
      %s48 = sphi 0, %s46
      %s58 = sphi 0, %s60
      %s61 = sphi 0, %s58
      %s62 = sphi 0, %s61
      %s78 = sphi 0, %s62
      %s82 = sphi 0, %s82
      %s84 = sphi 0, %s82
      %s85 = sphi 0, %s84
      %s99 = sphi 0, %s85
      %s109 = sphi 0, %s111
      %s112 = sphi 0, %s109
      %s113 = sphi 0, %s112
      %s129 = sphi 0, %s113
      %s139 = sphi 0, %s141
      %s142 = sphi 0, %s139
      %s143 = sphi 0, %s142
      %s159 = sphi 0, %s143
      %s169 = sphi 0, %s171
      %s172 = sphi 0, %s169
      %s173 = sphi 0, %s172
      %s189 = sphi 0, %s173
      %s199 = sphi 0, %s201
      %s202 = sphi 0, %s199
      %s203 = sphi 0, %s202
      %s219 = sphi 0, %s203
      %s229 = sphi 0, %s231
      %s232 = sphi 0, %s229
      %s233 = sphi 0, %s232
      %s249 = sphi 0, %s233
      %s255 = sphi 0, %s257
      %s258 = sphi 0, %s255
      %s259 = sphi 0, %s258
      %s275 = sphi 0, %s259
      %s279 = sphi 0, %s279
      %s281 = sphi 0, %s279
      %s282 = sphi 0, %s281
      %s296 = sphi 0, %s282
      %s308 = sphi 0, %s310
      %s311 = sphi 0, %s308
      %s312 = sphi 0, %s311
      %s328 = sphi 0, %s312
      %s340 = sphi 0, %s342
      %s343 = sphi 0, %s340
      %s344 = sphi 0, %s343
      %s360 = sphi 0, %s344
      %s372 = sphi 0, %s374
      %s375 = sphi 0, %s372
      %s376 = sphi 0, %s375
      %s392 = sphi 0, %s376
      %s398 = sphi 0, %s400
      %s401 = sphi 0, %s398
      %s402 = sphi 0, %s401
      %s418 = sphi 0, %s402
    $region4: #{tpu_custom_call.1} parent=1 // loop_header_branch
      %39 = sbr.rel (%p37) target = $region8
    $region5: #{tpu_custom_call.1} parent=1 // loop_body
      %s41 = ssub.s32 %s36, 1
      %s42 = ssub.s32 %s36, 2
      %s49 = sadd.s32 1, %s44
      %p50 = scmp.ge.s32.totalorder %s49, 4
      %s51 = scalar_select %p50, 0, %s49
      %s52 = sadd.s32 1, %s43
      %s53 = scalar_select %p50, %s52, %s43
      %p54 = scmp.ge.s32.totalorder %s53, 2
      %s55 = scalar_select %p54, 0, %s53
      %s56 = ssub.s32 %s43, %s55
      %p57 = scmp.eq.s32.totalorder %s56, 0
      %s59 = sadd.s32 %s58, 1
      %s60 = scalar_select %p57, %s58, %s59
      %p63 = pneg %p57
      %p64 = scmp.eq.s32.totalorder %s36, 7
      %p65 = por %p63, %p64
      %p66 = scmp.ne.s32.totalorder %s58, %s61
      %p67 = scmp.eq.s32.totalorder %s36, 0
      %p68 = por %p66, %p67
      %p69 = scmp.ne.s32.totalorder %s58, %s61
      %p70 = scmp.eq.s32.totalorder %s41, 7
      %p71 = por %p69, %p70
      %p72 = scmp.ne.s32.totalorder %s61, %s62
      %p73 = scmp.eq.s32.totalorder %s41, 0
      %p74 = por %p72, %p73
      %p75 = scmp.ne.s32.totalorder %s61, %s62
      %p76 = scmp.eq.s32.totalorder %s42, 7
      %p77 = por %p75, %p76
      %p79 = scmp.ne.s32.totalorder %s62, %s78
      %p80 = scmp.eq.s32.totalorder %s42, 0
      %p81 = por %p79, %p80
      %s83 = sadd.s32 %s82, 1
      %p86 = scmp.eq.s32.totalorder %s36, 7
      %p87 = scmp.ne.s32.totalorder %s82, %s84
      %p88 = scmp.eq.s32.totalorder %s36, 0
      %p89 = por %p87, %p88
      %p90 = scmp.ne.s32.totalorder %s82, %s84
      %p91 = scmp.eq.s32.totalorder %s41, 7
      %p92 = por %p90, %p91
      %p93 = scmp.ne.s32.totalorder %s84, %s85
      %p94 = scmp.eq.s32.totalorder %s41, 0
      %p95 = por %p93, %p94
      %p96 = scmp.ne.s32.totalorder %s84, %s85
      %p97 = scmp.eq.s32.totalorder %s42, 7
      %p98 = por %p96, %p97
      %p100 = scmp.ne.s32.totalorder %s85, %s99
      %p101 = scmp.eq.s32.totalorder %s42, 0
      %p102 = por %p100, %p101
      %p103 = scmp.lt.s32.totalorder %s44, 1
      %s104 = scalar_select %p103, %s44, 1
      %p105 = scmp.lt.s32.totalorder %s51, 1
      %s106 = scalar_select %p105, %s51, 1
      %s107 = ssub.s32 %s104, %s106
      %p108 = scmp.eq.s32.totalorder %s107, 0
      %s110 = sadd.s32 %s109, 1
      %s111 = scalar_select %p108, %s109, %s110
      %p114 = pneg %p108
      %p115 = scmp.eq.s32.totalorder %s36, 7
      %p116 = por %p114, %p115
      %p117 = scmp.ne.s32.totalorder %s109, %s112
      %p118 = scmp.eq.s32.totalorder %s36, 0
      %p119 = por %p117, %p118
      %p120 = scmp.ne.s32.totalorder %s109, %s112
      %p121 = scmp.eq.s32.totalorder %s41, 7
      %p122 = por %p120, %p121
      %p123 = scmp.ne.s32.totalorder %s112, %s113
      %p124 = scmp.eq.s32.totalorder %s41, 0
      %p125 = por %p123, %p124
      %p126 = scmp.ne.s32.totalorder %s112, %s113
      %p127 = scmp.eq.s32.totalorder %s42, 7
      %p128 = por %p126, %p127
      %p130 = scmp.ne.s32.totalorder %s113, %s129
      %p131 = scmp.eq.s32.totalorder %s42, 0
      %p132 = por %p130, %p131
      %p133 = scmp.lt.s32.totalorder %s44, 1
      %s134 = scalar_select %p133, %s44, 1
      %p135 = scmp.lt.s32.totalorder %s51, 1
      %s136 = scalar_select %p135, %s51, 1
      %s137 = ssub.s32 %s134, %s136
      %p138 = scmp.eq.s32.totalorder %s137, 0
      %s140 = sadd.s32 %s139, 1
      %s141 = scalar_select %p138, %s139, %s140
      %p144 = pneg %p138
      %p145 = scmp.eq.s32.totalorder %s36, 7
      %p146 = por %p144, %p145
      %p147 = scmp.ne.s32.totalorder %s139, %s142
      %p148 = scmp.eq.s32.totalorder %s36, 0
      %p149 = por %p147, %p148
      %p150 = scmp.ne.s32.totalorder %s139, %s142
      %p151 = scmp.eq.s32.totalorder %s41, 7
      %p152 = por %p150, %p151
      %p153 = scmp.ne.s32.totalorder %s142, %s143
      %p154 = scmp.eq.s32.totalorder %s41, 0
      %p155 = por %p153, %p154
      %p156 = scmp.ne.s32.totalorder %s142, %s143
      %p157 = scmp.eq.s32.totalorder %s42, 7
      %p158 = por %p156, %p157
      %p160 = scmp.ne.s32.totalorder %s143, %s159
      %p161 = scmp.eq.s32.totalorder %s42, 0
      %p162 = por %p160, %p161
      %p163 = scmp.lt.s32.totalorder %s44, 1
      %s164 = scalar_select %p163, %s44, 1
      %p165 = scmp.lt.s32.totalorder %s51, 1
      %s166 = scalar_select %p165, %s51, 1
      %s167 = ssub.s32 %s164, %s166
      %p168 = scmp.eq.s32.totalorder %s167, 0
      %s170 = sadd.s32 %s169, 1
      %s171 = scalar_select %p168, %s169, %s170
      %p174 = pneg %p168
      %p175 = scmp.eq.s32.totalorder %s36, 7
      %p176 = por %p174, %p175
      %p177 = scmp.ne.s32.totalorder %s169, %s172
      %p178 = scmp.eq.s32.totalorder %s36, 0
      %p179 = por %p177, %p178
      %p180 = scmp.ne.s32.totalorder %s169, %s172
      %p181 = scmp.eq.s32.totalorder %s41, 7
      %p182 = por %p180, %p181
      %p183 = scmp.ne.s32.totalorder %s172, %s173
      %p184 = scmp.eq.s32.totalorder %s41, 0
      %p185 = por %p183, %p184
      %p186 = scmp.ne.s32.totalorder %s172, %s173
      %p187 = scmp.eq.s32.totalorder %s42, 7
      %p188 = por %p186, %p187
      %p190 = scmp.ne.s32.totalorder %s173, %s189
      %p191 = scmp.eq.s32.totalorder %s42, 0
      %p192 = por %p190, %p191
      %p193 = scmp.lt.s32.totalorder %s44, 1
      %s194 = scalar_select %p193, %s44, 1
      %p195 = scmp.lt.s32.totalorder %s51, 1
      %s196 = scalar_select %p195, %s51, 1
      %s197 = ssub.s32 %s194, %s196
      %p198 = scmp.eq.s32.totalorder %s197, 0
      %s200 = sadd.s32 %s199, 1
      %s201 = scalar_select %p198, %s199, %s200
      %p204 = pneg %p198
      %p205 = scmp.eq.s32.totalorder %s36, 7
      %p206 = por %p204, %p205
      %p207 = scmp.ne.s32.totalorder %s199, %s202
      %p208 = scmp.eq.s32.totalorder %s36, 0
      %p209 = por %p207, %p208
      %p210 = scmp.ne.s32.totalorder %s199, %s202
      %p211 = scmp.eq.s32.totalorder %s41, 7
      %p212 = por %p210, %p211
      %p213 = scmp.ne.s32.totalorder %s202, %s203
      %p214 = scmp.eq.s32.totalorder %s41, 0
      %p215 = por %p213, %p214
      %p216 = scmp.ne.s32.totalorder %s202, %s203
      %p217 = scmp.eq.s32.totalorder %s42, 7
      %p218 = por %p216, %p217
      %p220 = scmp.ne.s32.totalorder %s203, %s219
      %p221 = scmp.eq.s32.totalorder %s42, 0
      %p222 = por %p220, %p221
      %p223 = scmp.lt.s32.totalorder %s44, 1
      %s224 = scalar_select %p223, %s44, 1
      %p225 = scmp.lt.s32.totalorder %s51, 1
      %s226 = scalar_select %p225, %s51, 1
      %s227 = ssub.s32 %s224, %s226
      %p228 = scmp.eq.s32.totalorder %s227, 0
      %s230 = sadd.s32 %s229, 1
      %s231 = scalar_select %p228, %s229, %s230
      %p234 = pneg %p228
      %p235 = scmp.eq.s32.totalorder %s36, 7
      %p236 = por %p234, %p235
      %p237 = scmp.ne.s32.totalorder %s229, %s232
      %p238 = scmp.eq.s32.totalorder %s36, 0
      %p239 = por %p237, %p238
      %p240 = scmp.ne.s32.totalorder %s229, %s232
      %p241 = scmp.eq.s32.totalorder %s41, 7
      %p242 = por %p240, %p241
      %p243 = scmp.ne.s32.totalorder %s232, %s233
      %p244 = scmp.eq.s32.totalorder %s41, 0
      %p245 = por %p243, %p244
      %p246 = scmp.ne.s32.totalorder %s232, %s233
      %p247 = scmp.eq.s32.totalorder %s42, 7
      %p248 = por %p246, %p247
      %p250 = scmp.ne.s32.totalorder %s233, %s249
      %p251 = scmp.eq.s32.totalorder %s42, 0
      %p252 = por %p250, %p251
      %s253 = ssub.s32 %s43, %s55
      %p254 = scmp.eq.s32.totalorder %s253, 0
      %s256 = sadd.s32 %s255, 1
      %s257 = scalar_select %p254, %s255, %s256
      %p260 = pneg %p254
      %p261 = scmp.eq.s32.totalorder %s36, 7
      %p262 = por %p260, %p261
      %p263 = scmp.ne.s32.totalorder %s255, %s258
      %p264 = scmp.eq.s32.totalorder %s36, 0
      %p265 = por %p263, %p264
      %p266 = scmp.ne.s32.totalorder %s255, %s258
      %p267 = scmp.eq.s32.totalorder %s41, 7
      %p268 = por %p266, %p267
      %p269 = scmp.ne.s32.totalorder %s258, %s259
      %p270 = scmp.eq.s32.totalorder %s41, 0
      %p271 = por %p269, %p270
      %p272 = scmp.ne.s32.totalorder %s258, %s259
      %p273 = scmp.eq.s32.totalorder %s42, 7
      %p274 = por %p272, %p273
      %p276 = scmp.ne.s32.totalorder %s259, %s275
      %p277 = scmp.eq.s32.totalorder %s42, 0
      %p278 = por %p276, %p277
      %s280 = sadd.s32 %s279, 1
      %p283 = scmp.eq.s32.totalorder %s36, 7
      %p284 = scmp.ne.s32.totalorder %s279, %s281
      %p285 = scmp.eq.s32.totalorder %s36, 0
      %p286 = por %p284, %p285
      %p287 = scmp.ne.s32.totalorder %s279, %s281
      %p288 = scmp.eq.s32.totalorder %s41, 7
      %p289 = por %p287, %p288
      %p290 = scmp.ne.s32.totalorder %s281, %s282
      %p291 = scmp.eq.s32.totalorder %s41, 0
      %p292 = por %p290, %p291
      %p293 = scmp.ne.s32.totalorder %s281, %s282
      %p294 = scmp.eq.s32.totalorder %s42, 7
      %p295 = por %p293, %p294
      %p297 = scmp.ne.s32.totalorder %s282, %s296
      %p298 = scmp.eq.s32.totalorder %s42, 0
      %p299 = por %p297, %p298
      %s300 = ssub.s32 %s44, 2
      %p301 = scmp.gt.s32.totalorder %s300, 0
      %s302 = scalar_select %p301, %s300, 0
      %s303 = ssub.s32 %s51, 2
      %p304 = scmp.gt.s32.totalorder %s303, 0
      %s305 = scalar_select %p304, %s303, 0
      %s306 = ssub.s32 %s302, %s305
      %p307 = scmp.eq.s32.totalorder %s306, 0
      %s309 = sadd.s32 %s308, 1
      %s310 = scalar_select %p307, %s308, %s309
      %p313 = pneg %p307
      %p314 = scmp.eq.s32.totalorder %s36, 7
      %p315 = por %p313, %p314
      %p316 = scmp.ne.s32.totalorder %s308, %s311
      %p317 = scmp.eq.s32.totalorder %s36, 0
      %p318 = por %p316, %p317
      %p319 = scmp.ne.s32.totalorder %s308, %s311
      %p320 = scmp.eq.s32.totalorder %s41, 7
      %p321 = por %p319, %p320
      %p322 = scmp.ne.s32.totalorder %s311, %s312
      %p323 = scmp.eq.s32.totalorder %s41, 0
      %p324 = por %p322, %p323
      %p325 = scmp.ne.s32.totalorder %s311, %s312
      %p326 = scmp.eq.s32.totalorder %s42, 7
      %p327 = por %p325, %p326
      %p329 = scmp.ne.s32.totalorder %s312, %s328
      %p330 = scmp.eq.s32.totalorder %s42, 0
      %p331 = por %p329, %p330
      %s332 = ssub.s32 %s44, 2
      %p333 = scmp.gt.s32.totalorder %s332, 0
      %s334 = scalar_select %p333, %s332, 0
      %s335 = ssub.s32 %s51, 2
      %p336 = scmp.gt.s32.totalorder %s335, 0
      %s337 = scalar_select %p336, %s335, 0
      %s338 = ssub.s32 %s334, %s337
      %p339 = scmp.eq.s32.totalorder %s338, 0
      %s341 = sadd.s32 %s340, 1
      %s342 = scalar_select %p339, %s340, %s341
      %p345 = pneg %p339
      %p346 = scmp.eq.s32.totalorder %s36, 7
      %p347 = por %p345, %p346
      %p348 = scmp.ne.s32.totalorder %s340, %s343
      %p349 = scmp.eq.s32.totalorder %s36, 0
      %p350 = por %p348, %p349
      %p351 = scmp.ne.s32.totalorder %s340, %s343
      %p352 = scmp.eq.s32.totalorder %s41, 7
      %p353 = por %p351, %p352
      %p354 = scmp.ne.s32.totalorder %s343, %s344
      %p355 = scmp.eq.s32.totalorder %s41, 0
      %p356 = por %p354, %p355
      %p357 = scmp.ne.s32.totalorder %s343, %s344
      %p358 = scmp.eq.s32.totalorder %s42, 7
      %p359 = por %p357, %p358
      %p361 = scmp.ne.s32.totalorder %s344, %s360
      %p362 = scmp.eq.s32.totalorder %s42, 0
      %p363 = por %p361, %p362
      %s364 = ssub.s32 %s44, 2
      %p365 = scmp.gt.s32.totalorder %s364, 0
      %s366 = scalar_select %p365, %s364, 0
      %s367 = ssub.s32 %s51, 2
      %p368 = scmp.gt.s32.totalorder %s367, 0
      %s369 = scalar_select %p368, %s367, 0
      %s370 = ssub.s32 %s366, %s369
      %p371 = scmp.eq.s32.totalorder %s370, 0
      %s373 = sadd.s32 %s372, 1
      %s374 = scalar_select %p371, %s372, %s373
      %p377 = pneg %p371
      %p378 = scmp.eq.s32.totalorder %s36, 7
      %p379 = por %p377, %p378
      %p380 = scmp.ne.s32.totalorder %s372, %s375
      %p381 = scmp.eq.s32.totalorder %s36, 0
      %p382 = por %p380, %p381
      %p383 = scmp.ne.s32.totalorder %s372, %s375
      %p384 = scmp.eq.s32.totalorder %s41, 7
      %p385 = por %p383, %p384
      %p386 = scmp.ne.s32.totalorder %s375, %s376
      %p387 = scmp.eq.s32.totalorder %s41, 0
      %p388 = por %p386, %p387
      %p389 = scmp.ne.s32.totalorder %s375, %s376
      %p390 = scmp.eq.s32.totalorder %s42, 7
      %p391 = por %p389, %p390
      %p393 = scmp.ne.s32.totalorder %s376, %s392
      %p394 = scmp.eq.s32.totalorder %s42, 0
      %p395 = por %p393, %p394
      %s396 = ssub.s32 %s43, %s55
      %p397 = scmp.eq.s32.totalorder %s396, 0
      %s399 = sadd.s32 %s398, 1
      %s400 = scalar_select %p397, %s398, %s399
      %p403 = pneg %p397
      %p404 = scmp.eq.s32.totalorder %s36, 7
      %p405 = por %p403, %p404
      %p406 = scmp.ne.s32.totalorder %s398, %s401
      %p407 = scmp.eq.s32.totalorder %s36, 0
      %p408 = por %p406, %p407
      %p409 = scmp.ne.s32.totalorder %s398, %s401
      %p410 = scmp.eq.s32.totalorder %s41, 7
      %p411 = por %p409, %p410
      %p412 = scmp.ne.s32.totalorder %s401, %s402
      %p413 = scmp.eq.s32.totalorder %s41, 0
      %p414 = por %p412, %p413
      %p415 = scmp.ne.s32.totalorder %s401, %s402
      %p416 = scmp.eq.s32.totalorder %s42, 7
      %p417 = por %p415, %p416
      %p419 = scmp.ne.s32.totalorder %s402, %s418
      %p420 = scmp.eq.s32.totalorder %s42, 0
      %p421 = por %p419, %p420
      %p422 = scmp.le.s32.totalorder 1, %s36
      %p423 = scmp.lt.s32.totalorder %s36, 9
      %p424 = pnand %p422, %p423
      %p425 = pneg %p424
      // Predicated region
      $region9: #{tpu_custom_call.1} parent=5 // pred_check
        _
      $region10: #{tpu_custom_call.1} parent=5 // pred_check_branch
        %427 = sbr.rel (%p424) target = $region12
      $region11: #{tpu_custom_call.1} parent=5 // pred_region
        %s428 = ssub.s32 %s36, 1
        // Predicated region
        $region13: #{tpu_custom_call.1} parent=11 // pred_check
          %p429 = pneg %p95
        $region14: #{tpu_custom_call.1} parent=11 // pred_check_branch
          %431 = sbr.rel (%p429) target = $region16
        $region15: #{tpu_custom_call.1} parent=11 // pred_region
          _
        $region16: #{tpu_custom_call.1} parent=11 // pred_fallthru
          _
        // Predicated region
        $region17: #{tpu_custom_call.1} parent=11 // pred_check
          %p432 = pneg %p292
        $region18: #{tpu_custom_call.1} parent=11 // pred_check_branch
          %434 = sbr.rel (%p432) target = $region20
        $region19: #{tpu_custom_call.1} parent=11 // pred_region
          _
        $region20: #{tpu_custom_call.1} parent=11 // pred_fallthru
          _
      $region12: #{tpu_custom_call.1} parent=5 // pred_fallthru
        _
      %p435 = scmp.lt.s32.totalorder %s36, 8
      // Predicated region
      $region21: #{tpu_custom_call.1} parent=5 // pred_check
        %p436 = pneg %p435
      $region22: #{tpu_custom_call.1} parent=5 // pred_check_branch
        %438 = sbr.rel (%p436) target = $region24
      $region23: #{tpu_custom_call.1} parent=5 // pred_region
        // Predicated region
        $region25: #{tpu_custom_call.1} parent=23 // pred_check
          %p439 = pneg %p68
        $region26: #{tpu_custom_call.1} parent=23 // pred_check_branch
          %441 = sbr.rel (%p439) target = $region28
        $region27: #{tpu_custom_call.1} parent=23 // pred_region
          %s442 = sand.u32 %s58, 1
          %s443 = scalar_lea.sflag [#allocation6], %s442
          %s444 = sand.u32 %s58, 1
          %s445 = smul.addr %s444, 128
          %s446 = scalar_lea.vmem [#allocation5], %s445
          %s448 = ssub.s32 2048, 2048
          %449 = vsyncadd %s443, %s448
          %s450 = smul.addr %s43, 16
          %s451 = smul.addr %s450, 128
          %s452 = scalar_lea.hbm %s0, %s451
          %s453 = sshll.u32 %s446, 4
          %s454 = int_to_ptr.vmem [resolvable:$true] %s453
          %459 = dma.hbm_to_vmem [thread:$0]  %s452, 2048, %s454, %s443, 128, 128, 8
        $region28: #{tpu_custom_call.1} parent=23 // pred_fallthru
          _
        // Predicated region
        $region29: #{tpu_custom_call.1} parent=23 // pred_check
          %p460 = pneg %p119
        $region30: #{tpu_custom_call.1} parent=23 // pred_check_branch
          %462 = sbr.rel (%p460) target = $region32
        $region31: #{tpu_custom_call.1} parent=23 // pred_region
          %s463 = sand.u32 %s36, 1
          %s464 = scalar_lea.sflag [#allocation9], %s463
          %s465 = sand.u32 %s109, 1
          %s466 = smul.addr %s465, 64
          %s467 = scalar_lea.vmem [#allocation8], %s466
          %p468 = scmp.lt.s32.totalorder %s44, 1
          %s469 = scalar_select %p468, %s44, 1
          %s471 = ssub.s32 1024, 1024
          %472 = vsyncadd %s464, %s471
          %s473 = smul.addr %s469, 64
          %s474 = scalar_lea.hbm %s2, %s473
          %s475 = sshll.u32 %s467, 4
          %s476 = int_to_ptr.vmem [resolvable:$true] %s475
          %481 = dma.hbm_to_vmem [thread:$0]  %s474, 1024, %s476, %s464, 128, 64, 4
        $region32: #{tpu_custom_call.1} parent=23 // pred_fallthru
          _
        // Predicated region
        $region33: #{tpu_custom_call.1} parent=23 // pred_check
          %p482 = pneg %p149
        $region34: #{tpu_custom_call.1} parent=23 // pred_check_branch
          %484 = sbr.rel (%p482) target = $region36
        $region35: #{tpu_custom_call.1} parent=23 // pred_region
          %s485 = sand.u32 %s36, 1
          %s486 = scalar_lea.sflag [#allocation9], %s485
          %s487 = sand.u32 %s139, 1
          %s488 = smul.addr %s487, 64
          %s489 = scalar_lea.vmem [#allocation10], %s488
          %p490 = scmp.lt.s32.totalorder %s44, 1
          %s491 = scalar_select %p490, %s44, 1
          %s493 = ssub.s32 1024, 1024
          %494 = vsyncadd %s486, %s493
          %s495 = smul.addr %s491, 64
          %s496 = scalar_lea.hbm %s3, %s495
          %s497 = sshll.u32 %s489, 4
          %s498 = int_to_ptr.vmem [resolvable:$true] %s497
          %503 = dma.hbm_to_vmem [thread:$0]  %s496, 1024, %s498, %s486, 128, 64, 4
        $region36: #{tpu_custom_call.1} parent=23 // pred_fallthru
          _
        // Predicated region
        $region37: #{tpu_custom_call.1} parent=23 // pred_check
          %p504 = pneg %p179
        $region38: #{tpu_custom_call.1} parent=23 // pred_check_branch
          %506 = sbr.rel (%p504) target = $region40
        $region39: #{tpu_custom_call.1} parent=23 // pred_region
          %s507 = sand.u32 %s36, 1
          %s508 = scalar_lea.sflag [#allocation12], %s507
          %s509 = sand.u32 %s169, 1
          %s510 = smul.addr %s509, 64
          %s511 = scalar_lea.vmem [#allocation11], %s510
          %p512 = scmp.lt.s32.totalorder %s44, 1
          %s513 = scalar_select %p512, %s44, 1
          %s515 = ssub.s32 1024, 1024
          %516 = vsyncadd %s508, %s515
          %s517 = smul.addr %s513, 64
          %s518 = scalar_lea.hbm %s4, %s517
          %s519 = sshll.u32 %s511, 4
          %s520 = int_to_ptr.vmem [resolvable:$true] %s519
          %525 = dma.hbm_to_vmem [thread:$0]  %s518, 1024, %s520, %s508, 128, 64, 4
        $region40: #{tpu_custom_call.1} parent=23 // pred_fallthru
          _
        // Predicated region
        $region41: #{tpu_custom_call.1} parent=23 // pred_check
          %p526 = pneg %p209
        $region42: #{tpu_custom_call.1} parent=23 // pred_check_branch
          %528 = sbr.rel (%p526) target = $region44
        $region43: #{tpu_custom_call.1} parent=23 // pred_region
          %s529 = sand.u32 %s36, 1
          %s530 = scalar_lea.sflag [#allocation12], %s529
          %s531 = sand.u32 %s199, 1
          %s532 = smul.addr %s531, 64
          %s533 = scalar_lea.vmem [#allocation13], %s532
          %p534 = scmp.lt.s32.totalorder %s44, 1
          %s535 = scalar_select %p534, %s44, 1
          %s536 = smul.u32 16, %s535
          %s538 = ssub.s32 1024, 1024
          %539 = vsyncadd %s530, %s538
          %s540 = smul.addr %s536, 64
          %s541 = scalar_lea.hbm %s5, %s540
          %s542 = sshll.u32 %s533, 4
          %s543 = int_to_ptr.vmem [resolvable:$true] %s542
          %548 = dma.hbm_to_vmem [thread:$0]  %s541, 1024, %s543, %s530, 64, 64, 4
        $region44: #{tpu_custom_call.1} parent=23 // pred_fallthru
          _
        // Predicated region
        $region45: #{tpu_custom_call.1} parent=23 // pred_check
          %p549 = pneg %p239
        $region46: #{tpu_custom_call.1} parent=23 // pred_check_branch
          %551 = sbr.rel (%p549) target = $region48
        $region47: #{tpu_custom_call.1} parent=23 // pred_region
          %s552 = sand.u32 %s36, 1
          %s553 = scalar_lea.sflag [#allocation15], %s552
          %s554 = sand.u32 %s229, 1
          %s555 = smul.addr %s554, 128
          %s556 = scalar_lea.vmem [#allocation14], %s555
          %p557 = scmp.lt.s32.totalorder %s44, 1
          %s558 = scalar_select %p557, %s44, 1
          %s559 = smul.u32 2, %s558
          %s561 = ssub.s32 2048, 2048
          %562 = vsyncadd %s553, %s561
          %s563 = smul.addr %s559, 16
          %s564 = smul.addr %s563, 64
          %s565 = scalar_lea.hbm %s6, %s564
          %s566 = sshll.u32 %s556, 4
          %s567 = int_to_ptr.vmem [resolvable:$true] %s566
          %572 = dma.hbm_to_vmem [thread:$0]  %s565, 2048, %s567, %s553, 64, 64, 4
        $region48: #{tpu_custom_call.1} parent=23 // pred_fallthru
          _
        // Predicated region
        $region49: #{tpu_custom_call.1} parent=23 // pred_check
          %p573 = pneg %p265
        $region50: #{tpu_custom_call.1} parent=23 // pred_check_branch
          %575 = sbr.rel (%p573) target = $region52
        $region51: #{tpu_custom_call.1} parent=23 // pred_region
          %p576 = scmp.lt.s32.totalorder %s43, 1
          %s577 = scalar_select %p576, %s43, 1
          %s578 = scalar_lea.vmem %s7, %s577
        $region52: #{tpu_custom_call.1} parent=23 // pred_fallthru
          _
        // Predicated region
        $region53: #{tpu_custom_call.1} parent=23 // pred_check
          %p579 = pneg %p318
        $region54: #{tpu_custom_call.1} parent=23 // pred_check_branch
          %581 = sbr.rel (%p579) target = $region56
        $region55: #{tpu_custom_call.1} parent=23 // pred_region
          %s582 = sand.u32 %s36, 1
          %s583 = scalar_lea.sflag [#allocation15], %s582
          %s584 = sand.u32 %s308, 1
          %s585 = smul.addr %s584, 64
          %s586 = scalar_lea.vmem [#allocation16], %s585
          %s587 = ssub.s32 %s44, 2
          %p588 = scmp.gt.s32.totalorder %s587, 0
          %s589 = scalar_select %p588, %s587, 0
          %s591 = ssub.s32 1024, 1024
          %592 = vsyncadd %s583, %s591
          %s593 = smul.addr %s589, 64
          %s594 = scalar_lea.hbm %s9, %s593
          %s595 = sshll.u32 %s586, 4
          %s596 = int_to_ptr.vmem [resolvable:$true] %s595
          %601 = dma.hbm_to_vmem [thread:$0]  %s594, 1024, %s596, %s583, 128, 64, 4
        $region56: #{tpu_custom_call.1} parent=23 // pred_fallthru
          _
        // Predicated region
        $region57: #{tpu_custom_call.1} parent=23 // pred_check
          %p602 = pneg %p350
        $region58: #{tpu_custom_call.1} parent=23 // pred_check_branch
          %604 = sbr.rel (%p602) target = $region60
        $region59: #{tpu_custom_call.1} parent=23 // pred_region
          %s605 = sand.u32 %s36, 1
          %s606 = scalar_lea.sflag [#allocation18], %s605
          %s607 = sand.u32 %s340, 1
          %s608 = smul.addr %s607, 64
          %s609 = scalar_lea.vmem [#allocation17], %s608
          %s610 = ssub.s32 %s44, 2
          %p611 = scmp.gt.s32.totalorder %s610, 0
          %s612 = scalar_select %p611, %s610, 0
          %s614 = ssub.s32 1024, 1024
          %615 = vsyncadd %s606, %s614
          %s616 = smul.addr %s612, 64
          %s617 = scalar_lea.hbm %s10, %s616
          %s618 = sshll.u32 %s609, 4
          %s619 = int_to_ptr.vmem [resolvable:$true] %s618
          %624 = dma.hbm_to_vmem [thread:$0]  %s617, 1024, %s619, %s606, 128, 64, 4
        $region60: #{tpu_custom_call.1} parent=23 // pred_fallthru
          _
        // Predicated region
        $region61: #{tpu_custom_call.1} parent=23 // pred_check
          %p625 = pneg %p382
        $region62: #{tpu_custom_call.1} parent=23 // pred_check_branch
          %627 = sbr.rel (%p625) target = $region64
        $region63: #{tpu_custom_call.1} parent=23 // pred_region
          %s628 = sand.u32 %s36, 1
          %s629 = scalar_lea.sflag [#allocation18], %s628
          %s630 = sand.u32 %s372, 1
          %s631 = smul.addr %s630, 64
          %s632 = scalar_lea.vmem [#allocation19], %s631
          %s633 = ssub.s32 %s44, 2
          %p634 = scmp.gt.s32.totalorder %s633, 0
          %s635 = scalar_select %p634, %s633, 0
          %s636 = smul.u32 16, %s635
          %s638 = ssub.s32 1024, 1024
          %639 = vsyncadd %s629, %s638
          %s640 = smul.addr %s636, 64
          %s641 = scalar_lea.hbm %s11, %s640
          %s642 = sshll.u32 %s632, 4
          %s643 = int_to_ptr.vmem [resolvable:$true] %s642
          %648 = dma.hbm_to_vmem [thread:$0]  %s641, 1024, %s643, %s629, 64, 64, 4
        $region64: #{tpu_custom_call.1} parent=23 // pred_fallthru
          _
      $region24: #{tpu_custom_call.1} parent=5 // pred_fallthru
        _
      %p649 = scmp.le.s32.totalorder 1, %s36
      %p650 = scmp.lt.s32.totalorder %s36, 9
      %p651 = pnand %p649, %p650
      %p652 = pneg %p651
      // Predicated region
      $region65: #{tpu_custom_call.1} parent=5 // pred_check
        _
      $region66: #{tpu_custom_call.1} parent=5 // pred_check_branch
        %654 = sbr.rel (%p651) target = $region68
      $region67: #{tpu_custom_call.1} parent=5 // pred_region
        %s655 = ssub.s32 %s36, 1
        %s656 = sand.u32 %s61, 1
        %s657 = scalar_lea.sflag [#allocation6], %s656
        %s658 = sand.u32 %s61, 1
        %s659 = smul.addr %s658, 128
        %s660 = scalar_lea.vmem [#allocation5], %s659
        // Predicated region
        $region69: #{tpu_custom_call.1} parent=67 // pred_check
          %p661 = pneg %p74
        $region70: #{tpu_custom_call.1} parent=67 // pred_check_branch
          %663 = sbr.rel (%p661) target = $region72
        $region71: #{tpu_custom_call.1} parent=67 // pred_region
          %664 = dma.done %s657, 2048
        $region72: #{tpu_custom_call.1} parent=67 // pred_fallthru
          _
        %s665 = sand.u32 %s41, 1
        %s666 = scalar_lea.sflag [#allocation9], %s665
        %s667 = sand.u32 %s112, 1
        %s668 = smul.addr %s667, 64
        %s669 = scalar_lea.vmem [#allocation8], %s668
        // Predicated region
        $region73: #{tpu_custom_call.1} parent=67 // pred_check
          %p670 = pneg %p125
        $region74: #{tpu_custom_call.1} parent=67 // pred_check_branch
          %672 = sbr.rel (%p670) target = $region76
        $region75: #{tpu_custom_call.1} parent=67 // pred_region
          %673 = dma.done %s666, 1024
        $region76: #{tpu_custom_call.1} parent=67 // pred_fallthru
          _
        %s674 = sand.u32 %s41, 1
        %s675 = scalar_lea.sflag [#allocation9], %s674
        %s676 = sand.u32 %s142, 1
        %s677 = smul.addr %s676, 64
        %s678 = scalar_lea.vmem [#allocation10], %s677
        // Predicated region
        $region77: #{tpu_custom_call.1} parent=67 // pred_check
          %p679 = pneg %p155
        $region78: #{tpu_custom_call.1} parent=67 // pred_check_branch
          %681 = sbr.rel (%p679) target = $region80
        $region79: #{tpu_custom_call.1} parent=67 // pred_region
          %682 = dma.done %s675, 1024
        $region80: #{tpu_custom_call.1} parent=67 // pred_fallthru
          _
        %s683 = sand.u32 %s41, 1
        %s684 = scalar_lea.sflag [#allocation12], %s683
        %s685 = sand.u32 %s172, 1
        %s686 = smul.addr %s685, 64
        %s687 = scalar_lea.vmem [#allocation11], %s686
        // Predicated region
        $region81: #{tpu_custom_call.1} parent=67 // pred_check
          %p688 = pneg %p185
        $region82: #{tpu_custom_call.1} parent=67 // pred_check_branch
          %690 = sbr.rel (%p688) target = $region84
        $region83: #{tpu_custom_call.1} parent=67 // pred_region
          %691 = dma.done %s684, 1024
        $region84: #{tpu_custom_call.1} parent=67 // pred_fallthru
          _
        %s692 = sand.u32 %s41, 1
        %s693 = scalar_lea.sflag [#allocation12], %s692
        %s694 = sand.u32 %s202, 1
        %s695 = smul.addr %s694, 64
        %s696 = scalar_lea.vmem [#allocation13], %s695
        // Predicated region
        $region85: #{tpu_custom_call.1} parent=67 // pred_check
          %p697 = pneg %p215
        $region86: #{tpu_custom_call.1} parent=67 // pred_check_branch
          %699 = sbr.rel (%p697) target = $region88
        $region87: #{tpu_custom_call.1} parent=67 // pred_region
          %700 = dma.done %s693, 1024
        $region88: #{tpu_custom_call.1} parent=67 // pred_fallthru
          _
        %s701 = sand.u32 %s41, 1
        %s702 = scalar_lea.sflag [#allocation15], %s701
        %s703 = sand.u32 %s232, 1
        %s704 = smul.addr %s703, 128
        %s705 = scalar_lea.vmem [#allocation14], %s704
        // Predicated region
        $region89: #{tpu_custom_call.1} parent=67 // pred_check
          %p706 = pneg %p245
        $region90: #{tpu_custom_call.1} parent=67 // pred_check_branch
          %708 = sbr.rel (%p706) target = $region92
        $region91: #{tpu_custom_call.1} parent=67 // pred_region
          %709 = dma.done %s702, 2048
        $region92: #{tpu_custom_call.1} parent=67 // pred_fallthru
          _
        %s710 = sand.u32 %s41, 1
        %s711 = scalar_lea.sflag [#allocation15], %s710
        %s712 = sand.u32 %s311, 1
        %s713 = smul.addr %s712, 64
        %s714 = scalar_lea.vmem [#allocation16], %s713
        // Predicated region
        $region93: #{tpu_custom_call.1} parent=67 // pred_check
          %p715 = pneg %p324
        $region94: #{tpu_custom_call.1} parent=67 // pred_check_branch
          %717 = sbr.rel (%p715) target = $region96
        $region95: #{tpu_custom_call.1} parent=67 // pred_region
          %718 = dma.done %s711, 1024
        $region96: #{tpu_custom_call.1} parent=67 // pred_fallthru
          _
        %s719 = sand.u32 %s41, 1
        %s720 = scalar_lea.sflag [#allocation18], %s719
        %s721 = sand.u32 %s343, 1
        %s722 = smul.addr %s721, 64
        %s723 = scalar_lea.vmem [#allocation17], %s722
        // Predicated region
        $region97: #{tpu_custom_call.1} parent=67 // pred_check
          %p724 = pneg %p356
        $region98: #{tpu_custom_call.1} parent=67 // pred_check_branch
          %726 = sbr.rel (%p724) target = $region100
        $region99: #{tpu_custom_call.1} parent=67 // pred_region
          %727 = dma.done %s720, 1024
        $region100: #{tpu_custom_call.1} parent=67 // pred_fallthru
          _
        %s728 = sand.u32 %s41, 1
        %s729 = scalar_lea.sflag [#allocation18], %s728
        %s730 = sand.u32 %s375, 1
        %s731 = smul.addr %s730, 64
        %s732 = scalar_lea.vmem [#allocation19], %s731
        // Predicated region
        $region101: #{tpu_custom_call.1} parent=67 // pred_check
          %p733 = pneg %p388
        $region102: #{tpu_custom_call.1} parent=67 // pred_check_branch
          %735 = sbr.rel (%p733) target = $region104
        $region103: #{tpu_custom_call.1} parent=67 // pred_region
          %736 = dma.done %s729, 1024
        $region104: #{tpu_custom_call.1} parent=67 // pred_fallthru
          _
        %s737 = sand.u32 %s61, 1
        %s738 = scalar_lea.sflag [#allocation6], %s737
        %s739 = sand.u32 %s61, 1
        %s740 = smul.addr %s739, 128
        %s741 = scalar_lea.vmem [#allocation5], %s740
        %p742 = pneg %p74
        %p743 = pneg %p71
        %p744 = pneg %p95
        %p745 = pneg %p92
        %s746 = sand.u32 %s41, 1
        %s747 = scalar_lea.sflag [#allocation9], %s746
        %s748 = sand.u32 %s112, 1
        %s749 = smul.addr %s748, 64
        %s750 = scalar_lea.vmem [#allocation8], %s749
        %p751 = pneg %p125
        %p752 = pneg %p122
        %s753 = sand.u32 %s41, 1
        %s754 = scalar_lea.sflag [#allocation9], %s753
        %s755 = sand.u32 %s142, 1
        %s756 = smul.addr %s755, 64
        %s757 = scalar_lea.vmem [#allocation10], %s756
        %p758 = pneg %p155
        %p759 = pneg %p152
        %s760 = sand.u32 %s41, 1
        %s761 = scalar_lea.sflag [#allocation12], %s760
        %s762 = sand.u32 %s172, 1
        %s763 = smul.addr %s762, 64
        %s764 = scalar_lea.vmem [#allocation11], %s763
        %p765 = pneg %p185
        %p766 = pneg %p182
        %s767 = sand.u32 %s41, 1
        %s768 = scalar_lea.sflag [#allocation12], %s767
        %s769 = sand.u32 %s202, 1
        %s770 = smul.addr %s769, 64
        %s771 = scalar_lea.vmem [#allocation13], %s770
        %p772 = pneg %p215
        %p773 = pneg %p212
        %s774 = sand.u32 %s41, 1
        %s775 = scalar_lea.sflag [#allocation15], %s774
        %s776 = sand.u32 %s232, 1
        %s777 = smul.addr %s776, 128
        %s778 = scalar_lea.vmem [#allocation14], %s777
        %p779 = pneg %p245
        %p780 = pneg %p242
        %p781 = scmp.lt.s32.totalorder %s45, 1
        %s782 = scalar_select %p781, %s45, 1
        %s783 = scalar_lea.vmem %s7, %s782
        %p784 = pneg %p271
        %p785 = pneg %p268
        %p786 = pneg %p292
        %p787 = pneg %p289
        %s788 = sand.u32 %s41, 1
        %s789 = scalar_lea.sflag [#allocation15], %s788
        %s790 = sand.u32 %s311, 1
        %s791 = smul.addr %s790, 64
        %s792 = scalar_lea.vmem [#allocation16], %s791
        %p793 = pneg %p324
        %p794 = pneg %p321
        %s795 = sand.u32 %s41, 1
        %s796 = scalar_lea.sflag [#allocation18], %s795
        %s797 = sand.u32 %s343, 1
        %s798 = smul.addr %s797, 64
        %s799 = scalar_lea.vmem [#allocation17], %s798
        %p800 = pneg %p356
        %p801 = pneg %p353
        %s802 = sand.u32 %s41, 1
        %s803 = scalar_lea.sflag [#allocation18], %s802
        %s804 = sand.u32 %s375, 1
        %s805 = smul.addr %s804, 64
        %s806 = scalar_lea.vmem [#allocation19], %s805
        %p807 = pneg %p388
        %p808 = pneg %p385
        %p809 = pneg %p414
        %p810 = pneg %p411
        %s811 = sand.u32 %s401, 1
        %s812 = scalar_lea.sflag [#allocation7], %s811
        %s813 = sand.u32 %s401, 1
        %s814 = smul.addr %s813, 128
        %s815 = scalar_lea.vmem [#allocation20], %s814
        %p816 = scmp.lt.s32.totalorder %s46, 1
        %s817 = scalar_select %p816, %s46, 1
        %p818 = scmp.lt.s32.totalorder %s46, 1
        %s819 = scalar_select %p818, %s46, 1
        %p820 = scmp.lt.s32.totalorder %s46, 1
        %s821 = scalar_select %p820, %s46, 1
        %p822 = scmp.lt.s32.totalorder %s46, 1
        %s823 = scalar_select %p822, %s46, 1
        %s824 = smul.u32 16, %s823
        %p825 = scmp.lt.s32.totalorder %s46, 1
        %s826 = scalar_select %p825, %s46, 1
        %s827 = smul.u32 2, %s826
        %p828 = scmp.lt.s32.totalorder %s45, 1
        %s829 = scalar_select %p828, %s45, 1
        %s830 = scalar_lea.vmem %s7, %s829
        %s831 = ssub.s32 %s46, 2
        %p832 = scmp.gt.s32.totalorder %s831, 0
        %s833 = scalar_select %p832, %s831, 0
        %s834 = ssub.s32 %s46, 2
        %p835 = scmp.gt.s32.totalorder %s834, 0
        %s836 = scalar_select %p835, %s834, 0
        %s837 = ssub.s32 %s46, 2
        %p838 = scmp.gt.s32.totalorder %s837, 0
        %s839 = scalar_select %p838, %s837, 0
        %s840 = smul.u32 16, %s839
        %p842 = scmp.eq.s32.totalorder %s46, 0
        // Predicated region
        $region105: #{tpu_custom_call.1} parent=67 // pred_check
          %p843 = pneg %p842
        $region106: #{tpu_custom_call.1} parent=67 // pred_check_branch
          %845 = sbr.rel (%p843) target = $region108
        $region107: #{tpu_custom_call.1} parent=67 // pred_region
          %v846 = vld [vmem:[%s660] sm:$0xff]
          %v847 = vld [vmem:[%s660 + $0x8] sm:$0xff]
          %v848 = vld [vmem:[%s660 + $0x10] sm:$0xff]
          %v849 = vld [vmem:[%s660 + $0x18] sm:$0xff]
          %v850 = vld [vmem:[%s660 + $0x20] sm:$0xff]
          %v851 = vld [vmem:[%s660 + $0x28] sm:$0xff]
          %v852 = vld [vmem:[%s660 + $0x30] sm:$0xff]
          %v853 = vld [vmem:[%s660 + $0x38] sm:$0xff]
          %v854 = vld [vmem:[%s660 + $0x40] sm:$0xff]
          %v855 = vld [vmem:[%s660 + $0x48] sm:$0xff]
          %v856 = vld [vmem:[%s660 + $0x50] sm:$0xff]
          %v857 = vld [vmem:[%s660 + $0x58] sm:$0xff]
          %v858 = vld [vmem:[%s660 + $0x60] sm:$0xff]
          %v859 = vld [vmem:[%s660 + $0x68] sm:$0xff]
          %v860 = vld [vmem:[%s660 + $0x70] sm:$0xff]
          %v861 = vld [vmem:[%s660 + $0x78] sm:$0xff]
          %v862 = vld [vmem:[%s1] sm:$0x1]
          %v863 = vmul.f32 %v846, %v846
          %v864 = vmul.f32 %v847, %v847
          %v865 = vmul.f32 %v848, %v848
          %v866 = vmul.f32 %v849, %v849
          %v867 = vmul.f32 %v850, %v850
          %v868 = vmul.f32 %v851, %v851
          %v869 = vmul.f32 %v852, %v852
          %v870 = vmul.f32 %v853, %v853
          %v871 = vmul.f32 %v854, %v854
          %v872 = vmul.f32 %v855, %v855
          %v873 = vmul.f32 %v856, %v856
          %v874 = vmul.f32 %v857, %v857
          %v875 = vmul.f32 %v858, %v858
          %v876 = vmul.f32 %v859, %v859
          %v877 = vmul.f32 %v860, %v860
          %v878 = vmul.f32 %v861, %v861
          %879 = vadd.xlane.f32.xlu0 %v863
          %v880 = vpop.xlane.xlu0 %879
          %881 = vadd.xlane.f32.xlu0 %v864
          %v882 = vpop.xlane.xlu0 %881
          %883 = vadd.xlane.f32.xlu0 %v865
          %v884 = vpop.xlane.xlu0 %883
          %885 = vadd.xlane.f32.xlu0 %v866
          %v886 = vpop.xlane.xlu0 %885
          %887 = vadd.xlane.f32.xlu0 %v867
          %v888 = vpop.xlane.xlu0 %887
          %889 = vadd.xlane.f32.xlu0 %v868
          %v890 = vpop.xlane.xlu0 %889
          %891 = vadd.xlane.f32.xlu0 %v869
          %v892 = vpop.xlane.xlu0 %891
          %893 = vadd.xlane.f32.xlu0 %v870
          %v894 = vpop.xlane.xlu0 %893
          %895 = vadd.xlane.f32.xlu0 %v871
          %v896 = vpop.xlane.xlu0 %895
          %897 = vadd.xlane.f32.xlu0 %v872
          %v898 = vpop.xlane.xlu0 %897
          %899 = vadd.xlane.f32.xlu0 %v873
          %v900 = vpop.xlane.xlu0 %899
          %901 = vadd.xlane.f32.xlu0 %v874
          %v902 = vpop.xlane.xlu0 %901
          %903 = vadd.xlane.f32.xlu0 %v875
          %v904 = vpop.xlane.xlu0 %903
          %905 = vadd.xlane.f32.xlu0 %v876
          %v906 = vpop.xlane.xlu0 %905
          %907 = vadd.xlane.f32.xlu0 %v877
          %v908 = vpop.xlane.xlu0 %907
          %909 = vadd.xlane.f32.xlu0 %v878
          %v910 = vpop.xlane.xlu0 %909
          %v911 = vrcp.pop 128.0
          %v912 = vmul.f32 %v880, %v911
          %v913 = vmul.f32 %v882, %v911
          %v914 = vmul.f32 %v884, %v911
          %v915 = vmul.f32 %v886, %v911
          %v916 = vmul.f32 %v888, %v911
          %v917 = vmul.f32 %v890, %v911
          %v918 = vmul.f32 %v892, %v911
          %v919 = vmul.f32 %v894, %v911
          %v920 = vmul.f32 %v896, %v911
          %v921 = vmul.f32 %v898, %v911
          %v922 = vmul.f32 %v900, %v911
          %v923 = vmul.f32 %v902, %v911
          %v924 = vmul.f32 %v904, %v911
          %v925 = vmul.f32 %v906, %v911
          %v926 = vmul.f32 %v908, %v911
          %v927 = vmul.f32 %v910, %v911
          %v928 = vadd.f32 %v912, 1e-06
          %v929 = vadd.f32 %v913, 1e-06
          %v930 = vadd.f32 %v914, 1e-06
          %v931 = vadd.f32 %v915, 1e-06
          %v932 = vadd.f32 %v916, 1e-06
          %v933 = vadd.f32 %v917, 1e-06
          %v934 = vadd.f32 %v918, 1e-06
          %v935 = vadd.f32 %v919, 1e-06
          %v936 = vadd.f32 %v920, 1e-06
          %v937 = vadd.f32 %v921, 1e-06
          %v938 = vadd.f32 %v922, 1e-06
          %v939 = vadd.f32 %v923, 1e-06
          %v940 = vadd.f32 %v924, 1e-06
          %v941 = vadd.f32 %v925, 1e-06
          %v942 = vadd.f32 %v926, 1e-06
          %v943 = vadd.f32 %v927, 1e-06
          %v944 = vrsqrt.pop %v928
          %v945 = vrsqrt.pop %v929
          %v946 = vrsqrt.pop %v930
          %v947 = vrsqrt.pop %v931
          %v948 = vrsqrt.pop %v932
          %v949 = vrsqrt.pop %v933
          %v950 = vrsqrt.pop %v934
          %v951 = vrsqrt.pop %v935
          %v952 = vrsqrt.pop %v936
          %v953 = vrsqrt.pop %v937
          %v954 = vrsqrt.pop %v938
          %v955 = vrsqrt.pop %v939
          %v956 = vrsqrt.pop %v940
          %v957 = vrsqrt.pop %v941
          %v958 = vrsqrt.pop %v942
          %v959 = vrsqrt.pop %v943
          %v960 = vmul.f32 %v846, %v944
          %v961 = vmul.f32 %v847, %v945
          %v962 = vmul.f32 %v848, %v946
          %v963 = vmul.f32 %v849, %v947
          %v964 = vmul.f32 %v850, %v948
          %v965 = vmul.f32 %v851, %v949
          %v966 = vmul.f32 %v852, %v950
          %v967 = vmul.f32 %v853, %v951
          %v968 = vmul.f32 %v854, %v952
          %v969 = vmul.f32 %v855, %v953
          %v970 = vmul.f32 %v856, %v954
          %v971 = vmul.f32 %v857, %v955
          %v972 = vmul.f32 %v858, %v956
          %v973 = vmul.f32 %v859, %v957
          %v974 = vmul.f32 %v860, %v958
          %v975 = vmul.f32 %v861, %v959
          %v977 = vlaneseq
          %v978 = vshrl.u32 %v977, 7
          %v979 = vsub.s32 0, %v978
          %v980 = vrot.slane %v862, %v979
          %v982 = vmul.f32 %v960, %v980
          %v983 = vmul.f32 %v961, %v980
          %v984 = vmul.f32 %v962, %v980
          %v985 = vmul.f32 %v963, %v980
          %v986 = vmul.f32 %v964, %v980
          %v987 = vmul.f32 %v965, %v980
          %v988 = vmul.f32 %v966, %v980
          %v989 = vmul.f32 %v967, %v980
          %v990 = vmul.f32 %v968, %v980
          %v991 = vmul.f32 %v969, %v980
          %v992 = vmul.f32 %v970, %v980
          %v993 = vmul.f32 %v971, %v980
          %v994 = vmul.f32 %v972, %v980
          %v995 = vmul.f32 %v973, %v980
          %v996 = vmul.f32 %v974, %v980
          %v997 = vmul.f32 %v975, %v980
          %v998 = vpack.c.bf16 %v983, %v982
          %v999 = vpack.c.bf16 %v985, %v984
          %v1000 = vpack.c.bf16 %v987, %v986
          %v1001 = vpack.c.bf16 %v989, %v988
          %v1002 = vpack.c.bf16 %v991, %v990
          %v1003 = vpack.c.bf16 %v993, %v992
          %v1004 = vpack.c.bf16 %v995, %v994
          %v1005 = vpack.c.bf16 %v997, %v996
          %v1014 = vunpack.c.l.b16 %v998
          %v1015 = vunpack.c.h.b16 %v998
          %v1016 = vunpack.c.l.b16 %v999
          %v1017 = vunpack.c.h.b16 %v999
          %v1018 = vunpack.c.l.b16 %v1000
          %v1019 = vunpack.c.h.b16 %v1000
          %v1020 = vunpack.c.l.b16 %v1001
          %v1021 = vunpack.c.h.b16 %v1001
          %v1022 = vunpack.c.l.b16 %v1002
          %v1023 = vunpack.c.h.b16 %v1002
          %v1024 = vunpack.c.l.b16 %v1003
          %v1025 = vunpack.c.h.b16 %v1003
          %v1026 = vunpack.c.l.b16 %v1004
          %v1027 = vunpack.c.h.b16 %v1004
          %v1028 = vunpack.c.l.b16 %v1005
          %v1029 = vunpack.c.h.b16 %v1005
          %v1030 = vpack.c.b16 %v1014, %v1014
          %v1031 = vpack.c.b16 %v1015, %v1015
          %v1032 = vpack.c.b16 %v1016, %v1016
          %v1033 = vpack.c.b16 %v1017, %v1017
          %v1034 = vpack.c.b16 %v1018, %v1018
          %v1035 = vpack.c.b16 %v1019, %v1019
          %v1036 = vpack.c.b16 %v1020, %v1020
          %v1037 = vpack.c.b16 %v1021, %v1021
          %v1038 = vpack.c.b16 %v1022, %v1022
          %v1039 = vpack.c.b16 %v1023, %v1023
          %v1040 = vpack.c.b16 %v1024, %v1024
          %v1041 = vpack.c.b16 %v1025, %v1025
          %v1042 = vpack.c.b16 %v1026, %v1026
          %v1043 = vpack.c.b16 %v1027, %v1027
          %v1044 = vpack.c.b16 %v1028, %v1028
          %v1045 = vpack.c.b16 %v1029, %v1029
          %1062 = vst [vmem:[#allocation3] sm:$0xf] %v1030
          %1063 = vst [vmem:[#allocation3 + $0x4] sm:$0xf] %v1031
          %1064 = vst [vmem:[#allocation3 + $0x8] sm:$0xf] %v1032
          %1065 = vst [vmem:[#allocation3 + $0xc] sm:$0xf] %v1033
          %1066 = vst [vmem:[#allocation3 + $0x10] sm:$0xf] %v1034
          %1067 = vst [vmem:[#allocation3 + $0x14] sm:$0xf] %v1035
          %1068 = vst [vmem:[#allocation3 + $0x18] sm:$0xf] %v1036
          %1069 = vst [vmem:[#allocation3 + $0x1c] sm:$0xf] %v1037
          %1070 = vst [vmem:[#allocation3 + $0x20] sm:$0xf] %v1038
          %1071 = vst [vmem:[#allocation3 + $0x24] sm:$0xf] %v1039
          %1072 = vst [vmem:[#allocation3 + $0x28] sm:$0xf] %v1040
          %1073 = vst [vmem:[#allocation3 + $0x2c] sm:$0xf] %v1041
          %1074 = vst [vmem:[#allocation3 + $0x30] sm:$0xf] %v1042
          %1075 = vst [vmem:[#allocation3 + $0x34] sm:$0xf] %v1043
          %1076 = vst [vmem:[#allocation3 + $0x38] sm:$0xf] %v1044
          %1077 = vst [vmem:[#allocation3 + $0x3c] sm:$0xf] %v1045
          %1078 = vst [vmem:[#allocation2] sm:$0xff] 0.0
          %1079 = vst [vmem:[#allocation2 + $0x8] sm:$0xff] 0.0
          %1080 = vst [vmem:[#allocation2 + $0x10] sm:$0xff] 0.0
          %1081 = vst [vmem:[#allocation2 + $0x18] sm:$0xff] 0.0
          %1082 = vst [vmem:[#allocation2 + $0x20] sm:$0xff] 0.0
          %1083 = vst [vmem:[#allocation2 + $0x28] sm:$0xff] 0.0
          %1084 = vst [vmem:[#allocation2 + $0x30] sm:$0xff] 0.0
          %1085 = vst [vmem:[#allocation2 + $0x38] sm:$0xff] 0.0
          %1086 = vst [vmem:[#allocation2 + $0x40] sm:$0xff] 0.0
          %1087 = vst [vmem:[#allocation2 + $0x48] sm:$0xff] 0.0
          %1088 = vst [vmem:[#allocation2 + $0x50] sm:$0xff] 0.0
          %1089 = vst [vmem:[#allocation2 + $0x58] sm:$0xff] 0.0
          %1090 = vst [vmem:[#allocation2 + $0x60] sm:$0xff] 0.0
          %1091 = vst [vmem:[#allocation2 + $0x68] sm:$0xff] 0.0
          %1092 = vst [vmem:[#allocation2 + $0x70] sm:$0xff] 0.0
          %1093 = vst [vmem:[#allocation2 + $0x78] sm:$0xff] 0.0
        $region108: #{tpu_custom_call.1} parent=67 // pred_fallthru
          _
        %p1094 = scmp.lt.s32.totalorder %s46, 2
        // Predicated region
        $region109: #{tpu_custom_call.1} parent=67 // pred_check
          %p1095 = pneg %p1094
        $region110: #{tpu_custom_call.1} parent=67 // pred_check_branch
          %1097 = sbr.rel (%p1095) target = $region112
        $region111: #{tpu_custom_call.1} parent=67 // pred_region
          %v1098 = vld [vmem:[#allocation3] sm:$0xf]
          %v1099 = vld [vmem:[#allocation3 + $0x4] sm:$0xf]
          %v1100 = vld [vmem:[#allocation3 + $0x8] sm:$0xf]
          %v1101 = vld [vmem:[#allocation3 + $0xc] sm:$0xf]
          %v1102 = vld [vmem:[#allocation3 + $0x10] sm:$0xf]
          %v1103 = vld [vmem:[#allocation3 + $0x14] sm:$0xf]
          %v1104 = vld [vmem:[#allocation3 + $0x18] sm:$0xf]
          %v1105 = vld [vmem:[#allocation3 + $0x1c] sm:$0xf]
          %v1106 = vld [vmem:[#allocation3 + $0x20] sm:$0xf]
          %v1107 = vld [vmem:[#allocation3 + $0x24] sm:$0xf]
          %v1108 = vld [vmem:[#allocation3 + $0x28] sm:$0xf]
          %v1109 = vld [vmem:[#allocation3 + $0x2c] sm:$0xf]
          %v1110 = vld [vmem:[#allocation3 + $0x30] sm:$0xf]
          %v1111 = vld [vmem:[#allocation3 + $0x34] sm:$0xf]
          %v1112 = vld [vmem:[#allocation3 + $0x38] sm:$0xf]
          %v1113 = vld [vmem:[#allocation3 + $0x3c] sm:$0xf]
          %v1114 = vld [vmem:[%s669] sm:$0xf]
          %v1115 = vld [vmem:[%s669 + $0x4] sm:$0xf]
          %v1116 = vld [vmem:[%s669 + $0x8] sm:$0xf]
          %v1117 = vld [vmem:[%s669 + $0xc] sm:$0xf]
          %v1118 = vld [vmem:[%s669 + $0x10] sm:$0xf]
          %v1119 = vld [vmem:[%s669 + $0x14] sm:$0xf]
          %v1120 = vld [vmem:[%s669 + $0x18] sm:$0xf]
          %v1121 = vld [vmem:[%s669 + $0x1c] sm:$0xf]
          %v1122 = vld [vmem:[%s669 + $0x20] sm:$0xf]
          %v1123 = vld [vmem:[%s669 + $0x24] sm:$0xf]
          %v1124 = vld [vmem:[%s669 + $0x28] sm:$0xf]
          %v1125 = vld [vmem:[%s669 + $0x2c] sm:$0xf]
          %v1126 = vld [vmem:[%s669 + $0x30] sm:$0xf]
          %v1127 = vld [vmem:[%s669 + $0x34] sm:$0xf]
          %v1128 = vld [vmem:[%s669 + $0x38] sm:$0xf]
          %v1129 = vld [vmem:[%s669 + $0x3c] sm:$0xf]
          %v1146 = vunpack.c.l.b16 %v1098
          %v1147 = vunpack.c.l.b16 %v1099
          %v1148 = vunpack.c.l.b16 %v1100
          %v1149 = vunpack.c.l.b16 %v1101
          %v1150 = vunpack.c.l.b16 %v1102
          %v1151 = vunpack.c.l.b16 %v1103
          %v1152 = vunpack.c.l.b16 %v1104
          %v1153 = vunpack.c.l.b16 %v1105
          %v1154 = vunpack.c.l.b16 %v1106
          %v1155 = vunpack.c.l.b16 %v1107
          %v1156 = vunpack.c.l.b16 %v1108
          %v1157 = vunpack.c.l.b16 %v1109
          %v1158 = vunpack.c.l.b16 %v1110
          %v1159 = vunpack.c.l.b16 %v1111
          %v1160 = vunpack.c.l.b16 %v1112
          %v1161 = vunpack.c.l.b16 %v1113
          %v1162 = vpack.c.b16 %v1147, %v1146
          %v1163 = vpack.c.b16 %v1149, %v1148
          %v1164 = vpack.c.b16 %v1151, %v1150
          %v1165 = vpack.c.b16 %v1153, %v1152
          %v1166 = vpack.c.b16 %v1155, %v1154
          %v1167 = vpack.c.b16 %v1157, %v1156
          %v1168 = vpack.c.b16 %v1159, %v1158
          %v1169 = vpack.c.b16 %v1161, %v1160
          %v1194 = vunpack.c.l.b16 %v1114
          %v1195 = vunpack.c.l.b16 %v1115
          %v1196 = vunpack.c.l.b16 %v1116
          %v1197 = vunpack.c.l.b16 %v1117
          %v1198 = vunpack.c.l.b16 %v1118
          %v1199 = vunpack.c.l.b16 %v1119
          %v1200 = vunpack.c.l.b16 %v1120
          %v1201 = vunpack.c.l.b16 %v1121
          %v1202 = vunpack.c.l.b16 %v1122
          %v1203 = vunpack.c.l.b16 %v1123
          %v1204 = vunpack.c.l.b16 %v1124
          %v1205 = vunpack.c.l.b16 %v1125
          %v1206 = vunpack.c.l.b16 %v1126
          %v1207 = vunpack.c.l.b16 %v1127
          %v1208 = vunpack.c.l.b16 %v1128
          %v1209 = vunpack.c.l.b16 %v1129
          %v1210 = vpack.c.b16 %v1195, %v1194
          %v1211 = vpack.c.b16 %v1197, %v1196
          %v1212 = vpack.c.b16 %v1199, %v1198
          %v1213 = vpack.c.b16 %v1201, %v1200
          %v1214 = vpack.c.b16 %v1203, %v1202
          %v1215 = vpack.c.b16 %v1205, %v1204
          %v1216 = vpack.c.b16 %v1207, %v1206
          %v1217 = vpack.c.b16 %v1209, %v1208
          %1226 = vmatprep.subr.bf16.mxu0 0
          %1227 = vmatpush1.bf16.msra.mxu0 %v1217
          %1228 = vmatprep.subr.bf16.mxu0 0
          %1229 = vmatpush1.bf16.msra.mxu0 %v1216
          %1230 = vmatprep.subr.bf16.mxu0 0
          %1231 = vmatpush1.bf16.msra.mxu0 %v1215
          %1232 = vmatprep.subr.bf16.mxu0 0
          %1233 = vmatpush1.bf16.msra.mxu0 %v1214
          %1234 = vmatprep.subr.bf16.mxu0 0
          %1235 = vmatpush1.bf16.msra.mxu0 %v1213
          %1236 = vmatprep.subr.bf16.mxu0 0
          %1237 = vmatpush1.bf16.msra.mxu0 %v1212
          %1238 = vmatprep.subr.bf16.mxu0 0
          %1239 = vmatpush1.bf16.msra.mxu0 %v1211
          %1240 = vmatprep.subr.bf16.mxu0 0
          %1241 = vmatpush1.bf16.msra.mxu0 %v1210
          %1242 = vmatprep.subr.bf16.mxu0 0
          %1243 = vmatpush2.bf16.msra.mxu0 0
          %1244 = vmatprep.subr.bf16.mxu0 0
          %1245 = vmatpush2.bf16.msra.mxu0 0
          %1246 = vmatprep.subr.bf16.mxu0 0
          %1247 = vmatpush2.bf16.msra.mxu0 0
          %1248 = vmatprep.subr.bf16.mxu0 0
          %1249 = vmatpush2.bf16.msra.mxu0 0
          %1250 = vmatprep.subr.bf16.mxu0 0
          %1251 = vmatpush2.bf16.msra.mxu0 0
          %1252 = vmatprep.subr.bf16.mxu0 0
          %1253 = vmatpush2.bf16.msra.mxu0 0
          %1254 = vmatprep.subr.bf16.mxu0 0
          %1255 = vmatpush2.bf16.msra.mxu0 0
          %1256 = vmatprep.subr.bf16.mxu0 0
          %1257 = vmatpush2.bf16.msra.mxu0 0
          %1258 = vmatprep.mubr.bf16.mxu0 0
          %1259 = vmatmul.mubr.bf16.gmra.mxu0 %v1162
          %v1260 = vpop.f32.mrf.mxu0
          %v1261 = vadd.f32 0.0, %v1260
          %v1262 = vpop.f32.mrf.mxu0
          %v1263 = vpop.f32.mrf.mxu0
          %v1264 = vadd.f32 0.0, %v1263
          %v1265 = vpop.f32.mrf.mxu0
          %1266 = vmatprep.mubr.bf16.mxu0 0
          %1267 = vmatmul.mubr.bf16.gmra.mxu0 %v1163
          %v1268 = vpop.f32.mrf.mxu0
          %v1269 = vadd.f32 0.0, %v1268
          %v1270 = vpop.f32.mrf.mxu0
          %v1271 = vpop.f32.mrf.mxu0
          %v1272 = vadd.f32 0.0, %v1271
          %v1273 = vpop.f32.mrf.mxu0
          %1274 = vmatprep.mubr.bf16.mxu0 0
          %1275 = vmatmul.mubr.bf16.gmra.mxu0 %v1164
          %v1276 = vpop.f32.mrf.mxu0
          %v1277 = vadd.f32 0.0, %v1276
          %v1278 = vpop.f32.mrf.mxu0
          %v1279 = vpop.f32.mrf.mxu0
          %v1280 = vadd.f32 0.0, %v1279
          %v1281 = vpop.f32.mrf.mxu0
          %1282 = vmatprep.mubr.bf16.mxu0 0
          %1283 = vmatmul.mubr.bf16.gmra.mxu0 %v1165
          %v1284 = vpop.f32.mrf.mxu0
          %v1285 = vadd.f32 0.0, %v1284
          %v1286 = vpop.f32.mrf.mxu0
          %v1287 = vpop.f32.mrf.mxu0
          %v1288 = vadd.f32 0.0, %v1287
          %v1289 = vpop.f32.mrf.mxu0
          %1290 = vmatprep.mubr.bf16.mxu0 0
          %1291 = vmatmul.mubr.bf16.gmra.mxu0 %v1166
          %v1292 = vpop.f32.mrf.mxu0
          %v1293 = vadd.f32 0.0, %v1292
          %v1294 = vpop.f32.mrf.mxu0
          %v1295 = vpop.f32.mrf.mxu0
          %v1296 = vadd.f32 0.0, %v1295
          %v1297 = vpop.f32.mrf.mxu0
          %1298 = vmatprep.mubr.bf16.mxu0 0
          %1299 = vmatmul.mubr.bf16.gmra.mxu0 %v1167
          %v1300 = vpop.f32.mrf.mxu0
          %v1301 = vadd.f32 0.0, %v1300
          %v1302 = vpop.f32.mrf.mxu0
          %v1303 = vpop.f32.mrf.mxu0
          %v1304 = vadd.f32 0.0, %v1303
          %v1305 = vpop.f32.mrf.mxu0
          %1306 = vmatprep.mubr.bf16.mxu0 0
          %1307 = vmatmul.mubr.bf16.gmra.mxu0 %v1168
          %v1308 = vpop.f32.mrf.mxu0
          %v1309 = vadd.f32 0.0, %v1308
          %v1310 = vpop.f32.mrf.mxu0
          %v1311 = vpop.f32.mrf.mxu0
          %v1312 = vadd.f32 0.0, %v1311
          %v1313 = vpop.f32.mrf.mxu0
          %1314 = vmatprep.mubr.bf16.mxu0 0
          %1315 = vmatmul.mubr.bf16.gmra.mxu0 %v1169
          %v1316 = vpop.f32.mrf.mxu0
          %v1317 = vadd.f32 0.0, %v1316
          %v1318 = vpop.f32.mrf.mxu0
          %v1319 = vpop.f32.mrf.mxu0
          %v1320 = vadd.f32 0.0, %v1319
          %v1321 = vpop.f32.mrf.mxu0
          %1322 = vdwg.mxu0
          %v1323 = vld [vmem:[%s678] sm:$0xf]
          %v1324 = vld [vmem:[%s678 + $0x4] sm:$0xf]
          %v1325 = vld [vmem:[%s678 + $0x8] sm:$0xf]
          %v1326 = vld [vmem:[%s678 + $0xc] sm:$0xf]
          %v1327 = vld [vmem:[%s678 + $0x10] sm:$0xf]
          %v1328 = vld [vmem:[%s678 + $0x14] sm:$0xf]
          %v1329 = vld [vmem:[%s678 + $0x18] sm:$0xf]
          %v1330 = vld [vmem:[%s678 + $0x1c] sm:$0xf]
          %v1331 = vld [vmem:[%s678 + $0x20] sm:$0xf]
          %v1332 = vld [vmem:[%s678 + $0x24] sm:$0xf]
          %v1333 = vld [vmem:[%s678 + $0x28] sm:$0xf]
          %v1334 = vld [vmem:[%s678 + $0x2c] sm:$0xf]
          %v1335 = vld [vmem:[%s678 + $0x30] sm:$0xf]
          %v1336 = vld [vmem:[%s678 + $0x34] sm:$0xf]
          %v1337 = vld [vmem:[%s678 + $0x38] sm:$0xf]
          %v1338 = vld [vmem:[%s678 + $0x3c] sm:$0xf]
          %v1355 = vunpack.c.l.b16 %v1323
          %v1356 = vunpack.c.l.b16 %v1324
          %v1357 = vunpack.c.l.b16 %v1325
          %v1358 = vunpack.c.l.b16 %v1326
          %v1359 = vunpack.c.l.b16 %v1327
          %v1360 = vunpack.c.l.b16 %v1328
          %v1361 = vunpack.c.l.b16 %v1329
          %v1362 = vunpack.c.l.b16 %v1330
          %v1363 = vunpack.c.l.b16 %v1331
          %v1364 = vunpack.c.l.b16 %v1332
          %v1365 = vunpack.c.l.b16 %v1333
          %v1366 = vunpack.c.l.b16 %v1334
          %v1367 = vunpack.c.l.b16 %v1335
          %v1368 = vunpack.c.l.b16 %v1336
          %v1369 = vunpack.c.l.b16 %v1337
          %v1370 = vunpack.c.l.b16 %v1338
          %v1371 = vpack.c.b16 %v1356, %v1355
          %v1372 = vpack.c.b16 %v1358, %v1357
          %v1373 = vpack.c.b16 %v1360, %v1359
          %v1374 = vpack.c.b16 %v1362, %v1361
          %v1375 = vpack.c.b16 %v1364, %v1363
          %v1376 = vpack.c.b16 %v1366, %v1365
          %v1377 = vpack.c.b16 %v1368, %v1367
          %v1378 = vpack.c.b16 %v1370, %v1369
          %1387 = vmatprep.subr.bf16.mxu0 0
          %1388 = vmatpush1.bf16.msra.mxu0 %v1378
          %1389 = vmatprep.subr.bf16.mxu0 0
          %1390 = vmatpush1.bf16.msra.mxu0 %v1377
          %1391 = vmatprep.subr.bf16.mxu0 0
          %1392 = vmatpush1.bf16.msra.mxu0 %v1376
          %1393 = vmatprep.subr.bf16.mxu0 0
          %1394 = vmatpush1.bf16.msra.mxu0 %v1375
          %1395 = vmatprep.subr.bf16.mxu0 0
          %1396 = vmatpush1.bf16.msra.mxu0 %v1374
          %1397 = vmatprep.subr.bf16.mxu0 0
          %1398 = vmatpush1.bf16.msra.mxu0 %v1373
          %1399 = vmatprep.subr.bf16.mxu0 0
          %1400 = vmatpush1.bf16.msra.mxu0 %v1372
          %1401 = vmatprep.subr.bf16.mxu0 0
          %1402 = vmatpush1.bf16.msra.mxu0 %v1371
          %1403 = vmatprep.subr.bf16.mxu0 0
          %1404 = vmatpush2.bf16.msra.mxu0 0
          %1405 = vmatprep.subr.bf16.mxu0 0
          %1406 = vmatpush2.bf16.msra.mxu0 0
          %1407 = vmatprep.subr.bf16.mxu0 0
          %1408 = vmatpush2.bf16.msra.mxu0 0
          %1409 = vmatprep.subr.bf16.mxu0 0
          %1410 = vmatpush2.bf16.msra.mxu0 0
          %1411 = vmatprep.subr.bf16.mxu0 0
          %1412 = vmatpush2.bf16.msra.mxu0 0
          %1413 = vmatprep.subr.bf16.mxu0 0
          %1414 = vmatpush2.bf16.msra.mxu0 0
          %1415 = vmatprep.subr.bf16.mxu0 0
          %1416 = vmatpush2.bf16.msra.mxu0 0
          %1417 = vmatprep.subr.bf16.mxu0 0
          %1418 = vmatpush2.bf16.msra.mxu0 0
          %1419 = vmatprep.mubr.bf16.mxu0 0
          %1420 = vmatmul.mubr.bf16.gmra.mxu0 %v1162
          %v1421 = vpop.f32.mrf.mxu0
          %v1422 = vadd.f32 0.0, %v1421
          %v1423 = vpop.f32.mrf.mxu0
          %v1424 = vpop.f32.mrf.mxu0
          %v1425 = vadd.f32 0.0, %v1424
          %v1426 = vpop.f32.mrf.mxu0
          %1427 = vmatprep.mubr.bf16.mxu0 0
          %1428 = vmatmul.mubr.bf16.gmra.mxu0 %v1163
          %v1429 = vpop.f32.mrf.mxu0
          %v1430 = vadd.f32 0.0, %v1429
          %v1431 = vpop.f32.mrf.mxu0
          %v1432 = vpop.f32.mrf.mxu0
          %v1433 = vadd.f32 0.0, %v1432
          %v1434 = vpop.f32.mrf.mxu0
          %1435 = vmatprep.mubr.bf16.mxu0 0
          %1436 = vmatmul.mubr.bf16.gmra.mxu0 %v1164
          %v1437 = vpop.f32.mrf.mxu0
          %v1438 = vadd.f32 0.0, %v1437
          %v1439 = vpop.f32.mrf.mxu0
          %v1440 = vpop.f32.mrf.mxu0
          %v1441 = vadd.f32 0.0, %v1440
          %v1442 = vpop.f32.mrf.mxu0
          %1443 = vmatprep.mubr.bf16.mxu0 0
          %1444 = vmatmul.mubr.bf16.gmra.mxu0 %v1165
          %v1445 = vpop.f32.mrf.mxu0
          %v1446 = vadd.f32 0.0, %v1445
          %v1447 = vpop.f32.mrf.mxu0
          %v1448 = vpop.f32.mrf.mxu0
          %v1449 = vadd.f32 0.0, %v1448
          %v1450 = vpop.f32.mrf.mxu0
          %1451 = vmatprep.mubr.bf16.mxu0 0
          %1452 = vmatmul.mubr.bf16.gmra.mxu0 %v1166
          %v1453 = vpop.f32.mrf.mxu0
          %v1454 = vadd.f32 0.0, %v1453
          %v1455 = vpop.f32.mrf.mxu0
          %v1456 = vpop.f32.mrf.mxu0
          %v1457 = vadd.f32 0.0, %v1456
          %v1458 = vpop.f32.mrf.mxu0
          %1459 = vmatprep.mubr.bf16.mxu0 0
          %1460 = vmatmul.mubr.bf16.gmra.mxu0 %v1167
          %v1461 = vpop.f32.mrf.mxu0
          %v1462 = vadd.f32 0.0, %v1461
          %v1463 = vpop.f32.mrf.mxu0
          %v1464 = vpop.f32.mrf.mxu0
          %v1465 = vadd.f32 0.0, %v1464
          %v1466 = vpop.f32.mrf.mxu0
          %1467 = vmatprep.mubr.bf16.mxu0 0
          %1468 = vmatmul.mubr.bf16.gmra.mxu0 %v1168
          %v1469 = vpop.f32.mrf.mxu0
          %v1470 = vadd.f32 0.0, %v1469
          %v1471 = vpop.f32.mrf.mxu0
          %v1472 = vpop.f32.mrf.mxu0
          %v1473 = vadd.f32 0.0, %v1472
          %v1474 = vpop.f32.mrf.mxu0
          %1475 = vmatprep.mubr.bf16.mxu0 0
          %1476 = vmatmul.mubr.bf16.gmra.mxu0 %v1169
          %v1477 = vpop.f32.mrf.mxu0
          %v1478 = vadd.f32 0.0, %v1477
          %v1479 = vpop.f32.mrf.mxu0
          %v1480 = vpop.f32.mrf.mxu0
          %v1481 = vadd.f32 0.0, %v1480
          %v1482 = vpop.f32.mrf.mxu0
          %1483 = vdwg.mxu0
          %v1484 = vld [vmem:[%s687] sm:$0xf]
          %v1485 = vld [vmem:[%s687 + $0x4] sm:$0xf]
          %v1486 = vld [vmem:[%s687 + $0x8] sm:$0xf]
          %v1487 = vld [vmem:[%s687 + $0xc] sm:$0xf]
          %v1488 = vld [vmem:[%s687 + $0x10] sm:$0xf]
          %v1489 = vld [vmem:[%s687 + $0x14] sm:$0xf]
          %v1490 = vld [vmem:[%s687 + $0x18] sm:$0xf]
          %v1491 = vld [vmem:[%s687 + $0x1c] sm:$0xf]
          %v1492 = vld [vmem:[%s687 + $0x20] sm:$0xf]
          %v1493 = vld [vmem:[%s687 + $0x24] sm:$0xf]
          %v1494 = vld [vmem:[%s687 + $0x28] sm:$0xf]
          %v1495 = vld [vmem:[%s687 + $0x2c] sm:$0xf]
          %v1496 = vld [vmem:[%s687 + $0x30] sm:$0xf]
          %v1497 = vld [vmem:[%s687 + $0x34] sm:$0xf]
          %v1498 = vld [vmem:[%s687 + $0x38] sm:$0xf]
          %v1499 = vld [vmem:[%s687 + $0x3c] sm:$0xf]
          %v1516 = vunpack.c.l.b16 %v1484
          %v1517 = vunpack.c.l.b16 %v1485
          %v1518 = vunpack.c.l.b16 %v1486
          %v1519 = vunpack.c.l.b16 %v1487
          %v1520 = vunpack.c.l.b16 %v1488
          %v1521 = vunpack.c.l.b16 %v1489
          %v1522 = vunpack.c.l.b16 %v1490
          %v1523 = vunpack.c.l.b16 %v1491
          %v1524 = vunpack.c.l.b16 %v1492
          %v1525 = vunpack.c.l.b16 %v1493
          %v1526 = vunpack.c.l.b16 %v1494
          %v1527 = vunpack.c.l.b16 %v1495
          %v1528 = vunpack.c.l.b16 %v1496
          %v1529 = vunpack.c.l.b16 %v1497
          %v1530 = vunpack.c.l.b16 %v1498
          %v1531 = vunpack.c.l.b16 %v1499
          %v1532 = vpack.c.b16 %v1517, %v1516
          %v1533 = vpack.c.b16 %v1519, %v1518
          %v1534 = vpack.c.b16 %v1521, %v1520
          %v1535 = vpack.c.b16 %v1523, %v1522
          %v1536 = vpack.c.b16 %v1525, %v1524
          %v1537 = vpack.c.b16 %v1527, %v1526
          %v1538 = vpack.c.b16 %v1529, %v1528
          %v1539 = vpack.c.b16 %v1531, %v1530
          %1548 = vmatprep.subr.bf16.mxu0 0
          %1549 = vmatpush1.bf16.msra.mxu0 %v1539
          %1550 = vmatprep.subr.bf16.mxu0 0
          %1551 = vmatpush1.bf16.msra.mxu0 %v1538
          %1552 = vmatprep.subr.bf16.mxu0 0
          %1553 = vmatpush1.bf16.msra.mxu0 %v1537
          %1554 = vmatprep.subr.bf16.mxu0 0
          %1555 = vmatpush1.bf16.msra.mxu0 %v1536
          %1556 = vmatprep.subr.bf16.mxu0 0
          %1557 = vmatpush1.bf16.msra.mxu0 %v1535
          %1558 = vmatprep.subr.bf16.mxu0 0
          %1559 = vmatpush1.bf16.msra.mxu0 %v1534
          %1560 = vmatprep.subr.bf16.mxu0 0
          %1561 = vmatpush1.bf16.msra.mxu0 %v1533
          %1562 = vmatprep.subr.bf16.mxu0 0
          %1563 = vmatpush1.bf16.msra.mxu0 %v1532
          %1564 = vmatprep.subr.bf16.mxu0 0
          %1565 = vmatpush2.bf16.msra.mxu0 0
          %1566 = vmatprep.subr.bf16.mxu0 0
          %1567 = vmatpush2.bf16.msra.mxu0 0
          %1568 = vmatprep.subr.bf16.mxu0 0
          %1569 = vmatpush2.bf16.msra.mxu0 0
          %1570 = vmatprep.subr.bf16.mxu0 0
          %1571 = vmatpush2.bf16.msra.mxu0 0
          %1572 = vmatprep.subr.bf16.mxu0 0
          %1573 = vmatpush2.bf16.msra.mxu0 0
          %1574 = vmatprep.subr.bf16.mxu0 0
          %1575 = vmatpush2.bf16.msra.mxu0 0
          %1576 = vmatprep.subr.bf16.mxu0 0
          %1577 = vmatpush2.bf16.msra.mxu0 0
          %1578 = vmatprep.subr.bf16.mxu0 0
          %1579 = vmatpush2.bf16.msra.mxu0 0
          %1580 = vmatprep.mubr.bf16.mxu0 0
          %1581 = vmatmul.mubr.bf16.gmra.mxu0 %v1162
          %v1582 = vpop.f32.mrf.mxu0
          %v1583 = vadd.f32 0.0, %v1582
          %v1584 = vpop.f32.mrf.mxu0
          %v1585 = vpop.f32.mrf.mxu0
          %v1586 = vadd.f32 0.0, %v1585
          %v1587 = vpop.f32.mrf.mxu0
          %1588 = vmatprep.mubr.bf16.mxu0 0
          %1589 = vmatmul.mubr.bf16.gmra.mxu0 %v1163
          %v1590 = vpop.f32.mrf.mxu0
          %v1591 = vadd.f32 0.0, %v1590
          %v1592 = vpop.f32.mrf.mxu0
          %v1593 = vpop.f32.mrf.mxu0
          %v1594 = vadd.f32 0.0, %v1593
          %v1595 = vpop.f32.mrf.mxu0
          %1596 = vmatprep.mubr.bf16.mxu0 0
          %1597 = vmatmul.mubr.bf16.gmra.mxu0 %v1164
          %v1598 = vpop.f32.mrf.mxu0
          %v1599 = vadd.f32 0.0, %v1598
          %v1600 = vpop.f32.mrf.mxu0
          %v1601 = vpop.f32.mrf.mxu0
          %v1602 = vadd.f32 0.0, %v1601
          %v1603 = vpop.f32.mrf.mxu0
          %1604 = vmatprep.mubr.bf16.mxu0 0
          %1605 = vmatmul.mubr.bf16.gmra.mxu0 %v1165
          %v1606 = vpop.f32.mrf.mxu0
          %v1607 = vadd.f32 0.0, %v1606
          %v1608 = vpop.f32.mrf.mxu0
          %v1609 = vpop.f32.mrf.mxu0
          %v1610 = vadd.f32 0.0, %v1609
          %v1611 = vpop.f32.mrf.mxu0
          %1612 = vmatprep.mubr.bf16.mxu0 0
          %1613 = vmatmul.mubr.bf16.gmra.mxu0 %v1166
          %v1614 = vpop.f32.mrf.mxu0
          %v1615 = vadd.f32 0.0, %v1614
          %v1616 = vpop.f32.mrf.mxu0
          %v1617 = vpop.f32.mrf.mxu0
          %v1618 = vadd.f32 0.0, %v1617
          %v1619 = vpop.f32.mrf.mxu0
          %1620 = vmatprep.mubr.bf16.mxu0 0
          %1621 = vmatmul.mubr.bf16.gmra.mxu0 %v1167
          %v1622 = vpop.f32.mrf.mxu0
          %v1623 = vadd.f32 0.0, %v1622
          %v1624 = vpop.f32.mrf.mxu0
          %v1625 = vpop.f32.mrf.mxu0
          %v1626 = vadd.f32 0.0, %v1625
          %v1627 = vpop.f32.mrf.mxu0
          %1628 = vmatprep.mubr.bf16.mxu0 0
          %1629 = vmatmul.mubr.bf16.gmra.mxu0 %v1168
          %v1630 = vpop.f32.mrf.mxu0
          %v1631 = vadd.f32 0.0, %v1630
          %v1632 = vpop.f32.mrf.mxu0
          %v1633 = vpop.f32.mrf.mxu0
          %v1634 = vadd.f32 0.0, %v1633
          %v1635 = vpop.f32.mrf.mxu0
          %1636 = vmatprep.mubr.bf16.mxu0 0
          %1637 = vmatmul.mubr.bf16.gmra.mxu0 %v1169
          %v1638 = vpop.f32.mrf.mxu0
          %v1639 = vadd.f32 0.0, %v1638
          %v1640 = vpop.f32.mrf.mxu0
          %v1641 = vpop.f32.mrf.mxu0
          %v1642 = vadd.f32 0.0, %v1641
          %v1643 = vpop.f32.mrf.mxu0
          %1644 = vdwg.mxu0
          %v1645 = vpack.c.bf16 %v1264, %v1261
          %v1646 = vpack.c.bf16 %v1272, %v1269
          %v1647 = vpack.c.bf16 %v1280, %v1277
          %v1648 = vpack.c.bf16 %v1288, %v1285
          %v1649 = vpack.c.bf16 %v1296, %v1293
          %v1650 = vpack.c.bf16 %v1304, %v1301
          %v1651 = vpack.c.bf16 %v1312, %v1309
          %v1652 = vpack.c.bf16 %v1320, %v1317
          %1661 = vrot.lane.b32.xlu0 %v1645, 64
          %v1662 = vpop.permute.xlu0 %1661
          %1663 = vrot.lane.b32.xlu0 %v1646, 64
          %v1664 = vpop.permute.xlu0 %1663
          %1665 = vrot.lane.b32.xlu0 %v1647, 64
          %v1666 = vpop.permute.xlu0 %1665
          %1667 = vrot.lane.b32.xlu0 %v1648, 64
          %v1668 = vpop.permute.xlu0 %1667
          %1669 = vrot.lane.b32.xlu0 %v1649, 64
          %v1670 = vpop.permute.xlu0 %1669
          %1671 = vrot.lane.b32.xlu0 %v1650, 64
          %v1672 = vpop.permute.xlu0 %1671
          %1673 = vrot.lane.b32.xlu0 %v1651, 64
          %v1674 = vpop.permute.xlu0 %1673
          %1675 = vrot.lane.b32.xlu0 %v1652, 64
          %v1676 = vpop.permute.xlu0 %1675
          %v1679 = vpack.i.b16 %v1662, %v1645
          %v1681 = vshrl.u32 %v1645, 16
          %v1682 = vshrl.u32 %v1662, 16
          %v1683 = vpack.i.b16 %v1682, %v1681
          %v1686 = vpack.i.b16 0, 0
          %v1688 = vshrl.u32 0, 16
          %v1689 = vpack.i.b16 %v1688, %v1688
          %v1693 = vpack.i.b16 %v1664, %v1646
          %v1695 = vshrl.u32 %v1646, 16
          %v1696 = vshrl.u32 %v1664, 16
          %v1697 = vpack.i.b16 %v1696, %v1695
          %v1701 = vpack.i.b16 %v1666, %v1647
          %v1703 = vshrl.u32 %v1647, 16
          %v1704 = vshrl.u32 %v1666, 16
          %v1705 = vpack.i.b16 %v1704, %v1703
          %v1709 = vpack.i.b16 %v1668, %v1648
          %v1711 = vshrl.u32 %v1648, 16
          %v1712 = vshrl.u32 %v1668, 16
          %v1713 = vpack.i.b16 %v1712, %v1711
          %v1717 = vpack.i.b16 %v1670, %v1649
          %v1719 = vshrl.u32 %v1649, 16
          %v1720 = vshrl.u32 %v1670, 16
          %v1721 = vpack.i.b16 %v1720, %v1719
          %v1725 = vpack.i.b16 %v1672, %v1650
          %v1727 = vshrl.u32 %v1650, 16
          %v1728 = vshrl.u32 %v1672, 16
          %v1729 = vpack.i.b16 %v1728, %v1727
          %v1733 = vpack.i.b16 %v1674, %v1651
          %v1735 = vshrl.u32 %v1651, 16
          %v1736 = vshrl.u32 %v1674, 16
          %v1737 = vpack.i.b16 %v1736, %v1735
          %v1741 = vpack.i.b16 %v1676, %v1652
          %v1743 = vshrl.u32 %v1652, 16
          %v1744 = vshrl.u32 %v1676, 16
          %v1745 = vpack.i.b16 %v1744, %v1743
          %v1747 = vcombine.high %v1679, %v1686
          %v1749 = vunpack.c.l.s4 1983009808
          %v1750 = vunpack.c.0.s8 %v1749
          %v1751 = vlaneseq
          %v1752 = vshrl.u32 %v1751, 7
          %v1753 = vsub.s32 %v1750, %v1752
          %v1754 = vrot.slane %v1679, %v1753
          %v1756 = vunpack.c.l.s4 1983009808
          %v1757 = vunpack.c.0.s8 %v1756
          %v1758 = vlaneseq
          %v1759 = vshrl.u32 %v1758, 7
          %v1760 = vsub.s32 %v1757, %v1759
          %v1761 = vrot.slane %v1747, %v1760
          %v1762 = vcombine.high %v1754, 0
          %v1764 = vunpack.c.l.s4 1934713408
          %v1765 = vunpack.c.0.s8 %v1764
          %v1766 = vlaneseq
          %v1767 = vshrl.u32 %v1766, 7
          %v1768 = vsub.s32 %v1765, %v1767
          %v1769 = vrot.slane %v1754, %v1768
          %v1771 = vunpack.c.l.s4 1934713408
          %v1772 = vunpack.c.0.s8 %v1771
          %v1773 = vlaneseq
          %v1774 = vshrl.u32 %v1773, 7
          %v1775 = vsub.s32 %v1772, %v1774
          %v1776 = vrot.slane %v1762, %v1775
          %v1777 = vcombine.high %v1761, 0
          %v1779 = vunpack.c.l.s4 1934713408
          %v1780 = vunpack.c.0.s8 %v1779
          %v1781 = vlaneseq
          %v1782 = vshrl.u32 %v1781, 7
          %v1783 = vsub.s32 %v1780, %v1782
          %v1784 = vrot.slane %v1761, %v1783
          %v1786 = vunpack.c.l.s4 1934713408
          %v1787 = vunpack.c.0.s8 %v1786
          %v1788 = vlaneseq
          %v1789 = vshrl.u32 %v1788, 7
          %v1790 = vsub.s32 %v1787, %v1789
          %v1791 = vrot.slane %v1777, %v1790
          %v1792 = vcombine.high %v1769, 0
          %v1793 = vcombine.high %v1776, 0
          %v1794 = vcombine.high %v1784, 0
          %v1795 = vcombine.high %v1791, 0
          %v1796 = vcombine.high %v1683, %v1689
          %v1798 = vunpack.c.l.s4 1983009808
          %v1799 = vunpack.c.0.s8 %v1798
          %v1800 = vlaneseq
          %v1801 = vshrl.u32 %v1800, 7
          %v1802 = vsub.s32 %v1799, %v1801
          %v1803 = vrot.slane %v1683, %v1802
          %v1805 = vunpack.c.l.s4 1983009808
          %v1806 = vunpack.c.0.s8 %v1805
          %v1807 = vlaneseq
          %v1808 = vshrl.u32 %v1807, 7
          %v1809 = vsub.s32 %v1806, %v1808
          %v1810 = vrot.slane %v1796, %v1809
          %v1811 = vcombine.high %v1803, 0
          %v1813 = vunpack.c.l.s4 1934713408
          %v1814 = vunpack.c.0.s8 %v1813
          %v1815 = vlaneseq
          %v1816 = vshrl.u32 %v1815, 7
          %v1817 = vsub.s32 %v1814, %v1816
          %v1818 = vrot.slane %v1803, %v1817
          %v1820 = vunpack.c.l.s4 1934713408
          %v1821 = vunpack.c.0.s8 %v1820
          %v1822 = vlaneseq
          %v1823 = vshrl.u32 %v1822, 7
          %v1824 = vsub.s32 %v1821, %v1823
          %v1825 = vrot.slane %v1811, %v1824
          %v1826 = vcombine.high %v1810, 0
          %v1828 = vunpack.c.l.s4 1934713408
          %v1829 = vunpack.c.0.s8 %v1828
          %v1830 = vlaneseq
          %v1831 = vshrl.u32 %v1830, 7
          %v1832 = vsub.s32 %v1829, %v1831
          %v1833 = vrot.slane %v1810, %v1832
          %v1835 = vunpack.c.l.s4 1934713408
          %v1836 = vunpack.c.0.s8 %v1835
          %v1837 = vlaneseq
          %v1838 = vshrl.u32 %v1837, 7
          %v1839 = vsub.s32 %v1836, %v1838
          %v1840 = vrot.slane %v1826, %v1839
          %v1841 = vcombine.high %v1818, 0
          %v1842 = vcombine.high %v1825, 0
          %v1843 = vcombine.high %v1833, 0
          %v1844 = vcombine.high %v1840, 0
          %v1845 = vcombine.high %v1693, %v1686
          %v1847 = vunpack.c.l.s4 1983009808
          %v1848 = vunpack.c.0.s8 %v1847
          %v1849 = vlaneseq
          %v1850 = vshrl.u32 %v1849, 7
          %v1851 = vsub.s32 %v1848, %v1850
          %v1852 = vrot.slane %v1693, %v1851
          %v1854 = vunpack.c.l.s4 1983009808
          %v1855 = vunpack.c.0.s8 %v1854
          %v1856 = vlaneseq
          %v1857 = vshrl.u32 %v1856, 7
          %v1858 = vsub.s32 %v1855, %v1857
          %v1859 = vrot.slane %v1845, %v1858
          %v1860 = vcombine.high %v1852, 0
          %v1862 = vunpack.c.l.s4 1934713408
          %v1863 = vunpack.c.0.s8 %v1862
          %v1864 = vlaneseq
          %v1865 = vshrl.u32 %v1864, 7
          %v1866 = vsub.s32 %v1863, %v1865
          %v1867 = vrot.slane %v1852, %v1866
          %v1869 = vunpack.c.l.s4 1934713408
          %v1870 = vunpack.c.0.s8 %v1869
          %v1871 = vlaneseq
          %v1872 = vshrl.u32 %v1871, 7
          %v1873 = vsub.s32 %v1870, %v1872
          %v1874 = vrot.slane %v1860, %v1873
          %v1875 = vcombine.high %v1859, 0
          %v1877 = vunpack.c.l.s4 1934713408
          %v1878 = vunpack.c.0.s8 %v1877
          %v1879 = vlaneseq
          %v1880 = vshrl.u32 %v1879, 7
          %v1881 = vsub.s32 %v1878, %v1880
          %v1882 = vrot.slane %v1859, %v1881
          %v1884 = vunpack.c.l.s4 1934713408
          %v1885 = vunpack.c.0.s8 %v1884
          %v1886 = vlaneseq
          %v1887 = vshrl.u32 %v1886, 7
          %v1888 = vsub.s32 %v1885, %v1887
          %v1889 = vrot.slane %v1875, %v1888
          %v1890 = vcombine.high %v1867, 0
          %v1891 = vcombine.high %v1874, 0
          %v1892 = vcombine.high %v1882, 0
          %v1893 = vcombine.high %v1889, 0
          %v1894 = vcombine.high %v1697, %v1689
          %v1896 = vunpack.c.l.s4 1983009808
          %v1897 = vunpack.c.0.s8 %v1896
          %v1898 = vlaneseq
          %v1899 = vshrl.u32 %v1898, 7
          %v1900 = vsub.s32 %v1897, %v1899
          %v1901 = vrot.slane %v1697, %v1900
          %v1903 = vunpack.c.l.s4 1983009808
          %v1904 = vunpack.c.0.s8 %v1903
          %v1905 = vlaneseq
          %v1906 = vshrl.u32 %v1905, 7
          %v1907 = vsub.s32 %v1904, %v1906
          %v1908 = vrot.slane %v1894, %v1907
          %v1909 = vcombine.high %v1901, 0
          %v1911 = vunpack.c.l.s4 1934713408
          %v1912 = vunpack.c.0.s8 %v1911
          %v1913 = vlaneseq
          %v1914 = vshrl.u32 %v1913, 7
          %v1915 = vsub.s32 %v1912, %v1914
          %v1916 = vrot.slane %v1901, %v1915
          %v1918 = vunpack.c.l.s4 1934713408
          %v1919 = vunpack.c.0.s8 %v1918
          %v1920 = vlaneseq
          %v1921 = vshrl.u32 %v1920, 7
          %v1922 = vsub.s32 %v1919, %v1921
          %v1923 = vrot.slane %v1909, %v1922
          %v1924 = vcombine.high %v1908, 0
          %v1926 = vunpack.c.l.s4 1934713408
          %v1927 = vunpack.c.0.s8 %v1926
          %v1928 = vlaneseq
          %v1929 = vshrl.u32 %v1928, 7
          %v1930 = vsub.s32 %v1927, %v1929
          %v1931 = vrot.slane %v1908, %v1930
          %v1933 = vunpack.c.l.s4 1934713408
          %v1934 = vunpack.c.0.s8 %v1933
          %v1935 = vlaneseq
          %v1936 = vshrl.u32 %v1935, 7
          %v1937 = vsub.s32 %v1934, %v1936
          %v1938 = vrot.slane %v1924, %v1937
          %v1939 = vcombine.high %v1916, 0
          %v1940 = vcombine.high %v1923, 0
          %v1941 = vcombine.high %v1931, 0
          %v1942 = vcombine.high %v1938, 0
          %v1943 = vcombine.high %v1701, %v1686
          %v1945 = vunpack.c.l.s4 1983009808
          %v1946 = vunpack.c.0.s8 %v1945
          %v1947 = vlaneseq
          %v1948 = vshrl.u32 %v1947, 7
          %v1949 = vsub.s32 %v1946, %v1948
          %v1950 = vrot.slane %v1701, %v1949
          %v1952 = vunpack.c.l.s4 1983009808
          %v1953 = vunpack.c.0.s8 %v1952
          %v1954 = vlaneseq
          %v1955 = vshrl.u32 %v1954, 7
          %v1956 = vsub.s32 %v1953, %v1955
          %v1957 = vrot.slane %v1943, %v1956
          %v1958 = vcombine.high %v1950, 0
          %v1960 = vunpack.c.l.s4 1934713408
          %v1961 = vunpack.c.0.s8 %v1960
          %v1962 = vlaneseq
          %v1963 = vshrl.u32 %v1962, 7
          %v1964 = vsub.s32 %v1961, %v1963
          %v1965 = vrot.slane %v1950, %v1964
          %v1967 = vunpack.c.l.s4 1934713408
          %v1968 = vunpack.c.0.s8 %v1967
          %v1969 = vlaneseq
          %v1970 = vshrl.u32 %v1969, 7
          %v1971 = vsub.s32 %v1968, %v1970
          %v1972 = vrot.slane %v1958, %v1971
          %v1973 = vcombine.high %v1957, 0
          %v1975 = vunpack.c.l.s4 1934713408
          %v1976 = vunpack.c.0.s8 %v1975
          %v1977 = vlaneseq
          %v1978 = vshrl.u32 %v1977, 7
          %v1979 = vsub.s32 %v1976, %v1978
          %v1980 = vrot.slane %v1957, %v1979
          %v1982 = vunpack.c.l.s4 1934713408
          %v1983 = vunpack.c.0.s8 %v1982
          %v1984 = vlaneseq
          %v1985 = vshrl.u32 %v1984, 7
          %v1986 = vsub.s32 %v1983, %v1985
          %v1987 = vrot.slane %v1973, %v1986
          %v1988 = vcombine.high %v1965, 0
          %v1989 = vcombine.high %v1972, 0
          %v1990 = vcombine.high %v1980, 0
          %v1991 = vcombine.high %v1987, 0
          %v1992 = vcombine.high %v1705, %v1689
          %v1994 = vunpack.c.l.s4 1983009808
          %v1995 = vunpack.c.0.s8 %v1994
          %v1996 = vlaneseq
          %v1997 = vshrl.u32 %v1996, 7
          %v1998 = vsub.s32 %v1995, %v1997
          %v1999 = vrot.slane %v1705, %v1998
          %v2001 = vunpack.c.l.s4 1983009808
          %v2002 = vunpack.c.0.s8 %v2001
          %v2003 = vlaneseq
          %v2004 = vshrl.u32 %v2003, 7
          %v2005 = vsub.s32 %v2002, %v2004
          %v2006 = vrot.slane %v1992, %v2005
          %v2007 = vcombine.high %v1999, 0
          %v2009 = vunpack.c.l.s4 1934713408
          %v2010 = vunpack.c.0.s8 %v2009
          %v2011 = vlaneseq
          %v2012 = vshrl.u32 %v2011, 7
          %v2013 = vsub.s32 %v2010, %v2012
          %v2014 = vrot.slane %v1999, %v2013
          %v2016 = vunpack.c.l.s4 1934713408
          %v2017 = vunpack.c.0.s8 %v2016
          %v2018 = vlaneseq
          %v2019 = vshrl.u32 %v2018, 7
          %v2020 = vsub.s32 %v2017, %v2019
          %v2021 = vrot.slane %v2007, %v2020
          %v2022 = vcombine.high %v2006, 0
          %v2024 = vunpack.c.l.s4 1934713408
          %v2025 = vunpack.c.0.s8 %v2024
          %v2026 = vlaneseq
          %v2027 = vshrl.u32 %v2026, 7
          %v2028 = vsub.s32 %v2025, %v2027
          %v2029 = vrot.slane %v2006, %v2028
          %v2031 = vunpack.c.l.s4 1934713408
          %v2032 = vunpack.c.0.s8 %v2031
          %v2033 = vlaneseq
          %v2034 = vshrl.u32 %v2033, 7
          %v2035 = vsub.s32 %v2032, %v2034
          %v2036 = vrot.slane %v2022, %v2035
          %v2037 = vcombine.high %v2014, 0
          %v2038 = vcombine.high %v2021, 0
          %v2039 = vcombine.high %v2029, 0
          %v2040 = vcombine.high %v2036, 0
          %v2041 = vcombine.high %v1709, %v1686
          %v2043 = vunpack.c.l.s4 1983009808
          %v2044 = vunpack.c.0.s8 %v2043
          %v2045 = vlaneseq
          %v2046 = vshrl.u32 %v2045, 7
          %v2047 = vsub.s32 %v2044, %v2046
          %v2048 = vrot.slane %v1709, %v2047
          %v2050 = vunpack.c.l.s4 1983009808
          %v2051 = vunpack.c.0.s8 %v2050
          %v2052 = vlaneseq
          %v2053 = vshrl.u32 %v2052, 7
          %v2054 = vsub.s32 %v2051, %v2053
          %v2055 = vrot.slane %v2041, %v2054
          %v2056 = vcombine.high %v2048, 0
          %v2058 = vunpack.c.l.s4 1934713408
          %v2059 = vunpack.c.0.s8 %v2058
          %v2060 = vlaneseq
          %v2061 = vshrl.u32 %v2060, 7
          %v2062 = vsub.s32 %v2059, %v2061
          %v2063 = vrot.slane %v2048, %v2062
          %v2065 = vunpack.c.l.s4 1934713408
          %v2066 = vunpack.c.0.s8 %v2065
          %v2067 = vlaneseq
          %v2068 = vshrl.u32 %v2067, 7
          %v2069 = vsub.s32 %v2066, %v2068
          %v2070 = vrot.slane %v2056, %v2069
          %v2071 = vcombine.high %v2055, 0
          %v2073 = vunpack.c.l.s4 1934713408
          %v2074 = vunpack.c.0.s8 %v2073
          %v2075 = vlaneseq
          %v2076 = vshrl.u32 %v2075, 7
          %v2077 = vsub.s32 %v2074, %v2076
          %v2078 = vrot.slane %v2055, %v2077
          %v2080 = vunpack.c.l.s4 1934713408
          %v2081 = vunpack.c.0.s8 %v2080
          %v2082 = vlaneseq
          %v2083 = vshrl.u32 %v2082, 7
          %v2084 = vsub.s32 %v2081, %v2083
          %v2085 = vrot.slane %v2071, %v2084
          %v2086 = vcombine.high %v2063, 0
          %v2087 = vcombine.high %v2070, 0
          %v2088 = vcombine.high %v2078, 0
          %v2089 = vcombine.high %v2085, 0
          %v2090 = vcombine.high %v1713, %v1689
          %v2092 = vunpack.c.l.s4 1983009808
          %v2093 = vunpack.c.0.s8 %v2092
          %v2094 = vlaneseq
          %v2095 = vshrl.u32 %v2094, 7
          %v2096 = vsub.s32 %v2093, %v2095
          %v2097 = vrot.slane %v1713, %v2096
          %v2099 = vunpack.c.l.s4 1983009808
          %v2100 = vunpack.c.0.s8 %v2099
          %v2101 = vlaneseq
          %v2102 = vshrl.u32 %v2101, 7
          %v2103 = vsub.s32 %v2100, %v2102
          %v2104 = vrot.slane %v2090, %v2103
          %v2105 = vcombine.high %v2097, 0
          %v2107 = vunpack.c.l.s4 1934713408
          %v2108 = vunpack.c.0.s8 %v2107
          %v2109 = vlaneseq
          %v2110 = vshrl.u32 %v2109, 7
          %v2111 = vsub.s32 %v2108, %v2110
          %v2112 = vrot.slane %v2097, %v2111
          %v2114 = vunpack.c.l.s4 1934713408
          %v2115 = vunpack.c.0.s8 %v2114
          %v2116 = vlaneseq
          %v2117 = vshrl.u32 %v2116, 7
          %v2118 = vsub.s32 %v2115, %v2117
          %v2119 = vrot.slane %v2105, %v2118
          %v2120 = vcombine.high %v2104, 0
          %v2122 = vunpack.c.l.s4 1934713408
          %v2123 = vunpack.c.0.s8 %v2122
          %v2124 = vlaneseq
          %v2125 = vshrl.u32 %v2124, 7
          %v2126 = vsub.s32 %v2123, %v2125
          %v2127 = vrot.slane %v2104, %v2126
          %v2129 = vunpack.c.l.s4 1934713408
          %v2130 = vunpack.c.0.s8 %v2129
          %v2131 = vlaneseq
          %v2132 = vshrl.u32 %v2131, 7
          %v2133 = vsub.s32 %v2130, %v2132
          %v2134 = vrot.slane %v2120, %v2133
          %v2135 = vcombine.high %v2112, 0
          %v2136 = vcombine.high %v2119, 0
          %v2137 = vcombine.high %v2127, 0
          %v2138 = vcombine.high %v2134, 0
          %v2139 = vcombine.high %v1717, %v1686
          %v2141 = vunpack.c.l.s4 1983009808
          %v2142 = vunpack.c.0.s8 %v2141
          %v2143 = vlaneseq
          %v2144 = vshrl.u32 %v2143, 7
          %v2145 = vsub.s32 %v2142, %v2144
          %v2146 = vrot.slane %v1717, %v2145
          %v2148 = vunpack.c.l.s4 1983009808
          %v2149 = vunpack.c.0.s8 %v2148
          %v2150 = vlaneseq
          %v2151 = vshrl.u32 %v2150, 7
          %v2152 = vsub.s32 %v2149, %v2151
          %v2153 = vrot.slane %v2139, %v2152
          %v2154 = vcombine.high %v2146, 0
          %v2156 = vunpack.c.l.s4 1934713408
          %v2157 = vunpack.c.0.s8 %v2156
          %v2158 = vlaneseq
          %v2159 = vshrl.u32 %v2158, 7
          %v2160 = vsub.s32 %v2157, %v2159
          %v2161 = vrot.slane %v2146, %v2160
          %v2163 = vunpack.c.l.s4 1934713408
          %v2164 = vunpack.c.0.s8 %v2163
          %v2165 = vlaneseq
          %v2166 = vshrl.u32 %v2165, 7
          %v2167 = vsub.s32 %v2164, %v2166
          %v2168 = vrot.slane %v2154, %v2167
          %v2169 = vcombine.high %v2153, 0
          %v2171 = vunpack.c.l.s4 1934713408
          %v2172 = vunpack.c.0.s8 %v2171
          %v2173 = vlaneseq
          %v2174 = vshrl.u32 %v2173, 7
          %v2175 = vsub.s32 %v2172, %v2174
          %v2176 = vrot.slane %v2153, %v2175
          %v2178 = vunpack.c.l.s4 1934713408
          %v2179 = vunpack.c.0.s8 %v2178
          %v2180 = vlaneseq
          %v2181 = vshrl.u32 %v2180, 7
          %v2182 = vsub.s32 %v2179, %v2181
          %v2183 = vrot.slane %v2169, %v2182
          %v2184 = vcombine.high %v2161, 0
          %v2185 = vcombine.high %v2168, 0
          %v2186 = vcombine.high %v2176, 0
          %v2187 = vcombine.high %v2183, 0
          %v2188 = vcombine.high %v1721, %v1689
          %v2190 = vunpack.c.l.s4 1983009808
          %v2191 = vunpack.c.0.s8 %v2190
          %v2192 = vlaneseq
          %v2193 = vshrl.u32 %v2192, 7
          %v2194 = vsub.s32 %v2191, %v2193
          %v2195 = vrot.slane %v1721, %v2194
          %v2197 = vunpack.c.l.s4 1983009808
          %v2198 = vunpack.c.0.s8 %v2197
          %v2199 = vlaneseq
          %v2200 = vshrl.u32 %v2199, 7
          %v2201 = vsub.s32 %v2198, %v2200
          %v2202 = vrot.slane %v2188, %v2201
          %v2203 = vcombine.high %v2195, 0
          %v2205 = vunpack.c.l.s4 1934713408
          %v2206 = vunpack.c.0.s8 %v2205
          %v2207 = vlaneseq
          %v2208 = vshrl.u32 %v2207, 7
          %v2209 = vsub.s32 %v2206, %v2208
          %v2210 = vrot.slane %v2195, %v2209
          %v2212 = vunpack.c.l.s4 1934713408
          %v2213 = vunpack.c.0.s8 %v2212
          %v2214 = vlaneseq
          %v2215 = vshrl.u32 %v2214, 7
          %v2216 = vsub.s32 %v2213, %v2215
          %v2217 = vrot.slane %v2203, %v2216
          %v2218 = vcombine.high %v2202, 0
          %v2220 = vunpack.c.l.s4 1934713408
          %v2221 = vunpack.c.0.s8 %v2220
          %v2222 = vlaneseq
          %v2223 = vshrl.u32 %v2222, 7
          %v2224 = vsub.s32 %v2221, %v2223
          %v2225 = vrot.slane %v2202, %v2224
          %v2227 = vunpack.c.l.s4 1934713408
          %v2228 = vunpack.c.0.s8 %v2227
          %v2229 = vlaneseq
          %v2230 = vshrl.u32 %v2229, 7
          %v2231 = vsub.s32 %v2228, %v2230
          %v2232 = vrot.slane %v2218, %v2231
          %v2233 = vcombine.high %v2210, 0
          %v2234 = vcombine.high %v2217, 0
          %v2235 = vcombine.high %v2225, 0
          %v2236 = vcombine.high %v2232, 0
          %v2237 = vcombine.high %v1725, %v1686
          %v2239 = vunpack.c.l.s4 1983009808
          %v2240 = vunpack.c.0.s8 %v2239
          %v2241 = vlaneseq
          %v2242 = vshrl.u32 %v2241, 7
          %v2243 = vsub.s32 %v2240, %v2242
          %v2244 = vrot.slane %v1725, %v2243
          %v2246 = vunpack.c.l.s4 1983009808
          %v2247 = vunpack.c.0.s8 %v2246
          %v2248 = vlaneseq
          %v2249 = vshrl.u32 %v2248, 7
          %v2250 = vsub.s32 %v2247, %v2249
          %v2251 = vrot.slane %v2237, %v2250
          %v2252 = vcombine.high %v2244, 0
          %v2254 = vunpack.c.l.s4 1934713408
          %v2255 = vunpack.c.0.s8 %v2254
          %v2256 = vlaneseq
          %v2257 = vshrl.u32 %v2256, 7
          %v2258 = vsub.s32 %v2255, %v2257
          %v2259 = vrot.slane %v2244, %v2258
          %v2261 = vunpack.c.l.s4 1934713408
          %v2262 = vunpack.c.0.s8 %v2261
          %v2263 = vlaneseq
          %v2264 = vshrl.u32 %v2263, 7
          %v2265 = vsub.s32 %v2262, %v2264
          %v2266 = vrot.slane %v2252, %v2265
          %v2267 = vcombine.high %v2251, 0
          %v2269 = vunpack.c.l.s4 1934713408
          %v2270 = vunpack.c.0.s8 %v2269
          %v2271 = vlaneseq
          %v2272 = vshrl.u32 %v2271, 7
          %v2273 = vsub.s32 %v2270, %v2272
          %v2274 = vrot.slane %v2251, %v2273
          %v2276 = vunpack.c.l.s4 1934713408
          %v2277 = vunpack.c.0.s8 %v2276
          %v2278 = vlaneseq
          %v2279 = vshrl.u32 %v2278, 7
          %v2280 = vsub.s32 %v2277, %v2279
          %v2281 = vrot.slane %v2267, %v2280
          %v2282 = vcombine.high %v2259, 0
          %v2283 = vcombine.high %v2266, 0
          %v2284 = vcombine.high %v2274, 0
          %v2285 = vcombine.high %v2281, 0
          %v2286 = vcombine.high %v1729, %v1689
          %v2288 = vunpack.c.l.s4 1983009808
          %v2289 = vunpack.c.0.s8 %v2288
          %v2290 = vlaneseq
          %v2291 = vshrl.u32 %v2290, 7
          %v2292 = vsub.s32 %v2289, %v2291
          %v2293 = vrot.slane %v1729, %v2292
          %v2295 = vunpack.c.l.s4 1983009808
          %v2296 = vunpack.c.0.s8 %v2295
          %v2297 = vlaneseq
          %v2298 = vshrl.u32 %v2297, 7
          %v2299 = vsub.s32 %v2296, %v2298
          %v2300 = vrot.slane %v2286, %v2299
          %v2301 = vcombine.high %v2293, 0
          %v2303 = vunpack.c.l.s4 1934713408
          %v2304 = vunpack.c.0.s8 %v2303
          %v2305 = vlaneseq
          %v2306 = vshrl.u32 %v2305, 7
          %v2307 = vsub.s32 %v2304, %v2306
          %v2308 = vrot.slane %v2293, %v2307
          %v2310 = vunpack.c.l.s4 1934713408
          %v2311 = vunpack.c.0.s8 %v2310
          %v2312 = vlaneseq
          %v2313 = vshrl.u32 %v2312, 7
          %v2314 = vsub.s32 %v2311, %v2313
          %v2315 = vrot.slane %v2301, %v2314
          %v2316 = vcombine.high %v2300, 0
          %v2318 = vunpack.c.l.s4 1934713408
          %v2319 = vunpack.c.0.s8 %v2318
          %v2320 = vlaneseq
          %v2321 = vshrl.u32 %v2320, 7
          %v2322 = vsub.s32 %v2319, %v2321
          %v2323 = vrot.slane %v2300, %v2322
          %v2325 = vunpack.c.l.s4 1934713408
          %v2326 = vunpack.c.0.s8 %v2325
          %v2327 = vlaneseq
          %v2328 = vshrl.u32 %v2327, 7
          %v2329 = vsub.s32 %v2326, %v2328
          %v2330 = vrot.slane %v2316, %v2329
          %v2331 = vcombine.high %v2308, 0
          %v2332 = vcombine.high %v2315, 0
          %v2333 = vcombine.high %v2323, 0
          %v2334 = vcombine.high %v2330, 0
          %v2335 = vcombine.high %v1733, %v1686
          %v2337 = vunpack.c.l.s4 1983009808
          %v2338 = vunpack.c.0.s8 %v2337
          %v2339 = vlaneseq
          %v2340 = vshrl.u32 %v2339, 7
          %v2341 = vsub.s32 %v2338, %v2340
          %v2342 = vrot.slane %v1733, %v2341
          %v2344 = vunpack.c.l.s4 1983009808
          %v2345 = vunpack.c.0.s8 %v2344
          %v2346 = vlaneseq
          %v2347 = vshrl.u32 %v2346, 7
          %v2348 = vsub.s32 %v2345, %v2347
          %v2349 = vrot.slane %v2335, %v2348
          %v2350 = vcombine.high %v2342, 0
          %v2352 = vunpack.c.l.s4 1934713408
          %v2353 = vunpack.c.0.s8 %v2352
          %v2354 = vlaneseq
          %v2355 = vshrl.u32 %v2354, 7
          %v2356 = vsub.s32 %v2353, %v2355
          %v2357 = vrot.slane %v2342, %v2356
          %v2359 = vunpack.c.l.s4 1934713408
          %v2360 = vunpack.c.0.s8 %v2359
          %v2361 = vlaneseq
          %v2362 = vshrl.u32 %v2361, 7
          %v2363 = vsub.s32 %v2360, %v2362
          %v2364 = vrot.slane %v2350, %v2363
          %v2365 = vcombine.high %v2349, 0
          %v2367 = vunpack.c.l.s4 1934713408
          %v2368 = vunpack.c.0.s8 %v2367
          %v2369 = vlaneseq
          %v2370 = vshrl.u32 %v2369, 7
          %v2371 = vsub.s32 %v2368, %v2370
          %v2372 = vrot.slane %v2349, %v2371
          %v2374 = vunpack.c.l.s4 1934713408
          %v2375 = vunpack.c.0.s8 %v2374
          %v2376 = vlaneseq
          %v2377 = vshrl.u32 %v2376, 7
          %v2378 = vsub.s32 %v2375, %v2377
          %v2379 = vrot.slane %v2365, %v2378
          %v2380 = vcombine.high %v2357, 0
          %v2381 = vcombine.high %v2364, 0
          %v2382 = vcombine.high %v2372, 0
          %v2383 = vcombine.high %v2379, 0
          %v2384 = vcombine.high %v1737, %v1689
          %v2386 = vunpack.c.l.s4 1983009808
          %v2387 = vunpack.c.0.s8 %v2386
          %v2388 = vlaneseq
          %v2389 = vshrl.u32 %v2388, 7
          %v2390 = vsub.s32 %v2387, %v2389
          %v2391 = vrot.slane %v1737, %v2390
          %v2393 = vunpack.c.l.s4 1983009808
          %v2394 = vunpack.c.0.s8 %v2393
          %v2395 = vlaneseq
          %v2396 = vshrl.u32 %v2395, 7
          %v2397 = vsub.s32 %v2394, %v2396
          %v2398 = vrot.slane %v2384, %v2397
          %v2399 = vcombine.high %v2391, 0
          %v2401 = vunpack.c.l.s4 1934713408
          %v2402 = vunpack.c.0.s8 %v2401
          %v2403 = vlaneseq
          %v2404 = vshrl.u32 %v2403, 7
          %v2405 = vsub.s32 %v2402, %v2404
          %v2406 = vrot.slane %v2391, %v2405
          %v2408 = vunpack.c.l.s4 1934713408
          %v2409 = vunpack.c.0.s8 %v2408
          %v2410 = vlaneseq
          %v2411 = vshrl.u32 %v2410, 7
          %v2412 = vsub.s32 %v2409, %v2411
          %v2413 = vrot.slane %v2399, %v2412
          %v2414 = vcombine.high %v2398, 0
          %v2416 = vunpack.c.l.s4 1934713408
          %v2417 = vunpack.c.0.s8 %v2416
          %v2418 = vlaneseq
          %v2419 = vshrl.u32 %v2418, 7
          %v2420 = vsub.s32 %v2417, %v2419
          %v2421 = vrot.slane %v2398, %v2420
          %v2423 = vunpack.c.l.s4 1934713408
          %v2424 = vunpack.c.0.s8 %v2423
          %v2425 = vlaneseq
          %v2426 = vshrl.u32 %v2425, 7
          %v2427 = vsub.s32 %v2424, %v2426
          %v2428 = vrot.slane %v2414, %v2427
          %v2429 = vcombine.high %v2406, 0
          %v2430 = vcombine.high %v2413, 0
          %v2431 = vcombine.high %v2421, 0
          %v2432 = vcombine.high %v2428, 0
          %v2433 = vcombine.high %v1741, %v1686
          %v2435 = vunpack.c.l.s4 1983009808
          %v2436 = vunpack.c.0.s8 %v2435
          %v2437 = vlaneseq
          %v2438 = vshrl.u32 %v2437, 7
          %v2439 = vsub.s32 %v2436, %v2438
          %v2440 = vrot.slane %v1741, %v2439
          %v2442 = vunpack.c.l.s4 1983009808
          %v2443 = vunpack.c.0.s8 %v2442
          %v2444 = vlaneseq
          %v2445 = vshrl.u32 %v2444, 7
          %v2446 = vsub.s32 %v2443, %v2445
          %v2447 = vrot.slane %v2433, %v2446
          %v2448 = vcombine.high %v2440, 0
          %v2450 = vunpack.c.l.s4 1934713408
          %v2451 = vunpack.c.0.s8 %v2450
          %v2452 = vlaneseq
          %v2453 = vshrl.u32 %v2452, 7
          %v2454 = vsub.s32 %v2451, %v2453
          %v2455 = vrot.slane %v2440, %v2454
          %v2457 = vunpack.c.l.s4 1934713408
          %v2458 = vunpack.c.0.s8 %v2457
          %v2459 = vlaneseq
          %v2460 = vshrl.u32 %v2459, 7
          %v2461 = vsub.s32 %v2458, %v2460
          %v2462 = vrot.slane %v2448, %v2461
          %v2463 = vcombine.high %v2447, 0
          %v2465 = vunpack.c.l.s4 1934713408
          %v2466 = vunpack.c.0.s8 %v2465
          %v2467 = vlaneseq
          %v2468 = vshrl.u32 %v2467, 7
          %v2469 = vsub.s32 %v2466, %v2468
          %v2470 = vrot.slane %v2447, %v2469
          %v2472 = vunpack.c.l.s4 1934713408
          %v2473 = vunpack.c.0.s8 %v2472
          %v2474 = vlaneseq
          %v2475 = vshrl.u32 %v2474, 7
          %v2476 = vsub.s32 %v2473, %v2475
          %v2477 = vrot.slane %v2463, %v2476
          %v2478 = vcombine.high %v2455, 0
          %v2479 = vcombine.high %v2462, 0
          %v2480 = vcombine.high %v2470, 0
          %v2481 = vcombine.high %v2477, 0
          %v2482 = vcombine.high %v1745, %v1689
          %v2484 = vunpack.c.l.s4 1983009808
          %v2485 = vunpack.c.0.s8 %v2484
          %v2486 = vlaneseq
          %v2487 = vshrl.u32 %v2486, 7
          %v2488 = vsub.s32 %v2485, %v2487
          %v2489 = vrot.slane %v1745, %v2488
          %v2491 = vunpack.c.l.s4 1983009808
          %v2492 = vunpack.c.0.s8 %v2491
          %v2493 = vlaneseq
          %v2494 = vshrl.u32 %v2493, 7
          %v2495 = vsub.s32 %v2492, %v2494
          %v2496 = vrot.slane %v2482, %v2495
          %v2497 = vcombine.high %v2489, 0
          %v2499 = vunpack.c.l.s4 1934713408
          %v2500 = vunpack.c.0.s8 %v2499
          %v2501 = vlaneseq
          %v2502 = vshrl.u32 %v2501, 7
          %v2503 = vsub.s32 %v2500, %v2502
          %v2504 = vrot.slane %v2489, %v2503
          %v2506 = vunpack.c.l.s4 1934713408
          %v2507 = vunpack.c.0.s8 %v2506
          %v2508 = vlaneseq
          %v2509 = vshrl.u32 %v2508, 7
          %v2510 = vsub.s32 %v2507, %v2509
          %v2511 = vrot.slane %v2497, %v2510
          %v2512 = vcombine.high %v2496, 0
          %v2514 = vunpack.c.l.s4 1934713408
          %v2515 = vunpack.c.0.s8 %v2514
          %v2516 = vlaneseq
          %v2517 = vshrl.u32 %v2516, 7
          %v2518 = vsub.s32 %v2515, %v2517
          %v2519 = vrot.slane %v2496, %v2518
          %v2521 = vunpack.c.l.s4 1934713408
          %v2522 = vunpack.c.0.s8 %v2521
          %v2523 = vlaneseq
          %v2524 = vshrl.u32 %v2523, 7
          %v2525 = vsub.s32 %v2522, %v2524
          %v2526 = vrot.slane %v2512, %v2525
          %v2527 = vcombine.high %v2504, 0
          %v2528 = vcombine.high %v2511, 0
          %v2529 = vcombine.high %v2519, 0
          %v2530 = vcombine.high %v2526, 0
          %v2531 = vcombine.low %v1769, %v1776
          %v2533 = vunpack.c.l.s4 1983009808
          %v2534 = vunpack.c.0.s8 %v2533
          %v2535 = vlaneseq
          %v2536 = vshrl.u32 %v2535, 7
          %v2537 = vsub.s32 %v2534, %v2536
          %v2538 = vrot.slane %v2531, %v2537
          %v2539 = vcombine.low %v1792, %v1793
          %v2541 = vunpack.c.l.s4 1983009808
          %v2542 = vunpack.c.0.s8 %v2541
          %v2543 = vlaneseq
          %v2544 = vshrl.u32 %v2543, 7
          %v2545 = vsub.s32 %v2542, %v2544
          %v2546 = vrot.slane %v2539, %v2545
          %v2547 = vcombine.low %v1784, %v1791
          %v2549 = vunpack.c.l.s4 1983009808
          %v2550 = vunpack.c.0.s8 %v2549
          %v2551 = vlaneseq
          %v2552 = vshrl.u32 %v2551, 7
          %v2553 = vsub.s32 %v2550, %v2552
          %v2554 = vrot.slane %v2547, %v2553
          %v2555 = vcombine.low %v1794, %v1795
          %v2557 = vunpack.c.l.s4 1983009808
          %v2558 = vunpack.c.0.s8 %v2557
          %v2559 = vlaneseq
          %v2560 = vshrl.u32 %v2559, 7
          %v2561 = vsub.s32 %v2558, %v2560
          %v2562 = vrot.slane %v2555, %v2561
          %v2563 = vcombine.low %v2538, %v2546
          %v2565 = vunpack.c.l.s4 1934713408
          %v2566 = vunpack.c.0.s8 %v2565
          %v2567 = vlaneseq
          %v2568 = vshrl.u32 %v2567, 7
          %v2569 = vsub.s32 %v2566, %v2568
          %v2570 = vrot.slane %v2563, %v2569
          %v2571 = vcombine.low %v2554, %v2562
          %v2573 = vunpack.c.l.s4 1934713408
          %v2574 = vunpack.c.0.s8 %v2573
          %v2575 = vlaneseq
          %v2576 = vshrl.u32 %v2575, 7
          %v2577 = vsub.s32 %v2574, %v2576
          %v2578 = vrot.slane %v2571, %v2577
          %v2579 = vcombine.low %v2570, %v2578
          %v2580 = vcombine.low %v1818, %v1825
          %v2582 = vunpack.c.l.s4 1983009808
          %v2583 = vunpack.c.0.s8 %v2582
          %v2584 = vlaneseq
          %v2585 = vshrl.u32 %v2584, 7
          %v2586 = vsub.s32 %v2583, %v2585
          %v2587 = vrot.slane %v2580, %v2586
          %v2588 = vcombine.low %v1841, %v1842
          %v2590 = vunpack.c.l.s4 1983009808
          %v2591 = vunpack.c.0.s8 %v2590
          %v2592 = vlaneseq
          %v2593 = vshrl.u32 %v2592, 7
          %v2594 = vsub.s32 %v2591, %v2593
          %v2595 = vrot.slane %v2588, %v2594
          %v2596 = vcombine.low %v1833, %v1840
          %v2598 = vunpack.c.l.s4 1983009808
          %v2599 = vunpack.c.0.s8 %v2598
          %v2600 = vlaneseq
          %v2601 = vshrl.u32 %v2600, 7
          %v2602 = vsub.s32 %v2599, %v2601
          %v2603 = vrot.slane %v2596, %v2602
          %v2604 = vcombine.low %v1843, %v1844
          %v2606 = vunpack.c.l.s4 1983009808
          %v2607 = vunpack.c.0.s8 %v2606
          %v2608 = vlaneseq
          %v2609 = vshrl.u32 %v2608, 7
          %v2610 = vsub.s32 %v2607, %v2609
          %v2611 = vrot.slane %v2604, %v2610
          %v2612 = vcombine.low %v2587, %v2595
          %v2614 = vunpack.c.l.s4 1934713408
          %v2615 = vunpack.c.0.s8 %v2614
          %v2616 = vlaneseq
          %v2617 = vshrl.u32 %v2616, 7
          %v2618 = vsub.s32 %v2615, %v2617
          %v2619 = vrot.slane %v2612, %v2618
          %v2620 = vcombine.low %v2603, %v2611
          %v2622 = vunpack.c.l.s4 1934713408
          %v2623 = vunpack.c.0.s8 %v2622
          %v2624 = vlaneseq
          %v2625 = vshrl.u32 %v2624, 7
          %v2626 = vsub.s32 %v2623, %v2625
          %v2627 = vrot.slane %v2620, %v2626
          %v2628 = vcombine.low %v2619, %v2627
          %v2629 = vcombine.low %v1867, %v1874
          %v2631 = vunpack.c.l.s4 1983009808
          %v2632 = vunpack.c.0.s8 %v2631
          %v2633 = vlaneseq
          %v2634 = vshrl.u32 %v2633, 7
          %v2635 = vsub.s32 %v2632, %v2634
          %v2636 = vrot.slane %v2629, %v2635
          %v2637 = vcombine.low %v1890, %v1891
          %v2639 = vunpack.c.l.s4 1983009808
          %v2640 = vunpack.c.0.s8 %v2639
          %v2641 = vlaneseq
          %v2642 = vshrl.u32 %v2641, 7
          %v2643 = vsub.s32 %v2640, %v2642
          %v2644 = vrot.slane %v2637, %v2643
          %v2645 = vcombine.low %v1882, %v1889
          %v2647 = vunpack.c.l.s4 1983009808
          %v2648 = vunpack.c.0.s8 %v2647
          %v2649 = vlaneseq
          %v2650 = vshrl.u32 %v2649, 7
          %v2651 = vsub.s32 %v2648, %v2650
          %v2652 = vrot.slane %v2645, %v2651
          %v2653 = vcombine.low %v1892, %v1893
          %v2655 = vunpack.c.l.s4 1983009808
          %v2656 = vunpack.c.0.s8 %v2655
          %v2657 = vlaneseq
          %v2658 = vshrl.u32 %v2657, 7
          %v2659 = vsub.s32 %v2656, %v2658
          %v2660 = vrot.slane %v2653, %v2659
          %v2661 = vcombine.low %v2636, %v2644
          %v2663 = vunpack.c.l.s4 1934713408
          %v2664 = vunpack.c.0.s8 %v2663
          %v2665 = vlaneseq
          %v2666 = vshrl.u32 %v2665, 7
          %v2667 = vsub.s32 %v2664, %v2666
          %v2668 = vrot.slane %v2661, %v2667
          %v2669 = vcombine.low %v2652, %v2660
          %v2671 = vunpack.c.l.s4 1934713408
          %v2672 = vunpack.c.0.s8 %v2671
          %v2673 = vlaneseq
          %v2674 = vshrl.u32 %v2673, 7
          %v2675 = vsub.s32 %v2672, %v2674
          %v2676 = vrot.slane %v2669, %v2675
          %v2677 = vcombine.low %v2668, %v2676
          %v2678 = vcombine.low %v1916, %v1923
          %v2680 = vunpack.c.l.s4 1983009808
          %v2681 = vunpack.c.0.s8 %v2680
          %v2682 = vlaneseq
          %v2683 = vshrl.u32 %v2682, 7
          %v2684 = vsub.s32 %v2681, %v2683
          %v2685 = vrot.slane %v2678, %v2684
          %v2686 = vcombine.low %v1939, %v1940
          %v2688 = vunpack.c.l.s4 1983009808
          %v2689 = vunpack.c.0.s8 %v2688
          %v2690 = vlaneseq
          %v2691 = vshrl.u32 %v2690, 7
          %v2692 = vsub.s32 %v2689, %v2691
          %v2693 = vrot.slane %v2686, %v2692
          %v2694 = vcombine.low %v1931, %v1938
          %v2696 = vunpack.c.l.s4 1983009808
          %v2697 = vunpack.c.0.s8 %v2696
          %v2698 = vlaneseq
          %v2699 = vshrl.u32 %v2698, 7
          %v2700 = vsub.s32 %v2697, %v2699
          %v2701 = vrot.slane %v2694, %v2700
          %v2702 = vcombine.low %v1941, %v1942
          %v2704 = vunpack.c.l.s4 1983009808
          %v2705 = vunpack.c.0.s8 %v2704
          %v2706 = vlaneseq
          %v2707 = vshrl.u32 %v2706, 7
          %v2708 = vsub.s32 %v2705, %v2707
          %v2709 = vrot.slane %v2702, %v2708
          %v2710 = vcombine.low %v2685, %v2693
          %v2712 = vunpack.c.l.s4 1934713408
          %v2713 = vunpack.c.0.s8 %v2712
          %v2714 = vlaneseq
          %v2715 = vshrl.u32 %v2714, 7
          %v2716 = vsub.s32 %v2713, %v2715
          %v2717 = vrot.slane %v2710, %v2716
          %v2718 = vcombine.low %v2701, %v2709
          %v2720 = vunpack.c.l.s4 1934713408
          %v2721 = vunpack.c.0.s8 %v2720
          %v2722 = vlaneseq
          %v2723 = vshrl.u32 %v2722, 7
          %v2724 = vsub.s32 %v2721, %v2723
          %v2725 = vrot.slane %v2718, %v2724
          %v2726 = vcombine.low %v2717, %v2725
          %v2727 = vcombine.low %v1965, %v1972
          %v2729 = vunpack.c.l.s4 1983009808
          %v2730 = vunpack.c.0.s8 %v2729
          %v2731 = vlaneseq
          %v2732 = vshrl.u32 %v2731, 7
          %v2733 = vsub.s32 %v2730, %v2732
          %v2734 = vrot.slane %v2727, %v2733
          %v2735 = vcombine.low %v1988, %v1989
          %v2737 = vunpack.c.l.s4 1983009808
          %v2738 = vunpack.c.0.s8 %v2737
          %v2739 = vlaneseq
          %v2740 = vshrl.u32 %v2739, 7
          %v2741 = vsub.s32 %v2738, %v2740
          %v2742 = vrot.slane %v2735, %v2741
          %v2743 = vcombine.low %v1980, %v1987
          %v2745 = vunpack.c.l.s4 1983009808
          %v2746 = vunpack.c.0.s8 %v2745
          %v2747 = vlaneseq
          %v2748 = vshrl.u32 %v2747, 7
          %v2749 = vsub.s32 %v2746, %v2748
          %v2750 = vrot.slane %v2743, %v2749
          %v2751 = vcombine.low %v1990, %v1991
          %v2753 = vunpack.c.l.s4 1983009808
          %v2754 = vunpack.c.0.s8 %v2753
          %v2755 = vlaneseq
          %v2756 = vshrl.u32 %v2755, 7
          %v2757 = vsub.s32 %v2754, %v2756
          %v2758 = vrot.slane %v2751, %v2757
          %v2759 = vcombine.low %v2734, %v2742
          %v2761 = vunpack.c.l.s4 1934713408
          %v2762 = vunpack.c.0.s8 %v2761
          %v2763 = vlaneseq
          %v2764 = vshrl.u32 %v2763, 7
          %v2765 = vsub.s32 %v2762, %v2764
          %v2766 = vrot.slane %v2759, %v2765
          %v2767 = vcombine.low %v2750, %v2758
          %v2769 = vunpack.c.l.s4 1934713408
          %v2770 = vunpack.c.0.s8 %v2769
          %v2771 = vlaneseq
          %v2772 = vshrl.u32 %v2771, 7
          %v2773 = vsub.s32 %v2770, %v2772
          %v2774 = vrot.slane %v2767, %v2773
          %v2775 = vcombine.low %v2766, %v2774
          %v2776 = vcombine.low %v2014, %v2021
          %v2778 = vunpack.c.l.s4 1983009808
          %v2779 = vunpack.c.0.s8 %v2778
          %v2780 = vlaneseq
          %v2781 = vshrl.u32 %v2780, 7
          %v2782 = vsub.s32 %v2779, %v2781
          %v2783 = vrot.slane %v2776, %v2782
          %v2784 = vcombine.low %v2037, %v2038
          %v2786 = vunpack.c.l.s4 1983009808
          %v2787 = vunpack.c.0.s8 %v2786
          %v2788 = vlaneseq
          %v2789 = vshrl.u32 %v2788, 7
          %v2790 = vsub.s32 %v2787, %v2789
          %v2791 = vrot.slane %v2784, %v2790
          %v2792 = vcombine.low %v2029, %v2036
          %v2794 = vunpack.c.l.s4 1983009808
          %v2795 = vunpack.c.0.s8 %v2794
          %v2796 = vlaneseq
          %v2797 = vshrl.u32 %v2796, 7
          %v2798 = vsub.s32 %v2795, %v2797
          %v2799 = vrot.slane %v2792, %v2798
          %v2800 = vcombine.low %v2039, %v2040
          %v2802 = vunpack.c.l.s4 1983009808
          %v2803 = vunpack.c.0.s8 %v2802
          %v2804 = vlaneseq
          %v2805 = vshrl.u32 %v2804, 7
          %v2806 = vsub.s32 %v2803, %v2805
          %v2807 = vrot.slane %v2800, %v2806
          %v2808 = vcombine.low %v2783, %v2791
          %v2810 = vunpack.c.l.s4 1934713408
          %v2811 = vunpack.c.0.s8 %v2810
          %v2812 = vlaneseq
          %v2813 = vshrl.u32 %v2812, 7
          %v2814 = vsub.s32 %v2811, %v2813
          %v2815 = vrot.slane %v2808, %v2814
          %v2816 = vcombine.low %v2799, %v2807
          %v2818 = vunpack.c.l.s4 1934713408
          %v2819 = vunpack.c.0.s8 %v2818
          %v2820 = vlaneseq
          %v2821 = vshrl.u32 %v2820, 7
          %v2822 = vsub.s32 %v2819, %v2821
          %v2823 = vrot.slane %v2816, %v2822
          %v2824 = vcombine.low %v2815, %v2823
          %v2825 = vcombine.low %v2063, %v2070
          %v2827 = vunpack.c.l.s4 1983009808
          %v2828 = vunpack.c.0.s8 %v2827
          %v2829 = vlaneseq
          %v2830 = vshrl.u32 %v2829, 7
          %v2831 = vsub.s32 %v2828, %v2830
          %v2832 = vrot.slane %v2825, %v2831
          %v2833 = vcombine.low %v2086, %v2087
          %v2835 = vunpack.c.l.s4 1983009808
          %v2836 = vunpack.c.0.s8 %v2835
          %v2837 = vlaneseq
          %v2838 = vshrl.u32 %v2837, 7
          %v2839 = vsub.s32 %v2836, %v2838
          %v2840 = vrot.slane %v2833, %v2839
          %v2841 = vcombine.low %v2078, %v2085
          %v2843 = vunpack.c.l.s4 1983009808
          %v2844 = vunpack.c.0.s8 %v2843
          %v2845 = vlaneseq
          %v2846 = vshrl.u32 %v2845, 7
          %v2847 = vsub.s32 %v2844, %v2846
          %v2848 = vrot.slane %v2841, %v2847
          %v2849 = vcombine.low %v2088, %v2089
          %v2851 = vunpack.c.l.s4 1983009808
          %v2852 = vunpack.c.0.s8 %v2851
          %v2853 = vlaneseq
          %v2854 = vshrl.u32 %v2853, 7
          %v2855 = vsub.s32 %v2852, %v2854
          %v2856 = vrot.slane %v2849, %v2855
          %v2857 = vcombine.low %v2832, %v2840
          %v2859 = vunpack.c.l.s4 1934713408
          %v2860 = vunpack.c.0.s8 %v2859
          %v2861 = vlaneseq
          %v2862 = vshrl.u32 %v2861, 7
          %v2863 = vsub.s32 %v2860, %v2862
          %v2864 = vrot.slane %v2857, %v2863
          %v2865 = vcombine.low %v2848, %v2856
          %v2867 = vunpack.c.l.s4 1934713408
          %v2868 = vunpack.c.0.s8 %v2867
          %v2869 = vlaneseq
          %v2870 = vshrl.u32 %v2869, 7
          %v2871 = vsub.s32 %v2868, %v2870
          %v2872 = vrot.slane %v2865, %v2871
          %v2873 = vcombine.low %v2864, %v2872
          %v2874 = vcombine.low %v2112, %v2119
          %v2876 = vunpack.c.l.s4 1983009808
          %v2877 = vunpack.c.0.s8 %v2876
          %v2878 = vlaneseq
          %v2879 = vshrl.u32 %v2878, 7
          %v2880 = vsub.s32 %v2877, %v2879
          %v2881 = vrot.slane %v2874, %v2880
          %v2882 = vcombine.low %v2135, %v2136
          %v2884 = vunpack.c.l.s4 1983009808
          %v2885 = vunpack.c.0.s8 %v2884
          %v2886 = vlaneseq
          %v2887 = vshrl.u32 %v2886, 7
          %v2888 = vsub.s32 %v2885, %v2887
          %v2889 = vrot.slane %v2882, %v2888
          %v2890 = vcombine.low %v2127, %v2134
          %v2892 = vunpack.c.l.s4 1983009808
          %v2893 = vunpack.c.0.s8 %v2892
          %v2894 = vlaneseq
          %v2895 = vshrl.u32 %v2894, 7
          %v2896 = vsub.s32 %v2893, %v2895
          %v2897 = vrot.slane %v2890, %v2896
          %v2898 = vcombine.low %v2137, %v2138
          %v2900 = vunpack.c.l.s4 1983009808
          %v2901 = vunpack.c.0.s8 %v2900
          %v2902 = vlaneseq
          %v2903 = vshrl.u32 %v2902, 7
          %v2904 = vsub.s32 %v2901, %v2903
          %v2905 = vrot.slane %v2898, %v2904
          %v2906 = vcombine.low %v2881, %v2889
          %v2908 = vunpack.c.l.s4 1934713408
          %v2909 = vunpack.c.0.s8 %v2908
          %v2910 = vlaneseq
          %v2911 = vshrl.u32 %v2910, 7
          %v2912 = vsub.s32 %v2909, %v2911
          %v2913 = vrot.slane %v2906, %v2912
          %v2914 = vcombine.low %v2897, %v2905
          %v2916 = vunpack.c.l.s4 1934713408
          %v2917 = vunpack.c.0.s8 %v2916
          %v2918 = vlaneseq
          %v2919 = vshrl.u32 %v2918, 7
          %v2920 = vsub.s32 %v2917, %v2919
          %v2921 = vrot.slane %v2914, %v2920
          %v2922 = vcombine.low %v2913, %v2921
          %v2923 = vcombine.low %v2161, %v2168
          %v2925 = vunpack.c.l.s4 1983009808
          %v2926 = vunpack.c.0.s8 %v2925
          %v2927 = vlaneseq
          %v2928 = vshrl.u32 %v2927, 7
          %v2929 = vsub.s32 %v2926, %v2928
          %v2930 = vrot.slane %v2923, %v2929
          %v2931 = vcombine.low %v2184, %v2185
          %v2933 = vunpack.c.l.s4 1983009808
          %v2934 = vunpack.c.0.s8 %v2933
          %v2935 = vlaneseq
          %v2936 = vshrl.u32 %v2935, 7
          %v2937 = vsub.s32 %v2934, %v2936
          %v2938 = vrot.slane %v2931, %v2937
          %v2939 = vcombine.low %v2176, %v2183
          %v2941 = vunpack.c.l.s4 1983009808
          %v2942 = vunpack.c.0.s8 %v2941
          %v2943 = vlaneseq
          %v2944 = vshrl.u32 %v2943, 7
          %v2945 = vsub.s32 %v2942, %v2944
          %v2946 = vrot.slane %v2939, %v2945
          %v2947 = vcombine.low %v2186, %v2187
          %v2949 = vunpack.c.l.s4 1983009808
          %v2950 = vunpack.c.0.s8 %v2949
          %v2951 = vlaneseq
          %v2952 = vshrl.u32 %v2951, 7
          %v2953 = vsub.s32 %v2950, %v2952
          %v2954 = vrot.slane %v2947, %v2953
          %v2955 = vcombine.low %v2930, %v2938
          %v2957 = vunpack.c.l.s4 1934713408
          %v2958 = vunpack.c.0.s8 %v2957
          %v2959 = vlaneseq
          %v2960 = vshrl.u32 %v2959, 7
          %v2961 = vsub.s32 %v2958, %v2960
          %v2962 = vrot.slane %v2955, %v2961
          %v2963 = vcombine.low %v2946, %v2954
          %v2965 = vunpack.c.l.s4 1934713408
          %v2966 = vunpack.c.0.s8 %v2965
          %v2967 = vlaneseq
          %v2968 = vshrl.u32 %v2967, 7
          %v2969 = vsub.s32 %v2966, %v2968
          %v2970 = vrot.slane %v2963, %v2969
          %v2971 = vcombine.low %v2962, %v2970
          %v2972 = vcombine.low %v2210, %v2217
          %v2974 = vunpack.c.l.s4 1983009808
          %v2975 = vunpack.c.0.s8 %v2974
          %v2976 = vlaneseq
          %v2977 = vshrl.u32 %v2976, 7
          %v2978 = vsub.s32 %v2975, %v2977
          %v2979 = vrot.slane %v2972, %v2978
          %v2980 = vcombine.low %v2233, %v2234
          %v2982 = vunpack.c.l.s4 1983009808
          %v2983 = vunpack.c.0.s8 %v2982
          %v2984 = vlaneseq
          %v2985 = vshrl.u32 %v2984, 7
          %v2986 = vsub.s32 %v2983, %v2985
          %v2987 = vrot.slane %v2980, %v2986
          %v2988 = vcombine.low %v2225, %v2232
          %v2990 = vunpack.c.l.s4 1983009808
          %v2991 = vunpack.c.0.s8 %v2990
          %v2992 = vlaneseq
          %v2993 = vshrl.u32 %v2992, 7
          %v2994 = vsub.s32 %v2991, %v2993
          %v2995 = vrot.slane %v2988, %v2994
          %v2996 = vcombine.low %v2235, %v2236
          %v2998 = vunpack.c.l.s4 1983009808
          %v2999 = vunpack.c.0.s8 %v2998
          %v3000 = vlaneseq
          %v3001 = vshrl.u32 %v3000, 7
          %v3002 = vsub.s32 %v2999, %v3001
          %v3003 = vrot.slane %v2996, %v3002
          %v3004 = vcombine.low %v2979, %v2987
          %v3006 = vunpack.c.l.s4 1934713408
          %v3007 = vunpack.c.0.s8 %v3006
          %v3008 = vlaneseq
          %v3009 = vshrl.u32 %v3008, 7
          %v3010 = vsub.s32 %v3007, %v3009
          %v3011 = vrot.slane %v3004, %v3010
          %v3012 = vcombine.low %v2995, %v3003
          %v3014 = vunpack.c.l.s4 1934713408
          %v3015 = vunpack.c.0.s8 %v3014
          %v3016 = vlaneseq
          %v3017 = vshrl.u32 %v3016, 7
          %v3018 = vsub.s32 %v3015, %v3017
          %v3019 = vrot.slane %v3012, %v3018
          %v3020 = vcombine.low %v3011, %v3019
          %v3021 = vcombine.low %v2259, %v2266
          %v3023 = vunpack.c.l.s4 1983009808
          %v3024 = vunpack.c.0.s8 %v3023
          %v3025 = vlaneseq
          %v3026 = vshrl.u32 %v3025, 7
          %v3027 = vsub.s32 %v3024, %v3026
          %v3028 = vrot.slane %v3021, %v3027
          %v3029 = vcombine.low %v2282, %v2283
          %v3031 = vunpack.c.l.s4 1983009808
          %v3032 = vunpack.c.0.s8 %v3031
          %v3033 = vlaneseq
          %v3034 = vshrl.u32 %v3033, 7
          %v3035 = vsub.s32 %v3032, %v3034
          %v3036 = vrot.slane %v3029, %v3035
          %v3037 = vcombine.low %v2274, %v2281
          %v3039 = vunpack.c.l.s4 1983009808
          %v3040 = vunpack.c.0.s8 %v3039
          %v3041 = vlaneseq
          %v3042 = vshrl.u32 %v3041, 7
          %v3043 = vsub.s32 %v3040, %v3042
          %v3044 = vrot.slane %v3037, %v3043
          %v3045 = vcombine.low %v2284, %v2285
          %v3047 = vunpack.c.l.s4 1983009808
          %v3048 = vunpack.c.0.s8 %v3047
          %v3049 = vlaneseq
          %v3050 = vshrl.u32 %v3049, 7
          %v3051 = vsub.s32 %v3048, %v3050
          %v3052 = vrot.slane %v3045, %v3051
          %v3053 = vcombine.low %v3028, %v3036
          %v3055 = vunpack.c.l.s4 1934713408
          %v3056 = vunpack.c.0.s8 %v3055
          %v3057 = vlaneseq
          %v3058 = vshrl.u32 %v3057, 7
          %v3059 = vsub.s32 %v3056, %v3058
          %v3060 = vrot.slane %v3053, %v3059
          %v3061 = vcombine.low %v3044, %v3052
          %v3063 = vunpack.c.l.s4 1934713408
          %v3064 = vunpack.c.0.s8 %v3063
          %v3065 = vlaneseq
          %v3066 = vshrl.u32 %v3065, 7
          %v3067 = vsub.s32 %v3064, %v3066
          %v3068 = vrot.slane %v3061, %v3067
          %v3069 = vcombine.low %v3060, %v3068
          %v3070 = vcombine.low %v2308, %v2315
          %v3072 = vunpack.c.l.s4 1983009808
          %v3073 = vunpack.c.0.s8 %v3072
          %v3074 = vlaneseq
          %v3075 = vshrl.u32 %v3074, 7
          %v3076 = vsub.s32 %v3073, %v3075
          %v3077 = vrot.slane %v3070, %v3076
          %v3078 = vcombine.low %v2331, %v2332
          %v3080 = vunpack.c.l.s4 1983009808
          %v3081 = vunpack.c.0.s8 %v3080
          %v3082 = vlaneseq
          %v3083 = vshrl.u32 %v3082, 7
          %v3084 = vsub.s32 %v3081, %v3083
          %v3085 = vrot.slane %v3078, %v3084
          %v3086 = vcombine.low %v2323, %v2330
          %v3088 = vunpack.c.l.s4 1983009808
          %v3089 = vunpack.c.0.s8 %v3088
          %v3090 = vlaneseq
          %v3091 = vshrl.u32 %v3090, 7
          %v3092 = vsub.s32 %v3089, %v3091
          %v3093 = vrot.slane %v3086, %v3092
          %v3094 = vcombine.low %v2333, %v2334
          %v3096 = vunpack.c.l.s4 1983009808
          %v3097 = vunpack.c.0.s8 %v3096
          %v3098 = vlaneseq
          %v3099 = vshrl.u32 %v3098, 7
          %v3100 = vsub.s32 %v3097, %v3099
          %v3101 = vrot.slane %v3094, %v3100
          %v3102 = vcombine.low %v3077, %v3085
          %v3104 = vunpack.c.l.s4 1934713408
          %v3105 = vunpack.c.0.s8 %v3104
          %v3106 = vlaneseq
          %v3107 = vshrl.u32 %v3106, 7
          %v3108 = vsub.s32 %v3105, %v3107
          %v3109 = vrot.slane %v3102, %v3108
          %v3110 = vcombine.low %v3093, %v3101
          %v3112 = vunpack.c.l.s4 1934713408
          %v3113 = vunpack.c.0.s8 %v3112
          %v3114 = vlaneseq
          %v3115 = vshrl.u32 %v3114, 7
          %v3116 = vsub.s32 %v3113, %v3115
          %v3117 = vrot.slane %v3110, %v3116
          %v3118 = vcombine.low %v3109, %v3117
          %v3119 = vcombine.low %v2357, %v2364
          %v3121 = vunpack.c.l.s4 1983009808
          %v3122 = vunpack.c.0.s8 %v3121
          %v3123 = vlaneseq
          %v3124 = vshrl.u32 %v3123, 7
          %v3125 = vsub.s32 %v3122, %v3124
          %v3126 = vrot.slane %v3119, %v3125
          %v3127 = vcombine.low %v2380, %v2381
          %v3129 = vunpack.c.l.s4 1983009808
          %v3130 = vunpack.c.0.s8 %v3129
          %v3131 = vlaneseq
          %v3132 = vshrl.u32 %v3131, 7
          %v3133 = vsub.s32 %v3130, %v3132
          %v3134 = vrot.slane %v3127, %v3133
          %v3135 = vcombine.low %v2372, %v2379
          %v3137 = vunpack.c.l.s4 1983009808
          %v3138 = vunpack.c.0.s8 %v3137
          %v3139 = vlaneseq
          %v3140 = vshrl.u32 %v3139, 7
          %v3141 = vsub.s32 %v3138, %v3140
          %v3142 = vrot.slane %v3135, %v3141
          %v3143 = vcombine.low %v2382, %v2383
          %v3145 = vunpack.c.l.s4 1983009808
          %v3146 = vunpack.c.0.s8 %v3145
          %v3147 = vlaneseq
          %v3148 = vshrl.u32 %v3147, 7
          %v3149 = vsub.s32 %v3146, %v3148
          %v3150 = vrot.slane %v3143, %v3149
          %v3151 = vcombine.low %v3126, %v3134
          %v3153 = vunpack.c.l.s4 1934713408
          %v3154 = vunpack.c.0.s8 %v3153
          %v3155 = vlaneseq
          %v3156 = vshrl.u32 %v3155, 7
          %v3157 = vsub.s32 %v3154, %v3156
          %v3158 = vrot.slane %v3151, %v3157
          %v3159 = vcombine.low %v3142, %v3150
          %v3161 = vunpack.c.l.s4 1934713408
          %v3162 = vunpack.c.0.s8 %v3161
          %v3163 = vlaneseq
          %v3164 = vshrl.u32 %v3163, 7
          %v3165 = vsub.s32 %v3162, %v3164
          %v3166 = vrot.slane %v3159, %v3165
          %v3167 = vcombine.low %v3158, %v3166
          %v3168 = vcombine.low %v2406, %v2413
          %v3170 = vunpack.c.l.s4 1983009808
          %v3171 = vunpack.c.0.s8 %v3170
          %v3172 = vlaneseq
          %v3173 = vshrl.u32 %v3172, 7
          %v3174 = vsub.s32 %v3171, %v3173
          %v3175 = vrot.slane %v3168, %v3174
          %v3176 = vcombine.low %v2429, %v2430
          %v3178 = vunpack.c.l.s4 1983009808
          %v3179 = vunpack.c.0.s8 %v3178
          %v3180 = vlaneseq
          %v3181 = vshrl.u32 %v3180, 7
          %v3182 = vsub.s32 %v3179, %v3181
          %v3183 = vrot.slane %v3176, %v3182
          %v3184 = vcombine.low %v2421, %v2428
          %v3186 = vunpack.c.l.s4 1983009808
          %v3187 = vunpack.c.0.s8 %v3186
          %v3188 = vlaneseq
          %v3189 = vshrl.u32 %v3188, 7
          %v3190 = vsub.s32 %v3187, %v3189
          %v3191 = vrot.slane %v3184, %v3190
          %v3192 = vcombine.low %v2431, %v2432
          %v3194 = vunpack.c.l.s4 1983009808
          %v3195 = vunpack.c.0.s8 %v3194
          %v3196 = vlaneseq
          %v3197 = vshrl.u32 %v3196, 7
          %v3198 = vsub.s32 %v3195, %v3197
          %v3199 = vrot.slane %v3192, %v3198
          %v3200 = vcombine.low %v3175, %v3183
          %v3202 = vunpack.c.l.s4 1934713408
          %v3203 = vunpack.c.0.s8 %v3202
          %v3204 = vlaneseq
          %v3205 = vshrl.u32 %v3204, 7
          %v3206 = vsub.s32 %v3203, %v3205
          %v3207 = vrot.slane %v3200, %v3206
          %v3208 = vcombine.low %v3191, %v3199
          %v3210 = vunpack.c.l.s4 1934713408
          %v3211 = vunpack.c.0.s8 %v3210
          %v3212 = vlaneseq
          %v3213 = vshrl.u32 %v3212, 7
          %v3214 = vsub.s32 %v3211, %v3213
          %v3215 = vrot.slane %v3208, %v3214
          %v3216 = vcombine.low %v3207, %v3215
          %v3217 = vcombine.low %v2455, %v2462
          %v3219 = vunpack.c.l.s4 1983009808
          %v3220 = vunpack.c.0.s8 %v3219
          %v3221 = vlaneseq
          %v3222 = vshrl.u32 %v3221, 7
          %v3223 = vsub.s32 %v3220, %v3222
          %v3224 = vrot.slane %v3217, %v3223
          %v3225 = vcombine.low %v2478, %v2479
          %v3227 = vunpack.c.l.s4 1983009808
          %v3228 = vunpack.c.0.s8 %v3227
          %v3229 = vlaneseq
          %v3230 = vshrl.u32 %v3229, 7
          %v3231 = vsub.s32 %v3228, %v3230
          %v3232 = vrot.slane %v3225, %v3231
          %v3233 = vcombine.low %v2470, %v2477
          %v3235 = vunpack.c.l.s4 1983009808
          %v3236 = vunpack.c.0.s8 %v3235
          %v3237 = vlaneseq
          %v3238 = vshrl.u32 %v3237, 7
          %v3239 = vsub.s32 %v3236, %v3238
          %v3240 = vrot.slane %v3233, %v3239
          %v3241 = vcombine.low %v2480, %v2481
          %v3243 = vunpack.c.l.s4 1983009808
          %v3244 = vunpack.c.0.s8 %v3243
          %v3245 = vlaneseq
          %v3246 = vshrl.u32 %v3245, 7
          %v3247 = vsub.s32 %v3244, %v3246
          %v3248 = vrot.slane %v3241, %v3247
          %v3249 = vcombine.low %v3224, %v3232
          %v3251 = vunpack.c.l.s4 1934713408
          %v3252 = vunpack.c.0.s8 %v3251
          %v3253 = vlaneseq
          %v3254 = vshrl.u32 %v3253, 7
          %v3255 = vsub.s32 %v3252, %v3254
          %v3256 = vrot.slane %v3249, %v3255
          %v3257 = vcombine.low %v3240, %v3248
          %v3259 = vunpack.c.l.s4 1934713408
          %v3260 = vunpack.c.0.s8 %v3259
          %v3261 = vlaneseq
          %v3262 = vshrl.u32 %v3261, 7
          %v3263 = vsub.s32 %v3260, %v3262
          %v3264 = vrot.slane %v3257, %v3263
          %v3265 = vcombine.low %v3256, %v3264
          %v3266 = vcombine.low %v2504, %v2511
          %v3268 = vunpack.c.l.s4 1983009808
          %v3269 = vunpack.c.0.s8 %v3268
          %v3270 = vlaneseq
          %v3271 = vshrl.u32 %v3270, 7
          %v3272 = vsub.s32 %v3269, %v3271
          %v3273 = vrot.slane %v3266, %v3272
          %v3274 = vcombine.low %v2527, %v2528
          %v3276 = vunpack.c.l.s4 1983009808
          %v3277 = vunpack.c.0.s8 %v3276
          %v3278 = vlaneseq
          %v3279 = vshrl.u32 %v3278, 7
          %v3280 = vsub.s32 %v3277, %v3279
          %v3281 = vrot.slane %v3274, %v3280
          %v3282 = vcombine.low %v2519, %v2526
          %v3284 = vunpack.c.l.s4 1983009808
          %v3285 = vunpack.c.0.s8 %v3284
          %v3286 = vlaneseq
          %v3287 = vshrl.u32 %v3286, 7
          %v3288 = vsub.s32 %v3285, %v3287
          %v3289 = vrot.slane %v3282, %v3288
          %v3290 = vcombine.low %v2529, %v2530
          %v3292 = vunpack.c.l.s4 1983009808
          %v3293 = vunpack.c.0.s8 %v3292
          %v3294 = vlaneseq
          %v3295 = vshrl.u32 %v3294, 7
          %v3296 = vsub.s32 %v3293, %v3295
          %v3297 = vrot.slane %v3290, %v3296
          %v3298 = vcombine.low %v3273, %v3281
          %v3300 = vunpack.c.l.s4 1934713408
          %v3301 = vunpack.c.0.s8 %v3300
          %v3302 = vlaneseq
          %v3303 = vshrl.u32 %v3302, 7
          %v3304 = vsub.s32 %v3301, %v3303
          %v3305 = vrot.slane %v3298, %v3304
          %v3306 = vcombine.low %v3289, %v3297
          %v3308 = vunpack.c.l.s4 1934713408
          %v3309 = vunpack.c.0.s8 %v3308
          %v3310 = vlaneseq
          %v3311 = vshrl.u32 %v3310, 7
          %v3312 = vsub.s32 %v3309, %v3311
          %v3313 = vrot.slane %v3306, %v3312
          %v3314 = vcombine.low %v3305, %v3313
          %v3317 = vpack.i.b16 %v2628, %v2579
          %v3318 = vshrl.u32 %v2579, 16
          %v3319 = vshrl.u32 %v2628, 16
          %v3320 = vpack.i.b16 %v3319, %v3318
          %v3323 = vpack.i.b16 %v2726, %v2677
          %v3324 = vshrl.u32 %v2677, 16
          %v3325 = vshrl.u32 %v2726, 16
          %v3326 = vpack.i.b16 %v3325, %v3324
          %v3329 = vpack.i.b16 %v2824, %v2775
          %v3330 = vshrl.u32 %v2775, 16
          %v3331 = vshrl.u32 %v2824, 16
          %v3332 = vpack.i.b16 %v3331, %v3330
          %v3335 = vpack.i.b16 %v2922, %v2873
          %v3336 = vshrl.u32 %v2873, 16
          %v3337 = vshrl.u32 %v2922, 16
          %v3338 = vpack.i.b16 %v3337, %v3336
          %v3341 = vpack.i.b16 %v3020, %v2971
          %v3342 = vshrl.u32 %v2971, 16
          %v3343 = vshrl.u32 %v3020, 16
          %v3344 = vpack.i.b16 %v3343, %v3342
          %v3347 = vpack.i.b16 %v3118, %v3069
          %v3348 = vshrl.u32 %v3069, 16
          %v3349 = vshrl.u32 %v3118, 16
          %v3350 = vpack.i.b16 %v3349, %v3348
          %v3353 = vpack.i.b16 %v3216, %v3167
          %v3354 = vshrl.u32 %v3167, 16
          %v3355 = vshrl.u32 %v3216, 16
          %v3356 = vpack.i.b16 %v3355, %v3354
          %v3359 = vpack.i.b16 %v3314, %v3265
          %v3360 = vshrl.u32 %v3265, 16
          %v3361 = vshrl.u32 %v3314, 16
          %v3362 = vpack.i.b16 %v3361, %v3360
          %v3363 = vpack.c.bf16 %v1425, %v1422
          %v3364 = vpack.c.bf16 %v1433, %v1430
          %v3365 = vpack.c.bf16 %v1441, %v1438
          %v3366 = vpack.c.bf16 %v1449, %v1446
          %v3367 = vpack.c.bf16 %v1457, %v1454
          %v3368 = vpack.c.bf16 %v1465, %v1462
          %v3369 = vpack.c.bf16 %v1473, %v1470
          %v3370 = vpack.c.bf16 %v1481, %v1478
          %3379 = vrot.lane.b32.xlu0 %v3363, 64
          %v3380 = vpop.permute.xlu0 %3379
          %3381 = vrot.lane.b32.xlu0 %v3364, 64
          %v3382 = vpop.permute.xlu0 %3381
          %3383 = vrot.lane.b32.xlu0 %v3365, 64
          %v3384 = vpop.permute.xlu0 %3383
          %3385 = vrot.lane.b32.xlu0 %v3366, 64
          %v3386 = vpop.permute.xlu0 %3385
          %3387 = vrot.lane.b32.xlu0 %v3367, 64
          %v3388 = vpop.permute.xlu0 %3387
          %3389 = vrot.lane.b32.xlu0 %v3368, 64
          %v3390 = vpop.permute.xlu0 %3389
          %3391 = vrot.lane.b32.xlu0 %v3369, 64
          %v3392 = vpop.permute.xlu0 %3391
          %3393 = vrot.lane.b32.xlu0 %v3370, 64
          %v3394 = vpop.permute.xlu0 %3393
          %v3397 = vpack.i.b16 %v3380, %v3363
          %v3399 = vshrl.u32 %v3363, 16
          %v3400 = vshrl.u32 %v3380, 16
          %v3401 = vpack.i.b16 %v3400, %v3399
          %v3405 = vpack.i.b16 %v3382, %v3364
          %v3407 = vshrl.u32 %v3364, 16
          %v3408 = vshrl.u32 %v3382, 16
          %v3409 = vpack.i.b16 %v3408, %v3407
          %v3413 = vpack.i.b16 %v3384, %v3365
          %v3415 = vshrl.u32 %v3365, 16
          %v3416 = vshrl.u32 %v3384, 16
          %v3417 = vpack.i.b16 %v3416, %v3415
          %v3421 = vpack.i.b16 %v3386, %v3366
          %v3423 = vshrl.u32 %v3366, 16
          %v3424 = vshrl.u32 %v3386, 16
          %v3425 = vpack.i.b16 %v3424, %v3423
          %v3429 = vpack.i.b16 %v3388, %v3367
          %v3431 = vshrl.u32 %v3367, 16
          %v3432 = vshrl.u32 %v3388, 16
          %v3433 = vpack.i.b16 %v3432, %v3431
          %v3437 = vpack.i.b16 %v3390, %v3368
          %v3439 = vshrl.u32 %v3368, 16
          %v3440 = vshrl.u32 %v3390, 16
          %v3441 = vpack.i.b16 %v3440, %v3439
          %v3445 = vpack.i.b16 %v3392, %v3369
          %v3447 = vshrl.u32 %v3369, 16
          %v3448 = vshrl.u32 %v3392, 16
          %v3449 = vpack.i.b16 %v3448, %v3447
          %v3453 = vpack.i.b16 %v3394, %v3370
          %v3455 = vshrl.u32 %v3370, 16
          %v3456 = vshrl.u32 %v3394, 16
          %v3457 = vpack.i.b16 %v3456, %v3455
          %v3459 = vcombine.high %v3397, %v1686
          %v3461 = vunpack.c.l.s4 1983009808
          %v3462 = vunpack.c.0.s8 %v3461
          %v3463 = vlaneseq
          %v3464 = vshrl.u32 %v3463, 7
          %v3465 = vsub.s32 %v3462, %v3464
          %v3466 = vrot.slane %v3397, %v3465
          %v3468 = vunpack.c.l.s4 1983009808
          %v3469 = vunpack.c.0.s8 %v3468
          %v3470 = vlaneseq
          %v3471 = vshrl.u32 %v3470, 7
          %v3472 = vsub.s32 %v3469, %v3471
          %v3473 = vrot.slane %v3459, %v3472
          %v3474 = vcombine.high %v3466, 0
          %v3476 = vunpack.c.l.s4 1934713408
          %v3477 = vunpack.c.0.s8 %v3476
          %v3478 = vlaneseq
          %v3479 = vshrl.u32 %v3478, 7
          %v3480 = vsub.s32 %v3477, %v3479
          %v3481 = vrot.slane %v3466, %v3480
          %v3483 = vunpack.c.l.s4 1934713408
          %v3484 = vunpack.c.0.s8 %v3483
          %v3485 = vlaneseq
          %v3486 = vshrl.u32 %v3485, 7
          %v3487 = vsub.s32 %v3484, %v3486
          %v3488 = vrot.slane %v3474, %v3487
          %v3489 = vcombine.high %v3473, 0
          %v3491 = vunpack.c.l.s4 1934713408
          %v3492 = vunpack.c.0.s8 %v3491
          %v3493 = vlaneseq
          %v3494 = vshrl.u32 %v3493, 7
          %v3495 = vsub.s32 %v3492, %v3494
          %v3496 = vrot.slane %v3473, %v3495
          %v3498 = vunpack.c.l.s4 1934713408
          %v3499 = vunpack.c.0.s8 %v3498
          %v3500 = vlaneseq
          %v3501 = vshrl.u32 %v3500, 7
          %v3502 = vsub.s32 %v3499, %v3501
          %v3503 = vrot.slane %v3489, %v3502
          %v3504 = vcombine.high %v3481, 0
          %v3505 = vcombine.high %v3488, 0
          %v3506 = vcombine.high %v3496, 0
          %v3507 = vcombine.high %v3503, 0
          %v3508 = vcombine.high %v3401, %v1689
          %v3510 = vunpack.c.l.s4 1983009808
          %v3511 = vunpack.c.0.s8 %v3510
          %v3512 = vlaneseq
          %v3513 = vshrl.u32 %v3512, 7
          %v3514 = vsub.s32 %v3511, %v3513
          %v3515 = vrot.slane %v3401, %v3514
          %v3517 = vunpack.c.l.s4 1983009808
          %v3518 = vunpack.c.0.s8 %v3517
          %v3519 = vlaneseq
          %v3520 = vshrl.u32 %v3519, 7
          %v3521 = vsub.s32 %v3518, %v3520
          %v3522 = vrot.slane %v3508, %v3521
          %v3523 = vcombine.high %v3515, 0
          %v3525 = vunpack.c.l.s4 1934713408
          %v3526 = vunpack.c.0.s8 %v3525
          %v3527 = vlaneseq
          %v3528 = vshrl.u32 %v3527, 7
          %v3529 = vsub.s32 %v3526, %v3528
          %v3530 = vrot.slane %v3515, %v3529
          %v3532 = vunpack.c.l.s4 1934713408
          %v3533 = vunpack.c.0.s8 %v3532
          %v3534 = vlaneseq
          %v3535 = vshrl.u32 %v3534, 7
          %v3536 = vsub.s32 %v3533, %v3535
          %v3537 = vrot.slane %v3523, %v3536
          %v3538 = vcombine.high %v3522, 0
          %v3540 = vunpack.c.l.s4 1934713408
          %v3541 = vunpack.c.0.s8 %v3540
          %v3542 = vlaneseq
          %v3543 = vshrl.u32 %v3542, 7
          %v3544 = vsub.s32 %v3541, %v3543
          %v3545 = vrot.slane %v3522, %v3544
          %v3547 = vunpack.c.l.s4 1934713408
          %v3548 = vunpack.c.0.s8 %v3547
          %v3549 = vlaneseq
          %v3550 = vshrl.u32 %v3549, 7
          %v3551 = vsub.s32 %v3548, %v3550
          %v3552 = vrot.slane %v3538, %v3551
          %v3553 = vcombine.high %v3530, 0
          %v3554 = vcombine.high %v3537, 0
          %v3555 = vcombine.high %v3545, 0
          %v3556 = vcombine.high %v3552, 0
          %v3557 = vcombine.high %v3405, %v1686
          %v3559 = vunpack.c.l.s4 1983009808
          %v3560 = vunpack.c.0.s8 %v3559
          %v3561 = vlaneseq
          %v3562 = vshrl.u32 %v3561, 7
          %v3563 = vsub.s32 %v3560, %v3562
          %v3564 = vrot.slane %v3405, %v3563
          %v3566 = vunpack.c.l.s4 1983009808
          %v3567 = vunpack.c.0.s8 %v3566
          %v3568 = vlaneseq
          %v3569 = vshrl.u32 %v3568, 7
          %v3570 = vsub.s32 %v3567, %v3569
          %v3571 = vrot.slane %v3557, %v3570
          %v3572 = vcombine.high %v3564, 0
          %v3574 = vunpack.c.l.s4 1934713408
          %v3575 = vunpack.c.0.s8 %v3574
          %v3576 = vlaneseq
          %v3577 = vshrl.u32 %v3576, 7
          %v3578 = vsub.s32 %v3575, %v3577
          %v3579 = vrot.slane %v3564, %v3578
          %v3581 = vunpack.c.l.s4 1934713408
          %v3582 = vunpack.c.0.s8 %v3581
          %v3583 = vlaneseq
          %v3584 = vshrl.u32 %v3583, 7
          %v3585 = vsub.s32 %v3582, %v3584
          %v3586 = vrot.slane %v3572, %v3585
          %v3587 = vcombine.high %v3571, 0
          %v3589 = vunpack.c.l.s4 1934713408
          %v3590 = vunpack.c.0.s8 %v3589
          %v3591 = vlaneseq
          %v3592 = vshrl.u32 %v3591, 7
          %v3593 = vsub.s32 %v3590, %v3592
          %v3594 = vrot.slane %v3571, %v3593
          %v3596 = vunpack.c.l.s4 1934713408
          %v3597 = vunpack.c.0.s8 %v3596
          %v3598 = vlaneseq
          %v3599 = vshrl.u32 %v3598, 7
          %v3600 = vsub.s32 %v3597, %v3599
          %v3601 = vrot.slane %v3587, %v3600
          %v3602 = vcombine.high %v3579, 0
          %v3603 = vcombine.high %v3586, 0
          %v3604 = vcombine.high %v3594, 0
          %v3605 = vcombine.high %v3601, 0
          %v3606 = vcombine.high %v3409, %v1689
          %v3608 = vunpack.c.l.s4 1983009808
          %v3609 = vunpack.c.0.s8 %v3608
          %v3610 = vlaneseq
          %v3611 = vshrl.u32 %v3610, 7
          %v3612 = vsub.s32 %v3609, %v3611
          %v3613 = vrot.slane %v3409, %v3612
          %v3615 = vunpack.c.l.s4 1983009808
          %v3616 = vunpack.c.0.s8 %v3615
          %v3617 = vlaneseq
          %v3618 = vshrl.u32 %v3617, 7
          %v3619 = vsub.s32 %v3616, %v3618
          %v3620 = vrot.slane %v3606, %v3619
          %v3621 = vcombine.high %v3613, 0
          %v3623 = vunpack.c.l.s4 1934713408
          %v3624 = vunpack.c.0.s8 %v3623
          %v3625 = vlaneseq
          %v3626 = vshrl.u32 %v3625, 7
          %v3627 = vsub.s32 %v3624, %v3626
          %v3628 = vrot.slane %v3613, %v3627
          %v3630 = vunpack.c.l.s4 1934713408
          %v3631 = vunpack.c.0.s8 %v3630
          %v3632 = vlaneseq
          %v3633 = vshrl.u32 %v3632, 7
          %v3634 = vsub.s32 %v3631, %v3633
          %v3635 = vrot.slane %v3621, %v3634
          %v3636 = vcombine.high %v3620, 0
          %v3638 = vunpack.c.l.s4 1934713408
          %v3639 = vunpack.c.0.s8 %v3638
          %v3640 = vlaneseq
          %v3641 = vshrl.u32 %v3640, 7
          %v3642 = vsub.s32 %v3639, %v3641
          %v3643 = vrot.slane %v3620, %v3642
          %v3645 = vunpack.c.l.s4 1934713408
          %v3646 = vunpack.c.0.s8 %v3645
          %v3647 = vlaneseq
          %v3648 = vshrl.u32 %v3647, 7
          %v3649 = vsub.s32 %v3646, %v3648
          %v3650 = vrot.slane %v3636, %v3649
          %v3651 = vcombine.high %v3628, 0
          %v3652 = vcombine.high %v3635, 0
          %v3653 = vcombine.high %v3643, 0
          %v3654 = vcombine.high %v3650, 0
          %v3655 = vcombine.high %v3413, %v1686
          %v3657 = vunpack.c.l.s4 1983009808
          %v3658 = vunpack.c.0.s8 %v3657
          %v3659 = vlaneseq
          %v3660 = vshrl.u32 %v3659, 7
          %v3661 = vsub.s32 %v3658, %v3660
          %v3662 = vrot.slane %v3413, %v3661
          %v3664 = vunpack.c.l.s4 1983009808
          %v3665 = vunpack.c.0.s8 %v3664
          %v3666 = vlaneseq
          %v3667 = vshrl.u32 %v3666, 7
          %v3668 = vsub.s32 %v3665, %v3667
          %v3669 = vrot.slane %v3655, %v3668
          %v3670 = vcombine.high %v3662, 0
          %v3672 = vunpack.c.l.s4 1934713408
          %v3673 = vunpack.c.0.s8 %v3672
          %v3674 = vlaneseq
          %v3675 = vshrl.u32 %v3674, 7
          %v3676 = vsub.s32 %v3673, %v3675
          %v3677 = vrot.slane %v3662, %v3676
          %v3679 = vunpack.c.l.s4 1934713408
          %v3680 = vunpack.c.0.s8 %v3679
          %v3681 = vlaneseq
          %v3682 = vshrl.u32 %v3681, 7
          %v3683 = vsub.s32 %v3680, %v3682
          %v3684 = vrot.slane %v3670, %v3683
          %v3685 = vcombine.high %v3669, 0
          %v3687 = vunpack.c.l.s4 1934713408
          %v3688 = vunpack.c.0.s8 %v3687
          %v3689 = vlaneseq
          %v3690 = vshrl.u32 %v3689, 7
          %v3691 = vsub.s32 %v3688, %v3690
          %v3692 = vrot.slane %v3669, %v3691
          %v3694 = vunpack.c.l.s4 1934713408
          %v3695 = vunpack.c.0.s8 %v3694
          %v3696 = vlaneseq
          %v3697 = vshrl.u32 %v3696, 7
          %v3698 = vsub.s32 %v3695, %v3697
          %v3699 = vrot.slane %v3685, %v3698
          %v3700 = vcombine.high %v3677, 0
          %v3701 = vcombine.high %v3684, 0
          %v3702 = vcombine.high %v3692, 0
          %v3703 = vcombine.high %v3699, 0
          %v3704 = vcombine.high %v3417, %v1689
          %v3706 = vunpack.c.l.s4 1983009808
          %v3707 = vunpack.c.0.s8 %v3706
          %v3708 = vlaneseq
          %v3709 = vshrl.u32 %v3708, 7
          %v3710 = vsub.s32 %v3707, %v3709
          %v3711 = vrot.slane %v3417, %v3710
          %v3713 = vunpack.c.l.s4 1983009808
          %v3714 = vunpack.c.0.s8 %v3713
          %v3715 = vlaneseq
          %v3716 = vshrl.u32 %v3715, 7
          %v3717 = vsub.s32 %v3714, %v3716
          %v3718 = vrot.slane %v3704, %v3717
          %v3719 = vcombine.high %v3711, 0
          %v3721 = vunpack.c.l.s4 1934713408
          %v3722 = vunpack.c.0.s8 %v3721
          %v3723 = vlaneseq
          %v3724 = vshrl.u32 %v3723, 7
          %v3725 = vsub.s32 %v3722, %v3724
          %v3726 = vrot.slane %v3711, %v3725
          %v3728 = vunpack.c.l.s4 1934713408
          %v3729 = vunpack.c.0.s8 %v3728
          %v3730 = vlaneseq
          %v3731 = vshrl.u32 %v3730, 7
          %v3732 = vsub.s32 %v3729, %v3731
          %v3733 = vrot.slane %v3719, %v3732
          %v3734 = vcombine.high %v3718, 0
          %v3736 = vunpack.c.l.s4 1934713408
          %v3737 = vunpack.c.0.s8 %v3736
          %v3738 = vlaneseq
          %v3739 = vshrl.u32 %v3738, 7
          %v3740 = vsub.s32 %v3737, %v3739
          %v3741 = vrot.slane %v3718, %v3740
          %v3743 = vunpack.c.l.s4 1934713408
          %v3744 = vunpack.c.0.s8 %v3743
          %v3745 = vlaneseq
          %v3746 = vshrl.u32 %v3745, 7
          %v3747 = vsub.s32 %v3744, %v3746
          %v3748 = vrot.slane %v3734, %v3747
          %v3749 = vcombine.high %v3726, 0
          %v3750 = vcombine.high %v3733, 0
          %v3751 = vcombine.high %v3741, 0
          %v3752 = vcombine.high %v3748, 0
          %v3753 = vcombine.high %v3421, %v1686
          %v3755 = vunpack.c.l.s4 1983009808
          %v3756 = vunpack.c.0.s8 %v3755
          %v3757 = vlaneseq
          %v3758 = vshrl.u32 %v3757, 7
          %v3759 = vsub.s32 %v3756, %v3758
          %v3760 = vrot.slane %v3421, %v3759
          %v3762 = vunpack.c.l.s4 1983009808
          %v3763 = vunpack.c.0.s8 %v3762
          %v3764 = vlaneseq
          %v3765 = vshrl.u32 %v3764, 7
          %v3766 = vsub.s32 %v3763, %v3765
          %v3767 = vrot.slane %v3753, %v3766
          %v3768 = vcombine.high %v3760, 0
          %v3770 = vunpack.c.l.s4 1934713408
          %v3771 = vunpack.c.0.s8 %v3770
          %v3772 = vlaneseq
          %v3773 = vshrl.u32 %v3772, 7
          %v3774 = vsub.s32 %v3771, %v3773
          %v3775 = vrot.slane %v3760, %v3774
          %v3777 = vunpack.c.l.s4 1934713408
          %v3778 = vunpack.c.0.s8 %v3777
          %v3779 = vlaneseq
          %v3780 = vshrl.u32 %v3779, 7
          %v3781 = vsub.s32 %v3778, %v3780
          %v3782 = vrot.slane %v3768, %v3781
          %v3783 = vcombine.high %v3767, 0
          %v3785 = vunpack.c.l.s4 1934713408
          %v3786 = vunpack.c.0.s8 %v3785
          %v3787 = vlaneseq
          %v3788 = vshrl.u32 %v3787, 7
          %v3789 = vsub.s32 %v3786, %v3788
          %v3790 = vrot.slane %v3767, %v3789
          %v3792 = vunpack.c.l.s4 1934713408
          %v3793 = vunpack.c.0.s8 %v3792
          %v3794 = vlaneseq
          %v3795 = vshrl.u32 %v3794, 7
          %v3796 = vsub.s32 %v3793, %v3795
          %v3797 = vrot.slane %v3783, %v3796
          %v3798 = vcombine.high %v3775, 0
          %v3799 = vcombine.high %v3782, 0
          %v3800 = vcombine.high %v3790, 0
          %v3801 = vcombine.high %v3797, 0
          %v3802 = vcombine.high %v3425, %v1689
          %v3804 = vunpack.c.l.s4 1983009808
          %v3805 = vunpack.c.0.s8 %v3804
          %v3806 = vlaneseq
          %v3807 = vshrl.u32 %v3806, 7
          %v3808 = vsub.s32 %v3805, %v3807
          %v3809 = vrot.slane %v3425, %v3808
          %v3811 = vunpack.c.l.s4 1983009808
          %v3812 = vunpack.c.0.s8 %v3811
          %v3813 = vlaneseq
          %v3814 = vshrl.u32 %v3813, 7
          %v3815 = vsub.s32 %v3812, %v3814
          %v3816 = vrot.slane %v3802, %v3815
          %v3817 = vcombine.high %v3809, 0
          %v3819 = vunpack.c.l.s4 1934713408
          %v3820 = vunpack.c.0.s8 %v3819
          %v3821 = vlaneseq
          %v3822 = vshrl.u32 %v3821, 7
          %v3823 = vsub.s32 %v3820, %v3822
          %v3824 = vrot.slane %v3809, %v3823
          %v3826 = vunpack.c.l.s4 1934713408
          %v3827 = vunpack.c.0.s8 %v3826
          %v3828 = vlaneseq
          %v3829 = vshrl.u32 %v3828, 7
          %v3830 = vsub.s32 %v3827, %v3829
          %v3831 = vrot.slane %v3817, %v3830
          %v3832 = vcombine.high %v3816, 0
          %v3834 = vunpack.c.l.s4 1934713408
          %v3835 = vunpack.c.0.s8 %v3834
          %v3836 = vlaneseq
          %v3837 = vshrl.u32 %v3836, 7
          %v3838 = vsub.s32 %v3835, %v3837
          %v3839 = vrot.slane %v3816, %v3838
          %v3841 = vunpack.c.l.s4 1934713408
          %v3842 = vunpack.c.0.s8 %v3841
          %v3843 = vlaneseq
          %v3844 = vshrl.u32 %v3843, 7
          %v3845 = vsub.s32 %v3842, %v3844
          %v3846 = vrot.slane %v3832, %v3845
          %v3847 = vcombine.high %v3824, 0
          %v3848 = vcombine.high %v3831, 0
          %v3849 = vcombine.high %v3839, 0
          %v3850 = vcombine.high %v3846, 0
          %v3851 = vcombine.high %v3429, %v1686
          %v3853 = vunpack.c.l.s4 1983009808
          %v3854 = vunpack.c.0.s8 %v3853
          %v3855 = vlaneseq
          %v3856 = vshrl.u32 %v3855, 7
          %v3857 = vsub.s32 %v3854, %v3856
          %v3858 = vrot.slane %v3429, %v3857
          %v3860 = vunpack.c.l.s4 1983009808
          %v3861 = vunpack.c.0.s8 %v3860
          %v3862 = vlaneseq
          %v3863 = vshrl.u32 %v3862, 7
          %v3864 = vsub.s32 %v3861, %v3863
          %v3865 = vrot.slane %v3851, %v3864
          %v3866 = vcombine.high %v3858, 0
          %v3868 = vunpack.c.l.s4 1934713408
          %v3869 = vunpack.c.0.s8 %v3868
          %v3870 = vlaneseq
          %v3871 = vshrl.u32 %v3870, 7
          %v3872 = vsub.s32 %v3869, %v3871
          %v3873 = vrot.slane %v3858, %v3872
          %v3875 = vunpack.c.l.s4 1934713408
          %v3876 = vunpack.c.0.s8 %v3875
          %v3877 = vlaneseq
          %v3878 = vshrl.u32 %v3877, 7
          %v3879 = vsub.s32 %v3876, %v3878
          %v3880 = vrot.slane %v3866, %v3879
          %v3881 = vcombine.high %v3865, 0
          %v3883 = vunpack.c.l.s4 1934713408
          %v3884 = vunpack.c.0.s8 %v3883
          %v3885 = vlaneseq
          %v3886 = vshrl.u32 %v3885, 7
          %v3887 = vsub.s32 %v3884, %v3886
          %v3888 = vrot.slane %v3865, %v3887
          %v3890 = vunpack.c.l.s4 1934713408
          %v3891 = vunpack.c.0.s8 %v3890
          %v3892 = vlaneseq
          %v3893 = vshrl.u32 %v3892, 7
          %v3894 = vsub.s32 %v3891, %v3893
          %v3895 = vrot.slane %v3881, %v3894
          %v3896 = vcombine.high %v3873, 0
          %v3897 = vcombine.high %v3880, 0
          %v3898 = vcombine.high %v3888, 0
          %v3899 = vcombine.high %v3895, 0
          %v3900 = vcombine.high %v3433, %v1689
          %v3902 = vunpack.c.l.s4 1983009808
          %v3903 = vunpack.c.0.s8 %v3902
          %v3904 = vlaneseq
          %v3905 = vshrl.u32 %v3904, 7
          %v3906 = vsub.s32 %v3903, %v3905
          %v3907 = vrot.slane %v3433, %v3906
          %v3909 = vunpack.c.l.s4 1983009808
          %v3910 = vunpack.c.0.s8 %v3909
          %v3911 = vlaneseq
          %v3912 = vshrl.u32 %v3911, 7
          %v3913 = vsub.s32 %v3910, %v3912
          %v3914 = vrot.slane %v3900, %v3913
          %v3915 = vcombine.high %v3907, 0
          %v3917 = vunpack.c.l.s4 1934713408
          %v3918 = vunpack.c.0.s8 %v3917
          %v3919 = vlaneseq
          %v3920 = vshrl.u32 %v3919, 7
          %v3921 = vsub.s32 %v3918, %v3920
          %v3922 = vrot.slane %v3907, %v3921
          %v3924 = vunpack.c.l.s4 1934713408
          %v3925 = vunpack.c.0.s8 %v3924
          %v3926 = vlaneseq
          %v3927 = vshrl.u32 %v3926, 7
          %v3928 = vsub.s32 %v3925, %v3927
          %v3929 = vrot.slane %v3915, %v3928
          %v3930 = vcombine.high %v3914, 0
          %v3932 = vunpack.c.l.s4 1934713408
          %v3933 = vunpack.c.0.s8 %v3932
          %v3934 = vlaneseq
          %v3935 = vshrl.u32 %v3934, 7
          %v3936 = vsub.s32 %v3933, %v3935
          %v3937 = vrot.slane %v3914, %v3936
          %v3939 = vunpack.c.l.s4 1934713408
          %v3940 = vunpack.c.0.s8 %v3939
          %v3941 = vlaneseq
          %v3942 = vshrl.u32 %v3941, 7
          %v3943 = vsub.s32 %v3940, %v3942
          %v3944 = vrot.slane %v3930, %v3943
          %v3945 = vcombine.high %v3922, 0
          %v3946 = vcombine.high %v3929, 0
          %v3947 = vcombine.high %v3937, 0
          %v3948 = vcombine.high %v3944, 0
          %v3949 = vcombine.high %v3437, %v1686
          %v3951 = vunpack.c.l.s4 1983009808
          %v3952 = vunpack.c.0.s8 %v3951
          %v3953 = vlaneseq
          %v3954 = vshrl.u32 %v3953, 7
          %v3955 = vsub.s32 %v3952, %v3954
          %v3956 = vrot.slane %v3437, %v3955
          %v3958 = vunpack.c.l.s4 1983009808
          %v3959 = vunpack.c.0.s8 %v3958
          %v3960 = vlaneseq
          %v3961 = vshrl.u32 %v3960, 7
          %v3962 = vsub.s32 %v3959, %v3961
          %v3963 = vrot.slane %v3949, %v3962
          %v3964 = vcombine.high %v3956, 0
          %v3966 = vunpack.c.l.s4 1934713408
          %v3967 = vunpack.c.0.s8 %v3966
          %v3968 = vlaneseq
          %v3969 = vshrl.u32 %v3968, 7
          %v3970 = vsub.s32 %v3967, %v3969
          %v3971 = vrot.slane %v3956, %v3970
          %v3973 = vunpack.c.l.s4 1934713408
          %v3974 = vunpack.c.0.s8 %v3973
          %v3975 = vlaneseq
          %v3976 = vshrl.u32 %v3975, 7
          %v3977 = vsub.s32 %v3974, %v3976
          %v3978 = vrot.slane %v3964, %v3977
          %v3979 = vcombine.high %v3963, 0
          %v3981 = vunpack.c.l.s4 1934713408
          %v3982 = vunpack.c.0.s8 %v3981
          %v3983 = vlaneseq
          %v3984 = vshrl.u32 %v3983, 7
          %v3985 = vsub.s32 %v3982, %v3984
          %v3986 = vrot.slane %v3963, %v3985
          %v3988 = vunpack.c.l.s4 1934713408
          %v3989 = vunpack.c.0.s8 %v3988
          %v3990 = vlaneseq
          %v3991 = vshrl.u32 %v3990, 7
          %v3992 = vsub.s32 %v3989, %v3991
          %v3993 = vrot.slane %v3979, %v3992
          %v3994 = vcombine.high %v3971, 0
          %v3995 = vcombine.high %v3978, 0
          %v3996 = vcombine.high %v3986, 0
          %v3997 = vcombine.high %v3993, 0
          %v3998 = vcombine.high %v3441, %v1689
          %v4000 = vunpack.c.l.s4 1983009808
          %v4001 = vunpack.c.0.s8 %v4000
          %v4002 = vlaneseq
          %v4003 = vshrl.u32 %v4002, 7
          %v4004 = vsub.s32 %v4001, %v4003
          %v4005 = vrot.slane %v3441, %v4004
          %v4007 = vunpack.c.l.s4 1983009808
          %v4008 = vunpack.c.0.s8 %v4007
          %v4009 = vlaneseq
          %v4010 = vshrl.u32 %v4009, 7
          %v4011 = vsub.s32 %v4008, %v4010
          %v4012 = vrot.slane %v3998, %v4011
          %v4013 = vcombine.high %v4005, 0
          %v4015 = vunpack.c.l.s4 1934713408
          %v4016 = vunpack.c.0.s8 %v4015
          %v4017 = vlaneseq
          %v4018 = vshrl.u32 %v4017, 7
          %v4019 = vsub.s32 %v4016, %v4018
          %v4020 = vrot.slane %v4005, %v4019
          %v4022 = vunpack.c.l.s4 1934713408
          %v4023 = vunpack.c.0.s8 %v4022
          %v4024 = vlaneseq
          %v4025 = vshrl.u32 %v4024, 7
          %v4026 = vsub.s32 %v4023, %v4025
          %v4027 = vrot.slane %v4013, %v4026
          %v4028 = vcombine.high %v4012, 0
          %v4030 = vunpack.c.l.s4 1934713408
          %v4031 = vunpack.c.0.s8 %v4030
          %v4032 = vlaneseq
          %v4033 = vshrl.u32 %v4032, 7
          %v4034 = vsub.s32 %v4031, %v4033
          %v4035 = vrot.slane %v4012, %v4034
          %v4037 = vunpack.c.l.s4 1934713408
          %v4038 = vunpack.c.0.s8 %v4037
          %v4039 = vlaneseq
          %v4040 = vshrl.u32 %v4039, 7
          %v4041 = vsub.s32 %v4038, %v4040
          %v4042 = vrot.slane %v4028, %v4041
          %v4043 = vcombine.high %v4020, 0
          %v4044 = vcombine.high %v4027, 0
          %v4045 = vcombine.high %v4035, 0
          %v4046 = vcombine.high %v4042, 0
          %v4047 = vcombine.high %v3445, %v1686
          %v4049 = vunpack.c.l.s4 1983009808
          %v4050 = vunpack.c.0.s8 %v4049
          %v4051 = vlaneseq
          %v4052 = vshrl.u32 %v4051, 7
          %v4053 = vsub.s32 %v4050, %v4052
          %v4054 = vrot.slane %v3445, %v4053
          %v4056 = vunpack.c.l.s4 1983009808
          %v4057 = vunpack.c.0.s8 %v4056
          %v4058 = vlaneseq
          %v4059 = vshrl.u32 %v4058, 7
          %v4060 = vsub.s32 %v4057, %v4059
          %v4061 = vrot.slane %v4047, %v4060
          %v4062 = vcombine.high %v4054, 0
          %v4064 = vunpack.c.l.s4 1934713408
          %v4065 = vunpack.c.0.s8 %v4064
          %v4066 = vlaneseq
          %v4067 = vshrl.u32 %v4066, 7
          %v4068 = vsub.s32 %v4065, %v4067
          %v4069 = vrot.slane %v4054, %v4068
          %v4071 = vunpack.c.l.s4 1934713408
          %v4072 = vunpack.c.0.s8 %v4071
          %v4073 = vlaneseq
          %v4074 = vshrl.u32 %v4073, 7
          %v4075 = vsub.s32 %v4072, %v4074
          %v4076 = vrot.slane %v4062, %v4075
          %v4077 = vcombine.high %v4061, 0
          %v4079 = vunpack.c.l.s4 1934713408
          %v4080 = vunpack.c.0.s8 %v4079
          %v4081 = vlaneseq
          %v4082 = vshrl.u32 %v4081, 7
          %v4083 = vsub.s32 %v4080, %v4082
          %v4084 = vrot.slane %v4061, %v4083
          %v4086 = vunpack.c.l.s4 1934713408
          %v4087 = vunpack.c.0.s8 %v4086
          %v4088 = vlaneseq
          %v4089 = vshrl.u32 %v4088, 7
          %v4090 = vsub.s32 %v4087, %v4089
          %v4091 = vrot.slane %v4077, %v4090
          %v4092 = vcombine.high %v4069, 0
          %v4093 = vcombine.high %v4076, 0
          %v4094 = vcombine.high %v4084, 0
          %v4095 = vcombine.high %v4091, 0
          %v4096 = vcombine.high %v3449, %v1689
          %v4098 = vunpack.c.l.s4 1983009808
          %v4099 = vunpack.c.0.s8 %v4098
          %v4100 = vlaneseq
          %v4101 = vshrl.u32 %v4100, 7
          %v4102 = vsub.s32 %v4099, %v4101
          %v4103 = vrot.slane %v3449, %v4102
          %v4105 = vunpack.c.l.s4 1983009808
          %v4106 = vunpack.c.0.s8 %v4105
          %v4107 = vlaneseq
          %v4108 = vshrl.u32 %v4107, 7
          %v4109 = vsub.s32 %v4106, %v4108
          %v4110 = vrot.slane %v4096, %v4109
          %v4111 = vcombine.high %v4103, 0
          %v4113 = vunpack.c.l.s4 1934713408
          %v4114 = vunpack.c.0.s8 %v4113
          %v4115 = vlaneseq
          %v4116 = vshrl.u32 %v4115, 7
          %v4117 = vsub.s32 %v4114, %v4116
          %v4118 = vrot.slane %v4103, %v4117
          %v4120 = vunpack.c.l.s4 1934713408
          %v4121 = vunpack.c.0.s8 %v4120
          %v4122 = vlaneseq
          %v4123 = vshrl.u32 %v4122, 7
          %v4124 = vsub.s32 %v4121, %v4123
          %v4125 = vrot.slane %v4111, %v4124
          %v4126 = vcombine.high %v4110, 0
          %v4128 = vunpack.c.l.s4 1934713408
          %v4129 = vunpack.c.0.s8 %v4128
          %v4130 = vlaneseq
          %v4131 = vshrl.u32 %v4130, 7
          %v4132 = vsub.s32 %v4129, %v4131
          %v4133 = vrot.slane %v4110, %v4132
          %v4135 = vunpack.c.l.s4 1934713408
          %v4136 = vunpack.c.0.s8 %v4135
          %v4137 = vlaneseq
          %v4138 = vshrl.u32 %v4137, 7
          %v4139 = vsub.s32 %v4136, %v4138
          %v4140 = vrot.slane %v4126, %v4139
          %v4141 = vcombine.high %v4118, 0
          %v4142 = vcombine.high %v4125, 0
          %v4143 = vcombine.high %v4133, 0
          %v4144 = vcombine.high %v4140, 0
          %v4145 = vcombine.high %v3453, %v1686
          %v4147 = vunpack.c.l.s4 1983009808
          %v4148 = vunpack.c.0.s8 %v4147
          %v4149 = vlaneseq
          %v4150 = vshrl.u32 %v4149, 7
          %v4151 = vsub.s32 %v4148, %v4150
          %v4152 = vrot.slane %v3453, %v4151
          %v4154 = vunpack.c.l.s4 1983009808
          %v4155 = vunpack.c.0.s8 %v4154
          %v4156 = vlaneseq
          %v4157 = vshrl.u32 %v4156, 7
          %v4158 = vsub.s32 %v4155, %v4157
          %v4159 = vrot.slane %v4145, %v4158
          %v4160 = vcombine.high %v4152, 0
          %v4162 = vunpack.c.l.s4 1934713408
          %v4163 = vunpack.c.0.s8 %v4162
          %v4164 = vlaneseq
          %v4165 = vshrl.u32 %v4164, 7
          %v4166 = vsub.s32 %v4163, %v4165
          %v4167 = vrot.slane %v4152, %v4166
          %v4169 = vunpack.c.l.s4 1934713408
          %v4170 = vunpack.c.0.s8 %v4169
          %v4171 = vlaneseq
          %v4172 = vshrl.u32 %v4171, 7
          %v4173 = vsub.s32 %v4170, %v4172
          %v4174 = vrot.slane %v4160, %v4173
          %v4175 = vcombine.high %v4159, 0
          %v4177 = vunpack.c.l.s4 1934713408
          %v4178 = vunpack.c.0.s8 %v4177
          %v4179 = vlaneseq
          %v4180 = vshrl.u32 %v4179, 7
          %v4181 = vsub.s32 %v4178, %v4180
          %v4182 = vrot.slane %v4159, %v4181
          %v4184 = vunpack.c.l.s4 1934713408
          %v4185 = vunpack.c.0.s8 %v4184
          %v4186 = vlaneseq
          %v4187 = vshrl.u32 %v4186, 7
          %v4188 = vsub.s32 %v4185, %v4187
          %v4189 = vrot.slane %v4175, %v4188
          %v4190 = vcombine.high %v4167, 0
          %v4191 = vcombine.high %v4174, 0
          %v4192 = vcombine.high %v4182, 0
          %v4193 = vcombine.high %v4189, 0
          %v4194 = vcombine.high %v3457, %v1689
          %v4196 = vunpack.c.l.s4 1983009808
          %v4197 = vunpack.c.0.s8 %v4196
          %v4198 = vlaneseq
          %v4199 = vshrl.u32 %v4198, 7
          %v4200 = vsub.s32 %v4197, %v4199
          %v4201 = vrot.slane %v3457, %v4200
          %v4203 = vunpack.c.l.s4 1983009808
          %v4204 = vunpack.c.0.s8 %v4203
          %v4205 = vlaneseq
          %v4206 = vshrl.u32 %v4205, 7
          %v4207 = vsub.s32 %v4204, %v4206
          %v4208 = vrot.slane %v4194, %v4207
          %v4209 = vcombine.high %v4201, 0
          %v4211 = vunpack.c.l.s4 1934713408
          %v4212 = vunpack.c.0.s8 %v4211
          %v4213 = vlaneseq
          %v4214 = vshrl.u32 %v4213, 7
          %v4215 = vsub.s32 %v4212, %v4214
          %v4216 = vrot.slane %v4201, %v4215
          %v4218 = vunpack.c.l.s4 1934713408
          %v4219 = vunpack.c.0.s8 %v4218
          %v4220 = vlaneseq
          %v4221 = vshrl.u32 %v4220, 7
          %v4222 = vsub.s32 %v4219, %v4221
          %v4223 = vrot.slane %v4209, %v4222
          %v4224 = vcombine.high %v4208, 0
          %v4226 = vunpack.c.l.s4 1934713408
          %v4227 = vunpack.c.0.s8 %v4226
          %v4228 = vlaneseq
          %v4229 = vshrl.u32 %v4228, 7
          %v4230 = vsub.s32 %v4227, %v4229
          %v4231 = vrot.slane %v4208, %v4230
          %v4233 = vunpack.c.l.s4 1934713408
          %v4234 = vunpack.c.0.s8 %v4233
          %v4235 = vlaneseq
          %v4236 = vshrl.u32 %v4235, 7
          %v4237 = vsub.s32 %v4234, %v4236
          %v4238 = vrot.slane %v4224, %v4237
          %v4239 = vcombine.high %v4216, 0
          %v4240 = vcombine.high %v4223, 0
          %v4241 = vcombine.high %v4231, 0
          %v4242 = vcombine.high %v4238, 0
          %v4243 = vcombine.low %v3481, %v3488
          %v4245 = vunpack.c.l.s4 1983009808
          %v4246 = vunpack.c.0.s8 %v4245
          %v4247 = vlaneseq
          %v4248 = vshrl.u32 %v4247, 7
          %v4249 = vsub.s32 %v4246, %v4248
          %v4250 = vrot.slane %v4243, %v4249
          %v4251 = vcombine.low %v3504, %v3505
          %v4253 = vunpack.c.l.s4 1983009808
          %v4254 = vunpack.c.0.s8 %v4253
          %v4255 = vlaneseq
          %v4256 = vshrl.u32 %v4255, 7
          %v4257 = vsub.s32 %v4254, %v4256
          %v4258 = vrot.slane %v4251, %v4257
          %v4259 = vcombine.low %v3496, %v3503
          %v4261 = vunpack.c.l.s4 1983009808
          %v4262 = vunpack.c.0.s8 %v4261
          %v4263 = vlaneseq
          %v4264 = vshrl.u32 %v4263, 7
          %v4265 = vsub.s32 %v4262, %v4264
          %v4266 = vrot.slane %v4259, %v4265
          %v4267 = vcombine.low %v3506, %v3507
          %v4269 = vunpack.c.l.s4 1983009808
          %v4270 = vunpack.c.0.s8 %v4269
          %v4271 = vlaneseq
          %v4272 = vshrl.u32 %v4271, 7
          %v4273 = vsub.s32 %v4270, %v4272
          %v4274 = vrot.slane %v4267, %v4273
          %v4275 = vcombine.low %v4250, %v4258
          %v4277 = vunpack.c.l.s4 1934713408
          %v4278 = vunpack.c.0.s8 %v4277
          %v4279 = vlaneseq
          %v4280 = vshrl.u32 %v4279, 7
          %v4281 = vsub.s32 %v4278, %v4280
          %v4282 = vrot.slane %v4275, %v4281
          %v4283 = vcombine.low %v4266, %v4274
          %v4285 = vunpack.c.l.s4 1934713408
          %v4286 = vunpack.c.0.s8 %v4285
          %v4287 = vlaneseq
          %v4288 = vshrl.u32 %v4287, 7
          %v4289 = vsub.s32 %v4286, %v4288
          %v4290 = vrot.slane %v4283, %v4289
          %v4291 = vcombine.low %v4282, %v4290
          %v4292 = vcombine.low %v3530, %v3537
          %v4294 = vunpack.c.l.s4 1983009808
          %v4295 = vunpack.c.0.s8 %v4294
          %v4296 = vlaneseq
          %v4297 = vshrl.u32 %v4296, 7
          %v4298 = vsub.s32 %v4295, %v4297
          %v4299 = vrot.slane %v4292, %v4298
          %v4300 = vcombine.low %v3553, %v3554
          %v4302 = vunpack.c.l.s4 1983009808
          %v4303 = vunpack.c.0.s8 %v4302
          %v4304 = vlaneseq
          %v4305 = vshrl.u32 %v4304, 7
          %v4306 = vsub.s32 %v4303, %v4305
          %v4307 = vrot.slane %v4300, %v4306
          %v4308 = vcombine.low %v3545, %v3552
          %v4310 = vunpack.c.l.s4 1983009808
          %v4311 = vunpack.c.0.s8 %v4310
          %v4312 = vlaneseq
          %v4313 = vshrl.u32 %v4312, 7
          %v4314 = vsub.s32 %v4311, %v4313
          %v4315 = vrot.slane %v4308, %v4314
          %v4316 = vcombine.low %v3555, %v3556
          %v4318 = vunpack.c.l.s4 1983009808
          %v4319 = vunpack.c.0.s8 %v4318
          %v4320 = vlaneseq
          %v4321 = vshrl.u32 %v4320, 7
          %v4322 = vsub.s32 %v4319, %v4321
          %v4323 = vrot.slane %v4316, %v4322
          %v4324 = vcombine.low %v4299, %v4307
          %v4326 = vunpack.c.l.s4 1934713408
          %v4327 = vunpack.c.0.s8 %v4326
          %v4328 = vlaneseq
          %v4329 = vshrl.u32 %v4328, 7
          %v4330 = vsub.s32 %v4327, %v4329
          %v4331 = vrot.slane %v4324, %v4330
          %v4332 = vcombine.low %v4315, %v4323
          %v4334 = vunpack.c.l.s4 1934713408
          %v4335 = vunpack.c.0.s8 %v4334
          %v4336 = vlaneseq
          %v4337 = vshrl.u32 %v4336, 7
          %v4338 = vsub.s32 %v4335, %v4337
          %v4339 = vrot.slane %v4332, %v4338
          %v4340 = vcombine.low %v4331, %v4339
          %v4341 = vcombine.low %v3579, %v3586
          %v4343 = vunpack.c.l.s4 1983009808
          %v4344 = vunpack.c.0.s8 %v4343
          %v4345 = vlaneseq
          %v4346 = vshrl.u32 %v4345, 7
          %v4347 = vsub.s32 %v4344, %v4346
          %v4348 = vrot.slane %v4341, %v4347
          %v4349 = vcombine.low %v3602, %v3603
          %v4351 = vunpack.c.l.s4 1983009808
          %v4352 = vunpack.c.0.s8 %v4351
          %v4353 = vlaneseq
          %v4354 = vshrl.u32 %v4353, 7
          %v4355 = vsub.s32 %v4352, %v4354
          %v4356 = vrot.slane %v4349, %v4355
          %v4357 = vcombine.low %v3594, %v3601
          %v4359 = vunpack.c.l.s4 1983009808
          %v4360 = vunpack.c.0.s8 %v4359
          %v4361 = vlaneseq
          %v4362 = vshrl.u32 %v4361, 7
          %v4363 = vsub.s32 %v4360, %v4362
          %v4364 = vrot.slane %v4357, %v4363
          %v4365 = vcombine.low %v3604, %v3605
          %v4367 = vunpack.c.l.s4 1983009808
          %v4368 = vunpack.c.0.s8 %v4367
          %v4369 = vlaneseq
          %v4370 = vshrl.u32 %v4369, 7
          %v4371 = vsub.s32 %v4368, %v4370
          %v4372 = vrot.slane %v4365, %v4371
          %v4373 = vcombine.low %v4348, %v4356
          %v4375 = vunpack.c.l.s4 1934713408
          %v4376 = vunpack.c.0.s8 %v4375
          %v4377 = vlaneseq
          %v4378 = vshrl.u32 %v4377, 7
          %v4379 = vsub.s32 %v4376, %v4378
          %v4380 = vrot.slane %v4373, %v4379
          %v4381 = vcombine.low %v4364, %v4372
          %v4383 = vunpack.c.l.s4 1934713408
          %v4384 = vunpack.c.0.s8 %v4383
          %v4385 = vlaneseq
          %v4386 = vshrl.u32 %v4385, 7
          %v4387 = vsub.s32 %v4384, %v4386
          %v4388 = vrot.slane %v4381, %v4387
          %v4389 = vcombine.low %v4380, %v4388
          %v4390 = vcombine.low %v3628, %v3635
          %v4392 = vunpack.c.l.s4 1983009808
          %v4393 = vunpack.c.0.s8 %v4392
          %v4394 = vlaneseq
          %v4395 = vshrl.u32 %v4394, 7
          %v4396 = vsub.s32 %v4393, %v4395
          %v4397 = vrot.slane %v4390, %v4396
          %v4398 = vcombine.low %v3651, %v3652
          %v4400 = vunpack.c.l.s4 1983009808
          %v4401 = vunpack.c.0.s8 %v4400
          %v4402 = vlaneseq
          %v4403 = vshrl.u32 %v4402, 7
          %v4404 = vsub.s32 %v4401, %v4403
          %v4405 = vrot.slane %v4398, %v4404
          %v4406 = vcombine.low %v3643, %v3650
          %v4408 = vunpack.c.l.s4 1983009808
          %v4409 = vunpack.c.0.s8 %v4408
          %v4410 = vlaneseq
          %v4411 = vshrl.u32 %v4410, 7
          %v4412 = vsub.s32 %v4409, %v4411
          %v4413 = vrot.slane %v4406, %v4412
          %v4414 = vcombine.low %v3653, %v3654
          %v4416 = vunpack.c.l.s4 1983009808
          %v4417 = vunpack.c.0.s8 %v4416
          %v4418 = vlaneseq
          %v4419 = vshrl.u32 %v4418, 7
          %v4420 = vsub.s32 %v4417, %v4419
          %v4421 = vrot.slane %v4414, %v4420
          %v4422 = vcombine.low %v4397, %v4405
          %v4424 = vunpack.c.l.s4 1934713408
          %v4425 = vunpack.c.0.s8 %v4424
          %v4426 = vlaneseq
          %v4427 = vshrl.u32 %v4426, 7
          %v4428 = vsub.s32 %v4425, %v4427
          %v4429 = vrot.slane %v4422, %v4428
          %v4430 = vcombine.low %v4413, %v4421
          %v4432 = vunpack.c.l.s4 1934713408
          %v4433 = vunpack.c.0.s8 %v4432
          %v4434 = vlaneseq
          %v4435 = vshrl.u32 %v4434, 7
          %v4436 = vsub.s32 %v4433, %v4435
          %v4437 = vrot.slane %v4430, %v4436
          %v4438 = vcombine.low %v4429, %v4437
          %v4439 = vcombine.low %v3677, %v3684
          %v4441 = vunpack.c.l.s4 1983009808
          %v4442 = vunpack.c.0.s8 %v4441
          %v4443 = vlaneseq
          %v4444 = vshrl.u32 %v4443, 7
          %v4445 = vsub.s32 %v4442, %v4444
          %v4446 = vrot.slane %v4439, %v4445
          %v4447 = vcombine.low %v3700, %v3701
          %v4449 = vunpack.c.l.s4 1983009808
          %v4450 = vunpack.c.0.s8 %v4449
          %v4451 = vlaneseq
          %v4452 = vshrl.u32 %v4451, 7
          %v4453 = vsub.s32 %v4450, %v4452
          %v4454 = vrot.slane %v4447, %v4453
          %v4455 = vcombine.low %v3692, %v3699
          %v4457 = vunpack.c.l.s4 1983009808
          %v4458 = vunpack.c.0.s8 %v4457
          %v4459 = vlaneseq
          %v4460 = vshrl.u32 %v4459, 7
          %v4461 = vsub.s32 %v4458, %v4460
          %v4462 = vrot.slane %v4455, %v4461
          %v4463 = vcombine.low %v3702, %v3703
          %v4465 = vunpack.c.l.s4 1983009808
          %v4466 = vunpack.c.0.s8 %v4465
          %v4467 = vlaneseq
          %v4468 = vshrl.u32 %v4467, 7
          %v4469 = vsub.s32 %v4466, %v4468
          %v4470 = vrot.slane %v4463, %v4469
          %v4471 = vcombine.low %v4446, %v4454
          %v4473 = vunpack.c.l.s4 1934713408
          %v4474 = vunpack.c.0.s8 %v4473
          %v4475 = vlaneseq
          %v4476 = vshrl.u32 %v4475, 7
          %v4477 = vsub.s32 %v4474, %v4476
          %v4478 = vrot.slane %v4471, %v4477
          %v4479 = vcombine.low %v4462, %v4470
          %v4481 = vunpack.c.l.s4 1934713408
          %v4482 = vunpack.c.0.s8 %v4481
          %v4483 = vlaneseq
          %v4484 = vshrl.u32 %v4483, 7
          %v4485 = vsub.s32 %v4482, %v4484
          %v4486 = vrot.slane %v4479, %v4485
          %v4487 = vcombine.low %v4478, %v4486
          %v4488 = vcombine.low %v3726, %v3733
          %v4490 = vunpack.c.l.s4 1983009808
          %v4491 = vunpack.c.0.s8 %v4490
          %v4492 = vlaneseq
          %v4493 = vshrl.u32 %v4492, 7
          %v4494 = vsub.s32 %v4491, %v4493
          %v4495 = vrot.slane %v4488, %v4494
          %v4496 = vcombine.low %v3749, %v3750
          %v4498 = vunpack.c.l.s4 1983009808
          %v4499 = vunpack.c.0.s8 %v4498
          %v4500 = vlaneseq
          %v4501 = vshrl.u32 %v4500, 7
          %v4502 = vsub.s32 %v4499, %v4501
          %v4503 = vrot.slane %v4496, %v4502
          %v4504 = vcombine.low %v3741, %v3748
          %v4506 = vunpack.c.l.s4 1983009808
          %v4507 = vunpack.c.0.s8 %v4506
          %v4508 = vlaneseq
          %v4509 = vshrl.u32 %v4508, 7
          %v4510 = vsub.s32 %v4507, %v4509
          %v4511 = vrot.slane %v4504, %v4510
          %v4512 = vcombine.low %v3751, %v3752
          %v4514 = vunpack.c.l.s4 1983009808
          %v4515 = vunpack.c.0.s8 %v4514
          %v4516 = vlaneseq
          %v4517 = vshrl.u32 %v4516, 7
          %v4518 = vsub.s32 %v4515, %v4517
          %v4519 = vrot.slane %v4512, %v4518
          %v4520 = vcombine.low %v4495, %v4503
          %v4522 = vunpack.c.l.s4 1934713408
          %v4523 = vunpack.c.0.s8 %v4522
          %v4524 = vlaneseq
          %v4525 = vshrl.u32 %v4524, 7
          %v4526 = vsub.s32 %v4523, %v4525
          %v4527 = vrot.slane %v4520, %v4526
          %v4528 = vcombine.low %v4511, %v4519
          %v4530 = vunpack.c.l.s4 1934713408
          %v4531 = vunpack.c.0.s8 %v4530
          %v4532 = vlaneseq
          %v4533 = vshrl.u32 %v4532, 7
          %v4534 = vsub.s32 %v4531, %v4533
          %v4535 = vrot.slane %v4528, %v4534
          %v4536 = vcombine.low %v4527, %v4535
          %v4537 = vcombine.low %v3775, %v3782
          %v4539 = vunpack.c.l.s4 1983009808
          %v4540 = vunpack.c.0.s8 %v4539
          %v4541 = vlaneseq
          %v4542 = vshrl.u32 %v4541, 7
          %v4543 = vsub.s32 %v4540, %v4542
          %v4544 = vrot.slane %v4537, %v4543
          %v4545 = vcombine.low %v3798, %v3799
          %v4547 = vunpack.c.l.s4 1983009808
          %v4548 = vunpack.c.0.s8 %v4547
          %v4549 = vlaneseq
          %v4550 = vshrl.u32 %v4549, 7
          %v4551 = vsub.s32 %v4548, %v4550
          %v4552 = vrot.slane %v4545, %v4551
          %v4553 = vcombine.low %v3790, %v3797
          %v4555 = vunpack.c.l.s4 1983009808
          %v4556 = vunpack.c.0.s8 %v4555
          %v4557 = vlaneseq
          %v4558 = vshrl.u32 %v4557, 7
          %v4559 = vsub.s32 %v4556, %v4558
          %v4560 = vrot.slane %v4553, %v4559
          %v4561 = vcombine.low %v3800, %v3801
          %v4563 = vunpack.c.l.s4 1983009808
          %v4564 = vunpack.c.0.s8 %v4563
          %v4565 = vlaneseq
          %v4566 = vshrl.u32 %v4565, 7
          %v4567 = vsub.s32 %v4564, %v4566
          %v4568 = vrot.slane %v4561, %v4567
          %v4569 = vcombine.low %v4544, %v4552
          %v4571 = vunpack.c.l.s4 1934713408
          %v4572 = vunpack.c.0.s8 %v4571
          %v4573 = vlaneseq
          %v4574 = vshrl.u32 %v4573, 7
          %v4575 = vsub.s32 %v4572, %v4574
          %v4576 = vrot.slane %v4569, %v4575
          %v4577 = vcombine.low %v4560, %v4568
          %v4579 = vunpack.c.l.s4 1934713408
          %v4580 = vunpack.c.0.s8 %v4579
          %v4581 = vlaneseq
          %v4582 = vshrl.u32 %v4581, 7
          %v4583 = vsub.s32 %v4580, %v4582
          %v4584 = vrot.slane %v4577, %v4583
          %v4585 = vcombine.low %v4576, %v4584
          %v4586 = vcombine.low %v3824, %v3831
          %v4588 = vunpack.c.l.s4 1983009808
          %v4589 = vunpack.c.0.s8 %v4588
          %v4590 = vlaneseq
          %v4591 = vshrl.u32 %v4590, 7
          %v4592 = vsub.s32 %v4589, %v4591
          %v4593 = vrot.slane %v4586, %v4592
          %v4594 = vcombine.low %v3847, %v3848
          %v4596 = vunpack.c.l.s4 1983009808
          %v4597 = vunpack.c.0.s8 %v4596
          %v4598 = vlaneseq
          %v4599 = vshrl.u32 %v4598, 7
          %v4600 = vsub.s32 %v4597, %v4599
          %v4601 = vrot.slane %v4594, %v4600
          %v4602 = vcombine.low %v3839, %v3846
          %v4604 = vunpack.c.l.s4 1983009808
          %v4605 = vunpack.c.0.s8 %v4604
          %v4606 = vlaneseq
          %v4607 = vshrl.u32 %v4606, 7
          %v4608 = vsub.s32 %v4605, %v4607
          %v4609 = vrot.slane %v4602, %v4608
          %v4610 = vcombine.low %v3849, %v3850
          %v4612 = vunpack.c.l.s4 1983009808
          %v4613 = vunpack.c.0.s8 %v4612
          %v4614 = vlaneseq
          %v4615 = vshrl.u32 %v4614, 7
          %v4616 = vsub.s32 %v4613, %v4615
          %v4617 = vrot.slane %v4610, %v4616
          %v4618 = vcombine.low %v4593, %v4601
          %v4620 = vunpack.c.l.s4 1934713408
          %v4621 = vunpack.c.0.s8 %v4620
          %v4622 = vlaneseq
          %v4623 = vshrl.u32 %v4622, 7
          %v4624 = vsub.s32 %v4621, %v4623
          %v4625 = vrot.slane %v4618, %v4624
          %v4626 = vcombine.low %v4609, %v4617
          %v4628 = vunpack.c.l.s4 1934713408
          %v4629 = vunpack.c.0.s8 %v4628
          %v4630 = vlaneseq
          %v4631 = vshrl.u32 %v4630, 7
          %v4632 = vsub.s32 %v4629, %v4631
          %v4633 = vrot.slane %v4626, %v4632
          %v4634 = vcombine.low %v4625, %v4633
          %v4635 = vcombine.low %v3873, %v3880
          %v4637 = vunpack.c.l.s4 1983009808
          %v4638 = vunpack.c.0.s8 %v4637
          %v4639 = vlaneseq
          %v4640 = vshrl.u32 %v4639, 7
          %v4641 = vsub.s32 %v4638, %v4640
          %v4642 = vrot.slane %v4635, %v4641
          %v4643 = vcombine.low %v3896, %v3897
          %v4645 = vunpack.c.l.s4 1983009808
          %v4646 = vunpack.c.0.s8 %v4645
          %v4647 = vlaneseq
          %v4648 = vshrl.u32 %v4647, 7
          %v4649 = vsub.s32 %v4646, %v4648
          %v4650 = vrot.slane %v4643, %v4649
          %v4651 = vcombine.low %v3888, %v3895
          %v4653 = vunpack.c.l.s4 1983009808
          %v4654 = vunpack.c.0.s8 %v4653
          %v4655 = vlaneseq
          %v4656 = vshrl.u32 %v4655, 7
          %v4657 = vsub.s32 %v4654, %v4656
          %v4658 = vrot.slane %v4651, %v4657
          %v4659 = vcombine.low %v3898, %v3899
          %v4661 = vunpack.c.l.s4 1983009808
          %v4662 = vunpack.c.0.s8 %v4661
          %v4663 = vlaneseq
          %v4664 = vshrl.u32 %v4663, 7
          %v4665 = vsub.s32 %v4662, %v4664
          %v4666 = vrot.slane %v4659, %v4665
          %v4667 = vcombine.low %v4642, %v4650
          %v4669 = vunpack.c.l.s4 1934713408
          %v4670 = vunpack.c.0.s8 %v4669
          %v4671 = vlaneseq
          %v4672 = vshrl.u32 %v4671, 7
          %v4673 = vsub.s32 %v4670, %v4672
          %v4674 = vrot.slane %v4667, %v4673
          %v4675 = vcombine.low %v4658, %v4666
          %v4677 = vunpack.c.l.s4 1934713408
          %v4678 = vunpack.c.0.s8 %v4677
          %v4679 = vlaneseq
          %v4680 = vshrl.u32 %v4679, 7
          %v4681 = vsub.s32 %v4678, %v4680
          %v4682 = vrot.slane %v4675, %v4681
          %v4683 = vcombine.low %v4674, %v4682
          %v4684 = vcombine.low %v3922, %v3929
          %v4686 = vunpack.c.l.s4 1983009808
          %v4687 = vunpack.c.0.s8 %v4686
          %v4688 = vlaneseq
          %v4689 = vshrl.u32 %v4688, 7
          %v4690 = vsub.s32 %v4687, %v4689
          %v4691 = vrot.slane %v4684, %v4690
          %v4692 = vcombine.low %v3945, %v3946
          %v4694 = vunpack.c.l.s4 1983009808
          %v4695 = vunpack.c.0.s8 %v4694
          %v4696 = vlaneseq
          %v4697 = vshrl.u32 %v4696, 7
          %v4698 = vsub.s32 %v4695, %v4697
          %v4699 = vrot.slane %v4692, %v4698
          %v4700 = vcombine.low %v3937, %v3944
          %v4702 = vunpack.c.l.s4 1983009808
          %v4703 = vunpack.c.0.s8 %v4702
          %v4704 = vlaneseq
          %v4705 = vshrl.u32 %v4704, 7
          %v4706 = vsub.s32 %v4703, %v4705
          %v4707 = vrot.slane %v4700, %v4706
          %v4708 = vcombine.low %v3947, %v3948
          %v4710 = vunpack.c.l.s4 1983009808
          %v4711 = vunpack.c.0.s8 %v4710
          %v4712 = vlaneseq
          %v4713 = vshrl.u32 %v4712, 7
          %v4714 = vsub.s32 %v4711, %v4713
          %v4715 = vrot.slane %v4708, %v4714
          %v4716 = vcombine.low %v4691, %v4699
          %v4718 = vunpack.c.l.s4 1934713408
          %v4719 = vunpack.c.0.s8 %v4718
          %v4720 = vlaneseq
          %v4721 = vshrl.u32 %v4720, 7
          %v4722 = vsub.s32 %v4719, %v4721
          %v4723 = vrot.slane %v4716, %v4722
          %v4724 = vcombine.low %v4707, %v4715
          %v4726 = vunpack.c.l.s4 1934713408
          %v4727 = vunpack.c.0.s8 %v4726
          %v4728 = vlaneseq
          %v4729 = vshrl.u32 %v4728, 7
          %v4730 = vsub.s32 %v4727, %v4729
          %v4731 = vrot.slane %v4724, %v4730
          %v4732 = vcombine.low %v4723, %v4731
          %v4733 = vcombine.low %v3971, %v3978
          %v4735 = vunpack.c.l.s4 1983009808
          %v4736 = vunpack.c.0.s8 %v4735
          %v4737 = vlaneseq
          %v4738 = vshrl.u32 %v4737, 7
          %v4739 = vsub.s32 %v4736, %v4738
          %v4740 = vrot.slane %v4733, %v4739
          %v4741 = vcombine.low %v3994, %v3995
          %v4743 = vunpack.c.l.s4 1983009808
          %v4744 = vunpack.c.0.s8 %v4743
          %v4745 = vlaneseq
          %v4746 = vshrl.u32 %v4745, 7
          %v4747 = vsub.s32 %v4744, %v4746
          %v4748 = vrot.slane %v4741, %v4747
          %v4749 = vcombine.low %v3986, %v3993
          %v4751 = vunpack.c.l.s4 1983009808
          %v4752 = vunpack.c.0.s8 %v4751
          %v4753 = vlaneseq
          %v4754 = vshrl.u32 %v4753, 7
          %v4755 = vsub.s32 %v4752, %v4754
          %v4756 = vrot.slane %v4749, %v4755
          %v4757 = vcombine.low %v3996, %v3997
          %v4759 = vunpack.c.l.s4 1983009808
          %v4760 = vunpack.c.0.s8 %v4759
          %v4761 = vlaneseq
          %v4762 = vshrl.u32 %v4761, 7
          %v4763 = vsub.s32 %v4760, %v4762
          %v4764 = vrot.slane %v4757, %v4763
          %v4765 = vcombine.low %v4740, %v4748
          %v4767 = vunpack.c.l.s4 1934713408
          %v4768 = vunpack.c.0.s8 %v4767
          %v4769 = vlaneseq
          %v4770 = vshrl.u32 %v4769, 7
          %v4771 = vsub.s32 %v4768, %v4770
          %v4772 = vrot.slane %v4765, %v4771
          %v4773 = vcombine.low %v4756, %v4764
          %v4775 = vunpack.c.l.s4 1934713408
          %v4776 = vunpack.c.0.s8 %v4775
          %v4777 = vlaneseq
          %v4778 = vshrl.u32 %v4777, 7
          %v4779 = vsub.s32 %v4776, %v4778
          %v4780 = vrot.slane %v4773, %v4779
          %v4781 = vcombine.low %v4772, %v4780
          %v4782 = vcombine.low %v4020, %v4027
          %v4784 = vunpack.c.l.s4 1983009808
          %v4785 = vunpack.c.0.s8 %v4784
          %v4786 = vlaneseq
          %v4787 = vshrl.u32 %v4786, 7
          %v4788 = vsub.s32 %v4785, %v4787
          %v4789 = vrot.slane %v4782, %v4788
          %v4790 = vcombine.low %v4043, %v4044
          %v4792 = vunpack.c.l.s4 1983009808
          %v4793 = vunpack.c.0.s8 %v4792
          %v4794 = vlaneseq
          %v4795 = vshrl.u32 %v4794, 7
          %v4796 = vsub.s32 %v4793, %v4795
          %v4797 = vrot.slane %v4790, %v4796
          %v4798 = vcombine.low %v4035, %v4042
          %v4800 = vunpack.c.l.s4 1983009808
          %v4801 = vunpack.c.0.s8 %v4800
          %v4802 = vlaneseq
          %v4803 = vshrl.u32 %v4802, 7
          %v4804 = vsub.s32 %v4801, %v4803
          %v4805 = vrot.slane %v4798, %v4804
          %v4806 = vcombine.low %v4045, %v4046
          %v4808 = vunpack.c.l.s4 1983009808
          %v4809 = vunpack.c.0.s8 %v4808
          %v4810 = vlaneseq
          %v4811 = vshrl.u32 %v4810, 7
          %v4812 = vsub.s32 %v4809, %v4811
          %v4813 = vrot.slane %v4806, %v4812
          %v4814 = vcombine.low %v4789, %v4797
          %v4816 = vunpack.c.l.s4 1934713408
          %v4817 = vunpack.c.0.s8 %v4816
          %v4818 = vlaneseq
          %v4819 = vshrl.u32 %v4818, 7
          %v4820 = vsub.s32 %v4817, %v4819
          %v4821 = vrot.slane %v4814, %v4820
          %v4822 = vcombine.low %v4805, %v4813
          %v4824 = vunpack.c.l.s4 1934713408
          %v4825 = vunpack.c.0.s8 %v4824
          %v4826 = vlaneseq
          %v4827 = vshrl.u32 %v4826, 7
          %v4828 = vsub.s32 %v4825, %v4827
          %v4829 = vrot.slane %v4822, %v4828
          %v4830 = vcombine.low %v4821, %v4829
          %v4831 = vcombine.low %v4069, %v4076
          %v4833 = vunpack.c.l.s4 1983009808
          %v4834 = vunpack.c.0.s8 %v4833
          %v4835 = vlaneseq
          %v4836 = vshrl.u32 %v4835, 7
          %v4837 = vsub.s32 %v4834, %v4836
          %v4838 = vrot.slane %v4831, %v4837
          %v4839 = vcombine.low %v4092, %v4093
          %v4841 = vunpack.c.l.s4 1983009808
          %v4842 = vunpack.c.0.s8 %v4841
          %v4843 = vlaneseq
          %v4844 = vshrl.u32 %v4843, 7
          %v4845 = vsub.s32 %v4842, %v4844
          %v4846 = vrot.slane %v4839, %v4845
          %v4847 = vcombine.low %v4084, %v4091
          %v4849 = vunpack.c.l.s4 1983009808
          %v4850 = vunpack.c.0.s8 %v4849
          %v4851 = vlaneseq
          %v4852 = vshrl.u32 %v4851, 7
          %v4853 = vsub.s32 %v4850, %v4852
          %v4854 = vrot.slane %v4847, %v4853
          %v4855 = vcombine.low %v4094, %v4095
          %v4857 = vunpack.c.l.s4 1983009808
          %v4858 = vunpack.c.0.s8 %v4857
          %v4859 = vlaneseq
          %v4860 = vshrl.u32 %v4859, 7
          %v4861 = vsub.s32 %v4858, %v4860
          %v4862 = vrot.slane %v4855, %v4861
          %v4863 = vcombine.low %v4838, %v4846
          %v4865 = vunpack.c.l.s4 1934713408
          %v4866 = vunpack.c.0.s8 %v4865
          %v4867 = vlaneseq
          %v4868 = vshrl.u32 %v4867, 7
          %v4869 = vsub.s32 %v4866, %v4868
          %v4870 = vrot.slane %v4863, %v4869
          %v4871 = vcombine.low %v4854, %v4862
          %v4873 = vunpack.c.l.s4 1934713408
          %v4874 = vunpack.c.0.s8 %v4873
          %v4875 = vlaneseq
          %v4876 = vshrl.u32 %v4875, 7
          %v4877 = vsub.s32 %v4874, %v4876
          %v4878 = vrot.slane %v4871, %v4877
          %v4879 = vcombine.low %v4870, %v4878
          %v4880 = vcombine.low %v4118, %v4125
          %v4882 = vunpack.c.l.s4 1983009808
          %v4883 = vunpack.c.0.s8 %v4882
          %v4884 = vlaneseq
          %v4885 = vshrl.u32 %v4884, 7
          %v4886 = vsub.s32 %v4883, %v4885
          %v4887 = vrot.slane %v4880, %v4886
          %v4888 = vcombine.low %v4141, %v4142
          %v4890 = vunpack.c.l.s4 1983009808
          %v4891 = vunpack.c.0.s8 %v4890
          %v4892 = vlaneseq
          %v4893 = vshrl.u32 %v4892, 7
          %v4894 = vsub.s32 %v4891, %v4893
          %v4895 = vrot.slane %v4888, %v4894
          %v4896 = vcombine.low %v4133, %v4140
          %v4898 = vunpack.c.l.s4 1983009808
          %v4899 = vunpack.c.0.s8 %v4898
          %v4900 = vlaneseq
          %v4901 = vshrl.u32 %v4900, 7
          %v4902 = vsub.s32 %v4899, %v4901
          %v4903 = vrot.slane %v4896, %v4902
          %v4904 = vcombine.low %v4143, %v4144
          %v4906 = vunpack.c.l.s4 1983009808
          %v4907 = vunpack.c.0.s8 %v4906
          %v4908 = vlaneseq
          %v4909 = vshrl.u32 %v4908, 7
          %v4910 = vsub.s32 %v4907, %v4909
          %v4911 = vrot.slane %v4904, %v4910
          %v4912 = vcombine.low %v4887, %v4895
          %v4914 = vunpack.c.l.s4 1934713408
          %v4915 = vunpack.c.0.s8 %v4914
          %v4916 = vlaneseq
          %v4917 = vshrl.u32 %v4916, 7
          %v4918 = vsub.s32 %v4915, %v4917
          %v4919 = vrot.slane %v4912, %v4918
          %v4920 = vcombine.low %v4903, %v4911
          %v4922 = vunpack.c.l.s4 1934713408
          %v4923 = vunpack.c.0.s8 %v4922
          %v4924 = vlaneseq
          %v4925 = vshrl.u32 %v4924, 7
          %v4926 = vsub.s32 %v4923, %v4925
          %v4927 = vrot.slane %v4920, %v4926
          %v4928 = vcombine.low %v4919, %v4927
          %v4929 = vcombine.low %v4167, %v4174
          %v4931 = vunpack.c.l.s4 1983009808
          %v4932 = vunpack.c.0.s8 %v4931
          %v4933 = vlaneseq
          %v4934 = vshrl.u32 %v4933, 7
          %v4935 = vsub.s32 %v4932, %v4934
          %v4936 = vrot.slane %v4929, %v4935
          %v4937 = vcombine.low %v4190, %v4191
          %v4939 = vunpack.c.l.s4 1983009808
          %v4940 = vunpack.c.0.s8 %v4939
          %v4941 = vlaneseq
          %v4942 = vshrl.u32 %v4941, 7
          %v4943 = vsub.s32 %v4940, %v4942
          %v4944 = vrot.slane %v4937, %v4943
          %v4945 = vcombine.low %v4182, %v4189
          %v4947 = vunpack.c.l.s4 1983009808
          %v4948 = vunpack.c.0.s8 %v4947
          %v4949 = vlaneseq
          %v4950 = vshrl.u32 %v4949, 7
          %v4951 = vsub.s32 %v4948, %v4950
          %v4952 = vrot.slane %v4945, %v4951
          %v4953 = vcombine.low %v4192, %v4193
          %v4955 = vunpack.c.l.s4 1983009808
          %v4956 = vunpack.c.0.s8 %v4955
          %v4957 = vlaneseq
          %v4958 = vshrl.u32 %v4957, 7
          %v4959 = vsub.s32 %v4956, %v4958
          %v4960 = vrot.slane %v4953, %v4959
          %v4961 = vcombine.low %v4936, %v4944
          %v4963 = vunpack.c.l.s4 1934713408
          %v4964 = vunpack.c.0.s8 %v4963
          %v4965 = vlaneseq
          %v4966 = vshrl.u32 %v4965, 7
          %v4967 = vsub.s32 %v4964, %v4966
          %v4968 = vrot.slane %v4961, %v4967
          %v4969 = vcombine.low %v4952, %v4960
          %v4971 = vunpack.c.l.s4 1934713408
          %v4972 = vunpack.c.0.s8 %v4971
          %v4973 = vlaneseq
          %v4974 = vshrl.u32 %v4973, 7
          %v4975 = vsub.s32 %v4972, %v4974
          %v4976 = vrot.slane %v4969, %v4975
          %v4977 = vcombine.low %v4968, %v4976
          %v4978 = vcombine.low %v4216, %v4223
          %v4980 = vunpack.c.l.s4 1983009808
          %v4981 = vunpack.c.0.s8 %v4980
          %v4982 = vlaneseq
          %v4983 = vshrl.u32 %v4982, 7
          %v4984 = vsub.s32 %v4981, %v4983
          %v4985 = vrot.slane %v4978, %v4984
          %v4986 = vcombine.low %v4239, %v4240
          %v4988 = vunpack.c.l.s4 1983009808
          %v4989 = vunpack.c.0.s8 %v4988
          %v4990 = vlaneseq
          %v4991 = vshrl.u32 %v4990, 7
          %v4992 = vsub.s32 %v4989, %v4991
          %v4993 = vrot.slane %v4986, %v4992
          %v4994 = vcombine.low %v4231, %v4238
          %v4996 = vunpack.c.l.s4 1983009808
          %v4997 = vunpack.c.0.s8 %v4996
          %v4998 = vlaneseq
          %v4999 = vshrl.u32 %v4998, 7
          %v5000 = vsub.s32 %v4997, %v4999
          %v5001 = vrot.slane %v4994, %v5000
          %v5002 = vcombine.low %v4241, %v4242
          %v5004 = vunpack.c.l.s4 1983009808
          %v5005 = vunpack.c.0.s8 %v5004
          %v5006 = vlaneseq
          %v5007 = vshrl.u32 %v5006, 7
          %v5008 = vsub.s32 %v5005, %v5007
          %v5009 = vrot.slane %v5002, %v5008
          %v5010 = vcombine.low %v4985, %v4993
          %v5012 = vunpack.c.l.s4 1934713408
          %v5013 = vunpack.c.0.s8 %v5012
          %v5014 = vlaneseq
          %v5015 = vshrl.u32 %v5014, 7
          %v5016 = vsub.s32 %v5013, %v5015
          %v5017 = vrot.slane %v5010, %v5016
          %v5018 = vcombine.low %v5001, %v5009
          %v5020 = vunpack.c.l.s4 1934713408
          %v5021 = vunpack.c.0.s8 %v5020
          %v5022 = vlaneseq
          %v5023 = vshrl.u32 %v5022, 7
          %v5024 = vsub.s32 %v5021, %v5023
          %v5025 = vrot.slane %v5018, %v5024
          %v5026 = vcombine.low %v5017, %v5025
          %v5029 = vpack.i.b16 %v4340, %v4291
          %v5030 = vshrl.u32 %v4291, 16
          %v5031 = vshrl.u32 %v4340, 16
          %v5032 = vpack.i.b16 %v5031, %v5030
          %v5035 = vpack.i.b16 %v4438, %v4389
          %v5036 = vshrl.u32 %v4389, 16
          %v5037 = vshrl.u32 %v4438, 16
          %v5038 = vpack.i.b16 %v5037, %v5036
          %v5041 = vpack.i.b16 %v4536, %v4487
          %v5042 = vshrl.u32 %v4487, 16
          %v5043 = vshrl.u32 %v4536, 16
          %v5044 = vpack.i.b16 %v5043, %v5042
          %v5047 = vpack.i.b16 %v4634, %v4585
          %v5048 = vshrl.u32 %v4585, 16
          %v5049 = vshrl.u32 %v4634, 16
          %v5050 = vpack.i.b16 %v5049, %v5048
          %v5053 = vpack.i.b16 %v4732, %v4683
          %v5054 = vshrl.u32 %v4683, 16
          %v5055 = vshrl.u32 %v4732, 16
          %v5056 = vpack.i.b16 %v5055, %v5054
          %v5059 = vpack.i.b16 %v4830, %v4781
          %v5060 = vshrl.u32 %v4781, 16
          %v5061 = vshrl.u32 %v4830, 16
          %v5062 = vpack.i.b16 %v5061, %v5060
          %v5065 = vpack.i.b16 %v4928, %v4879
          %v5066 = vshrl.u32 %v4879, 16
          %v5067 = vshrl.u32 %v4928, 16
          %v5068 = vpack.i.b16 %v5067, %v5066
          %v5071 = vpack.i.b16 %v5026, %v4977
          %v5072 = vshrl.u32 %v4977, 16
          %v5073 = vshrl.u32 %v5026, 16
          %v5074 = vpack.i.b16 %v5073, %v5072
          %v5075 = vpack.c.bf16 %v1586, %v1583
          %v5076 = vpack.c.bf16 %v1594, %v1591
          %v5077 = vpack.c.bf16 %v1602, %v1599
          %v5078 = vpack.c.bf16 %v1610, %v1607
          %v5079 = vpack.c.bf16 %v1618, %v1615
          %v5080 = vpack.c.bf16 %v1626, %v1623
          %v5081 = vpack.c.bf16 %v1634, %v1631
          %v5082 = vpack.c.bf16 %v1642, %v1639
          %5091 = vrot.lane.b32.xlu0 %v5075, 64
          %v5092 = vpop.permute.xlu0 %5091
          %5093 = vrot.lane.b32.xlu0 %v5076, 64
          %v5094 = vpop.permute.xlu0 %5093
          %5095 = vrot.lane.b32.xlu0 %v5077, 64
          %v5096 = vpop.permute.xlu0 %5095
          %5097 = vrot.lane.b32.xlu0 %v5078, 64
          %v5098 = vpop.permute.xlu0 %5097
          %5099 = vrot.lane.b32.xlu0 %v5079, 64
          %v5100 = vpop.permute.xlu0 %5099
          %5101 = vrot.lane.b32.xlu0 %v5080, 64
          %v5102 = vpop.permute.xlu0 %5101
          %5103 = vrot.lane.b32.xlu0 %v5081, 64
          %v5104 = vpop.permute.xlu0 %5103
          %5105 = vrot.lane.b32.xlu0 %v5082, 64
          %v5106 = vpop.permute.xlu0 %5105
          %v5109 = vpack.i.b16 %v5092, %v5075
          %v5111 = vshrl.u32 %v5075, 16
          %v5112 = vshrl.u32 %v5092, 16
          %v5113 = vpack.i.b16 %v5112, %v5111
          %v5117 = vpack.i.b16 %v5094, %v5076
          %v5119 = vshrl.u32 %v5076, 16
          %v5120 = vshrl.u32 %v5094, 16
          %v5121 = vpack.i.b16 %v5120, %v5119
          %v5125 = vpack.i.b16 %v5096, %v5077
          %v5127 = vshrl.u32 %v5077, 16
          %v5128 = vshrl.u32 %v5096, 16
          %v5129 = vpack.i.b16 %v5128, %v5127
          %v5133 = vpack.i.b16 %v5098, %v5078
          %v5135 = vshrl.u32 %v5078, 16
          %v5136 = vshrl.u32 %v5098, 16
          %v5137 = vpack.i.b16 %v5136, %v5135
          %v5141 = vpack.i.b16 %v5100, %v5079
          %v5143 = vshrl.u32 %v5079, 16
          %v5144 = vshrl.u32 %v5100, 16
          %v5145 = vpack.i.b16 %v5144, %v5143
          %v5149 = vpack.i.b16 %v5102, %v5080
          %v5151 = vshrl.u32 %v5080, 16
          %v5152 = vshrl.u32 %v5102, 16
          %v5153 = vpack.i.b16 %v5152, %v5151
          %v5157 = vpack.i.b16 %v5104, %v5081
          %v5159 = vshrl.u32 %v5081, 16
          %v5160 = vshrl.u32 %v5104, 16
          %v5161 = vpack.i.b16 %v5160, %v5159
          %v5165 = vpack.i.b16 %v5106, %v5082
          %v5167 = vshrl.u32 %v5082, 16
          %v5168 = vshrl.u32 %v5106, 16
          %v5169 = vpack.i.b16 %v5168, %v5167
          %v5171 = vcombine.high %v5109, %v1686
          %v5173 = vunpack.c.l.s4 1983009808
          %v5174 = vunpack.c.0.s8 %v5173
          %v5175 = vlaneseq
          %v5176 = vshrl.u32 %v5175, 7
          %v5177 = vsub.s32 %v5174, %v5176
          %v5178 = vrot.slane %v5109, %v5177
          %v5180 = vunpack.c.l.s4 1983009808
          %v5181 = vunpack.c.0.s8 %v5180
          %v5182 = vlaneseq
          %v5183 = vshrl.u32 %v5182, 7
          %v5184 = vsub.s32 %v5181, %v5183
          %v5185 = vrot.slane %v5171, %v5184
          %v5186 = vcombine.high %v5178, 0
          %v5188 = vunpack.c.l.s4 1934713408
          %v5189 = vunpack.c.0.s8 %v5188
          %v5190 = vlaneseq
          %v5191 = vshrl.u32 %v5190, 7
          %v5192 = vsub.s32 %v5189, %v5191
          %v5193 = vrot.slane %v5178, %v5192
          %v5195 = vunpack.c.l.s4 1934713408
          %v5196 = vunpack.c.0.s8 %v5195
          %v5197 = vlaneseq
          %v5198 = vshrl.u32 %v5197, 7
          %v5199 = vsub.s32 %v5196, %v5198
          %v5200 = vrot.slane %v5186, %v5199
          %v5201 = vcombine.high %v5185, 0
          %v5203 = vunpack.c.l.s4 1934713408
          %v5204 = vunpack.c.0.s8 %v5203
          %v5205 = vlaneseq
          %v5206 = vshrl.u32 %v5205, 7
          %v5207 = vsub.s32 %v5204, %v5206
          %v5208 = vrot.slane %v5185, %v5207
          %v5210 = vunpack.c.l.s4 1934713408
          %v5211 = vunpack.c.0.s8 %v5210
          %v5212 = vlaneseq
          %v5213 = vshrl.u32 %v5212, 7
          %v5214 = vsub.s32 %v5211, %v5213
          %v5215 = vrot.slane %v5201, %v5214
          %v5216 = vcombine.high %v5193, 0
          %v5217 = vcombine.high %v5200, 0
          %v5218 = vcombine.high %v5208, 0
          %v5219 = vcombine.high %v5215, 0
          %v5220 = vcombine.high %v5113, %v1689
          %v5222 = vunpack.c.l.s4 1983009808
          %v5223 = vunpack.c.0.s8 %v5222
          %v5224 = vlaneseq
          %v5225 = vshrl.u32 %v5224, 7
          %v5226 = vsub.s32 %v5223, %v5225
          %v5227 = vrot.slane %v5113, %v5226
          %v5229 = vunpack.c.l.s4 1983009808
          %v5230 = vunpack.c.0.s8 %v5229
          %v5231 = vlaneseq
          %v5232 = vshrl.u32 %v5231, 7
          %v5233 = vsub.s32 %v5230, %v5232
          %v5234 = vrot.slane %v5220, %v5233
          %v5235 = vcombine.high %v5227, 0
          %v5237 = vunpack.c.l.s4 1934713408
          %v5238 = vunpack.c.0.s8 %v5237
          %v5239 = vlaneseq
          %v5240 = vshrl.u32 %v5239, 7
          %v5241 = vsub.s32 %v5238, %v5240
          %v5242 = vrot.slane %v5227, %v5241
          %v5244 = vunpack.c.l.s4 1934713408
          %v5245 = vunpack.c.0.s8 %v5244
          %v5246 = vlaneseq
          %v5247 = vshrl.u32 %v5246, 7
          %v5248 = vsub.s32 %v5245, %v5247
          %v5249 = vrot.slane %v5235, %v5248
          %v5250 = vcombine.high %v5234, 0
          %v5252 = vunpack.c.l.s4 1934713408
          %v5253 = vunpack.c.0.s8 %v5252
          %v5254 = vlaneseq
          %v5255 = vshrl.u32 %v5254, 7
          %v5256 = vsub.s32 %v5253, %v5255
          %v5257 = vrot.slane %v5234, %v5256
          %v5259 = vunpack.c.l.s4 1934713408
          %v5260 = vunpack.c.0.s8 %v5259
          %v5261 = vlaneseq
          %v5262 = vshrl.u32 %v5261, 7
          %v5263 = vsub.s32 %v5260, %v5262
          %v5264 = vrot.slane %v5250, %v5263
          %v5265 = vcombine.high %v5242, 0
          %v5266 = vcombine.high %v5249, 0
          %v5267 = vcombine.high %v5257, 0
          %v5268 = vcombine.high %v5264, 0
          %v5269 = vcombine.high %v5117, %v1686
          %v5271 = vunpack.c.l.s4 1983009808
          %v5272 = vunpack.c.0.s8 %v5271
          %v5273 = vlaneseq
          %v5274 = vshrl.u32 %v5273, 7
          %v5275 = vsub.s32 %v5272, %v5274
          %v5276 = vrot.slane %v5117, %v5275
          %v5278 = vunpack.c.l.s4 1983009808
          %v5279 = vunpack.c.0.s8 %v5278
          %v5280 = vlaneseq
          %v5281 = vshrl.u32 %v5280, 7
          %v5282 = vsub.s32 %v5279, %v5281
          %v5283 = vrot.slane %v5269, %v5282
          %v5284 = vcombine.high %v5276, 0
          %v5286 = vunpack.c.l.s4 1934713408
          %v5287 = vunpack.c.0.s8 %v5286
          %v5288 = vlaneseq
          %v5289 = vshrl.u32 %v5288, 7
          %v5290 = vsub.s32 %v5287, %v5289
          %v5291 = vrot.slane %v5276, %v5290
          %v5293 = vunpack.c.l.s4 1934713408
          %v5294 = vunpack.c.0.s8 %v5293
          %v5295 = vlaneseq
          %v5296 = vshrl.u32 %v5295, 7
          %v5297 = vsub.s32 %v5294, %v5296
          %v5298 = vrot.slane %v5284, %v5297
          %v5299 = vcombine.high %v5283, 0
          %v5301 = vunpack.c.l.s4 1934713408
          %v5302 = vunpack.c.0.s8 %v5301
          %v5303 = vlaneseq
          %v5304 = vshrl.u32 %v5303, 7
          %v5305 = vsub.s32 %v5302, %v5304
          %v5306 = vrot.slane %v5283, %v5305
          %v5308 = vunpack.c.l.s4 1934713408
          %v5309 = vunpack.c.0.s8 %v5308
          %v5310 = vlaneseq
          %v5311 = vshrl.u32 %v5310, 7
          %v5312 = vsub.s32 %v5309, %v5311
          %v5313 = vrot.slane %v5299, %v5312
          %v5314 = vcombine.high %v5291, 0
          %v5315 = vcombine.high %v5298, 0
          %v5316 = vcombine.high %v5306, 0
          %v5317 = vcombine.high %v5313, 0
          %v5318 = vcombine.high %v5121, %v1689
          %v5320 = vunpack.c.l.s4 1983009808
          %v5321 = vunpack.c.0.s8 %v5320
          %v5322 = vlaneseq
          %v5323 = vshrl.u32 %v5322, 7
          %v5324 = vsub.s32 %v5321, %v5323
          %v5325 = vrot.slane %v5121, %v5324
          %v5327 = vunpack.c.l.s4 1983009808
          %v5328 = vunpack.c.0.s8 %v5327
          %v5329 = vlaneseq
          %v5330 = vshrl.u32 %v5329, 7
          %v5331 = vsub.s32 %v5328, %v5330
          %v5332 = vrot.slane %v5318, %v5331
          %v5333 = vcombine.high %v5325, 0
          %v5335 = vunpack.c.l.s4 1934713408
          %v5336 = vunpack.c.0.s8 %v5335
          %v5337 = vlaneseq
          %v5338 = vshrl.u32 %v5337, 7
          %v5339 = vsub.s32 %v5336, %v5338
          %v5340 = vrot.slane %v5325, %v5339
          %v5342 = vunpack.c.l.s4 1934713408
          %v5343 = vunpack.c.0.s8 %v5342
          %v5344 = vlaneseq
          %v5345 = vshrl.u32 %v5344, 7
          %v5346 = vsub.s32 %v5343, %v5345
          %v5347 = vrot.slane %v5333, %v5346
          %v5348 = vcombine.high %v5332, 0
          %v5350 = vunpack.c.l.s4 1934713408
          %v5351 = vunpack.c.0.s8 %v5350
          %v5352 = vlaneseq
          %v5353 = vshrl.u32 %v5352, 7
          %v5354 = vsub.s32 %v5351, %v5353
          %v5355 = vrot.slane %v5332, %v5354
          %v5357 = vunpack.c.l.s4 1934713408
          %v5358 = vunpack.c.0.s8 %v5357
          %v5359 = vlaneseq
          %v5360 = vshrl.u32 %v5359, 7
          %v5361 = vsub.s32 %v5358, %v5360
          %v5362 = vrot.slane %v5348, %v5361
          %v5363 = vcombine.high %v5340, 0
          %v5364 = vcombine.high %v5347, 0
          %v5365 = vcombine.high %v5355, 0
          %v5366 = vcombine.high %v5362, 0
          %v5367 = vcombine.high %v5125, %v1686
          %v5369 = vunpack.c.l.s4 1983009808
          %v5370 = vunpack.c.0.s8 %v5369
          %v5371 = vlaneseq
          %v5372 = vshrl.u32 %v5371, 7
          %v5373 = vsub.s32 %v5370, %v5372
          %v5374 = vrot.slane %v5125, %v5373
          %v5376 = vunpack.c.l.s4 1983009808
          %v5377 = vunpack.c.0.s8 %v5376
          %v5378 = vlaneseq
          %v5379 = vshrl.u32 %v5378, 7
          %v5380 = vsub.s32 %v5377, %v5379
          %v5381 = vrot.slane %v5367, %v5380
          %v5382 = vcombine.high %v5374, 0
          %v5384 = vunpack.c.l.s4 1934713408
          %v5385 = vunpack.c.0.s8 %v5384
          %v5386 = vlaneseq
          %v5387 = vshrl.u32 %v5386, 7
          %v5388 = vsub.s32 %v5385, %v5387
          %v5389 = vrot.slane %v5374, %v5388
          %v5391 = vunpack.c.l.s4 1934713408
          %v5392 = vunpack.c.0.s8 %v5391
          %v5393 = vlaneseq
          %v5394 = vshrl.u32 %v5393, 7
          %v5395 = vsub.s32 %v5392, %v5394
          %v5396 = vrot.slane %v5382, %v5395
          %v5397 = vcombine.high %v5381, 0
          %v5399 = vunpack.c.l.s4 1934713408
          %v5400 = vunpack.c.0.s8 %v5399
          %v5401 = vlaneseq
          %v5402 = vshrl.u32 %v5401, 7
          %v5403 = vsub.s32 %v5400, %v5402
          %v5404 = vrot.slane %v5381, %v5403
          %v5406 = vunpack.c.l.s4 1934713408
          %v5407 = vunpack.c.0.s8 %v5406
          %v5408 = vlaneseq
          %v5409 = vshrl.u32 %v5408, 7
          %v5410 = vsub.s32 %v5407, %v5409
          %v5411 = vrot.slane %v5397, %v5410
          %v5412 = vcombine.high %v5389, 0
          %v5413 = vcombine.high %v5396, 0
          %v5414 = vcombine.high %v5404, 0
          %v5415 = vcombine.high %v5411, 0
          %v5416 = vcombine.high %v5129, %v1689
          %v5418 = vunpack.c.l.s4 1983009808
          %v5419 = vunpack.c.0.s8 %v5418
          %v5420 = vlaneseq
          %v5421 = vshrl.u32 %v5420, 7
          %v5422 = vsub.s32 %v5419, %v5421
          %v5423 = vrot.slane %v5129, %v5422
          %v5425 = vunpack.c.l.s4 1983009808
          %v5426 = vunpack.c.0.s8 %v5425
          %v5427 = vlaneseq
          %v5428 = vshrl.u32 %v5427, 7
          %v5429 = vsub.s32 %v5426, %v5428
          %v5430 = vrot.slane %v5416, %v5429
          %v5431 = vcombine.high %v5423, 0
          %v5433 = vunpack.c.l.s4 1934713408
          %v5434 = vunpack.c.0.s8 %v5433
          %v5435 = vlaneseq
          %v5436 = vshrl.u32 %v5435, 7
          %v5437 = vsub.s32 %v5434, %v5436
          %v5438 = vrot.slane %v5423, %v5437
          %v5440 = vunpack.c.l.s4 1934713408
          %v5441 = vunpack.c.0.s8 %v5440
          %v5442 = vlaneseq
          %v5443 = vshrl.u32 %v5442, 7
          %v5444 = vsub.s32 %v5441, %v5443
          %v5445 = vrot.slane %v5431, %v5444
          %v5446 = vcombine.high %v5430, 0
          %v5448 = vunpack.c.l.s4 1934713408
          %v5449 = vunpack.c.0.s8 %v5448
          %v5450 = vlaneseq
          %v5451 = vshrl.u32 %v5450, 7
          %v5452 = vsub.s32 %v5449, %v5451
          %v5453 = vrot.slane %v5430, %v5452
          %v5455 = vunpack.c.l.s4 1934713408
          %v5456 = vunpack.c.0.s8 %v5455
          %v5457 = vlaneseq
          %v5458 = vshrl.u32 %v5457, 7
          %v5459 = vsub.s32 %v5456, %v5458
          %v5460 = vrot.slane %v5446, %v5459
          %v5461 = vcombine.high %v5438, 0
          %v5462 = vcombine.high %v5445, 0
          %v5463 = vcombine.high %v5453, 0
          %v5464 = vcombine.high %v5460, 0
          %v5465 = vcombine.high %v5133, %v1686
          %v5467 = vunpack.c.l.s4 1983009808
          %v5468 = vunpack.c.0.s8 %v5467
          %v5469 = vlaneseq
          %v5470 = vshrl.u32 %v5469, 7
          %v5471 = vsub.s32 %v5468, %v5470
          %v5472 = vrot.slane %v5133, %v5471
          %v5474 = vunpack.c.l.s4 1983009808
          %v5475 = vunpack.c.0.s8 %v5474
          %v5476 = vlaneseq
          %v5477 = vshrl.u32 %v5476, 7
          %v5478 = vsub.s32 %v5475, %v5477
          %v5479 = vrot.slane %v5465, %v5478
          %v5480 = vcombine.high %v5472, 0
          %v5482 = vunpack.c.l.s4 1934713408
          %v5483 = vunpack.c.0.s8 %v5482
          %v5484 = vlaneseq
          %v5485 = vshrl.u32 %v5484, 7
          %v5486 = vsub.s32 %v5483, %v5485
          %v5487 = vrot.slane %v5472, %v5486
          %v5489 = vunpack.c.l.s4 1934713408
          %v5490 = vunpack.c.0.s8 %v5489
          %v5491 = vlaneseq
          %v5492 = vshrl.u32 %v5491, 7
          %v5493 = vsub.s32 %v5490, %v5492
          %v5494 = vrot.slane %v5480, %v5493
          %v5495 = vcombine.high %v5479, 0
          %v5497 = vunpack.c.l.s4 1934713408
          %v5498 = vunpack.c.0.s8 %v5497
          %v5499 = vlaneseq
          %v5500 = vshrl.u32 %v5499, 7
          %v5501 = vsub.s32 %v5498, %v5500
          %v5502 = vrot.slane %v5479, %v5501
          %v5504 = vunpack.c.l.s4 1934713408
          %v5505 = vunpack.c.0.s8 %v5504
          %v5506 = vlaneseq
          %v5507 = vshrl.u32 %v5506, 7
          %v5508 = vsub.s32 %v5505, %v5507
          %v5509 = vrot.slane %v5495, %v5508
          %v5510 = vcombine.high %v5487, 0
          %v5511 = vcombine.high %v5494, 0
          %v5512 = vcombine.high %v5502, 0
          %v5513 = vcombine.high %v5509, 0
          %v5514 = vcombine.high %v5137, %v1689
          %v5516 = vunpack.c.l.s4 1983009808
          %v5517 = vunpack.c.0.s8 %v5516
          %v5518 = vlaneseq
          %v5519 = vshrl.u32 %v5518, 7
          %v5520 = vsub.s32 %v5517, %v5519
          %v5521 = vrot.slane %v5137, %v5520
          %v5523 = vunpack.c.l.s4 1983009808
          %v5524 = vunpack.c.0.s8 %v5523
          %v5525 = vlaneseq
          %v5526 = vshrl.u32 %v5525, 7
          %v5527 = vsub.s32 %v5524, %v5526
          %v5528 = vrot.slane %v5514, %v5527
          %v5529 = vcombine.high %v5521, 0
          %v5531 = vunpack.c.l.s4 1934713408
          %v5532 = vunpack.c.0.s8 %v5531
          %v5533 = vlaneseq
          %v5534 = vshrl.u32 %v5533, 7
          %v5535 = vsub.s32 %v5532, %v5534
          %v5536 = vrot.slane %v5521, %v5535
          %v5538 = vunpack.c.l.s4 1934713408
          %v5539 = vunpack.c.0.s8 %v5538
          %v5540 = vlaneseq
          %v5541 = vshrl.u32 %v5540, 7
          %v5542 = vsub.s32 %v5539, %v5541
          %v5543 = vrot.slane %v5529, %v5542
          %v5544 = vcombine.high %v5528, 0
          %v5546 = vunpack.c.l.s4 1934713408
          %v5547 = vunpack.c.0.s8 %v5546
          %v5548 = vlaneseq
          %v5549 = vshrl.u32 %v5548, 7
          %v5550 = vsub.s32 %v5547, %v5549
          %v5551 = vrot.slane %v5528, %v5550
          %v5553 = vunpack.c.l.s4 1934713408
          %v5554 = vunpack.c.0.s8 %v5553
          %v5555 = vlaneseq
          %v5556 = vshrl.u32 %v5555, 7
          %v5557 = vsub.s32 %v5554, %v5556
          %v5558 = vrot.slane %v5544, %v5557
          %v5559 = vcombine.high %v5536, 0
          %v5560 = vcombine.high %v5543, 0
          %v5561 = vcombine.high %v5551, 0
          %v5562 = vcombine.high %v5558, 0
          %v5563 = vcombine.high %v5141, %v1686
          %v5565 = vunpack.c.l.s4 1983009808
          %v5566 = vunpack.c.0.s8 %v5565
          %v5567 = vlaneseq
          %v5568 = vshrl.u32 %v5567, 7
          %v5569 = vsub.s32 %v5566, %v5568
          %v5570 = vrot.slane %v5141, %v5569
          %v5572 = vunpack.c.l.s4 1983009808
          %v5573 = vunpack.c.0.s8 %v5572
          %v5574 = vlaneseq
          %v5575 = vshrl.u32 %v5574, 7
          %v5576 = vsub.s32 %v5573, %v5575
          %v5577 = vrot.slane %v5563, %v5576
          %v5578 = vcombine.high %v5570, 0
          %v5580 = vunpack.c.l.s4 1934713408
          %v5581 = vunpack.c.0.s8 %v5580
          %v5582 = vlaneseq
          %v5583 = vshrl.u32 %v5582, 7
          %v5584 = vsub.s32 %v5581, %v5583
          %v5585 = vrot.slane %v5570, %v5584
          %v5587 = vunpack.c.l.s4 1934713408
          %v5588 = vunpack.c.0.s8 %v5587
          %v5589 = vlaneseq
          %v5590 = vshrl.u32 %v5589, 7
          %v5591 = vsub.s32 %v5588, %v5590
          %v5592 = vrot.slane %v5578, %v5591
          %v5593 = vcombine.high %v5577, 0
          %v5595 = vunpack.c.l.s4 1934713408
          %v5596 = vunpack.c.0.s8 %v5595
          %v5597 = vlaneseq
          %v5598 = vshrl.u32 %v5597, 7
          %v5599 = vsub.s32 %v5596, %v5598
          %v5600 = vrot.slane %v5577, %v5599
          %v5602 = vunpack.c.l.s4 1934713408
          %v5603 = vunpack.c.0.s8 %v5602
          %v5604 = vlaneseq
          %v5605 = vshrl.u32 %v5604, 7
          %v5606 = vsub.s32 %v5603, %v5605
          %v5607 = vrot.slane %v5593, %v5606
          %v5608 = vcombine.high %v5585, 0
          %v5609 = vcombine.high %v5592, 0
          %v5610 = vcombine.high %v5600, 0
          %v5611 = vcombine.high %v5607, 0
          %v5612 = vcombine.high %v5145, %v1689
          %v5614 = vunpack.c.l.s4 1983009808
          %v5615 = vunpack.c.0.s8 %v5614
          %v5616 = vlaneseq
          %v5617 = vshrl.u32 %v5616, 7
          %v5618 = vsub.s32 %v5615, %v5617
          %v5619 = vrot.slane %v5145, %v5618
          %v5621 = vunpack.c.l.s4 1983009808
          %v5622 = vunpack.c.0.s8 %v5621
          %v5623 = vlaneseq
          %v5624 = vshrl.u32 %v5623, 7
          %v5625 = vsub.s32 %v5622, %v5624
          %v5626 = vrot.slane %v5612, %v5625
          %v5627 = vcombine.high %v5619, 0
          %v5629 = vunpack.c.l.s4 1934713408
          %v5630 = vunpack.c.0.s8 %v5629
          %v5631 = vlaneseq
          %v5632 = vshrl.u32 %v5631, 7
          %v5633 = vsub.s32 %v5630, %v5632
          %v5634 = vrot.slane %v5619, %v5633
          %v5636 = vunpack.c.l.s4 1934713408
          %v5637 = vunpack.c.0.s8 %v5636
          %v5638 = vlaneseq
          %v5639 = vshrl.u32 %v5638, 7
          %v5640 = vsub.s32 %v5637, %v5639
          %v5641 = vrot.slane %v5627, %v5640
          %v5642 = vcombine.high %v5626, 0
          %v5644 = vunpack.c.l.s4 1934713408
          %v5645 = vunpack.c.0.s8 %v5644
          %v5646 = vlaneseq
          %v5647 = vshrl.u32 %v5646, 7
          %v5648 = vsub.s32 %v5645, %v5647
          %v5649 = vrot.slane %v5626, %v5648
          %v5651 = vunpack.c.l.s4 1934713408
          %v5652 = vunpack.c.0.s8 %v5651
          %v5653 = vlaneseq
          %v5654 = vshrl.u32 %v5653, 7
          %v5655 = vsub.s32 %v5652, %v5654
          %v5656 = vrot.slane %v5642, %v5655
          %v5657 = vcombine.high %v5634, 0
          %v5658 = vcombine.high %v5641, 0
          %v5659 = vcombine.high %v5649, 0
          %v5660 = vcombine.high %v5656, 0
          %v5661 = vcombine.high %v5149, %v1686
          %v5663 = vunpack.c.l.s4 1983009808
          %v5664 = vunpack.c.0.s8 %v5663
          %v5665 = vlaneseq
          %v5666 = vshrl.u32 %v5665, 7
          %v5667 = vsub.s32 %v5664, %v5666
          %v5668 = vrot.slane %v5149, %v5667
          %v5670 = vunpack.c.l.s4 1983009808
          %v5671 = vunpack.c.0.s8 %v5670
          %v5672 = vlaneseq
          %v5673 = vshrl.u32 %v5672, 7
          %v5674 = vsub.s32 %v5671, %v5673
          %v5675 = vrot.slane %v5661, %v5674
          %v5676 = vcombine.high %v5668, 0
          %v5678 = vunpack.c.l.s4 1934713408
          %v5679 = vunpack.c.0.s8 %v5678
          %v5680 = vlaneseq
          %v5681 = vshrl.u32 %v5680, 7
          %v5682 = vsub.s32 %v5679, %v5681
          %v5683 = vrot.slane %v5668, %v5682
          %v5685 = vunpack.c.l.s4 1934713408
          %v5686 = vunpack.c.0.s8 %v5685
          %v5687 = vlaneseq
          %v5688 = vshrl.u32 %v5687, 7
          %v5689 = vsub.s32 %v5686, %v5688
          %v5690 = vrot.slane %v5676, %v5689
          %v5691 = vcombine.high %v5675, 0
          %v5693 = vunpack.c.l.s4 1934713408
          %v5694 = vunpack.c.0.s8 %v5693
          %v5695 = vlaneseq
          %v5696 = vshrl.u32 %v5695, 7
          %v5697 = vsub.s32 %v5694, %v5696
          %v5698 = vrot.slane %v5675, %v5697
          %v5700 = vunpack.c.l.s4 1934713408
          %v5701 = vunpack.c.0.s8 %v5700
          %v5702 = vlaneseq
          %v5703 = vshrl.u32 %v5702, 7
          %v5704 = vsub.s32 %v5701, %v5703
          %v5705 = vrot.slane %v5691, %v5704
          %v5706 = vcombine.high %v5683, 0
          %v5707 = vcombine.high %v5690, 0
          %v5708 = vcombine.high %v5698, 0
          %v5709 = vcombine.high %v5705, 0
          %v5710 = vcombine.high %v5153, %v1689
          %v5712 = vunpack.c.l.s4 1983009808
          %v5713 = vunpack.c.0.s8 %v5712
          %v5714 = vlaneseq
          %v5715 = vshrl.u32 %v5714, 7
          %v5716 = vsub.s32 %v5713, %v5715
          %v5717 = vrot.slane %v5153, %v5716
          %v5719 = vunpack.c.l.s4 1983009808
          %v5720 = vunpack.c.0.s8 %v5719
          %v5721 = vlaneseq
          %v5722 = vshrl.u32 %v5721, 7
          %v5723 = vsub.s32 %v5720, %v5722
          %v5724 = vrot.slane %v5710, %v5723
          %v5725 = vcombine.high %v5717, 0
          %v5727 = vunpack.c.l.s4 1934713408
          %v5728 = vunpack.c.0.s8 %v5727
          %v5729 = vlaneseq
          %v5730 = vshrl.u32 %v5729, 7
          %v5731 = vsub.s32 %v5728, %v5730
          %v5732 = vrot.slane %v5717, %v5731
          %v5734 = vunpack.c.l.s4 1934713408
          %v5735 = vunpack.c.0.s8 %v5734
          %v5736 = vlaneseq
          %v5737 = vshrl.u32 %v5736, 7
          %v5738 = vsub.s32 %v5735, %v5737
          %v5739 = vrot.slane %v5725, %v5738
          %v5740 = vcombine.high %v5724, 0
          %v5742 = vunpack.c.l.s4 1934713408
          %v5743 = vunpack.c.0.s8 %v5742
          %v5744 = vlaneseq
          %v5745 = vshrl.u32 %v5744, 7
          %v5746 = vsub.s32 %v5743, %v5745
          %v5747 = vrot.slane %v5724, %v5746
          %v5749 = vunpack.c.l.s4 1934713408
          %v5750 = vunpack.c.0.s8 %v5749
          %v5751 = vlaneseq
          %v5752 = vshrl.u32 %v5751, 7
          %v5753 = vsub.s32 %v5750, %v5752
          %v5754 = vrot.slane %v5740, %v5753
          %v5755 = vcombine.high %v5732, 0
          %v5756 = vcombine.high %v5739, 0
          %v5757 = vcombine.high %v5747, 0
          %v5758 = vcombine.high %v5754, 0
          %v5759 = vcombine.high %v5157, %v1686
          %v5761 = vunpack.c.l.s4 1983009808
          %v5762 = vunpack.c.0.s8 %v5761
          %v5763 = vlaneseq
          %v5764 = vshrl.u32 %v5763, 7
          %v5765 = vsub.s32 %v5762, %v5764
          %v5766 = vrot.slane %v5157, %v5765
          %v5768 = vunpack.c.l.s4 1983009808
          %v5769 = vunpack.c.0.s8 %v5768
          %v5770 = vlaneseq
          %v5771 = vshrl.u32 %v5770, 7
          %v5772 = vsub.s32 %v5769, %v5771
          %v5773 = vrot.slane %v5759, %v5772
          %v5774 = vcombine.high %v5766, 0
          %v5776 = vunpack.c.l.s4 1934713408
          %v5777 = vunpack.c.0.s8 %v5776
          %v5778 = vlaneseq
          %v5779 = vshrl.u32 %v5778, 7
          %v5780 = vsub.s32 %v5777, %v5779
          %v5781 = vrot.slane %v5766, %v5780
          %v5783 = vunpack.c.l.s4 1934713408
          %v5784 = vunpack.c.0.s8 %v5783
          %v5785 = vlaneseq
          %v5786 = vshrl.u32 %v5785, 7
          %v5787 = vsub.s32 %v5784, %v5786
          %v5788 = vrot.slane %v5774, %v5787
          %v5789 = vcombine.high %v5773, 0
          %v5791 = vunpack.c.l.s4 1934713408
          %v5792 = vunpack.c.0.s8 %v5791
          %v5793 = vlaneseq
          %v5794 = vshrl.u32 %v5793, 7
          %v5795 = vsub.s32 %v5792, %v5794
          %v5796 = vrot.slane %v5773, %v5795
          %v5798 = vunpack.c.l.s4 1934713408
          %v5799 = vunpack.c.0.s8 %v5798
          %v5800 = vlaneseq
          %v5801 = vshrl.u32 %v5800, 7
          %v5802 = vsub.s32 %v5799, %v5801
          %v5803 = vrot.slane %v5789, %v5802
          %v5804 = vcombine.high %v5781, 0
          %v5805 = vcombine.high %v5788, 0
          %v5806 = vcombine.high %v5796, 0
          %v5807 = vcombine.high %v5803, 0
          %v5808 = vcombine.high %v5161, %v1689
          %v5810 = vunpack.c.l.s4 1983009808
          %v5811 = vunpack.c.0.s8 %v5810
          %v5812 = vlaneseq
          %v5813 = vshrl.u32 %v5812, 7
          %v5814 = vsub.s32 %v5811, %v5813
          %v5815 = vrot.slane %v5161, %v5814
          %v5817 = vunpack.c.l.s4 1983009808
          %v5818 = vunpack.c.0.s8 %v5817
          %v5819 = vlaneseq
          %v5820 = vshrl.u32 %v5819, 7
          %v5821 = vsub.s32 %v5818, %v5820
          %v5822 = vrot.slane %v5808, %v5821
          %v5823 = vcombine.high %v5815, 0
          %v5825 = vunpack.c.l.s4 1934713408
          %v5826 = vunpack.c.0.s8 %v5825
          %v5827 = vlaneseq
          %v5828 = vshrl.u32 %v5827, 7
          %v5829 = vsub.s32 %v5826, %v5828
          %v5830 = vrot.slane %v5815, %v5829
          %v5832 = vunpack.c.l.s4 1934713408
          %v5833 = vunpack.c.0.s8 %v5832
          %v5834 = vlaneseq
          %v5835 = vshrl.u32 %v5834, 7
          %v5836 = vsub.s32 %v5833, %v5835
          %v5837 = vrot.slane %v5823, %v5836
          %v5838 = vcombine.high %v5822, 0
          %v5840 = vunpack.c.l.s4 1934713408
          %v5841 = vunpack.c.0.s8 %v5840
          %v5842 = vlaneseq
          %v5843 = vshrl.u32 %v5842, 7
          %v5844 = vsub.s32 %v5841, %v5843
          %v5845 = vrot.slane %v5822, %v5844
          %v5847 = vunpack.c.l.s4 1934713408
          %v5848 = vunpack.c.0.s8 %v5847
          %v5849 = vlaneseq
          %v5850 = vshrl.u32 %v5849, 7
          %v5851 = vsub.s32 %v5848, %v5850
          %v5852 = vrot.slane %v5838, %v5851
          %v5853 = vcombine.high %v5830, 0
          %v5854 = vcombine.high %v5837, 0
          %v5855 = vcombine.high %v5845, 0
          %v5856 = vcombine.high %v5852, 0
          %v5857 = vcombine.high %v5165, %v1686
          %v5859 = vunpack.c.l.s4 1983009808
          %v5860 = vunpack.c.0.s8 %v5859
          %v5861 = vlaneseq
          %v5862 = vshrl.u32 %v5861, 7
          %v5863 = vsub.s32 %v5860, %v5862
          %v5864 = vrot.slane %v5165, %v5863
          %v5866 = vunpack.c.l.s4 1983009808
          %v5867 = vunpack.c.0.s8 %v5866
          %v5868 = vlaneseq
          %v5869 = vshrl.u32 %v5868, 7
          %v5870 = vsub.s32 %v5867, %v5869
          %v5871 = vrot.slane %v5857, %v5870
          %v5872 = vcombine.high %v5864, 0
          %v5874 = vunpack.c.l.s4 1934713408
          %v5875 = vunpack.c.0.s8 %v5874
          %v5876 = vlaneseq
          %v5877 = vshrl.u32 %v5876, 7
          %v5878 = vsub.s32 %v5875, %v5877
          %v5879 = vrot.slane %v5864, %v5878
          %v5881 = vunpack.c.l.s4 1934713408
          %v5882 = vunpack.c.0.s8 %v5881
          %v5883 = vlaneseq
          %v5884 = vshrl.u32 %v5883, 7
          %v5885 = vsub.s32 %v5882, %v5884
          %v5886 = vrot.slane %v5872, %v5885
          %v5887 = vcombine.high %v5871, 0
          %v5889 = vunpack.c.l.s4 1934713408
          %v5890 = vunpack.c.0.s8 %v5889
          %v5891 = vlaneseq
          %v5892 = vshrl.u32 %v5891, 7
          %v5893 = vsub.s32 %v5890, %v5892
          %v5894 = vrot.slane %v5871, %v5893
          %v5896 = vunpack.c.l.s4 1934713408
          %v5897 = vunpack.c.0.s8 %v5896
          %v5898 = vlaneseq
          %v5899 = vshrl.u32 %v5898, 7
          %v5900 = vsub.s32 %v5897, %v5899
          %v5901 = vrot.slane %v5887, %v5900
          %v5902 = vcombine.high %v5879, 0
          %v5903 = vcombine.high %v5886, 0
          %v5904 = vcombine.high %v5894, 0
          %v5905 = vcombine.high %v5901, 0
          %v5906 = vcombine.high %v5169, %v1689
          %v5908 = vunpack.c.l.s4 1983009808
          %v5909 = vunpack.c.0.s8 %v5908
          %v5910 = vlaneseq
          %v5911 = vshrl.u32 %v5910, 7
          %v5912 = vsub.s32 %v5909, %v5911
          %v5913 = vrot.slane %v5169, %v5912
          %v5915 = vunpack.c.l.s4 1983009808
          %v5916 = vunpack.c.0.s8 %v5915
          %v5917 = vlaneseq
          %v5918 = vshrl.u32 %v5917, 7
          %v5919 = vsub.s32 %v5916, %v5918
          %v5920 = vrot.slane %v5906, %v5919
          %v5921 = vcombine.high %v5913, 0
          %v5923 = vunpack.c.l.s4 1934713408
          %v5924 = vunpack.c.0.s8 %v5923
          %v5925 = vlaneseq
          %v5926 = vshrl.u32 %v5925, 7
          %v5927 = vsub.s32 %v5924, %v5926
          %v5928 = vrot.slane %v5913, %v5927
          %v5930 = vunpack.c.l.s4 1934713408
          %v5931 = vunpack.c.0.s8 %v5930
          %v5932 = vlaneseq
          %v5933 = vshrl.u32 %v5932, 7
          %v5934 = vsub.s32 %v5931, %v5933
          %v5935 = vrot.slane %v5921, %v5934
          %v5936 = vcombine.high %v5920, 0
          %v5938 = vunpack.c.l.s4 1934713408
          %v5939 = vunpack.c.0.s8 %v5938
          %v5940 = vlaneseq
          %v5941 = vshrl.u32 %v5940, 7
          %v5942 = vsub.s32 %v5939, %v5941
          %v5943 = vrot.slane %v5920, %v5942
          %v5945 = vunpack.c.l.s4 1934713408
          %v5946 = vunpack.c.0.s8 %v5945
          %v5947 = vlaneseq
          %v5948 = vshrl.u32 %v5947, 7
          %v5949 = vsub.s32 %v5946, %v5948
          %v5950 = vrot.slane %v5936, %v5949
          %v5951 = vcombine.high %v5928, 0
          %v5952 = vcombine.high %v5935, 0
          %v5953 = vcombine.high %v5943, 0
          %v5954 = vcombine.high %v5950, 0
          %v5955 = vcombine.low %v5193, %v5200
          %v5957 = vunpack.c.l.s4 1983009808
          %v5958 = vunpack.c.0.s8 %v5957
          %v5959 = vlaneseq
          %v5960 = vshrl.u32 %v5959, 7
          %v5961 = vsub.s32 %v5958, %v5960
          %v5962 = vrot.slane %v5955, %v5961
          %v5963 = vcombine.low %v5216, %v5217
          %v5965 = vunpack.c.l.s4 1983009808
          %v5966 = vunpack.c.0.s8 %v5965
          %v5967 = vlaneseq
          %v5968 = vshrl.u32 %v5967, 7
          %v5969 = vsub.s32 %v5966, %v5968
          %v5970 = vrot.slane %v5963, %v5969
          %v5971 = vcombine.low %v5208, %v5215
          %v5973 = vunpack.c.l.s4 1983009808
          %v5974 = vunpack.c.0.s8 %v5973
          %v5975 = vlaneseq
          %v5976 = vshrl.u32 %v5975, 7
          %v5977 = vsub.s32 %v5974, %v5976
          %v5978 = vrot.slane %v5971, %v5977
          %v5979 = vcombine.low %v5218, %v5219
          %v5981 = vunpack.c.l.s4 1983009808
          %v5982 = vunpack.c.0.s8 %v5981
          %v5983 = vlaneseq
          %v5984 = vshrl.u32 %v5983, 7
          %v5985 = vsub.s32 %v5982, %v5984
          %v5986 = vrot.slane %v5979, %v5985
          %v5987 = vcombine.low %v5962, %v5970
          %v5989 = vunpack.c.l.s4 1934713408
          %v5990 = vunpack.c.0.s8 %v5989
          %v5991 = vlaneseq
          %v5992 = vshrl.u32 %v5991, 7
          %v5993 = vsub.s32 %v5990, %v5992
          %v5994 = vrot.slane %v5987, %v5993
          %v5995 = vcombine.low %v5978, %v5986
          %v5997 = vunpack.c.l.s4 1934713408
          %v5998 = vunpack.c.0.s8 %v5997
          %v5999 = vlaneseq
          %v6000 = vshrl.u32 %v5999, 7
          %v6001 = vsub.s32 %v5998, %v6000
          %v6002 = vrot.slane %v5995, %v6001
          %v6003 = vcombine.low %v5994, %v6002
          %v6004 = vcombine.low %v5242, %v5249
          %v6006 = vunpack.c.l.s4 1983009808
          %v6007 = vunpack.c.0.s8 %v6006
          %v6008 = vlaneseq
          %v6009 = vshrl.u32 %v6008, 7
          %v6010 = vsub.s32 %v6007, %v6009
          %v6011 = vrot.slane %v6004, %v6010
          %v6012 = vcombine.low %v5265, %v5266
          %v6014 = vunpack.c.l.s4 1983009808
          %v6015 = vunpack.c.0.s8 %v6014
          %v6016 = vlaneseq
          %v6017 = vshrl.u32 %v6016, 7
          %v6018 = vsub.s32 %v6015, %v6017
          %v6019 = vrot.slane %v6012, %v6018
          %v6020 = vcombine.low %v5257, %v5264
          %v6022 = vunpack.c.l.s4 1983009808
          %v6023 = vunpack.c.0.s8 %v6022
          %v6024 = vlaneseq
          %v6025 = vshrl.u32 %v6024, 7
          %v6026 = vsub.s32 %v6023, %v6025
          %v6027 = vrot.slane %v6020, %v6026
          %v6028 = vcombine.low %v5267, %v5268
          %v6030 = vunpack.c.l.s4 1983009808
          %v6031 = vunpack.c.0.s8 %v6030
          %v6032 = vlaneseq
          %v6033 = vshrl.u32 %v6032, 7
          %v6034 = vsub.s32 %v6031, %v6033
          %v6035 = vrot.slane %v6028, %v6034
          %v6036 = vcombine.low %v6011, %v6019
          %v6038 = vunpack.c.l.s4 1934713408
          %v6039 = vunpack.c.0.s8 %v6038
          %v6040 = vlaneseq
          %v6041 = vshrl.u32 %v6040, 7
          %v6042 = vsub.s32 %v6039, %v6041
          %v6043 = vrot.slane %v6036, %v6042
          %v6044 = vcombine.low %v6027, %v6035
          %v6046 = vunpack.c.l.s4 1934713408
          %v6047 = vunpack.c.0.s8 %v6046
          %v6048 = vlaneseq
          %v6049 = vshrl.u32 %v6048, 7
          %v6050 = vsub.s32 %v6047, %v6049
          %v6051 = vrot.slane %v6044, %v6050
          %v6052 = vcombine.low %v6043, %v6051
          %v6053 = vcombine.low %v5291, %v5298
          %v6055 = vunpack.c.l.s4 1983009808
          %v6056 = vunpack.c.0.s8 %v6055
          %v6057 = vlaneseq
          %v6058 = vshrl.u32 %v6057, 7
          %v6059 = vsub.s32 %v6056, %v6058
          %v6060 = vrot.slane %v6053, %v6059
          %v6061 = vcombine.low %v5314, %v5315
          %v6063 = vunpack.c.l.s4 1983009808
          %v6064 = vunpack.c.0.s8 %v6063
          %v6065 = vlaneseq
          %v6066 = vshrl.u32 %v6065, 7
          %v6067 = vsub.s32 %v6064, %v6066
          %v6068 = vrot.slane %v6061, %v6067
          %v6069 = vcombine.low %v5306, %v5313
          %v6071 = vunpack.c.l.s4 1983009808
          %v6072 = vunpack.c.0.s8 %v6071
          %v6073 = vlaneseq
          %v6074 = vshrl.u32 %v6073, 7
          %v6075 = vsub.s32 %v6072, %v6074
          %v6076 = vrot.slane %v6069, %v6075
          %v6077 = vcombine.low %v5316, %v5317
          %v6079 = vunpack.c.l.s4 1983009808
          %v6080 = vunpack.c.0.s8 %v6079
          %v6081 = vlaneseq
          %v6082 = vshrl.u32 %v6081, 7
          %v6083 = vsub.s32 %v6080, %v6082
          %v6084 = vrot.slane %v6077, %v6083
          %v6085 = vcombine.low %v6060, %v6068
          %v6087 = vunpack.c.l.s4 1934713408
          %v6088 = vunpack.c.0.s8 %v6087
          %v6089 = vlaneseq
          %v6090 = vshrl.u32 %v6089, 7
          %v6091 = vsub.s32 %v6088, %v6090
          %v6092 = vrot.slane %v6085, %v6091
          %v6093 = vcombine.low %v6076, %v6084
          %v6095 = vunpack.c.l.s4 1934713408
          %v6096 = vunpack.c.0.s8 %v6095
          %v6097 = vlaneseq
          %v6098 = vshrl.u32 %v6097, 7
          %v6099 = vsub.s32 %v6096, %v6098
          %v6100 = vrot.slane %v6093, %v6099
          %v6101 = vcombine.low %v6092, %v6100
          %v6102 = vcombine.low %v5340, %v5347
          %v6104 = vunpack.c.l.s4 1983009808
          %v6105 = vunpack.c.0.s8 %v6104
          %v6106 = vlaneseq
          %v6107 = vshrl.u32 %v6106, 7
          %v6108 = vsub.s32 %v6105, %v6107
          %v6109 = vrot.slane %v6102, %v6108
          %v6110 = vcombine.low %v5363, %v5364
          %v6112 = vunpack.c.l.s4 1983009808
          %v6113 = vunpack.c.0.s8 %v6112
          %v6114 = vlaneseq
          %v6115 = vshrl.u32 %v6114, 7
          %v6116 = vsub.s32 %v6113, %v6115
          %v6117 = vrot.slane %v6110, %v6116
          %v6118 = vcombine.low %v5355, %v5362
          %v6120 = vunpack.c.l.s4 1983009808
          %v6121 = vunpack.c.0.s8 %v6120
          %v6122 = vlaneseq
          %v6123 = vshrl.u32 %v6122, 7
          %v6124 = vsub.s32 %v6121, %v6123
          %v6125 = vrot.slane %v6118, %v6124
          %v6126 = vcombine.low %v5365, %v5366
          %v6128 = vunpack.c.l.s4 1983009808
          %v6129 = vunpack.c.0.s8 %v6128
          %v6130 = vlaneseq
          %v6131 = vshrl.u32 %v6130, 7
          %v6132 = vsub.s32 %v6129, %v6131
          %v6133 = vrot.slane %v6126, %v6132
          %v6134 = vcombine.low %v6109, %v6117
          %v6136 = vunpack.c.l.s4 1934713408
          %v6137 = vunpack.c.0.s8 %v6136
          %v6138 = vlaneseq
          %v6139 = vshrl.u32 %v6138, 7
          %v6140 = vsub.s32 %v6137, %v6139
          %v6141 = vrot.slane %v6134, %v6140
          %v6142 = vcombine.low %v6125, %v6133
          %v6144 = vunpack.c.l.s4 1934713408
          %v6145 = vunpack.c.0.s8 %v6144
          %v6146 = vlaneseq
          %v6147 = vshrl.u32 %v6146, 7
          %v6148 = vsub.s32 %v6145, %v6147
          %v6149 = vrot.slane %v6142, %v6148
          %v6150 = vcombine.low %v6141, %v6149
          %v6151 = vcombine.low %v5389, %v5396
          %v6153 = vunpack.c.l.s4 1983009808
          %v6154 = vunpack.c.0.s8 %v6153
          %v6155 = vlaneseq
          %v6156 = vshrl.u32 %v6155, 7
          %v6157 = vsub.s32 %v6154, %v6156
          %v6158 = vrot.slane %v6151, %v6157
          %v6159 = vcombine.low %v5412, %v5413
          %v6161 = vunpack.c.l.s4 1983009808
          %v6162 = vunpack.c.0.s8 %v6161
          %v6163 = vlaneseq
          %v6164 = vshrl.u32 %v6163, 7
          %v6165 = vsub.s32 %v6162, %v6164
          %v6166 = vrot.slane %v6159, %v6165
          %v6167 = vcombine.low %v5404, %v5411
          %v6169 = vunpack.c.l.s4 1983009808
          %v6170 = vunpack.c.0.s8 %v6169
          %v6171 = vlaneseq
          %v6172 = vshrl.u32 %v6171, 7
          %v6173 = vsub.s32 %v6170, %v6172
          %v6174 = vrot.slane %v6167, %v6173
          %v6175 = vcombine.low %v5414, %v5415
          %v6177 = vunpack.c.l.s4 1983009808
          %v6178 = vunpack.c.0.s8 %v6177
          %v6179 = vlaneseq
          %v6180 = vshrl.u32 %v6179, 7
          %v6181 = vsub.s32 %v6178, %v6180
          %v6182 = vrot.slane %v6175, %v6181
          %v6183 = vcombine.low %v6158, %v6166
          %v6185 = vunpack.c.l.s4 1934713408
          %v6186 = vunpack.c.0.s8 %v6185
          %v6187 = vlaneseq
          %v6188 = vshrl.u32 %v6187, 7
          %v6189 = vsub.s32 %v6186, %v6188
          %v6190 = vrot.slane %v6183, %v6189
          %v6191 = vcombine.low %v6174, %v6182
          %v6193 = vunpack.c.l.s4 1934713408
          %v6194 = vunpack.c.0.s8 %v6193
          %v6195 = vlaneseq
          %v6196 = vshrl.u32 %v6195, 7
          %v6197 = vsub.s32 %v6194, %v6196
          %v6198 = vrot.slane %v6191, %v6197
          %v6199 = vcombine.low %v6190, %v6198
          %v6200 = vcombine.low %v5438, %v5445
          %v6202 = vunpack.c.l.s4 1983009808
          %v6203 = vunpack.c.0.s8 %v6202
          %v6204 = vlaneseq
          %v6205 = vshrl.u32 %v6204, 7
          %v6206 = vsub.s32 %v6203, %v6205
          %v6207 = vrot.slane %v6200, %v6206
          %v6208 = vcombine.low %v5461, %v5462
          %v6210 = vunpack.c.l.s4 1983009808
          %v6211 = vunpack.c.0.s8 %v6210
          %v6212 = vlaneseq
          %v6213 = vshrl.u32 %v6212, 7
          %v6214 = vsub.s32 %v6211, %v6213
          %v6215 = vrot.slane %v6208, %v6214
          %v6216 = vcombine.low %v5453, %v5460
          %v6218 = vunpack.c.l.s4 1983009808
          %v6219 = vunpack.c.0.s8 %v6218
          %v6220 = vlaneseq
          %v6221 = vshrl.u32 %v6220, 7
          %v6222 = vsub.s32 %v6219, %v6221
          %v6223 = vrot.slane %v6216, %v6222
          %v6224 = vcombine.low %v5463, %v5464
          %v6226 = vunpack.c.l.s4 1983009808
          %v6227 = vunpack.c.0.s8 %v6226
          %v6228 = vlaneseq
          %v6229 = vshrl.u32 %v6228, 7
          %v6230 = vsub.s32 %v6227, %v6229
          %v6231 = vrot.slane %v6224, %v6230
          %v6232 = vcombine.low %v6207, %v6215
          %v6234 = vunpack.c.l.s4 1934713408
          %v6235 = vunpack.c.0.s8 %v6234
          %v6236 = vlaneseq
          %v6237 = vshrl.u32 %v6236, 7
          %v6238 = vsub.s32 %v6235, %v6237
          %v6239 = vrot.slane %v6232, %v6238
          %v6240 = vcombine.low %v6223, %v6231
          %v6242 = vunpack.c.l.s4 1934713408
          %v6243 = vunpack.c.0.s8 %v6242
          %v6244 = vlaneseq
          %v6245 = vshrl.u32 %v6244, 7
          %v6246 = vsub.s32 %v6243, %v6245
          %v6247 = vrot.slane %v6240, %v6246
          %v6248 = vcombine.low %v6239, %v6247
          %v6249 = vcombine.low %v5487, %v5494
          %v6251 = vunpack.c.l.s4 1983009808
          %v6252 = vunpack.c.0.s8 %v6251
          %v6253 = vlaneseq
          %v6254 = vshrl.u32 %v6253, 7
          %v6255 = vsub.s32 %v6252, %v6254
          %v6256 = vrot.slane %v6249, %v6255
          %v6257 = vcombine.low %v5510, %v5511
          %v6259 = vunpack.c.l.s4 1983009808
          %v6260 = vunpack.c.0.s8 %v6259
          %v6261 = vlaneseq
          %v6262 = vshrl.u32 %v6261, 7
          %v6263 = vsub.s32 %v6260, %v6262
          %v6264 = vrot.slane %v6257, %v6263
          %v6265 = vcombine.low %v5502, %v5509
          %v6267 = vunpack.c.l.s4 1983009808
          %v6268 = vunpack.c.0.s8 %v6267
          %v6269 = vlaneseq
          %v6270 = vshrl.u32 %v6269, 7
          %v6271 = vsub.s32 %v6268, %v6270
          %v6272 = vrot.slane %v6265, %v6271
          %v6273 = vcombine.low %v5512, %v5513
          %v6275 = vunpack.c.l.s4 1983009808
          %v6276 = vunpack.c.0.s8 %v6275
          %v6277 = vlaneseq
          %v6278 = vshrl.u32 %v6277, 7
          %v6279 = vsub.s32 %v6276, %v6278
          %v6280 = vrot.slane %v6273, %v6279
          %v6281 = vcombine.low %v6256, %v6264
          %v6283 = vunpack.c.l.s4 1934713408
          %v6284 = vunpack.c.0.s8 %v6283
          %v6285 = vlaneseq
          %v6286 = vshrl.u32 %v6285, 7
          %v6287 = vsub.s32 %v6284, %v6286
          %v6288 = vrot.slane %v6281, %v6287
          %v6289 = vcombine.low %v6272, %v6280
          %v6291 = vunpack.c.l.s4 1934713408
          %v6292 = vunpack.c.0.s8 %v6291
          %v6293 = vlaneseq
          %v6294 = vshrl.u32 %v6293, 7
          %v6295 = vsub.s32 %v6292, %v6294
          %v6296 = vrot.slane %v6289, %v6295
          %v6297 = vcombine.low %v6288, %v6296
          %v6298 = vcombine.low %v5536, %v5543
          %v6300 = vunpack.c.l.s4 1983009808
          %v6301 = vunpack.c.0.s8 %v6300
          %v6302 = vlaneseq
          %v6303 = vshrl.u32 %v6302, 7
          %v6304 = vsub.s32 %v6301, %v6303
          %v6305 = vrot.slane %v6298, %v6304
          %v6306 = vcombine.low %v5559, %v5560
          %v6308 = vunpack.c.l.s4 1983009808
          %v6309 = vunpack.c.0.s8 %v6308
          %v6310 = vlaneseq
          %v6311 = vshrl.u32 %v6310, 7
          %v6312 = vsub.s32 %v6309, %v6311
          %v6313 = vrot.slane %v6306, %v6312
          %v6314 = vcombine.low %v5551, %v5558
          %v6316 = vunpack.c.l.s4 1983009808
          %v6317 = vunpack.c.0.s8 %v6316
          %v6318 = vlaneseq
          %v6319 = vshrl.u32 %v6318, 7
          %v6320 = vsub.s32 %v6317, %v6319
          %v6321 = vrot.slane %v6314, %v6320
          %v6322 = vcombine.low %v5561, %v5562
          %v6324 = vunpack.c.l.s4 1983009808
          %v6325 = vunpack.c.0.s8 %v6324
          %v6326 = vlaneseq
          %v6327 = vshrl.u32 %v6326, 7
          %v6328 = vsub.s32 %v6325, %v6327
          %v6329 = vrot.slane %v6322, %v6328
          %v6330 = vcombine.low %v6305, %v6313
          %v6332 = vunpack.c.l.s4 1934713408
          %v6333 = vunpack.c.0.s8 %v6332
          %v6334 = vlaneseq
          %v6335 = vshrl.u32 %v6334, 7
          %v6336 = vsub.s32 %v6333, %v6335
          %v6337 = vrot.slane %v6330, %v6336
          %v6338 = vcombine.low %v6321, %v6329
          %v6340 = vunpack.c.l.s4 1934713408
          %v6341 = vunpack.c.0.s8 %v6340
          %v6342 = vlaneseq
          %v6343 = vshrl.u32 %v6342, 7
          %v6344 = vsub.s32 %v6341, %v6343
          %v6345 = vrot.slane %v6338, %v6344
          %v6346 = vcombine.low %v6337, %v6345
          %v6347 = vcombine.low %v5585, %v5592
          %v6349 = vunpack.c.l.s4 1983009808
          %v6350 = vunpack.c.0.s8 %v6349
          %v6351 = vlaneseq
          %v6352 = vshrl.u32 %v6351, 7
          %v6353 = vsub.s32 %v6350, %v6352
          %v6354 = vrot.slane %v6347, %v6353
          %v6355 = vcombine.low %v5608, %v5609
          %v6357 = vunpack.c.l.s4 1983009808
          %v6358 = vunpack.c.0.s8 %v6357
          %v6359 = vlaneseq
          %v6360 = vshrl.u32 %v6359, 7
          %v6361 = vsub.s32 %v6358, %v6360
          %v6362 = vrot.slane %v6355, %v6361
          %v6363 = vcombine.low %v5600, %v5607
          %v6365 = vunpack.c.l.s4 1983009808
          %v6366 = vunpack.c.0.s8 %v6365
          %v6367 = vlaneseq
          %v6368 = vshrl.u32 %v6367, 7
          %v6369 = vsub.s32 %v6366, %v6368
          %v6370 = vrot.slane %v6363, %v6369
          %v6371 = vcombine.low %v5610, %v5611
          %v6373 = vunpack.c.l.s4 1983009808
          %v6374 = vunpack.c.0.s8 %v6373
          %v6375 = vlaneseq
          %v6376 = vshrl.u32 %v6375, 7
          %v6377 = vsub.s32 %v6374, %v6376
          %v6378 = vrot.slane %v6371, %v6377
          %v6379 = vcombine.low %v6354, %v6362
          %v6381 = vunpack.c.l.s4 1934713408
          %v6382 = vunpack.c.0.s8 %v6381
          %v6383 = vlaneseq
          %v6384 = vshrl.u32 %v6383, 7
          %v6385 = vsub.s32 %v6382, %v6384
          %v6386 = vrot.slane %v6379, %v6385
          %v6387 = vcombine.low %v6370, %v6378
          %v6389 = vunpack.c.l.s4 1934713408
          %v6390 = vunpack.c.0.s8 %v6389
          %v6391 = vlaneseq
          %v6392 = vshrl.u32 %v6391, 7
          %v6393 = vsub.s32 %v6390, %v6392
          %v6394 = vrot.slane %v6387, %v6393
          %v6395 = vcombine.low %v6386, %v6394
          %v6396 = vcombine.low %v5634, %v5641
          %v6398 = vunpack.c.l.s4 1983009808
          %v6399 = vunpack.c.0.s8 %v6398
          %v6400 = vlaneseq
          %v6401 = vshrl.u32 %v6400, 7
          %v6402 = vsub.s32 %v6399, %v6401
          %v6403 = vrot.slane %v6396, %v6402
          %v6404 = vcombine.low %v5657, %v5658
          %v6406 = vunpack.c.l.s4 1983009808
          %v6407 = vunpack.c.0.s8 %v6406
          %v6408 = vlaneseq
          %v6409 = vshrl.u32 %v6408, 7
          %v6410 = vsub.s32 %v6407, %v6409
          %v6411 = vrot.slane %v6404, %v6410
          %v6412 = vcombine.low %v5649, %v5656
          %v6414 = vunpack.c.l.s4 1983009808
          %v6415 = vunpack.c.0.s8 %v6414
          %v6416 = vlaneseq
          %v6417 = vshrl.u32 %v6416, 7
          %v6418 = vsub.s32 %v6415, %v6417
          %v6419 = vrot.slane %v6412, %v6418
          %v6420 = vcombine.low %v5659, %v5660
          %v6422 = vunpack.c.l.s4 1983009808
          %v6423 = vunpack.c.0.s8 %v6422
          %v6424 = vlaneseq
          %v6425 = vshrl.u32 %v6424, 7
          %v6426 = vsub.s32 %v6423, %v6425
          %v6427 = vrot.slane %v6420, %v6426
          %v6428 = vcombine.low %v6403, %v6411
          %v6430 = vunpack.c.l.s4 1934713408
          %v6431 = vunpack.c.0.s8 %v6430
          %v6432 = vlaneseq
          %v6433 = vshrl.u32 %v6432, 7
          %v6434 = vsub.s32 %v6431, %v6433
          %v6435 = vrot.slane %v6428, %v6434
          %v6436 = vcombine.low %v6419, %v6427
          %v6438 = vunpack.c.l.s4 1934713408
          %v6439 = vunpack.c.0.s8 %v6438
          %v6440 = vlaneseq
          %v6441 = vshrl.u32 %v6440, 7
          %v6442 = vsub.s32 %v6439, %v6441
          %v6443 = vrot.slane %v6436, %v6442
          %v6444 = vcombine.low %v6435, %v6443
          %v6445 = vcombine.low %v5683, %v5690
          %v6447 = vunpack.c.l.s4 1983009808
          %v6448 = vunpack.c.0.s8 %v6447
          %v6449 = vlaneseq
          %v6450 = vshrl.u32 %v6449, 7
          %v6451 = vsub.s32 %v6448, %v6450
          %v6452 = vrot.slane %v6445, %v6451
          %v6453 = vcombine.low %v5706, %v5707
          %v6455 = vunpack.c.l.s4 1983009808
          %v6456 = vunpack.c.0.s8 %v6455
          %v6457 = vlaneseq
          %v6458 = vshrl.u32 %v6457, 7
          %v6459 = vsub.s32 %v6456, %v6458
          %v6460 = vrot.slane %v6453, %v6459
          %v6461 = vcombine.low %v5698, %v5705
          %v6463 = vunpack.c.l.s4 1983009808
          %v6464 = vunpack.c.0.s8 %v6463
          %v6465 = vlaneseq
          %v6466 = vshrl.u32 %v6465, 7
          %v6467 = vsub.s32 %v6464, %v6466
          %v6468 = vrot.slane %v6461, %v6467
          %v6469 = vcombine.low %v5708, %v5709
          %v6471 = vunpack.c.l.s4 1983009808
          %v6472 = vunpack.c.0.s8 %v6471
          %v6473 = vlaneseq
          %v6474 = vshrl.u32 %v6473, 7
          %v6475 = vsub.s32 %v6472, %v6474
          %v6476 = vrot.slane %v6469, %v6475
          %v6477 = vcombine.low %v6452, %v6460
          %v6479 = vunpack.c.l.s4 1934713408
          %v6480 = vunpack.c.0.s8 %v6479
          %v6481 = vlaneseq
          %v6482 = vshrl.u32 %v6481, 7
          %v6483 = vsub.s32 %v6480, %v6482
          %v6484 = vrot.slane %v6477, %v6483
          %v6485 = vcombine.low %v6468, %v6476
          %v6487 = vunpack.c.l.s4 1934713408
          %v6488 = vunpack.c.0.s8 %v6487
          %v6489 = vlaneseq
          %v6490 = vshrl.u32 %v6489, 7
          %v6491 = vsub.s32 %v6488, %v6490
          %v6492 = vrot.slane %v6485, %v6491
          %v6493 = vcombine.low %v6484, %v6492
          %v6494 = vcombine.low %v5732, %v5739
          %v6496 = vunpack.c.l.s4 1983009808
          %v6497 = vunpack.c.0.s8 %v6496
          %v6498 = vlaneseq
          %v6499 = vshrl.u32 %v6498, 7
          %v6500 = vsub.s32 %v6497, %v6499
          %v6501 = vrot.slane %v6494, %v6500
          %v6502 = vcombine.low %v5755, %v5756
          %v6504 = vunpack.c.l.s4 1983009808
          %v6505 = vunpack.c.0.s8 %v6504
          %v6506 = vlaneseq
          %v6507 = vshrl.u32 %v6506, 7
          %v6508 = vsub.s32 %v6505, %v6507
          %v6509 = vrot.slane %v6502, %v6508
          %v6510 = vcombine.low %v5747, %v5754
          %v6512 = vunpack.c.l.s4 1983009808
          %v6513 = vunpack.c.0.s8 %v6512
          %v6514 = vlaneseq
          %v6515 = vshrl.u32 %v6514, 7
          %v6516 = vsub.s32 %v6513, %v6515
          %v6517 = vrot.slane %v6510, %v6516
          %v6518 = vcombine.low %v5757, %v5758
          %v6520 = vunpack.c.l.s4 1983009808
          %v6521 = vunpack.c.0.s8 %v6520
          %v6522 = vlaneseq
          %v6523 = vshrl.u32 %v6522, 7
          %v6524 = vsub.s32 %v6521, %v6523
          %v6525 = vrot.slane %v6518, %v6524
          %v6526 = vcombine.low %v6501, %v6509
          %v6528 = vunpack.c.l.s4 1934713408
          %v6529 = vunpack.c.0.s8 %v6528
          %v6530 = vlaneseq
          %v6531 = vshrl.u32 %v6530, 7
          %v6532 = vsub.s32 %v6529, %v6531
          %v6533 = vrot.slane %v6526, %v6532
          %v6534 = vcombine.low %v6517, %v6525
          %v6536 = vunpack.c.l.s4 1934713408
          %v6537 = vunpack.c.0.s8 %v6536
          %v6538 = vlaneseq
          %v6539 = vshrl.u32 %v6538, 7
          %v6540 = vsub.s32 %v6537, %v6539
          %v6541 = vrot.slane %v6534, %v6540
          %v6542 = vcombine.low %v6533, %v6541
          %v6543 = vcombine.low %v5781, %v5788
          %v6545 = vunpack.c.l.s4 1983009808
          %v6546 = vunpack.c.0.s8 %v6545
          %v6547 = vlaneseq
          %v6548 = vshrl.u32 %v6547, 7
          %v6549 = vsub.s32 %v6546, %v6548
          %v6550 = vrot.slane %v6543, %v6549
          %v6551 = vcombine.low %v5804, %v5805
          %v6553 = vunpack.c.l.s4 1983009808
          %v6554 = vunpack.c.0.s8 %v6553
          %v6555 = vlaneseq
          %v6556 = vshrl.u32 %v6555, 7
          %v6557 = vsub.s32 %v6554, %v6556
          %v6558 = vrot.slane %v6551, %v6557
          %v6559 = vcombine.low %v5796, %v5803
          %v6561 = vunpack.c.l.s4 1983009808
          %v6562 = vunpack.c.0.s8 %v6561
          %v6563 = vlaneseq
          %v6564 = vshrl.u32 %v6563, 7
          %v6565 = vsub.s32 %v6562, %v6564
          %v6566 = vrot.slane %v6559, %v6565
          %v6567 = vcombine.low %v5806, %v5807
          %v6569 = vunpack.c.l.s4 1983009808
          %v6570 = vunpack.c.0.s8 %v6569
          %v6571 = vlaneseq
          %v6572 = vshrl.u32 %v6571, 7
          %v6573 = vsub.s32 %v6570, %v6572
          %v6574 = vrot.slane %v6567, %v6573
          %v6575 = vcombine.low %v6550, %v6558
          %v6577 = vunpack.c.l.s4 1934713408
          %v6578 = vunpack.c.0.s8 %v6577
          %v6579 = vlaneseq
          %v6580 = vshrl.u32 %v6579, 7
          %v6581 = vsub.s32 %v6578, %v6580
          %v6582 = vrot.slane %v6575, %v6581
          %v6583 = vcombine.low %v6566, %v6574
          %v6585 = vunpack.c.l.s4 1934713408
          %v6586 = vunpack.c.0.s8 %v6585
          %v6587 = vlaneseq
          %v6588 = vshrl.u32 %v6587, 7
          %v6589 = vsub.s32 %v6586, %v6588
          %v6590 = vrot.slane %v6583, %v6589
          %v6591 = vcombine.low %v6582, %v6590
          %v6592 = vcombine.low %v5830, %v5837
          %v6594 = vunpack.c.l.s4 1983009808
          %v6595 = vunpack.c.0.s8 %v6594
          %v6596 = vlaneseq
          %v6597 = vshrl.u32 %v6596, 7
          %v6598 = vsub.s32 %v6595, %v6597
          %v6599 = vrot.slane %v6592, %v6598
          %v6600 = vcombine.low %v5853, %v5854
          %v6602 = vunpack.c.l.s4 1983009808
          %v6603 = vunpack.c.0.s8 %v6602
          %v6604 = vlaneseq
          %v6605 = vshrl.u32 %v6604, 7
          %v6606 = vsub.s32 %v6603, %v6605
          %v6607 = vrot.slane %v6600, %v6606
          %v6608 = vcombine.low %v5845, %v5852
          %v6610 = vunpack.c.l.s4 1983009808
          %v6611 = vunpack.c.0.s8 %v6610
          %v6612 = vlaneseq
          %v6613 = vshrl.u32 %v6612, 7
          %v6614 = vsub.s32 %v6611, %v6613
          %v6615 = vrot.slane %v6608, %v6614
          %v6616 = vcombine.low %v5855, %v5856
          %v6618 = vunpack.c.l.s4 1983009808
          %v6619 = vunpack.c.0.s8 %v6618
          %v6620 = vlaneseq
          %v6621 = vshrl.u32 %v6620, 7
          %v6622 = vsub.s32 %v6619, %v6621
          %v6623 = vrot.slane %v6616, %v6622
          %v6624 = vcombine.low %v6599, %v6607
          %v6626 = vunpack.c.l.s4 1934713408
          %v6627 = vunpack.c.0.s8 %v6626
          %v6628 = vlaneseq
          %v6629 = vshrl.u32 %v6628, 7
          %v6630 = vsub.s32 %v6627, %v6629
          %v6631 = vrot.slane %v6624, %v6630
          %v6632 = vcombine.low %v6615, %v6623
          %v6634 = vunpack.c.l.s4 1934713408
          %v6635 = vunpack.c.0.s8 %v6634
          %v6636 = vlaneseq
          %v6637 = vshrl.u32 %v6636, 7
          %v6638 = vsub.s32 %v6635, %v6637
          %v6639 = vrot.slane %v6632, %v6638
          %v6640 = vcombine.low %v6631, %v6639
          %v6641 = vcombine.low %v5879, %v5886
          %v6643 = vunpack.c.l.s4 1983009808
          %v6644 = vunpack.c.0.s8 %v6643
          %v6645 = vlaneseq
          %v6646 = vshrl.u32 %v6645, 7
          %v6647 = vsub.s32 %v6644, %v6646
          %v6648 = vrot.slane %v6641, %v6647
          %v6649 = vcombine.low %v5902, %v5903
          %v6651 = vunpack.c.l.s4 1983009808
          %v6652 = vunpack.c.0.s8 %v6651
          %v6653 = vlaneseq
          %v6654 = vshrl.u32 %v6653, 7
          %v6655 = vsub.s32 %v6652, %v6654
          %v6656 = vrot.slane %v6649, %v6655
          %v6657 = vcombine.low %v5894, %v5901
          %v6659 = vunpack.c.l.s4 1983009808
          %v6660 = vunpack.c.0.s8 %v6659
          %v6661 = vlaneseq
          %v6662 = vshrl.u32 %v6661, 7
          %v6663 = vsub.s32 %v6660, %v6662
          %v6664 = vrot.slane %v6657, %v6663
          %v6665 = vcombine.low %v5904, %v5905
          %v6667 = vunpack.c.l.s4 1983009808
          %v6668 = vunpack.c.0.s8 %v6667
          %v6669 = vlaneseq
          %v6670 = vshrl.u32 %v6669, 7
          %v6671 = vsub.s32 %v6668, %v6670
          %v6672 = vrot.slane %v6665, %v6671
          %v6673 = vcombine.low %v6648, %v6656
          %v6675 = vunpack.c.l.s4 1934713408
          %v6676 = vunpack.c.0.s8 %v6675
          %v6677 = vlaneseq
          %v6678 = vshrl.u32 %v6677, 7
          %v6679 = vsub.s32 %v6676, %v6678
          %v6680 = vrot.slane %v6673, %v6679
          %v6681 = vcombine.low %v6664, %v6672
          %v6683 = vunpack.c.l.s4 1934713408
          %v6684 = vunpack.c.0.s8 %v6683
          %v6685 = vlaneseq
          %v6686 = vshrl.u32 %v6685, 7
          %v6687 = vsub.s32 %v6684, %v6686
          %v6688 = vrot.slane %v6681, %v6687
          %v6689 = vcombine.low %v6680, %v6688
          %v6690 = vcombine.low %v5928, %v5935
          %v6692 = vunpack.c.l.s4 1983009808
          %v6693 = vunpack.c.0.s8 %v6692
          %v6694 = vlaneseq
          %v6695 = vshrl.u32 %v6694, 7
          %v6696 = vsub.s32 %v6693, %v6695
          %v6697 = vrot.slane %v6690, %v6696
          %v6698 = vcombine.low %v5951, %v5952
          %v6700 = vunpack.c.l.s4 1983009808
          %v6701 = vunpack.c.0.s8 %v6700
          %v6702 = vlaneseq
          %v6703 = vshrl.u32 %v6702, 7
          %v6704 = vsub.s32 %v6701, %v6703
          %v6705 = vrot.slane %v6698, %v6704
          %v6706 = vcombine.low %v5943, %v5950
          %v6708 = vunpack.c.l.s4 1983009808
          %v6709 = vunpack.c.0.s8 %v6708
          %v6710 = vlaneseq
          %v6711 = vshrl.u32 %v6710, 7
          %v6712 = vsub.s32 %v6709, %v6711
          %v6713 = vrot.slane %v6706, %v6712
          %v6714 = vcombine.low %v5953, %v5954
          %v6716 = vunpack.c.l.s4 1983009808
          %v6717 = vunpack.c.0.s8 %v6716
          %v6718 = vlaneseq
          %v6719 = vshrl.u32 %v6718, 7
          %v6720 = vsub.s32 %v6717, %v6719
          %v6721 = vrot.slane %v6714, %v6720
          %v6722 = vcombine.low %v6697, %v6705
          %v6724 = vunpack.c.l.s4 1934713408
          %v6725 = vunpack.c.0.s8 %v6724
          %v6726 = vlaneseq
          %v6727 = vshrl.u32 %v6726, 7
          %v6728 = vsub.s32 %v6725, %v6727
          %v6729 = vrot.slane %v6722, %v6728
          %v6730 = vcombine.low %v6713, %v6721
          %v6732 = vunpack.c.l.s4 1934713408
          %v6733 = vunpack.c.0.s8 %v6732
          %v6734 = vlaneseq
          %v6735 = vshrl.u32 %v6734, 7
          %v6736 = vsub.s32 %v6733, %v6735
          %v6737 = vrot.slane %v6730, %v6736
          %v6738 = vcombine.low %v6729, %v6737
          %v6741 = vpack.i.b16 %v6052, %v6003
          %v6743 = vshrl.u32 %v6003, 16
          %v6744 = vshrl.u32 %v6052, 16
          %v6745 = vpack.i.b16 %v6744, %v6743
          %v6749 = vpack.i.b16 %v6150, %v6101
          %v6751 = vshrl.u32 %v6101, 16
          %v6752 = vshrl.u32 %v6150, 16
          %v6753 = vpack.i.b16 %v6752, %v6751
          %v6757 = vpack.i.b16 %v6248, %v6199
          %v6759 = vshrl.u32 %v6199, 16
          %v6760 = vshrl.u32 %v6248, 16
          %v6761 = vpack.i.b16 %v6760, %v6759
          %v6765 = vpack.i.b16 %v6346, %v6297
          %v6767 = vshrl.u32 %v6297, 16
          %v6768 = vshrl.u32 %v6346, 16
          %v6769 = vpack.i.b16 %v6768, %v6767
          %v6773 = vpack.i.b16 %v6444, %v6395
          %v6775 = vshrl.u32 %v6395, 16
          %v6776 = vshrl.u32 %v6444, 16
          %v6777 = vpack.i.b16 %v6776, %v6775
          %v6781 = vpack.i.b16 %v6542, %v6493
          %v6783 = vshrl.u32 %v6493, 16
          %v6784 = vshrl.u32 %v6542, 16
          %v6785 = vpack.i.b16 %v6784, %v6783
          %v6789 = vpack.i.b16 %v6640, %v6591
          %v6791 = vshrl.u32 %v6591, 16
          %v6792 = vshrl.u32 %v6640, 16
          %v6793 = vpack.i.b16 %v6792, %v6791
          %v6797 = vpack.i.b16 %v6738, %v6689
          %v6799 = vshrl.u32 %v6689, 16
          %v6800 = vshrl.u32 %v6738, 16
          %v6801 = vpack.i.b16 %v6800, %v6799
          %v6803 = vld [vmem:[%s705] sm:$0xf]
          %v6804 = vld [vmem:[%s705 + $0x4] sm:$0xf]
          %v6805 = vld [vmem:[%s705 + $0x8] sm:$0xf]
          %v6806 = vld [vmem:[%s705 + $0xc] sm:$0xf]
          %v6807 = vld [vmem:[%s705 + $0x10] sm:$0xf]
          %v6808 = vld [vmem:[%s705 + $0x14] sm:$0xf]
          %v6809 = vld [vmem:[%s705 + $0x18] sm:$0xf]
          %v6810 = vld [vmem:[%s705 + $0x1c] sm:$0xf]
          %v6811 = vld [vmem:[%s705 + $0x20] sm:$0xf]
          %v6812 = vld [vmem:[%s705 + $0x24] sm:$0xf]
          %v6813 = vld [vmem:[%s705 + $0x28] sm:$0xf]
          %v6814 = vld [vmem:[%s705 + $0x2c] sm:$0xf]
          %v6815 = vld [vmem:[%s705 + $0x30] sm:$0xf]
          %v6816 = vld [vmem:[%s705 + $0x34] sm:$0xf]
          %v6817 = vld [vmem:[%s705 + $0x38] sm:$0xf]
          %v6818 = vld [vmem:[%s705 + $0x3c] sm:$0xf]
          %v6819 = vld [vmem:[%s705 + $0x40] sm:$0xf]
          %v6820 = vld [vmem:[%s705 + $0x44] sm:$0xf]
          %v6821 = vld [vmem:[%s705 + $0x48] sm:$0xf]
          %v6822 = vld [vmem:[%s705 + $0x4c] sm:$0xf]
          %v6823 = vld [vmem:[%s705 + $0x50] sm:$0xf]
          %v6824 = vld [vmem:[%s705 + $0x54] sm:$0xf]
          %v6825 = vld [vmem:[%s705 + $0x58] sm:$0xf]
          %v6826 = vld [vmem:[%s705 + $0x5c] sm:$0xf]
          %v6827 = vld [vmem:[%s705 + $0x60] sm:$0xf]
          %v6828 = vld [vmem:[%s705 + $0x64] sm:$0xf]
          %v6829 = vld [vmem:[%s705 + $0x68] sm:$0xf]
          %v6830 = vld [vmem:[%s705 + $0x6c] sm:$0xf]
          %v6831 = vld [vmem:[%s705 + $0x70] sm:$0xf]
          %v6832 = vld [vmem:[%s705 + $0x74] sm:$0xf]
          %v6833 = vld [vmem:[%s705 + $0x78] sm:$0xf]
          %v6834 = vld [vmem:[%s705 + $0x7c] sm:$0xf]
          %v6835 = vunpack.c.l.bf16 %v6803
          %v6836 = vunpack.c.l.bf16 %v6804
          %v6837 = vunpack.c.l.bf16 %v6805
          %v6838 = vunpack.c.l.bf16 %v6806
          %v6839 = vunpack.c.l.bf16 %v6807
          %v6840 = vunpack.c.l.bf16 %v6808
          %v6841 = vunpack.c.l.bf16 %v6809
          %v6842 = vunpack.c.l.bf16 %v6810
          %v6843 = vunpack.c.l.bf16 %v6811
          %v6844 = vunpack.c.l.bf16 %v6812
          %v6845 = vunpack.c.l.bf16 %v6813
          %v6846 = vunpack.c.l.bf16 %v6814
          %v6847 = vunpack.c.l.bf16 %v6815
          %v6848 = vunpack.c.l.bf16 %v6816
          %v6849 = vunpack.c.l.bf16 %v6817
          %v6850 = vunpack.c.l.bf16 %v6818
          %v6851 = vunpack.c.l.bf16 %v6819
          %v6852 = vunpack.c.l.bf16 %v6820
          %v6853 = vunpack.c.l.bf16 %v6821
          %v6854 = vunpack.c.l.bf16 %v6822
          %v6855 = vunpack.c.l.bf16 %v6823
          %v6856 = vunpack.c.l.bf16 %v6824
          %v6857 = vunpack.c.l.bf16 %v6825
          %v6858 = vunpack.c.l.bf16 %v6826
          %v6859 = vunpack.c.l.bf16 %v6827
          %v6860 = vunpack.c.l.bf16 %v6828
          %v6861 = vunpack.c.l.bf16 %v6829
          %v6862 = vunpack.c.l.bf16 %v6830
          %v6863 = vunpack.c.l.bf16 %v6831
          %v6864 = vunpack.c.l.bf16 %v6832
          %v6865 = vunpack.c.l.bf16 %v6833
          %v6866 = vunpack.c.l.bf16 %v6834
          %vm6867 = vcmask 523264
          %v6869 = vsel %vm6867, %v3317, 0
          %v6872 = vsel %vm6867, %v3323, 0
          %v6875 = vsel %vm6867, %v3329, 0
          %v6878 = vsel %vm6867, %v3335, 0
          %v6881 = vsel %vm6867, %v3341, 0
          %v6884 = vsel %vm6867, %v3347, 0
          %v6887 = vsel %vm6867, %v3353, 0
          %v6890 = vsel %vm6867, %v3359, 0
          %v6893 = vsel %vm6867, %v5029, 0
          %v6896 = vsel %vm6867, %v5035, 0
          %v6899 = vsel %vm6867, %v5041, 0
          %v6902 = vsel %vm6867, %v5047, 0
          %v6905 = vsel %vm6867, %v5053, 0
          %v6908 = vsel %vm6867, %v5059, 0
          %v6911 = vsel %vm6867, %v5065, 0
          %v6914 = vsel %vm6867, %v5071, 0
          %6916 = vmatprep.subr.bf16.mxu0 0
          %6917 = vmatpush1.bf16.xpose.msra.mxu0 %v6914
          %6918 = vmatprep.subr.bf16.mxu0 0
          %6919 = vmatpush1.bf16.xpose.msra.mxu0 %v6911
          %6920 = vmatprep.subr.bf16.mxu0 0
          %6921 = vmatpush1.bf16.xpose.msra.mxu0 %v6908
          %6922 = vmatprep.subr.bf16.mxu0 0
          %6923 = vmatpush1.bf16.xpose.msra.mxu0 %v6905
          %6924 = vmatprep.subr.bf16.mxu0 0
          %6925 = vmatpush1.bf16.xpose.msra.mxu0 %v6902
          %6926 = vmatprep.subr.bf16.mxu0 0
          %6927 = vmatpush1.bf16.xpose.msra.mxu0 %v6899
          %6928 = vmatprep.subr.bf16.mxu0 0
          %6929 = vmatpush1.bf16.xpose.msra.mxu0 %v6896
          %6930 = vmatprep.subr.bf16.mxu0 0
          %6931 = vmatpush1.bf16.xpose.msra.mxu0 %v6893
          %6932 = vmatprep.subr.bf16.mxu0 0
          %6933 = vmatpush2.bf16.xpose.msra.mxu0 0
          %6934 = vmatprep.subr.bf16.mxu0 0
          %6935 = vmatpush2.bf16.xpose.msra.mxu0 0
          %6936 = vmatprep.subr.bf16.mxu0 0
          %6937 = vmatpush2.bf16.xpose.msra.mxu0 0
          %6938 = vmatprep.subr.bf16.mxu0 0
          %6939 = vmatpush2.bf16.xpose.msra.mxu0 0
          %6940 = vmatprep.subr.bf16.mxu0 0
          %6941 = vmatpush2.bf16.xpose.msra.mxu0 0
          %6942 = vmatprep.subr.bf16.mxu0 0
          %6943 = vmatpush2.bf16.xpose.msra.mxu0 0
          %6944 = vmatprep.subr.bf16.mxu0 0
          %6945 = vmatpush2.bf16.xpose.msra.mxu0 0
          %6946 = vmatprep.subr.bf16.mxu0 0
          %6947 = vmatpush2.bf16.xpose.msra.mxu0 0
          %6948 = vmatprep.mubr.bf16.mxu0 0
          %6949 = vmatmul.mubr.bf16.gmra.mxu0 %v6869
          %v6950 = vpop.f32.mrf.mxu0
          %v6951 = vadd.f32 %v6835, %v6950
          %v6952 = vpop.f32.mrf.mxu0
          %v6953 = vpop.f32.mrf.mxu0
          %v6954 = vadd.f32 %v6836, %v6953
          %v6955 = vpop.f32.mrf.mxu0
          %6956 = vmatprep.mubr.bf16.mxu0 0
          %6957 = vmatmul.mubr.bf16.gmra.mxu0 %v6872
          %v6958 = vpop.f32.mrf.mxu0
          %v6959 = vadd.f32 %v6837, %v6958
          %v6960 = vpop.f32.mrf.mxu0
          %v6961 = vpop.f32.mrf.mxu0
          %v6962 = vadd.f32 %v6838, %v6961
          %v6963 = vpop.f32.mrf.mxu0
          %6964 = vmatprep.mubr.bf16.mxu0 0
          %6965 = vmatmul.mubr.bf16.gmra.mxu0 %v6875
          %v6966 = vpop.f32.mrf.mxu0
          %v6967 = vadd.f32 %v6839, %v6966
          %v6968 = vpop.f32.mrf.mxu0
          %v6969 = vpop.f32.mrf.mxu0
          %v6970 = vadd.f32 %v6840, %v6969
          %v6971 = vpop.f32.mrf.mxu0
          %6972 = vmatprep.mubr.bf16.mxu0 0
          %6973 = vmatmul.mubr.bf16.gmra.mxu0 %v6878
          %v6974 = vpop.f32.mrf.mxu0
          %v6975 = vadd.f32 %v6841, %v6974
          %v6976 = vpop.f32.mrf.mxu0
          %v6977 = vpop.f32.mrf.mxu0
          %v6978 = vadd.f32 %v6842, %v6977
          %v6979 = vpop.f32.mrf.mxu0
          %6980 = vmatprep.mubr.bf16.mxu0 0
          %6981 = vmatmul.mubr.bf16.gmra.mxu0 %v6881
          %v6982 = vpop.f32.mrf.mxu0
          %v6983 = vadd.f32 %v6843, %v6982
          %v6984 = vpop.f32.mrf.mxu0
          %v6985 = vpop.f32.mrf.mxu0
          %v6986 = vadd.f32 %v6844, %v6985
          %v6987 = vpop.f32.mrf.mxu0
          %6988 = vmatprep.mubr.bf16.mxu0 0
          %6989 = vmatmul.mubr.bf16.gmra.mxu0 %v6884
          %v6990 = vpop.f32.mrf.mxu0
          %v6991 = vadd.f32 %v6845, %v6990
          %v6992 = vpop.f32.mrf.mxu0
          %v6993 = vpop.f32.mrf.mxu0
          %v6994 = vadd.f32 %v6846, %v6993
          %v6995 = vpop.f32.mrf.mxu0
          %6996 = vmatprep.mubr.bf16.mxu0 0
          %6997 = vmatmul.mubr.bf16.gmra.mxu0 %v6887
          %v6998 = vpop.f32.mrf.mxu0
          %v6999 = vadd.f32 %v6847, %v6998
          %v7000 = vpop.f32.mrf.mxu0
          %v7001 = vpop.f32.mrf.mxu0
          %v7002 = vadd.f32 %v6848, %v7001
          %v7003 = vpop.f32.mrf.mxu0
          %7004 = vmatprep.mubr.bf16.mxu0 0
          %7005 = vmatmul.mubr.bf16.gmra.mxu0 %v6890
          %v7006 = vpop.f32.mrf.mxu0
          %v7007 = vadd.f32 %v6849, %v7006
          %v7008 = vpop.f32.mrf.mxu0
          %v7009 = vpop.f32.mrf.mxu0
          %v7010 = vadd.f32 %v6850, %v7009
          %v7011 = vpop.f32.mrf.mxu0
          %7012 = vdwg.mxu0
          %v7014 = vsel %vm6867, %v3320, 0
          %v7017 = vsel %vm6867, %v3326, 0
          %v7020 = vsel %vm6867, %v3332, 0
          %v7023 = vsel %vm6867, %v3338, 0
          %v7026 = vsel %vm6867, %v3344, 0
          %v7029 = vsel %vm6867, %v3350, 0
          %v7032 = vsel %vm6867, %v3356, 0
          %v7035 = vsel %vm6867, %v3362, 0
          %v7038 = vsel %vm6867, %v5032, 0
          %v7041 = vsel %vm6867, %v5038, 0
          %v7044 = vsel %vm6867, %v5044, 0
          %v7047 = vsel %vm6867, %v5050, 0
          %v7050 = vsel %vm6867, %v5056, 0
          %v7053 = vsel %vm6867, %v5062, 0
          %v7056 = vsel %vm6867, %v5068, 0
          %v7059 = vsel %vm6867, %v5074, 0
          %7061 = vmatprep.subr.bf16.mxu0 0
          %7062 = vmatpush1.bf16.xpose.msra.mxu0 %v7059
          %7063 = vmatprep.subr.bf16.mxu0 0
          %7064 = vmatpush1.bf16.xpose.msra.mxu0 %v7056
          %7065 = vmatprep.subr.bf16.mxu0 0
          %7066 = vmatpush1.bf16.xpose.msra.mxu0 %v7053
          %7067 = vmatprep.subr.bf16.mxu0 0
          %7068 = vmatpush1.bf16.xpose.msra.mxu0 %v7050
          %7069 = vmatprep.subr.bf16.mxu0 0
          %7070 = vmatpush1.bf16.xpose.msra.mxu0 %v7047
          %7071 = vmatprep.subr.bf16.mxu0 0
          %7072 = vmatpush1.bf16.xpose.msra.mxu0 %v7044
          %7073 = vmatprep.subr.bf16.mxu0 0
          %7074 = vmatpush1.bf16.xpose.msra.mxu0 %v7041
          %7075 = vmatprep.subr.bf16.mxu0 0
          %7076 = vmatpush1.bf16.xpose.msra.mxu0 %v7038
          %7077 = vmatprep.subr.bf16.mxu0 0
          %7078 = vmatpush2.bf16.xpose.msra.mxu0 0
          %7079 = vmatprep.subr.bf16.mxu0 0
          %7080 = vmatpush2.bf16.xpose.msra.mxu0 0
          %7081 = vmatprep.subr.bf16.mxu0 0
          %7082 = vmatpush2.bf16.xpose.msra.mxu0 0
          %7083 = vmatprep.subr.bf16.mxu0 0
          %7084 = vmatpush2.bf16.xpose.msra.mxu0 0
          %7085 = vmatprep.subr.bf16.mxu0 0
          %7086 = vmatpush2.bf16.xpose.msra.mxu0 0
          %7087 = vmatprep.subr.bf16.mxu0 0
          %7088 = vmatpush2.bf16.xpose.msra.mxu0 0
          %7089 = vmatprep.subr.bf16.mxu0 0
          %7090 = vmatpush2.bf16.xpose.msra.mxu0 0
          %7091 = vmatprep.subr.bf16.mxu0 0
          %7092 = vmatpush2.bf16.xpose.msra.mxu0 0
          %7093 = vmatprep.mubr.bf16.mxu0 0
          %7094 = vmatmul.mubr.bf16.gmra.mxu0 %v7014
          %v7095 = vpop.f32.mrf.mxu0
          %v7096 = vadd.f32 %v6851, %v7095
          %v7097 = vpop.f32.mrf.mxu0
          %v7098 = vpop.f32.mrf.mxu0
          %v7099 = vadd.f32 %v6852, %v7098
          %v7100 = vpop.f32.mrf.mxu0
          %7101 = vmatprep.mubr.bf16.mxu0 0
          %7102 = vmatmul.mubr.bf16.gmra.mxu0 %v7017
          %v7103 = vpop.f32.mrf.mxu0
          %v7104 = vadd.f32 %v6853, %v7103
          %v7105 = vpop.f32.mrf.mxu0
          %v7106 = vpop.f32.mrf.mxu0
          %v7107 = vadd.f32 %v6854, %v7106
          %v7108 = vpop.f32.mrf.mxu0
          %7109 = vmatprep.mubr.bf16.mxu0 0
          %7110 = vmatmul.mubr.bf16.gmra.mxu0 %v7020
          %v7111 = vpop.f32.mrf.mxu0
          %v7112 = vadd.f32 %v6855, %v7111
          %v7113 = vpop.f32.mrf.mxu0
          %v7114 = vpop.f32.mrf.mxu0
          %v7115 = vadd.f32 %v6856, %v7114
          %v7116 = vpop.f32.mrf.mxu0
          %7117 = vmatprep.mubr.bf16.mxu0 0
          %7118 = vmatmul.mubr.bf16.gmra.mxu0 %v7023
          %v7119 = vpop.f32.mrf.mxu0
          %v7120 = vadd.f32 %v6857, %v7119
          %v7121 = vpop.f32.mrf.mxu0
          %v7122 = vpop.f32.mrf.mxu0
          %v7123 = vadd.f32 %v6858, %v7122
          %v7124 = vpop.f32.mrf.mxu0
          %7125 = vmatprep.mubr.bf16.mxu0 0
          %7126 = vmatmul.mubr.bf16.gmra.mxu0 %v7026
          %v7127 = vpop.f32.mrf.mxu0
          %v7128 = vadd.f32 %v6859, %v7127
          %v7129 = vpop.f32.mrf.mxu0
          %v7130 = vpop.f32.mrf.mxu0
          %v7131 = vadd.f32 %v6860, %v7130
          %v7132 = vpop.f32.mrf.mxu0
          %7133 = vmatprep.mubr.bf16.mxu0 0
          %7134 = vmatmul.mubr.bf16.gmra.mxu0 %v7029
          %v7135 = vpop.f32.mrf.mxu0
          %v7136 = vadd.f32 %v6861, %v7135
          %v7137 = vpop.f32.mrf.mxu0
          %v7138 = vpop.f32.mrf.mxu0
          %v7139 = vadd.f32 %v6862, %v7138
          %v7140 = vpop.f32.mrf.mxu0
          %7141 = vmatprep.mubr.bf16.mxu0 0
          %7142 = vmatmul.mubr.bf16.gmra.mxu0 %v7032
          %v7143 = vpop.f32.mrf.mxu0
          %v7144 = vadd.f32 %v6863, %v7143
          %v7145 = vpop.f32.mrf.mxu0
          %v7146 = vpop.f32.mrf.mxu0
          %v7147 = vadd.f32 %v6864, %v7146
          %v7148 = vpop.f32.mrf.mxu0
          %7149 = vmatprep.mubr.bf16.mxu0 0
          %7150 = vmatmul.mubr.bf16.gmra.mxu0 %v7035
          %v7151 = vpop.f32.mrf.mxu0
          %v7152 = vadd.f32 %v6865, %v7151
          %v7153 = vpop.f32.mrf.mxu0
          %v7154 = vpop.f32.mrf.mxu0
          %v7155 = vadd.f32 %v6866, %v7154
          %v7156 = vpop.f32.mrf.mxu0
          %7157 = vdwg.mxu0
          %v7158 = vld [vmem:[%s830] sm:$0x1]
          %vm7159 = vcmp.ne.f32.partialorder %v7158, 0.0
          %v7160 = vsel %vm7159, 1, 0
          %v7161 = vlaneseq
          %v7162 = vshrl.u32 %v7161, 7
          %v7163 = vsub.s32 0, %v7162
          %v7164 = vrot.slane %v7160, %v7163
          %vm7165 = vcmp.eq.s32.totalorder %v7164, 1
          %v7166 = vsel %vm7165, %v6951, -1e+09
          %v7167 = vsel %vm7165, %v6954, -1e+09
          %v7168 = vsel %vm7165, %v6959, -1e+09
          %v7169 = vsel %vm7165, %v6962, -1e+09
          %v7170 = vsel %vm7165, %v6967, -1e+09
          %v7171 = vsel %vm7165, %v6970, -1e+09
          %v7172 = vsel %vm7165, %v6975, -1e+09
          %v7173 = vsel %vm7165, %v6978, -1e+09
          %v7174 = vsel %vm7165, %v6983, -1e+09
          %v7175 = vsel %vm7165, %v6986, -1e+09
          %v7176 = vsel %vm7165, %v6991, -1e+09
          %v7177 = vsel %vm7165, %v6994, -1e+09
          %v7178 = vsel %vm7165, %v6999, -1e+09
          %v7179 = vsel %vm7165, %v7002, -1e+09
          %v7180 = vsel %vm7165, %v7007, -1e+09
          %v7181 = vsel %vm7165, %v7010, -1e+09
          %v7182 = vsel %vm7165, %v7096, -1e+09
          %v7183 = vsel %vm7165, %v7099, -1e+09
          %v7184 = vsel %vm7165, %v7104, -1e+09
          %v7185 = vsel %vm7165, %v7107, -1e+09
          %v7186 = vsel %vm7165, %v7112, -1e+09
          %v7187 = vsel %vm7165, %v7115, -1e+09
          %v7188 = vsel %vm7165, %v7120, -1e+09
          %v7189 = vsel %vm7165, %v7123, -1e+09
          %v7190 = vsel %vm7165, %v7128, -1e+09
          %v7191 = vsel %vm7165, %v7131, -1e+09
          %v7192 = vsel %vm7165, %v7136, -1e+09
          %v7193 = vsel %vm7165, %v7139, -1e+09
          %v7194 = vsel %vm7165, %v7144, -1e+09
          %v7195 = vsel %vm7165, %v7147, -1e+09
          %v7196 = vsel %vm7165, %v7152, -1e+09
          %v7197 = vsel %vm7165, %v7155, -1e+09
          %7198 = vmax.xlane.f32.xlu0 %v7166
          %v7199 = vpop.xlane.xlu0 %7198
          %7200 = vmax.xlane.f32.xlu0 %v7167
          %v7201 = vpop.xlane.xlu0 %7200
          %7202 = vmax.xlane.f32.xlu0 %v7168
          %v7203 = vpop.xlane.xlu0 %7202
          %7204 = vmax.xlane.f32.xlu0 %v7169
          %v7205 = vpop.xlane.xlu0 %7204
          %7206 = vmax.xlane.f32.xlu0 %v7170
          %v7207 = vpop.xlane.xlu0 %7206
          %7208 = vmax.xlane.f32.xlu0 %v7171
          %v7209 = vpop.xlane.xlu0 %7208
          %7210 = vmax.xlane.f32.xlu0 %v7172
          %v7211 = vpop.xlane.xlu0 %7210
          %7212 = vmax.xlane.f32.xlu0 %v7173
          %v7213 = vpop.xlane.xlu0 %7212
          %7214 = vmax.xlane.f32.xlu0 %v7174
          %v7215 = vpop.xlane.xlu0 %7214
          %7216 = vmax.xlane.f32.xlu0 %v7175
          %v7217 = vpop.xlane.xlu0 %7216
          %7218 = vmax.xlane.f32.xlu0 %v7176
          %v7219 = vpop.xlane.xlu0 %7218
          %7220 = vmax.xlane.f32.xlu0 %v7177
          %v7221 = vpop.xlane.xlu0 %7220
          %7222 = vmax.xlane.f32.xlu0 %v7178
          %v7223 = vpop.xlane.xlu0 %7222
          %7224 = vmax.xlane.f32.xlu0 %v7179
          %v7225 = vpop.xlane.xlu0 %7224
          %7226 = vmax.xlane.f32.xlu0 %v7180
          %v7227 = vpop.xlane.xlu0 %7226
          %7228 = vmax.xlane.f32.xlu0 %v7181
          %v7229 = vpop.xlane.xlu0 %7228
          %7230 = vmax.xlane.f32.xlu0 %v7182
          %v7231 = vpop.xlane.xlu0 %7230
          %7232 = vmax.xlane.f32.xlu0 %v7183
          %v7233 = vpop.xlane.xlu0 %7232
          %7234 = vmax.xlane.f32.xlu0 %v7184
          %v7235 = vpop.xlane.xlu0 %7234
          %7236 = vmax.xlane.f32.xlu0 %v7185
          %v7237 = vpop.xlane.xlu0 %7236
          %7238 = vmax.xlane.f32.xlu0 %v7186
          %v7239 = vpop.xlane.xlu0 %7238
          %7240 = vmax.xlane.f32.xlu0 %v7187
          %v7241 = vpop.xlane.xlu0 %7240
          %7242 = vmax.xlane.f32.xlu0 %v7188
          %v7243 = vpop.xlane.xlu0 %7242
          %7244 = vmax.xlane.f32.xlu0 %v7189
          %v7245 = vpop.xlane.xlu0 %7244
          %7246 = vmax.xlane.f32.xlu0 %v7190
          %v7247 = vpop.xlane.xlu0 %7246
          %7248 = vmax.xlane.f32.xlu0 %v7191
          %v7249 = vpop.xlane.xlu0 %7248
          %7250 = vmax.xlane.f32.xlu0 %v7192
          %v7251 = vpop.xlane.xlu0 %7250
          %7252 = vmax.xlane.f32.xlu0 %v7193
          %v7253 = vpop.xlane.xlu0 %7252
          %7254 = vmax.xlane.f32.xlu0 %v7194
          %v7255 = vpop.xlane.xlu0 %7254
          %7256 = vmax.xlane.f32.xlu0 %v7195
          %v7257 = vpop.xlane.xlu0 %7256
          %7258 = vmax.xlane.f32.xlu0 %v7196
          %v7259 = vpop.xlane.xlu0 %7258
          %7260 = vmax.xlane.f32.xlu0 %v7197
          %v7261 = vpop.xlane.xlu0 %7260
          %v7262 = vsub.f32 %v7166, %v7199
          %v7263 = vsub.f32 %v7167, %v7201
          %v7264 = vsub.f32 %v7168, %v7203
          %v7265 = vsub.f32 %v7169, %v7205
          %v7266 = vsub.f32 %v7170, %v7207
          %v7267 = vsub.f32 %v7171, %v7209
          %v7268 = vsub.f32 %v7172, %v7211
          %v7269 = vsub.f32 %v7173, %v7213
          %v7270 = vsub.f32 %v7174, %v7215
          %v7271 = vsub.f32 %v7175, %v7217
          %v7272 = vsub.f32 %v7176, %v7219
          %v7273 = vsub.f32 %v7177, %v7221
          %v7274 = vsub.f32 %v7178, %v7223
          %v7275 = vsub.f32 %v7179, %v7225
          %v7276 = vsub.f32 %v7180, %v7227
          %v7277 = vsub.f32 %v7181, %v7229
          %v7278 = vsub.f32 %v7182, %v7231
          %v7279 = vsub.f32 %v7183, %v7233
          %v7280 = vsub.f32 %v7184, %v7235
          %v7281 = vsub.f32 %v7185, %v7237
          %v7282 = vsub.f32 %v7186, %v7239
          %v7283 = vsub.f32 %v7187, %v7241
          %v7284 = vsub.f32 %v7188, %v7243
          %v7285 = vsub.f32 %v7189, %v7245
          %v7286 = vsub.f32 %v7190, %v7247
          %v7287 = vsub.f32 %v7191, %v7249
          %v7288 = vsub.f32 %v7192, %v7251
          %v7289 = vsub.f32 %v7193, %v7253
          %v7290 = vsub.f32 %v7194, %v7255
          %v7291 = vsub.f32 %v7195, %v7257
          %v7292 = vsub.f32 %v7196, %v7259
          %v7293 = vsub.f32 %v7197, %v7261
          %v7294 = vmul.f32 %v7262, 1.442695
          %v7295 = vpow.pop %v7294
          %v7296 = vmul.f32 %v7263, 1.442695
          %v7297 = vpow.pop %v7296
          %v7298 = vmul.f32 %v7264, 1.442695
          %v7299 = vpow.pop %v7298
          %v7300 = vmul.f32 %v7265, 1.442695
          %v7301 = vpow.pop %v7300
          %v7302 = vmul.f32 %v7266, 1.442695
          %v7303 = vpow.pop %v7302
          %v7304 = vmul.f32 %v7267, 1.442695
          %v7305 = vpow.pop %v7304
          %v7306 = vmul.f32 %v7268, 1.442695
          %v7307 = vpow.pop %v7306
          %v7308 = vmul.f32 %v7269, 1.442695
          %v7309 = vpow.pop %v7308
          %v7310 = vmul.f32 %v7270, 1.442695
          %v7311 = vpow.pop %v7310
          %v7312 = vmul.f32 %v7271, 1.442695
          %v7313 = vpow.pop %v7312
          %v7314 = vmul.f32 %v7272, 1.442695
          %v7315 = vpow.pop %v7314
          %v7316 = vmul.f32 %v7273, 1.442695
          %v7317 = vpow.pop %v7316
          %v7318 = vmul.f32 %v7274, 1.442695
          %v7319 = vpow.pop %v7318
          %v7320 = vmul.f32 %v7275, 1.442695
          %v7321 = vpow.pop %v7320
          %v7322 = vmul.f32 %v7276, 1.442695
          %v7323 = vpow.pop %v7322
          %v7324 = vmul.f32 %v7277, 1.442695
          %v7325 = vpow.pop %v7324
          %v7326 = vmul.f32 %v7278, 1.442695
          %v7327 = vpow.pop %v7326
          %v7328 = vmul.f32 %v7279, 1.442695
          %v7329 = vpow.pop %v7328
          %v7330 = vmul.f32 %v7280, 1.442695
          %v7331 = vpow.pop %v7330
          %v7332 = vmul.f32 %v7281, 1.442695
          %v7333 = vpow.pop %v7332
          %v7334 = vmul.f32 %v7282, 1.442695
          %v7335 = vpow.pop %v7334
          %v7336 = vmul.f32 %v7283, 1.442695
          %v7337 = vpow.pop %v7336
          %v7338 = vmul.f32 %v7284, 1.442695
          %v7339 = vpow.pop %v7338
          %v7340 = vmul.f32 %v7285, 1.442695
          %v7341 = vpow.pop %v7340
          %v7342 = vmul.f32 %v7286, 1.442695
          %v7343 = vpow.pop %v7342
          %v7344 = vmul.f32 %v7287, 1.442695
          %v7345 = vpow.pop %v7344
          %v7346 = vmul.f32 %v7288, 1.442695
          %v7347 = vpow.pop %v7346
          %v7348 = vmul.f32 %v7289, 1.442695
          %v7349 = vpow.pop %v7348
          %v7350 = vmul.f32 %v7290, 1.442695
          %v7351 = vpow.pop %v7350
          %v7352 = vmul.f32 %v7291, 1.442695
          %v7353 = vpow.pop %v7352
          %v7354 = vmul.f32 %v7292, 1.442695
          %v7355 = vpow.pop %v7354
          %v7356 = vmul.f32 %v7293, 1.442695
          %v7357 = vpow.pop %v7356
          %7358 = vadd.xlane.f32.xlu0 %v7295
          %v7359 = vpop.xlane.xlu0 %7358
          %7360 = vadd.xlane.f32.xlu0 %v7297
          %v7361 = vpop.xlane.xlu0 %7360
          %7362 = vadd.xlane.f32.xlu0 %v7299
          %v7363 = vpop.xlane.xlu0 %7362
          %7364 = vadd.xlane.f32.xlu0 %v7301
          %v7365 = vpop.xlane.xlu0 %7364
          %7366 = vadd.xlane.f32.xlu0 %v7303
          %v7367 = vpop.xlane.xlu0 %7366
          %7368 = vadd.xlane.f32.xlu0 %v7305
          %v7369 = vpop.xlane.xlu0 %7368
          %7370 = vadd.xlane.f32.xlu0 %v7307
          %v7371 = vpop.xlane.xlu0 %7370
          %7372 = vadd.xlane.f32.xlu0 %v7309
          %v7373 = vpop.xlane.xlu0 %7372
          %7374 = vadd.xlane.f32.xlu0 %v7311
          %v7375 = vpop.xlane.xlu0 %7374
          %7376 = vadd.xlane.f32.xlu0 %v7313
          %v7377 = vpop.xlane.xlu0 %7376
          %7378 = vadd.xlane.f32.xlu0 %v7315
          %v7379 = vpop.xlane.xlu0 %7378
          %7380 = vadd.xlane.f32.xlu0 %v7317
          %v7381 = vpop.xlane.xlu0 %7380
          %7382 = vadd.xlane.f32.xlu0 %v7319
          %v7383 = vpop.xlane.xlu0 %7382
          %7384 = vadd.xlane.f32.xlu0 %v7321
          %v7385 = vpop.xlane.xlu0 %7384
          %7386 = vadd.xlane.f32.xlu0 %v7323
          %v7387 = vpop.xlane.xlu0 %7386
          %7388 = vadd.xlane.f32.xlu0 %v7325
          %v7389 = vpop.xlane.xlu0 %7388
          %7390 = vadd.xlane.f32.xlu0 %v7327
          %v7391 = vpop.xlane.xlu0 %7390
          %7392 = vadd.xlane.f32.xlu0 %v7329
          %v7393 = vpop.xlane.xlu0 %7392
          %7394 = vadd.xlane.f32.xlu0 %v7331
          %v7395 = vpop.xlane.xlu0 %7394
          %7396 = vadd.xlane.f32.xlu0 %v7333
          %v7397 = vpop.xlane.xlu0 %7396
          %7398 = vadd.xlane.f32.xlu0 %v7335
          %v7399 = vpop.xlane.xlu0 %7398
          %7400 = vadd.xlane.f32.xlu0 %v7337
          %v7401 = vpop.xlane.xlu0 %7400
          %7402 = vadd.xlane.f32.xlu0 %v7339
          %v7403 = vpop.xlane.xlu0 %7402
          %7404 = vadd.xlane.f32.xlu0 %v7341
          %v7405 = vpop.xlane.xlu0 %7404
          %7406 = vadd.xlane.f32.xlu0 %v7343
          %v7407 = vpop.xlane.xlu0 %7406
          %7408 = vadd.xlane.f32.xlu0 %v7345
          %v7409 = vpop.xlane.xlu0 %7408
          %7410 = vadd.xlane.f32.xlu0 %v7347
          %v7411 = vpop.xlane.xlu0 %7410
          %7412 = vadd.xlane.f32.xlu0 %v7349
          %v7413 = vpop.xlane.xlu0 %7412
          %7414 = vadd.xlane.f32.xlu0 %v7351
          %v7415 = vpop.xlane.xlu0 %7414
          %7416 = vadd.xlane.f32.xlu0 %v7353
          %v7417 = vpop.xlane.xlu0 %7416
          %7418 = vadd.xlane.f32.xlu0 %v7355
          %v7419 = vpop.xlane.xlu0 %7418
          %7420 = vadd.xlane.f32.xlu0 %v7357
          %v7421 = vpop.xlane.xlu0 %7420
          %v7422 = vrcp.pop %v7359
          %v7423 = vrcp.pop %v7361
          %v7424 = vrcp.pop %v7363
          %v7425 = vrcp.pop %v7365
          %v7426 = vrcp.pop %v7367
          %v7427 = vrcp.pop %v7369
          %v7428 = vrcp.pop %v7371
          %v7429 = vrcp.pop %v7373
          %v7430 = vrcp.pop %v7375
          %v7431 = vrcp.pop %v7377
          %v7432 = vrcp.pop %v7379
          %v7433 = vrcp.pop %v7381
          %v7434 = vrcp.pop %v7383
          %v7435 = vrcp.pop %v7385
          %v7436 = vrcp.pop %v7387
          %v7437 = vrcp.pop %v7389
          %v7438 = vrcp.pop %v7391
          %v7439 = vrcp.pop %v7393
          %v7440 = vrcp.pop %v7395
          %v7441 = vrcp.pop %v7397
          %v7442 = vrcp.pop %v7399
          %v7443 = vrcp.pop %v7401
          %v7444 = vrcp.pop %v7403
          %v7445 = vrcp.pop %v7405
          %v7446 = vrcp.pop %v7407
          %v7447 = vrcp.pop %v7409
          %v7448 = vrcp.pop %v7411
          %v7449 = vrcp.pop %v7413
          %v7450 = vrcp.pop %v7415
          %v7451 = vrcp.pop %v7417
          %v7452 = vrcp.pop %v7419
          %v7453 = vrcp.pop %v7421
          %v7454 = vmul.f32 %v7295, %v7422
          %v7455 = vmul.f32 %v7297, %v7423
          %v7456 = vmul.f32 %v7299, %v7424
          %v7457 = vmul.f32 %v7301, %v7425
          %v7458 = vmul.f32 %v7303, %v7426
          %v7459 = vmul.f32 %v7305, %v7427
          %v7460 = vmul.f32 %v7307, %v7428
          %v7461 = vmul.f32 %v7309, %v7429
          %v7462 = vmul.f32 %v7311, %v7430
          %v7463 = vmul.f32 %v7313, %v7431
          %v7464 = vmul.f32 %v7315, %v7432
          %v7465 = vmul.f32 %v7317, %v7433
          %v7466 = vmul.f32 %v7319, %v7434
          %v7467 = vmul.f32 %v7321, %v7435
          %v7468 = vmul.f32 %v7323, %v7436
          %v7469 = vmul.f32 %v7325, %v7437
          %v7470 = vmul.f32 %v7327, %v7438
          %v7471 = vmul.f32 %v7329, %v7439
          %v7472 = vmul.f32 %v7331, %v7440
          %v7473 = vmul.f32 %v7333, %v7441
          %v7474 = vmul.f32 %v7335, %v7442
          %v7475 = vmul.f32 %v7337, %v7443
          %v7476 = vmul.f32 %v7339, %v7444
          %v7477 = vmul.f32 %v7341, %v7445
          %v7478 = vmul.f32 %v7343, %v7446
          %v7479 = vmul.f32 %v7345, %v7447
          %v7480 = vmul.f32 %v7347, %v7448
          %v7481 = vmul.f32 %v7349, %v7449
          %v7482 = vmul.f32 %v7351, %v7450
          %v7483 = vmul.f32 %v7353, %v7451
          %v7484 = vmul.f32 %v7355, %v7452
          %v7485 = vmul.f32 %v7357, %v7453
          %v7486 = vpack.c.bf16 %v7455, %v7454
          %v7487 = vpack.c.bf16 %v7457, %v7456
          %v7488 = vpack.c.bf16 %v7459, %v7458
          %v7489 = vpack.c.bf16 %v7461, %v7460
          %v7490 = vpack.c.bf16 %v7463, %v7462
          %v7491 = vpack.c.bf16 %v7465, %v7464
          %v7492 = vpack.c.bf16 %v7467, %v7466
          %v7493 = vpack.c.bf16 %v7469, %v7468
          %v7494 = vpack.c.bf16 %v7471, %v7470
          %v7495 = vpack.c.bf16 %v7473, %v7472
          %v7496 = vpack.c.bf16 %v7475, %v7474
          %v7497 = vpack.c.bf16 %v7477, %v7476
          %v7498 = vpack.c.bf16 %v7479, %v7478
          %v7499 = vpack.c.bf16 %v7481, %v7480
          %v7500 = vpack.c.bf16 %v7483, %v7482
          %v7501 = vpack.c.bf16 %v7485, %v7484
          %7502 = vmatprep.subr.bf16.mxu0 0
          %7503 = vmatpush1.bf16.msra.mxu0 %v6797
          %7504 = vmatprep.subr.bf16.mxu0 0
          %7505 = vmatpush1.bf16.msra.mxu0 %v6789
          %7506 = vmatprep.subr.bf16.mxu0 0
          %7507 = vmatpush1.bf16.msra.mxu0 %v6781
          %7508 = vmatprep.subr.bf16.mxu0 0
          %7509 = vmatpush1.bf16.msra.mxu0 %v6773
          %7510 = vmatprep.subr.bf16.mxu0 0
          %7511 = vmatpush1.bf16.msra.mxu0 %v6765
          %7512 = vmatprep.subr.bf16.mxu0 0
          %7513 = vmatpush1.bf16.msra.mxu0 %v6757
          %7514 = vmatprep.subr.bf16.mxu0 0
          %7515 = vmatpush1.bf16.msra.mxu0 %v6749
          %7516 = vmatprep.subr.bf16.mxu0 0
          %7517 = vmatpush1.bf16.msra.mxu0 %v6741
          %7518 = vmatprep.subr.bf16.mxu0 0
          %7519 = vmatpush2.bf16.msra.mxu0 0
          %7520 = vmatprep.subr.bf16.mxu0 0
          %7521 = vmatpush2.bf16.msra.mxu0 0
          %7522 = vmatprep.subr.bf16.mxu0 0
          %7523 = vmatpush2.bf16.msra.mxu0 0
          %7524 = vmatprep.subr.bf16.mxu0 0
          %7525 = vmatpush2.bf16.msra.mxu0 0
          %7526 = vmatprep.subr.bf16.mxu0 0
          %7527 = vmatpush2.bf16.msra.mxu0 0
          %7528 = vmatprep.subr.bf16.mxu0 0
          %7529 = vmatpush2.bf16.msra.mxu0 0
          %7530 = vmatprep.subr.bf16.mxu0 0
          %7531 = vmatpush2.bf16.msra.mxu0 0
          %7532 = vmatprep.subr.bf16.mxu0 0
          %7533 = vmatpush2.bf16.msra.mxu0 0
          %7534 = vmatprep.mubr.bf16.mxu0 0
          %7535 = vmatmul.mubr.bf16.gmra.mxu0 %v7486
          %v7536 = vpop.f32.mrf.mxu0
          %v7537 = vadd.f32 0.0, %v7536
          %v7538 = vpop.f32.mrf.mxu0
          %v7539 = vpop.f32.mrf.mxu0
          %v7540 = vadd.f32 0.0, %v7539
          %v7541 = vpop.f32.mrf.mxu0
          %7542 = vmatprep.mubr.bf16.mxu0 0
          %7543 = vmatmul.mubr.bf16.gmra.mxu0 %v7487
          %v7544 = vpop.f32.mrf.mxu0
          %v7545 = vadd.f32 0.0, %v7544
          %v7546 = vpop.f32.mrf.mxu0
          %v7547 = vpop.f32.mrf.mxu0
          %v7548 = vadd.f32 0.0, %v7547
          %v7549 = vpop.f32.mrf.mxu0
          %7550 = vmatprep.mubr.bf16.mxu0 0
          %7551 = vmatmul.mubr.bf16.gmra.mxu0 %v7488
          %v7552 = vpop.f32.mrf.mxu0
          %v7553 = vadd.f32 0.0, %v7552
          %v7554 = vpop.f32.mrf.mxu0
          %v7555 = vpop.f32.mrf.mxu0
          %v7556 = vadd.f32 0.0, %v7555
          %v7557 = vpop.f32.mrf.mxu0
          %7558 = vmatprep.mubr.bf16.mxu0 0
          %7559 = vmatmul.mubr.bf16.gmra.mxu0 %v7489
          %v7560 = vpop.f32.mrf.mxu0
          %v7561 = vadd.f32 0.0, %v7560
          %v7562 = vpop.f32.mrf.mxu0
          %v7563 = vpop.f32.mrf.mxu0
          %v7564 = vadd.f32 0.0, %v7563
          %v7565 = vpop.f32.mrf.mxu0
          %7566 = vmatprep.mubr.bf16.mxu0 0
          %7567 = vmatmul.mubr.bf16.gmra.mxu0 %v7490
          %v7568 = vpop.f32.mrf.mxu0
          %v7569 = vadd.f32 0.0, %v7568
          %v7570 = vpop.f32.mrf.mxu0
          %v7571 = vpop.f32.mrf.mxu0
          %v7572 = vadd.f32 0.0, %v7571
          %v7573 = vpop.f32.mrf.mxu0
          %7574 = vmatprep.mubr.bf16.mxu0 0
          %7575 = vmatmul.mubr.bf16.gmra.mxu0 %v7491
          %v7576 = vpop.f32.mrf.mxu0
          %v7577 = vadd.f32 0.0, %v7576
          %v7578 = vpop.f32.mrf.mxu0
          %v7579 = vpop.f32.mrf.mxu0
          %v7580 = vadd.f32 0.0, %v7579
          %v7581 = vpop.f32.mrf.mxu0
          %7582 = vmatprep.mubr.bf16.mxu0 0
          %7583 = vmatmul.mubr.bf16.gmra.mxu0 %v7492
          %v7584 = vpop.f32.mrf.mxu0
          %v7585 = vadd.f32 0.0, %v7584
          %v7586 = vpop.f32.mrf.mxu0
          %v7587 = vpop.f32.mrf.mxu0
          %v7588 = vadd.f32 0.0, %v7587
          %v7589 = vpop.f32.mrf.mxu0
          %7590 = vmatprep.mubr.bf16.mxu0 0
          %7591 = vmatmul.mubr.bf16.gmra.mxu0 %v7493
          %v7592 = vpop.f32.mrf.mxu0
          %v7593 = vadd.f32 0.0, %v7592
          %v7594 = vpop.f32.mrf.mxu0
          %v7595 = vpop.f32.mrf.mxu0
          %v7596 = vadd.f32 0.0, %v7595
          %v7597 = vpop.f32.mrf.mxu0
          %7598 = vdwg.mxu0
          %7599 = vmatprep.subr.bf16.mxu0 0
          %7600 = vmatpush1.bf16.msra.mxu0 %v6801
          %7601 = vmatprep.subr.bf16.mxu0 0
          %7602 = vmatpush1.bf16.msra.mxu0 %v6793
          %7603 = vmatprep.subr.bf16.mxu0 0
          %7604 = vmatpush1.bf16.msra.mxu0 %v6785
          %7605 = vmatprep.subr.bf16.mxu0 0
          %7606 = vmatpush1.bf16.msra.mxu0 %v6777
          %7607 = vmatprep.subr.bf16.mxu0 0
          %7608 = vmatpush1.bf16.msra.mxu0 %v6769
          %7609 = vmatprep.subr.bf16.mxu0 0
          %7610 = vmatpush1.bf16.msra.mxu0 %v6761
          %7611 = vmatprep.subr.bf16.mxu0 0
          %7612 = vmatpush1.bf16.msra.mxu0 %v6753
          %7613 = vmatprep.subr.bf16.mxu0 0
          %7614 = vmatpush1.bf16.msra.mxu0 %v6745
          %7615 = vmatprep.subr.bf16.mxu0 0
          %7616 = vmatpush2.bf16.msra.mxu0 0
          %7617 = vmatprep.subr.bf16.mxu0 0
          %7618 = vmatpush2.bf16.msra.mxu0 0
          %7619 = vmatprep.subr.bf16.mxu0 0
          %7620 = vmatpush2.bf16.msra.mxu0 0
          %7621 = vmatprep.subr.bf16.mxu0 0
          %7622 = vmatpush2.bf16.msra.mxu0 0
          %7623 = vmatprep.subr.bf16.mxu0 0
          %7624 = vmatpush2.bf16.msra.mxu0 0
          %7625 = vmatprep.subr.bf16.mxu0 0
          %7626 = vmatpush2.bf16.msra.mxu0 0
          %7627 = vmatprep.subr.bf16.mxu0 0
          %7628 = vmatpush2.bf16.msra.mxu0 0
          %7629 = vmatprep.subr.bf16.mxu0 0
          %7630 = vmatpush2.bf16.msra.mxu0 0
          %7631 = vmatprep.mubr.bf16.mxu0 0
          %7632 = vmatmul.mubr.bf16.gmra.mxu0 %v7494
          %v7633 = vpop.f32.mrf.mxu0
          %v7634 = vadd.f32 0.0, %v7633
          %v7635 = vpop.f32.mrf.mxu0
          %v7636 = vpop.f32.mrf.mxu0
          %v7637 = vadd.f32 0.0, %v7636
          %v7638 = vpop.f32.mrf.mxu0
          %7639 = vmatprep.mubr.bf16.mxu0 0
          %7640 = vmatmul.mubr.bf16.gmra.mxu0 %v7495
          %v7641 = vpop.f32.mrf.mxu0
          %v7642 = vadd.f32 0.0, %v7641
          %v7643 = vpop.f32.mrf.mxu0
          %v7644 = vpop.f32.mrf.mxu0
          %v7645 = vadd.f32 0.0, %v7644
          %v7646 = vpop.f32.mrf.mxu0
          %7647 = vmatprep.mubr.bf16.mxu0 0
          %7648 = vmatmul.mubr.bf16.gmra.mxu0 %v7496
          %v7649 = vpop.f32.mrf.mxu0
          %v7650 = vadd.f32 0.0, %v7649
          %v7651 = vpop.f32.mrf.mxu0
          %v7652 = vpop.f32.mrf.mxu0
          %v7653 = vadd.f32 0.0, %v7652
          %v7654 = vpop.f32.mrf.mxu0
          %7655 = vmatprep.mubr.bf16.mxu0 0
          %7656 = vmatmul.mubr.bf16.gmra.mxu0 %v7497
          %v7657 = vpop.f32.mrf.mxu0
          %v7658 = vadd.f32 0.0, %v7657
          %v7659 = vpop.f32.mrf.mxu0
          %v7660 = vpop.f32.mrf.mxu0
          %v7661 = vadd.f32 0.0, %v7660
          %v7662 = vpop.f32.mrf.mxu0
          %7663 = vmatprep.mubr.bf16.mxu0 0
          %7664 = vmatmul.mubr.bf16.gmra.mxu0 %v7498
          %v7665 = vpop.f32.mrf.mxu0
          %v7666 = vadd.f32 0.0, %v7665
          %v7667 = vpop.f32.mrf.mxu0
          %v7668 = vpop.f32.mrf.mxu0
          %v7669 = vadd.f32 0.0, %v7668
          %v7670 = vpop.f32.mrf.mxu0
          %7671 = vmatprep.mubr.bf16.mxu0 0
          %7672 = vmatmul.mubr.bf16.gmra.mxu0 %v7499
          %v7673 = vpop.f32.mrf.mxu0
          %v7674 = vadd.f32 0.0, %v7673
          %v7675 = vpop.f32.mrf.mxu0
          %v7676 = vpop.f32.mrf.mxu0
          %v7677 = vadd.f32 0.0, %v7676
          %v7678 = vpop.f32.mrf.mxu0
          %7679 = vmatprep.mubr.bf16.mxu0 0
          %7680 = vmatmul.mubr.bf16.gmra.mxu0 %v7500
          %v7681 = vpop.f32.mrf.mxu0
          %v7682 = vadd.f32 0.0, %v7681
          %v7683 = vpop.f32.mrf.mxu0
          %v7684 = vpop.f32.mrf.mxu0
          %v7685 = vadd.f32 0.0, %v7684
          %v7686 = vpop.f32.mrf.mxu0
          %7687 = vmatprep.mubr.bf16.mxu0 0
          %7688 = vmatmul.mubr.bf16.gmra.mxu0 %v7501
          %v7689 = vpop.f32.mrf.mxu0
          %v7690 = vadd.f32 0.0, %v7689
          %v7691 = vpop.f32.mrf.mxu0
          %v7692 = vpop.f32.mrf.mxu0
          %v7693 = vadd.f32 0.0, %v7692
          %v7694 = vpop.f32.mrf.mxu0
          %7695 = vdwg.mxu0
          %v7696 = vpack.c.bf16 %v7540, %v7537
          %v7697 = vpack.c.bf16 %v7548, %v7545
          %v7698 = vpack.c.bf16 %v7556, %v7553
          %v7699 = vpack.c.bf16 %v7564, %v7561
          %v7700 = vpack.c.bf16 %v7572, %v7569
          %v7701 = vpack.c.bf16 %v7580, %v7577
          %v7702 = vpack.c.bf16 %v7588, %v7585
          %v7703 = vpack.c.bf16 %v7596, %v7593
          %v7704 = vpack.c.bf16 %v7637, %v7634
          %v7705 = vpack.c.bf16 %v7645, %v7642
          %v7706 = vpack.c.bf16 %v7653, %v7650
          %v7707 = vpack.c.bf16 %v7661, %v7658
          %v7708 = vpack.c.bf16 %v7669, %v7666
          %v7709 = vpack.c.bf16 %v7677, %v7674
          %v7710 = vpack.c.bf16 %v7685, %v7682
          %v7711 = vpack.c.bf16 %v7693, %v7690
          %v7714 = vpack.i.b16 %v7704, %v7696
          %v7716 = vshrl.u32 %v7696, 16
          %v7717 = vshrl.u32 %v7704, 16
          %v7718 = vpack.i.b16 %v7717, %v7716
          %v7722 = vpack.i.b16 %v7705, %v7697
          %v7724 = vshrl.u32 %v7697, 16
          %v7725 = vshrl.u32 %v7705, 16
          %v7726 = vpack.i.b16 %v7725, %v7724
          %v7730 = vpack.i.b16 %v7706, %v7698
          %v7732 = vshrl.u32 %v7698, 16
          %v7733 = vshrl.u32 %v7706, 16
          %v7734 = vpack.i.b16 %v7733, %v7732
          %v7738 = vpack.i.b16 %v7707, %v7699
          %v7740 = vshrl.u32 %v7699, 16
          %v7741 = vshrl.u32 %v7707, 16
          %v7742 = vpack.i.b16 %v7741, %v7740
          %v7746 = vpack.i.b16 %v7708, %v7700
          %v7748 = vshrl.u32 %v7700, 16
          %v7749 = vshrl.u32 %v7708, 16
          %v7750 = vpack.i.b16 %v7749, %v7748
          %v7754 = vpack.i.b16 %v7709, %v7701
          %v7756 = vshrl.u32 %v7701, 16
          %v7757 = vshrl.u32 %v7709, 16
          %v7758 = vpack.i.b16 %v7757, %v7756
          %v7762 = vpack.i.b16 %v7710, %v7702
          %v7764 = vshrl.u32 %v7702, 16
          %v7765 = vshrl.u32 %v7710, 16
          %v7766 = vpack.i.b16 %v7765, %v7764
          %v7770 = vpack.i.b16 %v7711, %v7703
          %v7772 = vshrl.u32 %v7703, 16
          %v7773 = vshrl.u32 %v7711, 16
          %v7774 = vpack.i.b16 %v7773, %v7772
          %v7776 = vcombine.high %v7714, %v1686
          %v7778 = vunpack.c.l.s4 1983009808
          %v7779 = vunpack.c.0.s8 %v7778
          %v7780 = vlaneseq
          %v7781 = vshrl.u32 %v7780, 7
          %v7782 = vsub.s32 %v7779, %v7781
          %v7783 = vrot.slane %v7714, %v7782
          %v7785 = vunpack.c.l.s4 1983009808
          %v7786 = vunpack.c.0.s8 %v7785
          %v7787 = vlaneseq
          %v7788 = vshrl.u32 %v7787, 7
          %v7789 = vsub.s32 %v7786, %v7788
          %v7790 = vrot.slane %v7776, %v7789
          %v7791 = vcombine.high %v7783, 0
          %v7793 = vunpack.c.l.s4 1934713408
          %v7794 = vunpack.c.0.s8 %v7793
          %v7795 = vlaneseq
          %v7796 = vshrl.u32 %v7795, 7
          %v7797 = vsub.s32 %v7794, %v7796
          %v7798 = vrot.slane %v7783, %v7797
          %v7800 = vunpack.c.l.s4 1934713408
          %v7801 = vunpack.c.0.s8 %v7800
          %v7802 = vlaneseq
          %v7803 = vshrl.u32 %v7802, 7
          %v7804 = vsub.s32 %v7801, %v7803
          %v7805 = vrot.slane %v7791, %v7804
          %v7806 = vcombine.high %v7790, 0
          %v7808 = vunpack.c.l.s4 1934713408
          %v7809 = vunpack.c.0.s8 %v7808
          %v7810 = vlaneseq
          %v7811 = vshrl.u32 %v7810, 7
          %v7812 = vsub.s32 %v7809, %v7811
          %v7813 = vrot.slane %v7790, %v7812
          %v7815 = vunpack.c.l.s4 1934713408
          %v7816 = vunpack.c.0.s8 %v7815
          %v7817 = vlaneseq
          %v7818 = vshrl.u32 %v7817, 7
          %v7819 = vsub.s32 %v7816, %v7818
          %v7820 = vrot.slane %v7806, %v7819
          %v7821 = vcombine.high %v7798, 0
          %v7822 = vcombine.high %v7805, 0
          %v7823 = vcombine.high %v7813, 0
          %v7824 = vcombine.high %v7820, 0
          %v7825 = vcombine.high %v7718, %v1689
          %v7827 = vunpack.c.l.s4 1983009808
          %v7828 = vunpack.c.0.s8 %v7827
          %v7829 = vlaneseq
          %v7830 = vshrl.u32 %v7829, 7
          %v7831 = vsub.s32 %v7828, %v7830
          %v7832 = vrot.slane %v7718, %v7831
          %v7834 = vunpack.c.l.s4 1983009808
          %v7835 = vunpack.c.0.s8 %v7834
          %v7836 = vlaneseq
          %v7837 = vshrl.u32 %v7836, 7
          %v7838 = vsub.s32 %v7835, %v7837
          %v7839 = vrot.slane %v7825, %v7838
          %v7840 = vcombine.high %v7832, 0
          %v7842 = vunpack.c.l.s4 1934713408
          %v7843 = vunpack.c.0.s8 %v7842
          %v7844 = vlaneseq
          %v7845 = vshrl.u32 %v7844, 7
          %v7846 = vsub.s32 %v7843, %v7845
          %v7847 = vrot.slane %v7832, %v7846
          %v7849 = vunpack.c.l.s4 1934713408
          %v7850 = vunpack.c.0.s8 %v7849
          %v7851 = vlaneseq
          %v7852 = vshrl.u32 %v7851, 7
          %v7853 = vsub.s32 %v7850, %v7852
          %v7854 = vrot.slane %v7840, %v7853
          %v7855 = vcombine.high %v7839, 0
          %v7857 = vunpack.c.l.s4 1934713408
          %v7858 = vunpack.c.0.s8 %v7857
          %v7859 = vlaneseq
          %v7860 = vshrl.u32 %v7859, 7
          %v7861 = vsub.s32 %v7858, %v7860
          %v7862 = vrot.slane %v7839, %v7861
          %v7864 = vunpack.c.l.s4 1934713408
          %v7865 = vunpack.c.0.s8 %v7864
          %v7866 = vlaneseq
          %v7867 = vshrl.u32 %v7866, 7
          %v7868 = vsub.s32 %v7865, %v7867
          %v7869 = vrot.slane %v7855, %v7868
          %v7870 = vcombine.high %v7847, 0
          %v7871 = vcombine.high %v7854, 0
          %v7872 = vcombine.high %v7862, 0
          %v7873 = vcombine.high %v7869, 0
          %v7874 = vcombine.high %v7722, %v1686
          %v7876 = vunpack.c.l.s4 1983009808
          %v7877 = vunpack.c.0.s8 %v7876
          %v7878 = vlaneseq
          %v7879 = vshrl.u32 %v7878, 7
          %v7880 = vsub.s32 %v7877, %v7879
          %v7881 = vrot.slane %v7722, %v7880
          %v7883 = vunpack.c.l.s4 1983009808
          %v7884 = vunpack.c.0.s8 %v7883
          %v7885 = vlaneseq
          %v7886 = vshrl.u32 %v7885, 7
          %v7887 = vsub.s32 %v7884, %v7886
          %v7888 = vrot.slane %v7874, %v7887
          %v7889 = vcombine.high %v7881, 0
          %v7891 = vunpack.c.l.s4 1934713408
          %v7892 = vunpack.c.0.s8 %v7891
          %v7893 = vlaneseq
          %v7894 = vshrl.u32 %v7893, 7
          %v7895 = vsub.s32 %v7892, %v7894
          %v7896 = vrot.slane %v7881, %v7895
          %v7898 = vunpack.c.l.s4 1934713408
          %v7899 = vunpack.c.0.s8 %v7898
          %v7900 = vlaneseq
          %v7901 = vshrl.u32 %v7900, 7
          %v7902 = vsub.s32 %v7899, %v7901
          %v7903 = vrot.slane %v7889, %v7902
          %v7904 = vcombine.high %v7888, 0
          %v7906 = vunpack.c.l.s4 1934713408
          %v7907 = vunpack.c.0.s8 %v7906
          %v7908 = vlaneseq
          %v7909 = vshrl.u32 %v7908, 7
          %v7910 = vsub.s32 %v7907, %v7909
          %v7911 = vrot.slane %v7888, %v7910
          %v7913 = vunpack.c.l.s4 1934713408
          %v7914 = vunpack.c.0.s8 %v7913
          %v7915 = vlaneseq
          %v7916 = vshrl.u32 %v7915, 7
          %v7917 = vsub.s32 %v7914, %v7916
          %v7918 = vrot.slane %v7904, %v7917
          %v7919 = vcombine.high %v7896, 0
          %v7920 = vcombine.high %v7903, 0
          %v7921 = vcombine.high %v7911, 0
          %v7922 = vcombine.high %v7918, 0
          %v7923 = vcombine.high %v7726, %v1689
          %v7925 = vunpack.c.l.s4 1983009808
          %v7926 = vunpack.c.0.s8 %v7925
          %v7927 = vlaneseq
          %v7928 = vshrl.u32 %v7927, 7
          %v7929 = vsub.s32 %v7926, %v7928
          %v7930 = vrot.slane %v7726, %v7929
          %v7932 = vunpack.c.l.s4 1983009808
          %v7933 = vunpack.c.0.s8 %v7932
          %v7934 = vlaneseq
          %v7935 = vshrl.u32 %v7934, 7
          %v7936 = vsub.s32 %v7933, %v7935
          %v7937 = vrot.slane %v7923, %v7936
          %v7938 = vcombine.high %v7930, 0
          %v7940 = vunpack.c.l.s4 1934713408
          %v7941 = vunpack.c.0.s8 %v7940
          %v7942 = vlaneseq
          %v7943 = vshrl.u32 %v7942, 7
          %v7944 = vsub.s32 %v7941, %v7943
          %v7945 = vrot.slane %v7930, %v7944
          %v7947 = vunpack.c.l.s4 1934713408
          %v7948 = vunpack.c.0.s8 %v7947
          %v7949 = vlaneseq
          %v7950 = vshrl.u32 %v7949, 7
          %v7951 = vsub.s32 %v7948, %v7950
          %v7952 = vrot.slane %v7938, %v7951
          %v7953 = vcombine.high %v7937, 0
          %v7955 = vunpack.c.l.s4 1934713408
          %v7956 = vunpack.c.0.s8 %v7955
          %v7957 = vlaneseq
          %v7958 = vshrl.u32 %v7957, 7
          %v7959 = vsub.s32 %v7956, %v7958
          %v7960 = vrot.slane %v7937, %v7959
          %v7962 = vunpack.c.l.s4 1934713408
          %v7963 = vunpack.c.0.s8 %v7962
          %v7964 = vlaneseq
          %v7965 = vshrl.u32 %v7964, 7
          %v7966 = vsub.s32 %v7963, %v7965
          %v7967 = vrot.slane %v7953, %v7966
          %v7968 = vcombine.high %v7945, 0
          %v7969 = vcombine.high %v7952, 0
          %v7970 = vcombine.high %v7960, 0
          %v7971 = vcombine.high %v7967, 0
          %v7972 = vcombine.high %v7730, %v1686
          %v7974 = vunpack.c.l.s4 1983009808
          %v7975 = vunpack.c.0.s8 %v7974
          %v7976 = vlaneseq
          %v7977 = vshrl.u32 %v7976, 7
          %v7978 = vsub.s32 %v7975, %v7977
          %v7979 = vrot.slane %v7730, %v7978
          %v7981 = vunpack.c.l.s4 1983009808
          %v7982 = vunpack.c.0.s8 %v7981
          %v7983 = vlaneseq
          %v7984 = vshrl.u32 %v7983, 7
          %v7985 = vsub.s32 %v7982, %v7984
          %v7986 = vrot.slane %v7972, %v7985
          %v7987 = vcombine.high %v7979, 0
          %v7989 = vunpack.c.l.s4 1934713408
          %v7990 = vunpack.c.0.s8 %v7989
          %v7991 = vlaneseq
          %v7992 = vshrl.u32 %v7991, 7
          %v7993 = vsub.s32 %v7990, %v7992
          %v7994 = vrot.slane %v7979, %v7993
          %v7996 = vunpack.c.l.s4 1934713408
          %v7997 = vunpack.c.0.s8 %v7996
          %v7998 = vlaneseq
          %v7999 = vshrl.u32 %v7998, 7
          %v8000 = vsub.s32 %v7997, %v7999
          %v8001 = vrot.slane %v7987, %v8000
          %v8002 = vcombine.high %v7986, 0
          %v8004 = vunpack.c.l.s4 1934713408
          %v8005 = vunpack.c.0.s8 %v8004
          %v8006 = vlaneseq
          %v8007 = vshrl.u32 %v8006, 7
          %v8008 = vsub.s32 %v8005, %v8007
          %v8009 = vrot.slane %v7986, %v8008
          %v8011 = vunpack.c.l.s4 1934713408
          %v8012 = vunpack.c.0.s8 %v8011
          %v8013 = vlaneseq
          %v8014 = vshrl.u32 %v8013, 7
          %v8015 = vsub.s32 %v8012, %v8014
          %v8016 = vrot.slane %v8002, %v8015
          %v8017 = vcombine.high %v7994, 0
          %v8018 = vcombine.high %v8001, 0
          %v8019 = vcombine.high %v8009, 0
          %v8020 = vcombine.high %v8016, 0
          %v8021 = vcombine.high %v7734, %v1689
          %v8023 = vunpack.c.l.s4 1983009808
          %v8024 = vunpack.c.0.s8 %v8023
          %v8025 = vlaneseq
          %v8026 = vshrl.u32 %v8025, 7
          %v8027 = vsub.s32 %v8024, %v8026
          %v8028 = vrot.slane %v7734, %v8027
          %v8030 = vunpack.c.l.s4 1983009808
          %v8031 = vunpack.c.0.s8 %v8030
          %v8032 = vlaneseq
          %v8033 = vshrl.u32 %v8032, 7
          %v8034 = vsub.s32 %v8031, %v8033
          %v8035 = vrot.slane %v8021, %v8034
          %v8036 = vcombine.high %v8028, 0
          %v8038 = vunpack.c.l.s4 1934713408
          %v8039 = vunpack.c.0.s8 %v8038
          %v8040 = vlaneseq
          %v8041 = vshrl.u32 %v8040, 7
          %v8042 = vsub.s32 %v8039, %v8041
          %v8043 = vrot.slane %v8028, %v8042
          %v8045 = vunpack.c.l.s4 1934713408
          %v8046 = vunpack.c.0.s8 %v8045
          %v8047 = vlaneseq
          %v8048 = vshrl.u32 %v8047, 7
          %v8049 = vsub.s32 %v8046, %v8048
          %v8050 = vrot.slane %v8036, %v8049
          %v8051 = vcombine.high %v8035, 0
          %v8053 = vunpack.c.l.s4 1934713408
          %v8054 = vunpack.c.0.s8 %v8053
          %v8055 = vlaneseq
          %v8056 = vshrl.u32 %v8055, 7
          %v8057 = vsub.s32 %v8054, %v8056
          %v8058 = vrot.slane %v8035, %v8057
          %v8060 = vunpack.c.l.s4 1934713408
          %v8061 = vunpack.c.0.s8 %v8060
          %v8062 = vlaneseq
          %v8063 = vshrl.u32 %v8062, 7
          %v8064 = vsub.s32 %v8061, %v8063
          %v8065 = vrot.slane %v8051, %v8064
          %v8066 = vcombine.high %v8043, 0
          %v8067 = vcombine.high %v8050, 0
          %v8068 = vcombine.high %v8058, 0
          %v8069 = vcombine.high %v8065, 0
          %v8070 = vcombine.high %v7738, %v1686
          %v8072 = vunpack.c.l.s4 1983009808
          %v8073 = vunpack.c.0.s8 %v8072
          %v8074 = vlaneseq
          %v8075 = vshrl.u32 %v8074, 7
          %v8076 = vsub.s32 %v8073, %v8075
          %v8077 = vrot.slane %v7738, %v8076
          %v8079 = vunpack.c.l.s4 1983009808
          %v8080 = vunpack.c.0.s8 %v8079
          %v8081 = vlaneseq
          %v8082 = vshrl.u32 %v8081, 7
          %v8083 = vsub.s32 %v8080, %v8082
          %v8084 = vrot.slane %v8070, %v8083
          %v8085 = vcombine.high %v8077, 0
          %v8087 = vunpack.c.l.s4 1934713408
          %v8088 = vunpack.c.0.s8 %v8087
          %v8089 = vlaneseq
          %v8090 = vshrl.u32 %v8089, 7
          %v8091 = vsub.s32 %v8088, %v8090
          %v8092 = vrot.slane %v8077, %v8091
          %v8094 = vunpack.c.l.s4 1934713408
          %v8095 = vunpack.c.0.s8 %v8094
          %v8096 = vlaneseq
          %v8097 = vshrl.u32 %v8096, 7
          %v8098 = vsub.s32 %v8095, %v8097
          %v8099 = vrot.slane %v8085, %v8098
          %v8100 = vcombine.high %v8084, 0
          %v8102 = vunpack.c.l.s4 1934713408
          %v8103 = vunpack.c.0.s8 %v8102
          %v8104 = vlaneseq
          %v8105 = vshrl.u32 %v8104, 7
          %v8106 = vsub.s32 %v8103, %v8105
          %v8107 = vrot.slane %v8084, %v8106
          %v8109 = vunpack.c.l.s4 1934713408
          %v8110 = vunpack.c.0.s8 %v8109
          %v8111 = vlaneseq
          %v8112 = vshrl.u32 %v8111, 7
          %v8113 = vsub.s32 %v8110, %v8112
          %v8114 = vrot.slane %v8100, %v8113
          %v8115 = vcombine.high %v8092, 0
          %v8116 = vcombine.high %v8099, 0
          %v8117 = vcombine.high %v8107, 0
          %v8118 = vcombine.high %v8114, 0
          %v8119 = vcombine.high %v7742, %v1689
          %v8121 = vunpack.c.l.s4 1983009808
          %v8122 = vunpack.c.0.s8 %v8121
          %v8123 = vlaneseq
          %v8124 = vshrl.u32 %v8123, 7
          %v8125 = vsub.s32 %v8122, %v8124
          %v8126 = vrot.slane %v7742, %v8125
          %v8128 = vunpack.c.l.s4 1983009808
          %v8129 = vunpack.c.0.s8 %v8128
          %v8130 = vlaneseq
          %v8131 = vshrl.u32 %v8130, 7
          %v8132 = vsub.s32 %v8129, %v8131
          %v8133 = vrot.slane %v8119, %v8132
          %v8134 = vcombine.high %v8126, 0
          %v8136 = vunpack.c.l.s4 1934713408
          %v8137 = vunpack.c.0.s8 %v8136
          %v8138 = vlaneseq
          %v8139 = vshrl.u32 %v8138, 7
          %v8140 = vsub.s32 %v8137, %v8139
          %v8141 = vrot.slane %v8126, %v8140
          %v8143 = vunpack.c.l.s4 1934713408
          %v8144 = vunpack.c.0.s8 %v8143
          %v8145 = vlaneseq
          %v8146 = vshrl.u32 %v8145, 7
          %v8147 = vsub.s32 %v8144, %v8146
          %v8148 = vrot.slane %v8134, %v8147
          %v8149 = vcombine.high %v8133, 0
          %v8151 = vunpack.c.l.s4 1934713408
          %v8152 = vunpack.c.0.s8 %v8151
          %v8153 = vlaneseq
          %v8154 = vshrl.u32 %v8153, 7
          %v8155 = vsub.s32 %v8152, %v8154
          %v8156 = vrot.slane %v8133, %v8155
          %v8158 = vunpack.c.l.s4 1934713408
          %v8159 = vunpack.c.0.s8 %v8158
          %v8160 = vlaneseq
          %v8161 = vshrl.u32 %v8160, 7
          %v8162 = vsub.s32 %v8159, %v8161
          %v8163 = vrot.slane %v8149, %v8162
          %v8164 = vcombine.high %v8141, 0
          %v8165 = vcombine.high %v8148, 0
          %v8166 = vcombine.high %v8156, 0
          %v8167 = vcombine.high %v8163, 0
          %v8168 = vcombine.high %v7746, %v1686
          %v8170 = vunpack.c.l.s4 1983009808
          %v8171 = vunpack.c.0.s8 %v8170
          %v8172 = vlaneseq
          %v8173 = vshrl.u32 %v8172, 7
          %v8174 = vsub.s32 %v8171, %v8173
          %v8175 = vrot.slane %v7746, %v8174
          %v8177 = vunpack.c.l.s4 1983009808
          %v8178 = vunpack.c.0.s8 %v8177
          %v8179 = vlaneseq
          %v8180 = vshrl.u32 %v8179, 7
          %v8181 = vsub.s32 %v8178, %v8180
          %v8182 = vrot.slane %v8168, %v8181
          %v8183 = vcombine.high %v8175, 0
          %v8185 = vunpack.c.l.s4 1934713408
          %v8186 = vunpack.c.0.s8 %v8185
          %v8187 = vlaneseq
          %v8188 = vshrl.u32 %v8187, 7
          %v8189 = vsub.s32 %v8186, %v8188
          %v8190 = vrot.slane %v8175, %v8189
          %v8192 = vunpack.c.l.s4 1934713408
          %v8193 = vunpack.c.0.s8 %v8192
          %v8194 = vlaneseq
          %v8195 = vshrl.u32 %v8194, 7
          %v8196 = vsub.s32 %v8193, %v8195
          %v8197 = vrot.slane %v8183, %v8196
          %v8198 = vcombine.high %v8182, 0
          %v8200 = vunpack.c.l.s4 1934713408
          %v8201 = vunpack.c.0.s8 %v8200
          %v8202 = vlaneseq
          %v8203 = vshrl.u32 %v8202, 7
          %v8204 = vsub.s32 %v8201, %v8203
          %v8205 = vrot.slane %v8182, %v8204
          %v8207 = vunpack.c.l.s4 1934713408
          %v8208 = vunpack.c.0.s8 %v8207
          %v8209 = vlaneseq
          %v8210 = vshrl.u32 %v8209, 7
          %v8211 = vsub.s32 %v8208, %v8210
          %v8212 = vrot.slane %v8198, %v8211
          %v8213 = vcombine.high %v8190, 0
          %v8214 = vcombine.high %v8197, 0
          %v8215 = vcombine.high %v8205, 0
          %v8216 = vcombine.high %v8212, 0
          %v8217 = vcombine.high %v7750, %v1689
          %v8219 = vunpack.c.l.s4 1983009808
          %v8220 = vunpack.c.0.s8 %v8219
          %v8221 = vlaneseq
          %v8222 = vshrl.u32 %v8221, 7
          %v8223 = vsub.s32 %v8220, %v8222
          %v8224 = vrot.slane %v7750, %v8223
          %v8226 = vunpack.c.l.s4 1983009808
          %v8227 = vunpack.c.0.s8 %v8226
          %v8228 = vlaneseq
          %v8229 = vshrl.u32 %v8228, 7
          %v8230 = vsub.s32 %v8227, %v8229
          %v8231 = vrot.slane %v8217, %v8230
          %v8232 = vcombine.high %v8224, 0
          %v8234 = vunpack.c.l.s4 1934713408
          %v8235 = vunpack.c.0.s8 %v8234
          %v8236 = vlaneseq
          %v8237 = vshrl.u32 %v8236, 7
          %v8238 = vsub.s32 %v8235, %v8237
          %v8239 = vrot.slane %v8224, %v8238
          %v8241 = vunpack.c.l.s4 1934713408
          %v8242 = vunpack.c.0.s8 %v8241
          %v8243 = vlaneseq
          %v8244 = vshrl.u32 %v8243, 7
          %v8245 = vsub.s32 %v8242, %v8244
          %v8246 = vrot.slane %v8232, %v8245
          %v8247 = vcombine.high %v8231, 0
          %v8249 = vunpack.c.l.s4 1934713408
          %v8250 = vunpack.c.0.s8 %v8249
          %v8251 = vlaneseq
          %v8252 = vshrl.u32 %v8251, 7
          %v8253 = vsub.s32 %v8250, %v8252
          %v8254 = vrot.slane %v8231, %v8253
          %v8256 = vunpack.c.l.s4 1934713408
          %v8257 = vunpack.c.0.s8 %v8256
          %v8258 = vlaneseq
          %v8259 = vshrl.u32 %v8258, 7
          %v8260 = vsub.s32 %v8257, %v8259
          %v8261 = vrot.slane %v8247, %v8260
          %v8262 = vcombine.high %v8239, 0
          %v8263 = vcombine.high %v8246, 0
          %v8264 = vcombine.high %v8254, 0
          %v8265 = vcombine.high %v8261, 0
          %v8266 = vcombine.high %v7754, %v1686
          %v8268 = vunpack.c.l.s4 1983009808
          %v8269 = vunpack.c.0.s8 %v8268
          %v8270 = vlaneseq
          %v8271 = vshrl.u32 %v8270, 7
          %v8272 = vsub.s32 %v8269, %v8271
          %v8273 = vrot.slane %v7754, %v8272
          %v8275 = vunpack.c.l.s4 1983009808
          %v8276 = vunpack.c.0.s8 %v8275
          %v8277 = vlaneseq
          %v8278 = vshrl.u32 %v8277, 7
          %v8279 = vsub.s32 %v8276, %v8278
          %v8280 = vrot.slane %v8266, %v8279
          %v8281 = vcombine.high %v8273, 0
          %v8283 = vunpack.c.l.s4 1934713408
          %v8284 = vunpack.c.0.s8 %v8283
          %v8285 = vlaneseq
          %v8286 = vshrl.u32 %v8285, 7
          %v8287 = vsub.s32 %v8284, %v8286
          %v8288 = vrot.slane %v8273, %v8287
          %v8290 = vunpack.c.l.s4 1934713408
          %v8291 = vunpack.c.0.s8 %v8290
          %v8292 = vlaneseq
          %v8293 = vshrl.u32 %v8292, 7
          %v8294 = vsub.s32 %v8291, %v8293
          %v8295 = vrot.slane %v8281, %v8294
          %v8296 = vcombine.high %v8280, 0
          %v8298 = vunpack.c.l.s4 1934713408
          %v8299 = vunpack.c.0.s8 %v8298
          %v8300 = vlaneseq
          %v8301 = vshrl.u32 %v8300, 7
          %v8302 = vsub.s32 %v8299, %v8301
          %v8303 = vrot.slane %v8280, %v8302
          %v8305 = vunpack.c.l.s4 1934713408
          %v8306 = vunpack.c.0.s8 %v8305
          %v8307 = vlaneseq
          %v8308 = vshrl.u32 %v8307, 7
          %v8309 = vsub.s32 %v8306, %v8308
          %v8310 = vrot.slane %v8296, %v8309
          %v8311 = vcombine.high %v8288, 0
          %v8312 = vcombine.high %v8295, 0
          %v8313 = vcombine.high %v8303, 0
          %v8314 = vcombine.high %v8310, 0
          %v8315 = vcombine.high %v7758, %v1689
          %v8317 = vunpack.c.l.s4 1983009808
          %v8318 = vunpack.c.0.s8 %v8317
          %v8319 = vlaneseq
          %v8320 = vshrl.u32 %v8319, 7
          %v8321 = vsub.s32 %v8318, %v8320
          %v8322 = vrot.slane %v7758, %v8321
          %v8324 = vunpack.c.l.s4 1983009808
          %v8325 = vunpack.c.0.s8 %v8324
          %v8326 = vlaneseq
          %v8327 = vshrl.u32 %v8326, 7
          %v8328 = vsub.s32 %v8325, %v8327
          %v8329 = vrot.slane %v8315, %v8328
          %v8330 = vcombine.high %v8322, 0
          %v8332 = vunpack.c.l.s4 1934713408
          %v8333 = vunpack.c.0.s8 %v8332
          %v8334 = vlaneseq
          %v8335 = vshrl.u32 %v8334, 7
          %v8336 = vsub.s32 %v8333, %v8335
          %v8337 = vrot.slane %v8322, %v8336
          %v8339 = vunpack.c.l.s4 1934713408
          %v8340 = vunpack.c.0.s8 %v8339
          %v8341 = vlaneseq
          %v8342 = vshrl.u32 %v8341, 7
          %v8343 = vsub.s32 %v8340, %v8342
          %v8344 = vrot.slane %v8330, %v8343
          %v8345 = vcombine.high %v8329, 0
          %v8347 = vunpack.c.l.s4 1934713408
          %v8348 = vunpack.c.0.s8 %v8347
          %v8349 = vlaneseq
          %v8350 = vshrl.u32 %v8349, 7
          %v8351 = vsub.s32 %v8348, %v8350
          %v8352 = vrot.slane %v8329, %v8351
          %v8354 = vunpack.c.l.s4 1934713408
          %v8355 = vunpack.c.0.s8 %v8354
          %v8356 = vlaneseq
          %v8357 = vshrl.u32 %v8356, 7
          %v8358 = vsub.s32 %v8355, %v8357
          %v8359 = vrot.slane %v8345, %v8358
          %v8360 = vcombine.high %v8337, 0
          %v8361 = vcombine.high %v8344, 0
          %v8362 = vcombine.high %v8352, 0
          %v8363 = vcombine.high %v8359, 0
          %v8364 = vcombine.high %v7762, %v1686
          %v8366 = vunpack.c.l.s4 1983009808
          %v8367 = vunpack.c.0.s8 %v8366
          %v8368 = vlaneseq
          %v8369 = vshrl.u32 %v8368, 7
          %v8370 = vsub.s32 %v8367, %v8369
          %v8371 = vrot.slane %v7762, %v8370
          %v8373 = vunpack.c.l.s4 1983009808
          %v8374 = vunpack.c.0.s8 %v8373
          %v8375 = vlaneseq
          %v8376 = vshrl.u32 %v8375, 7
          %v8377 = vsub.s32 %v8374, %v8376
          %v8378 = vrot.slane %v8364, %v8377
          %v8379 = vcombine.high %v8371, 0
          %v8381 = vunpack.c.l.s4 1934713408
          %v8382 = vunpack.c.0.s8 %v8381
          %v8383 = vlaneseq
          %v8384 = vshrl.u32 %v8383, 7
          %v8385 = vsub.s32 %v8382, %v8384
          %v8386 = vrot.slane %v8371, %v8385
          %v8388 = vunpack.c.l.s4 1934713408
          %v8389 = vunpack.c.0.s8 %v8388
          %v8390 = vlaneseq
          %v8391 = vshrl.u32 %v8390, 7
          %v8392 = vsub.s32 %v8389, %v8391
          %v8393 = vrot.slane %v8379, %v8392
          %v8394 = vcombine.high %v8378, 0
          %v8396 = vunpack.c.l.s4 1934713408
          %v8397 = vunpack.c.0.s8 %v8396
          %v8398 = vlaneseq
          %v8399 = vshrl.u32 %v8398, 7
          %v8400 = vsub.s32 %v8397, %v8399
          %v8401 = vrot.slane %v8378, %v8400
          %v8403 = vunpack.c.l.s4 1934713408
          %v8404 = vunpack.c.0.s8 %v8403
          %v8405 = vlaneseq
          %v8406 = vshrl.u32 %v8405, 7
          %v8407 = vsub.s32 %v8404, %v8406
          %v8408 = vrot.slane %v8394, %v8407
          %v8409 = vcombine.high %v8386, 0
          %v8410 = vcombine.high %v8393, 0
          %v8411 = vcombine.high %v8401, 0
          %v8412 = vcombine.high %v8408, 0
          %v8413 = vcombine.high %v7766, %v1689
          %v8415 = vunpack.c.l.s4 1983009808
          %v8416 = vunpack.c.0.s8 %v8415
          %v8417 = vlaneseq
          %v8418 = vshrl.u32 %v8417, 7
          %v8419 = vsub.s32 %v8416, %v8418
          %v8420 = vrot.slane %v7766, %v8419
          %v8422 = vunpack.c.l.s4 1983009808
          %v8423 = vunpack.c.0.s8 %v8422
          %v8424 = vlaneseq
          %v8425 = vshrl.u32 %v8424, 7
          %v8426 = vsub.s32 %v8423, %v8425
          %v8427 = vrot.slane %v8413, %v8426
          %v8428 = vcombine.high %v8420, 0
          %v8430 = vunpack.c.l.s4 1934713408
          %v8431 = vunpack.c.0.s8 %v8430
          %v8432 = vlaneseq
          %v8433 = vshrl.u32 %v8432, 7
          %v8434 = vsub.s32 %v8431, %v8433
          %v8435 = vrot.slane %v8420, %v8434
          %v8437 = vunpack.c.l.s4 1934713408
          %v8438 = vunpack.c.0.s8 %v8437
          %v8439 = vlaneseq
          %v8440 = vshrl.u32 %v8439, 7
          %v8441 = vsub.s32 %v8438, %v8440
          %v8442 = vrot.slane %v8428, %v8441
          %v8443 = vcombine.high %v8427, 0
          %v8445 = vunpack.c.l.s4 1934713408
          %v8446 = vunpack.c.0.s8 %v8445
          %v8447 = vlaneseq
          %v8448 = vshrl.u32 %v8447, 7
          %v8449 = vsub.s32 %v8446, %v8448
          %v8450 = vrot.slane %v8427, %v8449
          %v8452 = vunpack.c.l.s4 1934713408
          %v8453 = vunpack.c.0.s8 %v8452
          %v8454 = vlaneseq
          %v8455 = vshrl.u32 %v8454, 7
          %v8456 = vsub.s32 %v8453, %v8455
          %v8457 = vrot.slane %v8443, %v8456
          %v8458 = vcombine.high %v8435, 0
          %v8459 = vcombine.high %v8442, 0
          %v8460 = vcombine.high %v8450, 0
          %v8461 = vcombine.high %v8457, 0
          %v8462 = vcombine.high %v7770, %v1686
          %v8464 = vunpack.c.l.s4 1983009808
          %v8465 = vunpack.c.0.s8 %v8464
          %v8466 = vlaneseq
          %v8467 = vshrl.u32 %v8466, 7
          %v8468 = vsub.s32 %v8465, %v8467
          %v8469 = vrot.slane %v7770, %v8468
          %v8471 = vunpack.c.l.s4 1983009808
          %v8472 = vunpack.c.0.s8 %v8471
          %v8473 = vlaneseq
          %v8474 = vshrl.u32 %v8473, 7
          %v8475 = vsub.s32 %v8472, %v8474
          %v8476 = vrot.slane %v8462, %v8475
          %v8477 = vcombine.high %v8469, 0
          %v8479 = vunpack.c.l.s4 1934713408
          %v8480 = vunpack.c.0.s8 %v8479
          %v8481 = vlaneseq
          %v8482 = vshrl.u32 %v8481, 7
          %v8483 = vsub.s32 %v8480, %v8482
          %v8484 = vrot.slane %v8469, %v8483
          %v8486 = vunpack.c.l.s4 1934713408
          %v8487 = vunpack.c.0.s8 %v8486
          %v8488 = vlaneseq
          %v8489 = vshrl.u32 %v8488, 7
          %v8490 = vsub.s32 %v8487, %v8489
          %v8491 = vrot.slane %v8477, %v8490
          %v8492 = vcombine.high %v8476, 0
          %v8494 = vunpack.c.l.s4 1934713408
          %v8495 = vunpack.c.0.s8 %v8494
          %v8496 = vlaneseq
          %v8497 = vshrl.u32 %v8496, 7
          %v8498 = vsub.s32 %v8495, %v8497
          %v8499 = vrot.slane %v8476, %v8498
          %v8501 = vunpack.c.l.s4 1934713408
          %v8502 = vunpack.c.0.s8 %v8501
          %v8503 = vlaneseq
          %v8504 = vshrl.u32 %v8503, 7
          %v8505 = vsub.s32 %v8502, %v8504
          %v8506 = vrot.slane %v8492, %v8505
          %v8507 = vcombine.high %v8484, 0
          %v8508 = vcombine.high %v8491, 0
          %v8509 = vcombine.high %v8499, 0
          %v8510 = vcombine.high %v8506, 0
          %v8511 = vcombine.high %v7774, %v1689
          %v8513 = vunpack.c.l.s4 1983009808
          %v8514 = vunpack.c.0.s8 %v8513
          %v8515 = vlaneseq
          %v8516 = vshrl.u32 %v8515, 7
          %v8517 = vsub.s32 %v8514, %v8516
          %v8518 = vrot.slane %v7774, %v8517
          %v8520 = vunpack.c.l.s4 1983009808
          %v8521 = vunpack.c.0.s8 %v8520
          %v8522 = vlaneseq
          %v8523 = vshrl.u32 %v8522, 7
          %v8524 = vsub.s32 %v8521, %v8523
          %v8525 = vrot.slane %v8511, %v8524
          %v8526 = vcombine.high %v8518, 0
          %v8528 = vunpack.c.l.s4 1934713408
          %v8529 = vunpack.c.0.s8 %v8528
          %v8530 = vlaneseq
          %v8531 = vshrl.u32 %v8530, 7
          %v8532 = vsub.s32 %v8529, %v8531
          %v8533 = vrot.slane %v8518, %v8532
          %v8535 = vunpack.c.l.s4 1934713408
          %v8536 = vunpack.c.0.s8 %v8535
          %v8537 = vlaneseq
          %v8538 = vshrl.u32 %v8537, 7
          %v8539 = vsub.s32 %v8536, %v8538
          %v8540 = vrot.slane %v8526, %v8539
          %v8541 = vcombine.high %v8525, 0
          %v8543 = vunpack.c.l.s4 1934713408
          %v8544 = vunpack.c.0.s8 %v8543
          %v8545 = vlaneseq
          %v8546 = vshrl.u32 %v8545, 7
          %v8547 = vsub.s32 %v8544, %v8546
          %v8548 = vrot.slane %v8525, %v8547
          %v8550 = vunpack.c.l.s4 1934713408
          %v8551 = vunpack.c.0.s8 %v8550
          %v8552 = vlaneseq
          %v8553 = vshrl.u32 %v8552, 7
          %v8554 = vsub.s32 %v8551, %v8553
          %v8555 = vrot.slane %v8541, %v8554
          %v8556 = vcombine.high %v8533, 0
          %v8557 = vcombine.high %v8540, 0
          %v8558 = vcombine.high %v8548, 0
          %v8559 = vcombine.high %v8555, 0
          %v8560 = vcombine.low %v7798, %v7805
          %v8562 = vunpack.c.l.s4 1983009808
          %v8563 = vunpack.c.0.s8 %v8562
          %v8564 = vlaneseq
          %v8565 = vshrl.u32 %v8564, 7
          %v8566 = vsub.s32 %v8563, %v8565
          %v8567 = vrot.slane %v8560, %v8566
          %v8568 = vcombine.low %v7821, %v7822
          %v8570 = vunpack.c.l.s4 1983009808
          %v8571 = vunpack.c.0.s8 %v8570
          %v8572 = vlaneseq
          %v8573 = vshrl.u32 %v8572, 7
          %v8574 = vsub.s32 %v8571, %v8573
          %v8575 = vrot.slane %v8568, %v8574
          %v8576 = vcombine.low %v7813, %v7820
          %v8578 = vunpack.c.l.s4 1983009808
          %v8579 = vunpack.c.0.s8 %v8578
          %v8580 = vlaneseq
          %v8581 = vshrl.u32 %v8580, 7
          %v8582 = vsub.s32 %v8579, %v8581
          %v8583 = vrot.slane %v8576, %v8582
          %v8584 = vcombine.low %v7823, %v7824
          %v8586 = vunpack.c.l.s4 1983009808
          %v8587 = vunpack.c.0.s8 %v8586
          %v8588 = vlaneseq
          %v8589 = vshrl.u32 %v8588, 7
          %v8590 = vsub.s32 %v8587, %v8589
          %v8591 = vrot.slane %v8584, %v8590
          %v8592 = vcombine.low %v8567, %v8575
          %v8594 = vunpack.c.l.s4 1934713408
          %v8595 = vunpack.c.0.s8 %v8594
          %v8596 = vlaneseq
          %v8597 = vshrl.u32 %v8596, 7
          %v8598 = vsub.s32 %v8595, %v8597
          %v8599 = vrot.slane %v8592, %v8598
          %v8600 = vcombine.low %v8583, %v8591
          %v8602 = vunpack.c.l.s4 1934713408
          %v8603 = vunpack.c.0.s8 %v8602
          %v8604 = vlaneseq
          %v8605 = vshrl.u32 %v8604, 7
          %v8606 = vsub.s32 %v8603, %v8605
          %v8607 = vrot.slane %v8600, %v8606
          %v8608 = vcombine.low %v8599, %v8607
          %v8609 = vcombine.low %v7847, %v7854
          %v8611 = vunpack.c.l.s4 1983009808
          %v8612 = vunpack.c.0.s8 %v8611
          %v8613 = vlaneseq
          %v8614 = vshrl.u32 %v8613, 7
          %v8615 = vsub.s32 %v8612, %v8614
          %v8616 = vrot.slane %v8609, %v8615
          %v8617 = vcombine.low %v7870, %v7871
          %v8619 = vunpack.c.l.s4 1983009808
          %v8620 = vunpack.c.0.s8 %v8619
          %v8621 = vlaneseq
          %v8622 = vshrl.u32 %v8621, 7
          %v8623 = vsub.s32 %v8620, %v8622
          %v8624 = vrot.slane %v8617, %v8623
          %v8625 = vcombine.low %v7862, %v7869
          %v8627 = vunpack.c.l.s4 1983009808
          %v8628 = vunpack.c.0.s8 %v8627
          %v8629 = vlaneseq
          %v8630 = vshrl.u32 %v8629, 7
          %v8631 = vsub.s32 %v8628, %v8630
          %v8632 = vrot.slane %v8625, %v8631
          %v8633 = vcombine.low %v7872, %v7873
          %v8635 = vunpack.c.l.s4 1983009808
          %v8636 = vunpack.c.0.s8 %v8635
          %v8637 = vlaneseq
          %v8638 = vshrl.u32 %v8637, 7
          %v8639 = vsub.s32 %v8636, %v8638
          %v8640 = vrot.slane %v8633, %v8639
          %v8641 = vcombine.low %v8616, %v8624
          %v8643 = vunpack.c.l.s4 1934713408
          %v8644 = vunpack.c.0.s8 %v8643
          %v8645 = vlaneseq
          %v8646 = vshrl.u32 %v8645, 7
          %v8647 = vsub.s32 %v8644, %v8646
          %v8648 = vrot.slane %v8641, %v8647
          %v8649 = vcombine.low %v8632, %v8640
          %v8651 = vunpack.c.l.s4 1934713408
          %v8652 = vunpack.c.0.s8 %v8651
          %v8653 = vlaneseq
          %v8654 = vshrl.u32 %v8653, 7
          %v8655 = vsub.s32 %v8652, %v8654
          %v8656 = vrot.slane %v8649, %v8655
          %v8657 = vcombine.low %v8648, %v8656
          %v8658 = vcombine.low %v7896, %v7903
          %v8660 = vunpack.c.l.s4 1983009808
          %v8661 = vunpack.c.0.s8 %v8660
          %v8662 = vlaneseq
          %v8663 = vshrl.u32 %v8662, 7
          %v8664 = vsub.s32 %v8661, %v8663
          %v8665 = vrot.slane %v8658, %v8664
          %v8666 = vcombine.low %v7919, %v7920
          %v8668 = vunpack.c.l.s4 1983009808
          %v8669 = vunpack.c.0.s8 %v8668
          %v8670 = vlaneseq
          %v8671 = vshrl.u32 %v8670, 7
          %v8672 = vsub.s32 %v8669, %v8671
          %v8673 = vrot.slane %v8666, %v8672
          %v8674 = vcombine.low %v7911, %v7918
          %v8676 = vunpack.c.l.s4 1983009808
          %v8677 = vunpack.c.0.s8 %v8676
          %v8678 = vlaneseq
          %v8679 = vshrl.u32 %v8678, 7
          %v8680 = vsub.s32 %v8677, %v8679
          %v8681 = vrot.slane %v8674, %v8680
          %v8682 = vcombine.low %v7921, %v7922
          %v8684 = vunpack.c.l.s4 1983009808
          %v8685 = vunpack.c.0.s8 %v8684
          %v8686 = vlaneseq
          %v8687 = vshrl.u32 %v8686, 7
          %v8688 = vsub.s32 %v8685, %v8687
          %v8689 = vrot.slane %v8682, %v8688
          %v8690 = vcombine.low %v8665, %v8673
          %v8692 = vunpack.c.l.s4 1934713408
          %v8693 = vunpack.c.0.s8 %v8692
          %v8694 = vlaneseq
          %v8695 = vshrl.u32 %v8694, 7
          %v8696 = vsub.s32 %v8693, %v8695
          %v8697 = vrot.slane %v8690, %v8696
          %v8698 = vcombine.low %v8681, %v8689
          %v8700 = vunpack.c.l.s4 1934713408
          %v8701 = vunpack.c.0.s8 %v8700
          %v8702 = vlaneseq
          %v8703 = vshrl.u32 %v8702, 7
          %v8704 = vsub.s32 %v8701, %v8703
          %v8705 = vrot.slane %v8698, %v8704
          %v8706 = vcombine.low %v8697, %v8705
          %v8707 = vcombine.low %v7945, %v7952
          %v8709 = vunpack.c.l.s4 1983009808
          %v8710 = vunpack.c.0.s8 %v8709
          %v8711 = vlaneseq
          %v8712 = vshrl.u32 %v8711, 7
          %v8713 = vsub.s32 %v8710, %v8712
          %v8714 = vrot.slane %v8707, %v8713
          %v8715 = vcombine.low %v7968, %v7969
          %v8717 = vunpack.c.l.s4 1983009808
          %v8718 = vunpack.c.0.s8 %v8717
          %v8719 = vlaneseq
          %v8720 = vshrl.u32 %v8719, 7
          %v8721 = vsub.s32 %v8718, %v8720
          %v8722 = vrot.slane %v8715, %v8721
          %v8723 = vcombine.low %v7960, %v7967
          %v8725 = vunpack.c.l.s4 1983009808
          %v8726 = vunpack.c.0.s8 %v8725
          %v8727 = vlaneseq
          %v8728 = vshrl.u32 %v8727, 7
          %v8729 = vsub.s32 %v8726, %v8728
          %v8730 = vrot.slane %v8723, %v8729
          %v8731 = vcombine.low %v7970, %v7971
          %v8733 = vunpack.c.l.s4 1983009808
          %v8734 = vunpack.c.0.s8 %v8733
          %v8735 = vlaneseq
          %v8736 = vshrl.u32 %v8735, 7
          %v8737 = vsub.s32 %v8734, %v8736
          %v8738 = vrot.slane %v8731, %v8737
          %v8739 = vcombine.low %v8714, %v8722
          %v8741 = vunpack.c.l.s4 1934713408
          %v8742 = vunpack.c.0.s8 %v8741
          %v8743 = vlaneseq
          %v8744 = vshrl.u32 %v8743, 7
          %v8745 = vsub.s32 %v8742, %v8744
          %v8746 = vrot.slane %v8739, %v8745
          %v8747 = vcombine.low %v8730, %v8738
          %v8749 = vunpack.c.l.s4 1934713408
          %v8750 = vunpack.c.0.s8 %v8749
          %v8751 = vlaneseq
          %v8752 = vshrl.u32 %v8751, 7
          %v8753 = vsub.s32 %v8750, %v8752
          %v8754 = vrot.slane %v8747, %v8753
          %v8755 = vcombine.low %v8746, %v8754
          %v8756 = vcombine.low %v7994, %v8001
          %v8758 = vunpack.c.l.s4 1983009808
          %v8759 = vunpack.c.0.s8 %v8758
          %v8760 = vlaneseq
          %v8761 = vshrl.u32 %v8760, 7
          %v8762 = vsub.s32 %v8759, %v8761
          %v8763 = vrot.slane %v8756, %v8762
          %v8764 = vcombine.low %v8017, %v8018
          %v8766 = vunpack.c.l.s4 1983009808
          %v8767 = vunpack.c.0.s8 %v8766
          %v8768 = vlaneseq
          %v8769 = vshrl.u32 %v8768, 7
          %v8770 = vsub.s32 %v8767, %v8769
          %v8771 = vrot.slane %v8764, %v8770
          %v8772 = vcombine.low %v8009, %v8016
          %v8774 = vunpack.c.l.s4 1983009808
          %v8775 = vunpack.c.0.s8 %v8774
          %v8776 = vlaneseq
          %v8777 = vshrl.u32 %v8776, 7
          %v8778 = vsub.s32 %v8775, %v8777
          %v8779 = vrot.slane %v8772, %v8778
          %v8780 = vcombine.low %v8019, %v8020
          %v8782 = vunpack.c.l.s4 1983009808
          %v8783 = vunpack.c.0.s8 %v8782
          %v8784 = vlaneseq
          %v8785 = vshrl.u32 %v8784, 7
          %v8786 = vsub.s32 %v8783, %v8785
          %v8787 = vrot.slane %v8780, %v8786
          %v8788 = vcombine.low %v8763, %v8771
          %v8790 = vunpack.c.l.s4 1934713408
          %v8791 = vunpack.c.0.s8 %v8790
          %v8792 = vlaneseq
          %v8793 = vshrl.u32 %v8792, 7
          %v8794 = vsub.s32 %v8791, %v8793
          %v8795 = vrot.slane %v8788, %v8794
          %v8796 = vcombine.low %v8779, %v8787
          %v8798 = vunpack.c.l.s4 1934713408
          %v8799 = vunpack.c.0.s8 %v8798
          %v8800 = vlaneseq
          %v8801 = vshrl.u32 %v8800, 7
          %v8802 = vsub.s32 %v8799, %v8801
          %v8803 = vrot.slane %v8796, %v8802
          %v8804 = vcombine.low %v8795, %v8803
          %v8805 = vcombine.low %v8043, %v8050
          %v8807 = vunpack.c.l.s4 1983009808
          %v8808 = vunpack.c.0.s8 %v8807
          %v8809 = vlaneseq
          %v8810 = vshrl.u32 %v8809, 7
          %v8811 = vsub.s32 %v8808, %v8810
          %v8812 = vrot.slane %v8805, %v8811
          %v8813 = vcombine.low %v8066, %v8067
          %v8815 = vunpack.c.l.s4 1983009808
          %v8816 = vunpack.c.0.s8 %v8815
          %v8817 = vlaneseq
          %v8818 = vshrl.u32 %v8817, 7
          %v8819 = vsub.s32 %v8816, %v8818
          %v8820 = vrot.slane %v8813, %v8819
          %v8821 = vcombine.low %v8058, %v8065
          %v8823 = vunpack.c.l.s4 1983009808
          %v8824 = vunpack.c.0.s8 %v8823
          %v8825 = vlaneseq
          %v8826 = vshrl.u32 %v8825, 7
          %v8827 = vsub.s32 %v8824, %v8826
          %v8828 = vrot.slane %v8821, %v8827
          %v8829 = vcombine.low %v8068, %v8069
          %v8831 = vunpack.c.l.s4 1983009808
          %v8832 = vunpack.c.0.s8 %v8831
          %v8833 = vlaneseq
          %v8834 = vshrl.u32 %v8833, 7
          %v8835 = vsub.s32 %v8832, %v8834
          %v8836 = vrot.slane %v8829, %v8835
          %v8837 = vcombine.low %v8812, %v8820
          %v8839 = vunpack.c.l.s4 1934713408
          %v8840 = vunpack.c.0.s8 %v8839
          %v8841 = vlaneseq
          %v8842 = vshrl.u32 %v8841, 7
          %v8843 = vsub.s32 %v8840, %v8842
          %v8844 = vrot.slane %v8837, %v8843
          %v8845 = vcombine.low %v8828, %v8836
          %v8847 = vunpack.c.l.s4 1934713408
          %v8848 = vunpack.c.0.s8 %v8847
          %v8849 = vlaneseq
          %v8850 = vshrl.u32 %v8849, 7
          %v8851 = vsub.s32 %v8848, %v8850
          %v8852 = vrot.slane %v8845, %v8851
          %v8853 = vcombine.low %v8844, %v8852
          %v8854 = vcombine.low %v8092, %v8099
          %v8856 = vunpack.c.l.s4 1983009808
          %v8857 = vunpack.c.0.s8 %v8856
          %v8858 = vlaneseq
          %v8859 = vshrl.u32 %v8858, 7
          %v8860 = vsub.s32 %v8857, %v8859
          %v8861 = vrot.slane %v8854, %v8860
          %v8862 = vcombine.low %v8115, %v8116
          %v8864 = vunpack.c.l.s4 1983009808
          %v8865 = vunpack.c.0.s8 %v8864
          %v8866 = vlaneseq
          %v8867 = vshrl.u32 %v8866, 7
          %v8868 = vsub.s32 %v8865, %v8867
          %v8869 = vrot.slane %v8862, %v8868
          %v8870 = vcombine.low %v8107, %v8114
          %v8872 = vunpack.c.l.s4 1983009808
          %v8873 = vunpack.c.0.s8 %v8872
          %v8874 = vlaneseq
          %v8875 = vshrl.u32 %v8874, 7
          %v8876 = vsub.s32 %v8873, %v8875
          %v8877 = vrot.slane %v8870, %v8876
          %v8878 = vcombine.low %v8117, %v8118
          %v8880 = vunpack.c.l.s4 1983009808
          %v8881 = vunpack.c.0.s8 %v8880
          %v8882 = vlaneseq
          %v8883 = vshrl.u32 %v8882, 7
          %v8884 = vsub.s32 %v8881, %v8883
          %v8885 = vrot.slane %v8878, %v8884
          %v8886 = vcombine.low %v8861, %v8869
          %v8888 = vunpack.c.l.s4 1934713408
          %v8889 = vunpack.c.0.s8 %v8888
          %v8890 = vlaneseq
          %v8891 = vshrl.u32 %v8890, 7
          %v8892 = vsub.s32 %v8889, %v8891
          %v8893 = vrot.slane %v8886, %v8892
          %v8894 = vcombine.low %v8877, %v8885
          %v8896 = vunpack.c.l.s4 1934713408
          %v8897 = vunpack.c.0.s8 %v8896
          %v8898 = vlaneseq
          %v8899 = vshrl.u32 %v8898, 7
          %v8900 = vsub.s32 %v8897, %v8899
          %v8901 = vrot.slane %v8894, %v8900
          %v8902 = vcombine.low %v8893, %v8901
          %v8903 = vcombine.low %v8141, %v8148
          %v8905 = vunpack.c.l.s4 1983009808
          %v8906 = vunpack.c.0.s8 %v8905
          %v8907 = vlaneseq
          %v8908 = vshrl.u32 %v8907, 7
          %v8909 = vsub.s32 %v8906, %v8908
          %v8910 = vrot.slane %v8903, %v8909
          %v8911 = vcombine.low %v8164, %v8165
          %v8913 = vunpack.c.l.s4 1983009808
          %v8914 = vunpack.c.0.s8 %v8913
          %v8915 = vlaneseq
          %v8916 = vshrl.u32 %v8915, 7
          %v8917 = vsub.s32 %v8914, %v8916
          %v8918 = vrot.slane %v8911, %v8917
          %v8919 = vcombine.low %v8156, %v8163
          %v8921 = vunpack.c.l.s4 1983009808
          %v8922 = vunpack.c.0.s8 %v8921
          %v8923 = vlaneseq
          %v8924 = vshrl.u32 %v8923, 7
          %v8925 = vsub.s32 %v8922, %v8924
          %v8926 = vrot.slane %v8919, %v8925
          %v8927 = vcombine.low %v8166, %v8167
          %v8929 = vunpack.c.l.s4 1983009808
          %v8930 = vunpack.c.0.s8 %v8929
          %v8931 = vlaneseq
          %v8932 = vshrl.u32 %v8931, 7
          %v8933 = vsub.s32 %v8930, %v8932
          %v8934 = vrot.slane %v8927, %v8933
          %v8935 = vcombine.low %v8910, %v8918
          %v8937 = vunpack.c.l.s4 1934713408
          %v8938 = vunpack.c.0.s8 %v8937
          %v8939 = vlaneseq
          %v8940 = vshrl.u32 %v8939, 7
          %v8941 = vsub.s32 %v8938, %v8940
          %v8942 = vrot.slane %v8935, %v8941
          %v8943 = vcombine.low %v8926, %v8934
          %v8945 = vunpack.c.l.s4 1934713408
          %v8946 = vunpack.c.0.s8 %v8945
          %v8947 = vlaneseq
          %v8948 = vshrl.u32 %v8947, 7
          %v8949 = vsub.s32 %v8946, %v8948
          %v8950 = vrot.slane %v8943, %v8949
          %v8951 = vcombine.low %v8942, %v8950
          %v8952 = vcombine.low %v8190, %v8197
          %v8954 = vunpack.c.l.s4 1983009808
          %v8955 = vunpack.c.0.s8 %v8954
          %v8956 = vlaneseq
          %v8957 = vshrl.u32 %v8956, 7
          %v8958 = vsub.s32 %v8955, %v8957
          %v8959 = vrot.slane %v8952, %v8958
          %v8960 = vcombine.low %v8213, %v8214
          %v8962 = vunpack.c.l.s4 1983009808
          %v8963 = vunpack.c.0.s8 %v8962
          %v8964 = vlaneseq
          %v8965 = vshrl.u32 %v8964, 7
          %v8966 = vsub.s32 %v8963, %v8965
          %v8967 = vrot.slane %v8960, %v8966
          %v8968 = vcombine.low %v8205, %v8212
          %v8970 = vunpack.c.l.s4 1983009808
          %v8971 = vunpack.c.0.s8 %v8970
          %v8972 = vlaneseq
          %v8973 = vshrl.u32 %v8972, 7
          %v8974 = vsub.s32 %v8971, %v8973
          %v8975 = vrot.slane %v8968, %v8974
          %v8976 = vcombine.low %v8215, %v8216
          %v8978 = vunpack.c.l.s4 1983009808
          %v8979 = vunpack.c.0.s8 %v8978
          %v8980 = vlaneseq
          %v8981 = vshrl.u32 %v8980, 7
          %v8982 = vsub.s32 %v8979, %v8981
          %v8983 = vrot.slane %v8976, %v8982
          %v8984 = vcombine.low %v8959, %v8967
          %v8986 = vunpack.c.l.s4 1934713408
          %v8987 = vunpack.c.0.s8 %v8986
          %v8988 = vlaneseq
          %v8989 = vshrl.u32 %v8988, 7
          %v8990 = vsub.s32 %v8987, %v8989
          %v8991 = vrot.slane %v8984, %v8990
          %v8992 = vcombine.low %v8975, %v8983
          %v8994 = vunpack.c.l.s4 1934713408
          %v8995 = vunpack.c.0.s8 %v8994
          %v8996 = vlaneseq
          %v8997 = vshrl.u32 %v8996, 7
          %v8998 = vsub.s32 %v8995, %v8997
          %v8999 = vrot.slane %v8992, %v8998
          %v9000 = vcombine.low %v8991, %v8999
          %v9001 = vcombine.low %v8239, %v8246
          %v9003 = vunpack.c.l.s4 1983009808
          %v9004 = vunpack.c.0.s8 %v9003
          %v9005 = vlaneseq
          %v9006 = vshrl.u32 %v9005, 7
          %v9007 = vsub.s32 %v9004, %v9006
          %v9008 = vrot.slane %v9001, %v9007
          %v9009 = vcombine.low %v8262, %v8263
          %v9011 = vunpack.c.l.s4 1983009808
          %v9012 = vunpack.c.0.s8 %v9011
          %v9013 = vlaneseq
          %v9014 = vshrl.u32 %v9013, 7
          %v9015 = vsub.s32 %v9012, %v9014
          %v9016 = vrot.slane %v9009, %v9015
          %v9017 = vcombine.low %v8254, %v8261
          %v9019 = vunpack.c.l.s4 1983009808
          %v9020 = vunpack.c.0.s8 %v9019
          %v9021 = vlaneseq
          %v9022 = vshrl.u32 %v9021, 7
          %v9023 = vsub.s32 %v9020, %v9022
          %v9024 = vrot.slane %v9017, %v9023
          %v9025 = vcombine.low %v8264, %v8265
          %v9027 = vunpack.c.l.s4 1983009808
          %v9028 = vunpack.c.0.s8 %v9027
          %v9029 = vlaneseq
          %v9030 = vshrl.u32 %v9029, 7
          %v9031 = vsub.s32 %v9028, %v9030
          %v9032 = vrot.slane %v9025, %v9031
          %v9033 = vcombine.low %v9008, %v9016
          %v9035 = vunpack.c.l.s4 1934713408
          %v9036 = vunpack.c.0.s8 %v9035
          %v9037 = vlaneseq
          %v9038 = vshrl.u32 %v9037, 7
          %v9039 = vsub.s32 %v9036, %v9038
          %v9040 = vrot.slane %v9033, %v9039
          %v9041 = vcombine.low %v9024, %v9032
          %v9043 = vunpack.c.l.s4 1934713408
          %v9044 = vunpack.c.0.s8 %v9043
          %v9045 = vlaneseq
          %v9046 = vshrl.u32 %v9045, 7
          %v9047 = vsub.s32 %v9044, %v9046
          %v9048 = vrot.slane %v9041, %v9047
          %v9049 = vcombine.low %v9040, %v9048
          %v9050 = vcombine.low %v8288, %v8295
          %v9052 = vunpack.c.l.s4 1983009808
          %v9053 = vunpack.c.0.s8 %v9052
          %v9054 = vlaneseq
          %v9055 = vshrl.u32 %v9054, 7
          %v9056 = vsub.s32 %v9053, %v9055
          %v9057 = vrot.slane %v9050, %v9056
          %v9058 = vcombine.low %v8311, %v8312
          %v9060 = vunpack.c.l.s4 1983009808
          %v9061 = vunpack.c.0.s8 %v9060
          %v9062 = vlaneseq
          %v9063 = vshrl.u32 %v9062, 7
          %v9064 = vsub.s32 %v9061, %v9063
          %v9065 = vrot.slane %v9058, %v9064
          %v9066 = vcombine.low %v8303, %v8310
          %v9068 = vunpack.c.l.s4 1983009808
          %v9069 = vunpack.c.0.s8 %v9068
          %v9070 = vlaneseq
          %v9071 = vshrl.u32 %v9070, 7
          %v9072 = vsub.s32 %v9069, %v9071
          %v9073 = vrot.slane %v9066, %v9072
          %v9074 = vcombine.low %v8313, %v8314
          %v9076 = vunpack.c.l.s4 1983009808
          %v9077 = vunpack.c.0.s8 %v9076
          %v9078 = vlaneseq
          %v9079 = vshrl.u32 %v9078, 7
          %v9080 = vsub.s32 %v9077, %v9079
          %v9081 = vrot.slane %v9074, %v9080
          %v9082 = vcombine.low %v9057, %v9065
          %v9084 = vunpack.c.l.s4 1934713408
          %v9085 = vunpack.c.0.s8 %v9084
          %v9086 = vlaneseq
          %v9087 = vshrl.u32 %v9086, 7
          %v9088 = vsub.s32 %v9085, %v9087
          %v9089 = vrot.slane %v9082, %v9088
          %v9090 = vcombine.low %v9073, %v9081
          %v9092 = vunpack.c.l.s4 1934713408
          %v9093 = vunpack.c.0.s8 %v9092
          %v9094 = vlaneseq
          %v9095 = vshrl.u32 %v9094, 7
          %v9096 = vsub.s32 %v9093, %v9095
          %v9097 = vrot.slane %v9090, %v9096
          %v9098 = vcombine.low %v9089, %v9097
          %v9099 = vcombine.low %v8337, %v8344
          %v9101 = vunpack.c.l.s4 1983009808
          %v9102 = vunpack.c.0.s8 %v9101
          %v9103 = vlaneseq
          %v9104 = vshrl.u32 %v9103, 7
          %v9105 = vsub.s32 %v9102, %v9104
          %v9106 = vrot.slane %v9099, %v9105
          %v9107 = vcombine.low %v8360, %v8361
          %v9109 = vunpack.c.l.s4 1983009808
          %v9110 = vunpack.c.0.s8 %v9109
          %v9111 = vlaneseq
          %v9112 = vshrl.u32 %v9111, 7
          %v9113 = vsub.s32 %v9110, %v9112
          %v9114 = vrot.slane %v9107, %v9113
          %v9115 = vcombine.low %v8352, %v8359
          %v9117 = vunpack.c.l.s4 1983009808
          %v9118 = vunpack.c.0.s8 %v9117
          %v9119 = vlaneseq
          %v9120 = vshrl.u32 %v9119, 7
          %v9121 = vsub.s32 %v9118, %v9120
          %v9122 = vrot.slane %v9115, %v9121
          %v9123 = vcombine.low %v8362, %v8363
          %v9125 = vunpack.c.l.s4 1983009808
          %v9126 = vunpack.c.0.s8 %v9125
          %v9127 = vlaneseq
          %v9128 = vshrl.u32 %v9127, 7
          %v9129 = vsub.s32 %v9126, %v9128
          %v9130 = vrot.slane %v9123, %v9129
          %v9131 = vcombine.low %v9106, %v9114
          %v9133 = vunpack.c.l.s4 1934713408
          %v9134 = vunpack.c.0.s8 %v9133
          %v9135 = vlaneseq
          %v9136 = vshrl.u32 %v9135, 7
          %v9137 = vsub.s32 %v9134, %v9136
          %v9138 = vrot.slane %v9131, %v9137
          %v9139 = vcombine.low %v9122, %v9130
          %v9141 = vunpack.c.l.s4 1934713408
          %v9142 = vunpack.c.0.s8 %v9141
          %v9143 = vlaneseq
          %v9144 = vshrl.u32 %v9143, 7
          %v9145 = vsub.s32 %v9142, %v9144
          %v9146 = vrot.slane %v9139, %v9145
          %v9147 = vcombine.low %v9138, %v9146
          %v9148 = vcombine.low %v8386, %v8393
          %v9150 = vunpack.c.l.s4 1983009808
          %v9151 = vunpack.c.0.s8 %v9150
          %v9152 = vlaneseq
          %v9153 = vshrl.u32 %v9152, 7
          %v9154 = vsub.s32 %v9151, %v9153
          %v9155 = vrot.slane %v9148, %v9154
          %v9156 = vcombine.low %v8409, %v8410
          %v9158 = vunpack.c.l.s4 1983009808
          %v9159 = vunpack.c.0.s8 %v9158
          %v9160 = vlaneseq
          %v9161 = vshrl.u32 %v9160, 7
          %v9162 = vsub.s32 %v9159, %v9161
          %v9163 = vrot.slane %v9156, %v9162
          %v9164 = vcombine.low %v8401, %v8408
          %v9166 = vunpack.c.l.s4 1983009808
          %v9167 = vunpack.c.0.s8 %v9166
          %v9168 = vlaneseq
          %v9169 = vshrl.u32 %v9168, 7
          %v9170 = vsub.s32 %v9167, %v9169
          %v9171 = vrot.slane %v9164, %v9170
          %v9172 = vcombine.low %v8411, %v8412
          %v9174 = vunpack.c.l.s4 1983009808
          %v9175 = vunpack.c.0.s8 %v9174
          %v9176 = vlaneseq
          %v9177 = vshrl.u32 %v9176, 7
          %v9178 = vsub.s32 %v9175, %v9177
          %v9179 = vrot.slane %v9172, %v9178
          %v9180 = vcombine.low %v9155, %v9163
          %v9182 = vunpack.c.l.s4 1934713408
          %v9183 = vunpack.c.0.s8 %v9182
          %v9184 = vlaneseq
          %v9185 = vshrl.u32 %v9184, 7
          %v9186 = vsub.s32 %v9183, %v9185
          %v9187 = vrot.slane %v9180, %v9186
          %v9188 = vcombine.low %v9171, %v9179
          %v9190 = vunpack.c.l.s4 1934713408
          %v9191 = vunpack.c.0.s8 %v9190
          %v9192 = vlaneseq
          %v9193 = vshrl.u32 %v9192, 7
          %v9194 = vsub.s32 %v9191, %v9193
          %v9195 = vrot.slane %v9188, %v9194
          %v9196 = vcombine.low %v9187, %v9195
          %v9197 = vcombine.low %v8435, %v8442
          %v9199 = vunpack.c.l.s4 1983009808
          %v9200 = vunpack.c.0.s8 %v9199
          %v9201 = vlaneseq
          %v9202 = vshrl.u32 %v9201, 7
          %v9203 = vsub.s32 %v9200, %v9202
          %v9204 = vrot.slane %v9197, %v9203
          %v9205 = vcombine.low %v8458, %v8459
          %v9207 = vunpack.c.l.s4 1983009808
          %v9208 = vunpack.c.0.s8 %v9207
          %v9209 = vlaneseq
          %v9210 = vshrl.u32 %v9209, 7
          %v9211 = vsub.s32 %v9208, %v9210
          %v9212 = vrot.slane %v9205, %v9211
          %v9213 = vcombine.low %v8450, %v8457
          %v9215 = vunpack.c.l.s4 1983009808
          %v9216 = vunpack.c.0.s8 %v9215
          %v9217 = vlaneseq
          %v9218 = vshrl.u32 %v9217, 7
          %v9219 = vsub.s32 %v9216, %v9218
          %v9220 = vrot.slane %v9213, %v9219
          %v9221 = vcombine.low %v8460, %v8461
          %v9223 = vunpack.c.l.s4 1983009808
          %v9224 = vunpack.c.0.s8 %v9223
          %v9225 = vlaneseq
          %v9226 = vshrl.u32 %v9225, 7
          %v9227 = vsub.s32 %v9224, %v9226
          %v9228 = vrot.slane %v9221, %v9227
          %v9229 = vcombine.low %v9204, %v9212
          %v9231 = vunpack.c.l.s4 1934713408
          %v9232 = vunpack.c.0.s8 %v9231
          %v9233 = vlaneseq
          %v9234 = vshrl.u32 %v9233, 7
          %v9235 = vsub.s32 %v9232, %v9234
          %v9236 = vrot.slane %v9229, %v9235
          %v9237 = vcombine.low %v9220, %v9228
          %v9239 = vunpack.c.l.s4 1934713408
          %v9240 = vunpack.c.0.s8 %v9239
          %v9241 = vlaneseq
          %v9242 = vshrl.u32 %v9241, 7
          %v9243 = vsub.s32 %v9240, %v9242
          %v9244 = vrot.slane %v9237, %v9243
          %v9245 = vcombine.low %v9236, %v9244
          %v9246 = vcombine.low %v8484, %v8491
          %v9248 = vunpack.c.l.s4 1983009808
          %v9249 = vunpack.c.0.s8 %v9248
          %v9250 = vlaneseq
          %v9251 = vshrl.u32 %v9250, 7
          %v9252 = vsub.s32 %v9249, %v9251
          %v9253 = vrot.slane %v9246, %v9252
          %v9254 = vcombine.low %v8507, %v8508
          %v9256 = vunpack.c.l.s4 1983009808
          %v9257 = vunpack.c.0.s8 %v9256
          %v9258 = vlaneseq
          %v9259 = vshrl.u32 %v9258, 7
          %v9260 = vsub.s32 %v9257, %v9259
          %v9261 = vrot.slane %v9254, %v9260
          %v9262 = vcombine.low %v8499, %v8506
          %v9264 = vunpack.c.l.s4 1983009808
          %v9265 = vunpack.c.0.s8 %v9264
          %v9266 = vlaneseq
          %v9267 = vshrl.u32 %v9266, 7
          %v9268 = vsub.s32 %v9265, %v9267
          %v9269 = vrot.slane %v9262, %v9268
          %v9270 = vcombine.low %v8509, %v8510
          %v9272 = vunpack.c.l.s4 1983009808
          %v9273 = vunpack.c.0.s8 %v9272
          %v9274 = vlaneseq
          %v9275 = vshrl.u32 %v9274, 7
          %v9276 = vsub.s32 %v9273, %v9275
          %v9277 = vrot.slane %v9270, %v9276
          %v9278 = vcombine.low %v9253, %v9261
          %v9280 = vunpack.c.l.s4 1934713408
          %v9281 = vunpack.c.0.s8 %v9280
          %v9282 = vlaneseq
          %v9283 = vshrl.u32 %v9282, 7
          %v9284 = vsub.s32 %v9281, %v9283
          %v9285 = vrot.slane %v9278, %v9284
          %v9286 = vcombine.low %v9269, %v9277
          %v9288 = vunpack.c.l.s4 1934713408
          %v9289 = vunpack.c.0.s8 %v9288
          %v9290 = vlaneseq
          %v9291 = vshrl.u32 %v9290, 7
          %v9292 = vsub.s32 %v9289, %v9291
          %v9293 = vrot.slane %v9286, %v9292
          %v9294 = vcombine.low %v9285, %v9293
          %v9295 = vcombine.low %v8533, %v8540
          %v9297 = vunpack.c.l.s4 1983009808
          %v9298 = vunpack.c.0.s8 %v9297
          %v9299 = vlaneseq
          %v9300 = vshrl.u32 %v9299, 7
          %v9301 = vsub.s32 %v9298, %v9300
          %v9302 = vrot.slane %v9295, %v9301
          %v9303 = vcombine.low %v8556, %v8557
          %v9305 = vunpack.c.l.s4 1983009808
          %v9306 = vunpack.c.0.s8 %v9305
          %v9307 = vlaneseq
          %v9308 = vshrl.u32 %v9307, 7
          %v9309 = vsub.s32 %v9306, %v9308
          %v9310 = vrot.slane %v9303, %v9309
          %v9311 = vcombine.low %v8548, %v8555
          %v9313 = vunpack.c.l.s4 1983009808
          %v9314 = vunpack.c.0.s8 %v9313
          %v9315 = vlaneseq
          %v9316 = vshrl.u32 %v9315, 7
          %v9317 = vsub.s32 %v9314, %v9316
          %v9318 = vrot.slane %v9311, %v9317
          %v9319 = vcombine.low %v8558, %v8559
          %v9321 = vunpack.c.l.s4 1983009808
          %v9322 = vunpack.c.0.s8 %v9321
          %v9323 = vlaneseq
          %v9324 = vshrl.u32 %v9323, 7
          %v9325 = vsub.s32 %v9322, %v9324
          %v9326 = vrot.slane %v9319, %v9325
          %v9327 = vcombine.low %v9302, %v9310
          %v9329 = vunpack.c.l.s4 1934713408
          %v9330 = vunpack.c.0.s8 %v9329
          %v9331 = vlaneseq
          %v9332 = vshrl.u32 %v9331, 7
          %v9333 = vsub.s32 %v9330, %v9332
          %v9334 = vrot.slane %v9327, %v9333
          %v9335 = vcombine.low %v9318, %v9326
          %v9337 = vunpack.c.l.s4 1934713408
          %v9338 = vunpack.c.0.s8 %v9337
          %v9339 = vlaneseq
          %v9340 = vshrl.u32 %v9339, 7
          %v9341 = vsub.s32 %v9338, %v9340
          %v9342 = vrot.slane %v9335, %v9341
          %v9343 = vcombine.low %v9334, %v9342
          %v9346 = vpack.i.b16 %v8657, %v8608
          %v9347 = vshrl.u32 %v8608, 16
          %v9348 = vshrl.u32 %v8657, 16
          %v9349 = vpack.i.b16 %v9348, %v9347
          %v9352 = vpack.i.b16 %v8755, %v8706
          %v9353 = vshrl.u32 %v8706, 16
          %v9354 = vshrl.u32 %v8755, 16
          %v9355 = vpack.i.b16 %v9354, %v9353
          %v9358 = vpack.i.b16 %v8853, %v8804
          %v9359 = vshrl.u32 %v8804, 16
          %v9360 = vshrl.u32 %v8853, 16
          %v9361 = vpack.i.b16 %v9360, %v9359
          %v9364 = vpack.i.b16 %v8951, %v8902
          %v9365 = vshrl.u32 %v8902, 16
          %v9366 = vshrl.u32 %v8951, 16
          %v9367 = vpack.i.b16 %v9366, %v9365
          %v9370 = vpack.i.b16 %v9049, %v9000
          %v9371 = vshrl.u32 %v9000, 16
          %v9372 = vshrl.u32 %v9049, 16
          %v9373 = vpack.i.b16 %v9372, %v9371
          %v9376 = vpack.i.b16 %v9147, %v9098
          %v9377 = vshrl.u32 %v9098, 16
          %v9378 = vshrl.u32 %v9147, 16
          %v9379 = vpack.i.b16 %v9378, %v9377
          %v9382 = vpack.i.b16 %v9245, %v9196
          %v9383 = vshrl.u32 %v9196, 16
          %v9384 = vshrl.u32 %v9245, 16
          %v9385 = vpack.i.b16 %v9384, %v9383
          %v9388 = vpack.i.b16 %v9343, %v9294
          %v9389 = vshrl.u32 %v9294, 16
          %v9390 = vshrl.u32 %v9343, 16
          %v9391 = vpack.i.b16 %v9390, %v9389
          %9392 = vrot.lane.b32.xlu0 %v9349, 64
          %v9393 = vpop.permute.xlu0 %9392
          %9394 = vrot.lane.b32.xlu0 %v9355, 64
          %v9395 = vpop.permute.xlu0 %9394
          %9396 = vrot.lane.b32.xlu0 %v9361, 64
          %v9397 = vpop.permute.xlu0 %9396
          %9398 = vrot.lane.b32.xlu0 %v9367, 64
          %v9399 = vpop.permute.xlu0 %9398
          %9400 = vrot.lane.b32.xlu0 %v9373, 64
          %v9401 = vpop.permute.xlu0 %9400
          %9402 = vrot.lane.b32.xlu0 %v9379, 64
          %v9403 = vpop.permute.xlu0 %9402
          %9404 = vrot.lane.b32.xlu0 %v9385, 64
          %v9405 = vpop.permute.xlu0 %9404
          %9406 = vrot.lane.b32.xlu0 %v9391, 64
          %v9407 = vpop.permute.xlu0 %9406
          %v9410 = vsel %vm6867, %v9346, %v9393
          %v9414 = vsel %vm6867, %v9352, %v9395
          %v9418 = vsel %vm6867, %v9358, %v9397
          %v9422 = vsel %vm6867, %v9364, %v9399
          %v9426 = vsel %vm6867, %v9370, %v9401
          %v9430 = vsel %vm6867, %v9376, %v9403
          %v9434 = vsel %vm6867, %v9382, %v9405
          %v9438 = vsel %vm6867, %v9388, %v9407
          %v9440 = vld [vmem:[#allocation2] sm:$0xff]
          %v9441 = vld [vmem:[#allocation2 + $0x8] sm:$0xff]
          %v9442 = vld [vmem:[#allocation2 + $0x10] sm:$0xff]
          %v9443 = vld [vmem:[#allocation2 + $0x18] sm:$0xff]
          %v9444 = vld [vmem:[#allocation2 + $0x20] sm:$0xff]
          %v9445 = vld [vmem:[#allocation2 + $0x28] sm:$0xff]
          %v9446 = vld [vmem:[#allocation2 + $0x30] sm:$0xff]
          %v9447 = vld [vmem:[#allocation2 + $0x38] sm:$0xff]
          %v9448 = vld [vmem:[#allocation2 + $0x40] sm:$0xff]
          %v9449 = vld [vmem:[#allocation2 + $0x48] sm:$0xff]
          %v9450 = vld [vmem:[#allocation2 + $0x50] sm:$0xff]
          %v9451 = vld [vmem:[#allocation2 + $0x58] sm:$0xff]
          %v9452 = vld [vmem:[#allocation2 + $0x60] sm:$0xff]
          %v9453 = vld [vmem:[#allocation2 + $0x68] sm:$0xff]
          %v9454 = vld [vmem:[#allocation2 + $0x70] sm:$0xff]
          %v9455 = vld [vmem:[#allocation2 + $0x78] sm:$0xff]
          %v9456 = vld [vmem:[%s696] sm:$0xf]
          %v9457 = vld [vmem:[%s696 + $0x4] sm:$0xf]
          %v9458 = vld [vmem:[%s696 + $0x8] sm:$0xf]
          %v9459 = vld [vmem:[%s696 + $0xc] sm:$0xf]
          %v9460 = vld [vmem:[%s696 + $0x10] sm:$0xf]
          %v9461 = vld [vmem:[%s696 + $0x14] sm:$0xf]
          %v9462 = vld [vmem:[%s696 + $0x18] sm:$0xf]
          %v9463 = vld [vmem:[%s696 + $0x1c] sm:$0xf]
          %v9464 = vld [vmem:[%s696 + $0x20] sm:$0xf]
          %v9465 = vld [vmem:[%s696 + $0x24] sm:$0xf]
          %v9466 = vld [vmem:[%s696 + $0x28] sm:$0xf]
          %v9467 = vld [vmem:[%s696 + $0x2c] sm:$0xf]
          %v9468 = vld [vmem:[%s696 + $0x30] sm:$0xf]
          %v9469 = vld [vmem:[%s696 + $0x34] sm:$0xf]
          %v9470 = vld [vmem:[%s696 + $0x38] sm:$0xf]
          %v9471 = vld [vmem:[%s696 + $0x3c] sm:$0xf]
          %v9488 = vunpack.c.l.b16 %v9456
          %v9489 = vunpack.c.l.b16 %v9457
          %v9490 = vunpack.c.l.b16 %v9458
          %v9491 = vunpack.c.l.b16 %v9459
          %v9492 = vunpack.c.l.b16 %v9460
          %v9493 = vunpack.c.l.b16 %v9461
          %v9494 = vunpack.c.l.b16 %v9462
          %v9495 = vunpack.c.l.b16 %v9463
          %v9496 = vunpack.c.l.b16 %v9464
          %v9497 = vunpack.c.l.b16 %v9465
          %v9498 = vunpack.c.l.b16 %v9466
          %v9499 = vunpack.c.l.b16 %v9467
          %v9500 = vunpack.c.l.b16 %v9468
          %v9501 = vunpack.c.l.b16 %v9469
          %v9502 = vunpack.c.l.b16 %v9470
          %v9503 = vunpack.c.l.b16 %v9471
          %v9504 = vpack.c.b16 %v9489, %v9488
          %v9505 = vpack.c.b16 %v9491, %v9490
          %v9506 = vpack.c.b16 %v9493, %v9492
          %v9507 = vpack.c.b16 %v9495, %v9494
          %v9508 = vpack.c.b16 %v9497, %v9496
          %v9509 = vpack.c.b16 %v9499, %v9498
          %v9510 = vpack.c.b16 %v9501, %v9500
          %v9511 = vpack.c.b16 %v9503, %v9502
          %9520 = vmatprep.subr.bf16.mxu0 0
          %9521 = vmatpush1.bf16.msra.mxu0 %v9511
          %9522 = vmatprep.subr.bf16.mxu0 0
          %9523 = vmatpush1.bf16.msra.mxu0 %v9510
          %9524 = vmatprep.subr.bf16.mxu0 0
          %9525 = vmatpush1.bf16.msra.mxu0 %v9509
          %9526 = vmatprep.subr.bf16.mxu0 0
          %9527 = vmatpush1.bf16.msra.mxu0 %v9508
          %9528 = vmatprep.subr.bf16.mxu0 0
          %9529 = vmatpush1.bf16.msra.mxu0 %v9507
          %9530 = vmatprep.subr.bf16.mxu0 0
          %9531 = vmatpush1.bf16.msra.mxu0 %v9506
          %9532 = vmatprep.subr.bf16.mxu0 0
          %9533 = vmatpush1.bf16.msra.mxu0 %v9505
          %9534 = vmatprep.subr.bf16.mxu0 0
          %9535 = vmatpush1.bf16.msra.mxu0 %v9504
          %9536 = vmatprep.subr.bf16.mxu0 0
          %9537 = vmatpush2.bf16.msra.mxu0 0
          %9538 = vmatprep.subr.bf16.mxu0 0
          %9539 = vmatpush2.bf16.msra.mxu0 0
          %9540 = vmatprep.subr.bf16.mxu0 0
          %9541 = vmatpush2.bf16.msra.mxu0 0
          %9542 = vmatprep.subr.bf16.mxu0 0
          %9543 = vmatpush2.bf16.msra.mxu0 0
          %9544 = vmatprep.subr.bf16.mxu0 0
          %9545 = vmatpush2.bf16.msra.mxu0 0
          %9546 = vmatprep.subr.bf16.mxu0 0
          %9547 = vmatpush2.bf16.msra.mxu0 0
          %9548 = vmatprep.subr.bf16.mxu0 0
          %9549 = vmatpush2.bf16.msra.mxu0 0
          %9550 = vmatprep.subr.bf16.mxu0 0
          %9551 = vmatpush2.bf16.msra.mxu0 0
          %9552 = vmatprep.mubr.bf16.mxu0 0
          %9553 = vmatmul.mubr.bf16.gmra.mxu0 %v9410
          %v9554 = vpop.f32.mrf.mxu0
          %v9555 = vadd.f32 0.0, %v9554
          %v9556 = vpop.f32.mrf.mxu0
          %v9557 = vpop.f32.mrf.mxu0
          %v9558 = vadd.f32 0.0, %v9557
          %v9559 = vpop.f32.mrf.mxu0
          %9560 = vmatprep.mubr.bf16.mxu0 0
          %9561 = vmatmul.mubr.bf16.gmra.mxu0 %v9414
          %v9562 = vpop.f32.mrf.mxu0
          %v9563 = vadd.f32 0.0, %v9562
          %v9564 = vpop.f32.mrf.mxu0
          %v9565 = vpop.f32.mrf.mxu0
          %v9566 = vadd.f32 0.0, %v9565
          %v9567 = vpop.f32.mrf.mxu0
          %9568 = vmatprep.mubr.bf16.mxu0 0
          %9569 = vmatmul.mubr.bf16.gmra.mxu0 %v9418
          %v9570 = vpop.f32.mrf.mxu0
          %v9571 = vadd.f32 0.0, %v9570
          %v9572 = vpop.f32.mrf.mxu0
          %v9573 = vpop.f32.mrf.mxu0
          %v9574 = vadd.f32 0.0, %v9573
          %v9575 = vpop.f32.mrf.mxu0
          %9576 = vmatprep.mubr.bf16.mxu0 0
          %9577 = vmatmul.mubr.bf16.gmra.mxu0 %v9422
          %v9578 = vpop.f32.mrf.mxu0
          %v9579 = vadd.f32 0.0, %v9578
          %v9580 = vpop.f32.mrf.mxu0
          %v9581 = vpop.f32.mrf.mxu0
          %v9582 = vadd.f32 0.0, %v9581
          %v9583 = vpop.f32.mrf.mxu0
          %9584 = vmatprep.mubr.bf16.mxu0 0
          %9585 = vmatmul.mubr.bf16.gmra.mxu0 %v9426
          %v9586 = vpop.f32.mrf.mxu0
          %v9587 = vadd.f32 0.0, %v9586
          %v9588 = vpop.f32.mrf.mxu0
          %v9589 = vpop.f32.mrf.mxu0
          %v9590 = vadd.f32 0.0, %v9589
          %v9591 = vpop.f32.mrf.mxu0
          %9592 = vmatprep.mubr.bf16.mxu0 0
          %9593 = vmatmul.mubr.bf16.gmra.mxu0 %v9430
          %v9594 = vpop.f32.mrf.mxu0
          %v9595 = vadd.f32 0.0, %v9594
          %v9596 = vpop.f32.mrf.mxu0
          %v9597 = vpop.f32.mrf.mxu0
          %v9598 = vadd.f32 0.0, %v9597
          %v9599 = vpop.f32.mrf.mxu0
          %9600 = vmatprep.mubr.bf16.mxu0 0
          %9601 = vmatmul.mubr.bf16.gmra.mxu0 %v9434
          %v9602 = vpop.f32.mrf.mxu0
          %v9603 = vadd.f32 0.0, %v9602
          %v9604 = vpop.f32.mrf.mxu0
          %v9605 = vpop.f32.mrf.mxu0
          %v9606 = vadd.f32 0.0, %v9605
          %v9607 = vpop.f32.mrf.mxu0
          %9608 = vmatprep.mubr.bf16.mxu0 0
          %9609 = vmatmul.mubr.bf16.gmra.mxu0 %v9438
          %v9610 = vpop.f32.mrf.mxu0
          %v9611 = vadd.f32 0.0, %v9610
          %v9612 = vpop.f32.mrf.mxu0
          %v9613 = vpop.f32.mrf.mxu0
          %v9614 = vadd.f32 0.0, %v9613
          %v9615 = vpop.f32.mrf.mxu0
          %9616 = vdwg.mxu0
          %v9617 = vadd.f32 %v9440, %v9555
          %v9618 = vadd.f32 %v9441, %v9558
          %v9619 = vadd.f32 %v9442, %v9563
          %v9620 = vadd.f32 %v9443, %v9566
          %v9621 = vadd.f32 %v9444, %v9571
          %v9622 = vadd.f32 %v9445, %v9574
          %v9623 = vadd.f32 %v9446, %v9579
          %v9624 = vadd.f32 %v9447, %v9582
          %v9625 = vadd.f32 %v9448, %v9587
          %v9626 = vadd.f32 %v9449, %v9590
          %v9627 = vadd.f32 %v9450, %v9595
          %v9628 = vadd.f32 %v9451, %v9598
          %v9629 = vadd.f32 %v9452, %v9603
          %v9630 = vadd.f32 %v9453, %v9606
          %v9631 = vadd.f32 %v9454, %v9611
          %v9632 = vadd.f32 %v9455, %v9614
          %9633 = vst [vmem:[#allocation2] sm:$0xff] %v9617
          %9634 = vst [vmem:[#allocation2 + $0x8] sm:$0xff] %v9618
          %9635 = vst [vmem:[#allocation2 + $0x10] sm:$0xff] %v9619
          %9636 = vst [vmem:[#allocation2 + $0x18] sm:$0xff] %v9620
          %9637 = vst [vmem:[#allocation2 + $0x20] sm:$0xff] %v9621
          %9638 = vst [vmem:[#allocation2 + $0x28] sm:$0xff] %v9622
          %9639 = vst [vmem:[#allocation2 + $0x30] sm:$0xff] %v9623
          %9640 = vst [vmem:[#allocation2 + $0x38] sm:$0xff] %v9624
          %9641 = vst [vmem:[#allocation2 + $0x40] sm:$0xff] %v9625
          %9642 = vst [vmem:[#allocation2 + $0x48] sm:$0xff] %v9626
          %9643 = vst [vmem:[#allocation2 + $0x50] sm:$0xff] %v9627
          %9644 = vst [vmem:[#allocation2 + $0x58] sm:$0xff] %v9628
          %9645 = vst [vmem:[#allocation2 + $0x60] sm:$0xff] %v9629
          %9646 = vst [vmem:[#allocation2 + $0x68] sm:$0xff] %v9630
          %9647 = vst [vmem:[#allocation2 + $0x70] sm:$0xff] %v9631
          %9648 = vst [vmem:[#allocation2 + $0x78] sm:$0xff] %v9632
        $region112: #{tpu_custom_call.1} parent=67 // pred_fallthru
          _
        %p9649 = scmp.eq.s32.totalorder %s46, 1
        // Predicated region
        $region113: #{tpu_custom_call.1} parent=67 // pred_check
          %p9650 = pneg %p9649
        $region114: #{tpu_custom_call.1} parent=67 // pred_check_branch
          %9652 = sbr.rel (%p9650) target = $region116
        $region115: #{tpu_custom_call.1} parent=67 // pred_region
          %v9653 = vld [vmem:[%s660] sm:$0xff]
          %v9654 = vld [vmem:[%s660 + $0x8] sm:$0xff]
          %v9655 = vld [vmem:[%s660 + $0x10] sm:$0xff]
          %v9656 = vld [vmem:[%s660 + $0x18] sm:$0xff]
          %v9657 = vld [vmem:[%s660 + $0x20] sm:$0xff]
          %v9658 = vld [vmem:[%s660 + $0x28] sm:$0xff]
          %v9659 = vld [vmem:[%s660 + $0x30] sm:$0xff]
          %v9660 = vld [vmem:[%s660 + $0x38] sm:$0xff]
          %v9661 = vld [vmem:[%s660 + $0x40] sm:$0xff]
          %v9662 = vld [vmem:[%s660 + $0x48] sm:$0xff]
          %v9663 = vld [vmem:[%s660 + $0x50] sm:$0xff]
          %v9664 = vld [vmem:[%s660 + $0x58] sm:$0xff]
          %v9665 = vld [vmem:[%s660 + $0x60] sm:$0xff]
          %v9666 = vld [vmem:[%s660 + $0x68] sm:$0xff]
          %v9667 = vld [vmem:[%s660 + $0x70] sm:$0xff]
          %v9668 = vld [vmem:[%s660 + $0x78] sm:$0xff]
          %v9669 = vld [vmem:[#allocation2] sm:$0xff]
          %v9670 = vld [vmem:[#allocation2 + $0x8] sm:$0xff]
          %v9671 = vld [vmem:[#allocation2 + $0x10] sm:$0xff]
          %v9672 = vld [vmem:[#allocation2 + $0x18] sm:$0xff]
          %v9673 = vld [vmem:[#allocation2 + $0x20] sm:$0xff]
          %v9674 = vld [vmem:[#allocation2 + $0x28] sm:$0xff]
          %v9675 = vld [vmem:[#allocation2 + $0x30] sm:$0xff]
          %v9676 = vld [vmem:[#allocation2 + $0x38] sm:$0xff]
          %v9677 = vld [vmem:[#allocation2 + $0x40] sm:$0xff]
          %v9678 = vld [vmem:[#allocation2 + $0x48] sm:$0xff]
          %v9679 = vld [vmem:[#allocation2 + $0x50] sm:$0xff]
          %v9680 = vld [vmem:[#allocation2 + $0x58] sm:$0xff]
          %v9681 = vld [vmem:[#allocation2 + $0x60] sm:$0xff]
          %v9682 = vld [vmem:[#allocation2 + $0x68] sm:$0xff]
          %v9683 = vld [vmem:[#allocation2 + $0x70] sm:$0xff]
          %v9684 = vld [vmem:[#allocation2 + $0x78] sm:$0xff]
          %v9685 = vadd.f32 %v9653, %v9669
          %v9686 = vadd.f32 %v9654, %v9670
          %v9687 = vadd.f32 %v9655, %v9671
          %v9688 = vadd.f32 %v9656, %v9672
          %v9689 = vadd.f32 %v9657, %v9673
          %v9690 = vadd.f32 %v9658, %v9674
          %v9691 = vadd.f32 %v9659, %v9675
          %v9692 = vadd.f32 %v9660, %v9676
          %v9693 = vadd.f32 %v9661, %v9677
          %v9694 = vadd.f32 %v9662, %v9678
          %v9695 = vadd.f32 %v9663, %v9679
          %v9696 = vadd.f32 %v9664, %v9680
          %v9697 = vadd.f32 %v9665, %v9681
          %v9698 = vadd.f32 %v9666, %v9682
          %v9699 = vadd.f32 %v9667, %v9683
          %v9700 = vadd.f32 %v9668, %v9684
          %9701 = vst [vmem:[#allocation4] sm:$0xff] %v9685
          %9702 = vst [vmem:[#allocation4 + $0x8] sm:$0xff] %v9686
          %9703 = vst [vmem:[#allocation4 + $0x10] sm:$0xff] %v9687
          %9704 = vst [vmem:[#allocation4 + $0x18] sm:$0xff] %v9688
          %9705 = vst [vmem:[#allocation4 + $0x20] sm:$0xff] %v9689
          %9706 = vst [vmem:[#allocation4 + $0x28] sm:$0xff] %v9690
          %9707 = vst [vmem:[#allocation4 + $0x30] sm:$0xff] %v9691
          %9708 = vst [vmem:[#allocation4 + $0x38] sm:$0xff] %v9692
          %9709 = vst [vmem:[#allocation4 + $0x40] sm:$0xff] %v9693
          %9710 = vst [vmem:[#allocation4 + $0x48] sm:$0xff] %v9694
          %9711 = vst [vmem:[#allocation4 + $0x50] sm:$0xff] %v9695
          %9712 = vst [vmem:[#allocation4 + $0x58] sm:$0xff] %v9696
          %9713 = vst [vmem:[#allocation4 + $0x60] sm:$0xff] %v9697
          %9714 = vst [vmem:[#allocation4 + $0x68] sm:$0xff] %v9698
          %9715 = vst [vmem:[#allocation4 + $0x70] sm:$0xff] %v9699
          %9716 = vst [vmem:[#allocation4 + $0x78] sm:$0xff] %v9700
          %v9717 = vld [vmem:[%s8] sm:$0x1]
          %v9718 = vmul.f32 %v9685, %v9685
          %v9719 = vmul.f32 %v9686, %v9686
          %v9720 = vmul.f32 %v9687, %v9687
          %v9721 = vmul.f32 %v9688, %v9688
          %v9722 = vmul.f32 %v9689, %v9689
          %v9723 = vmul.f32 %v9690, %v9690
          %v9724 = vmul.f32 %v9691, %v9691
          %v9725 = vmul.f32 %v9692, %v9692
          %v9726 = vmul.f32 %v9693, %v9693
          %v9727 = vmul.f32 %v9694, %v9694
          %v9728 = vmul.f32 %v9695, %v9695
          %v9729 = vmul.f32 %v9696, %v9696
          %v9730 = vmul.f32 %v9697, %v9697
          %v9731 = vmul.f32 %v9698, %v9698
          %v9732 = vmul.f32 %v9699, %v9699
          %v9733 = vmul.f32 %v9700, %v9700
          %9734 = vadd.xlane.f32.xlu0 %v9718
          %v9735 = vpop.xlane.xlu0 %9734
          %9736 = vadd.xlane.f32.xlu0 %v9719
          %v9737 = vpop.xlane.xlu0 %9736
          %9738 = vadd.xlane.f32.xlu0 %v9720
          %v9739 = vpop.xlane.xlu0 %9738
          %9740 = vadd.xlane.f32.xlu0 %v9721
          %v9741 = vpop.xlane.xlu0 %9740
          %9742 = vadd.xlane.f32.xlu0 %v9722
          %v9743 = vpop.xlane.xlu0 %9742
          %9744 = vadd.xlane.f32.xlu0 %v9723
          %v9745 = vpop.xlane.xlu0 %9744
          %9746 = vadd.xlane.f32.xlu0 %v9724
          %v9747 = vpop.xlane.xlu0 %9746
          %9748 = vadd.xlane.f32.xlu0 %v9725
          %v9749 = vpop.xlane.xlu0 %9748
          %9750 = vadd.xlane.f32.xlu0 %v9726
          %v9751 = vpop.xlane.xlu0 %9750
          %9752 = vadd.xlane.f32.xlu0 %v9727
          %v9753 = vpop.xlane.xlu0 %9752
          %9754 = vadd.xlane.f32.xlu0 %v9728
          %v9755 = vpop.xlane.xlu0 %9754
          %9756 = vadd.xlane.f32.xlu0 %v9729
          %v9757 = vpop.xlane.xlu0 %9756
          %9758 = vadd.xlane.f32.xlu0 %v9730
          %v9759 = vpop.xlane.xlu0 %9758
          %9760 = vadd.xlane.f32.xlu0 %v9731
          %v9761 = vpop.xlane.xlu0 %9760
          %9762 = vadd.xlane.f32.xlu0 %v9732
          %v9763 = vpop.xlane.xlu0 %9762
          %9764 = vadd.xlane.f32.xlu0 %v9733
          %v9765 = vpop.xlane.xlu0 %9764
          %v9766 = vrcp.pop 128.0
          %v9767 = vmul.f32 %v9735, %v9766
          %v9768 = vmul.f32 %v9737, %v9766
          %v9769 = vmul.f32 %v9739, %v9766
          %v9770 = vmul.f32 %v9741, %v9766
          %v9771 = vmul.f32 %v9743, %v9766
          %v9772 = vmul.f32 %v9745, %v9766
          %v9773 = vmul.f32 %v9747, %v9766
          %v9774 = vmul.f32 %v9749, %v9766
          %v9775 = vmul.f32 %v9751, %v9766
          %v9776 = vmul.f32 %v9753, %v9766
          %v9777 = vmul.f32 %v9755, %v9766
          %v9778 = vmul.f32 %v9757, %v9766
          %v9779 = vmul.f32 %v9759, %v9766
          %v9780 = vmul.f32 %v9761, %v9766
          %v9781 = vmul.f32 %v9763, %v9766
          %v9782 = vmul.f32 %v9765, %v9766
          %v9783 = vadd.f32 %v9767, 1e-06
          %v9784 = vadd.f32 %v9768, 1e-06
          %v9785 = vadd.f32 %v9769, 1e-06
          %v9786 = vadd.f32 %v9770, 1e-06
          %v9787 = vadd.f32 %v9771, 1e-06
          %v9788 = vadd.f32 %v9772, 1e-06
          %v9789 = vadd.f32 %v9773, 1e-06
          %v9790 = vadd.f32 %v9774, 1e-06
          %v9791 = vadd.f32 %v9775, 1e-06
          %v9792 = vadd.f32 %v9776, 1e-06
          %v9793 = vadd.f32 %v9777, 1e-06
          %v9794 = vadd.f32 %v9778, 1e-06
          %v9795 = vadd.f32 %v9779, 1e-06
          %v9796 = vadd.f32 %v9780, 1e-06
          %v9797 = vadd.f32 %v9781, 1e-06
          %v9798 = vadd.f32 %v9782, 1e-06
          %v9799 = vrsqrt.pop %v9783
          %v9800 = vrsqrt.pop %v9784
          %v9801 = vrsqrt.pop %v9785
          %v9802 = vrsqrt.pop %v9786
          %v9803 = vrsqrt.pop %v9787
          %v9804 = vrsqrt.pop %v9788
          %v9805 = vrsqrt.pop %v9789
          %v9806 = vrsqrt.pop %v9790
          %v9807 = vrsqrt.pop %v9791
          %v9808 = vrsqrt.pop %v9792
          %v9809 = vrsqrt.pop %v9793
          %v9810 = vrsqrt.pop %v9794
          %v9811 = vrsqrt.pop %v9795
          %v9812 = vrsqrt.pop %v9796
          %v9813 = vrsqrt.pop %v9797
          %v9814 = vrsqrt.pop %v9798
          %v9815 = vmul.f32 %v9685, %v9799
          %v9816 = vmul.f32 %v9686, %v9800
          %v9817 = vmul.f32 %v9687, %v9801
          %v9818 = vmul.f32 %v9688, %v9802
          %v9819 = vmul.f32 %v9689, %v9803
          %v9820 = vmul.f32 %v9690, %v9804
          %v9821 = vmul.f32 %v9691, %v9805
          %v9822 = vmul.f32 %v9692, %v9806
          %v9823 = vmul.f32 %v9693, %v9807
          %v9824 = vmul.f32 %v9694, %v9808
          %v9825 = vmul.f32 %v9695, %v9809
          %v9826 = vmul.f32 %v9696, %v9810
          %v9827 = vmul.f32 %v9697, %v9811
          %v9828 = vmul.f32 %v9698, %v9812
          %v9829 = vmul.f32 %v9699, %v9813
          %v9830 = vmul.f32 %v9700, %v9814
          %v9832 = vlaneseq
          %v9833 = vshrl.u32 %v9832, 7
          %v9834 = vsub.s32 0, %v9833
          %v9835 = vrot.slane %v9717, %v9834
          %v9837 = vmul.f32 %v9815, %v9835
          %v9838 = vmul.f32 %v9816, %v9835
          %v9839 = vmul.f32 %v9817, %v9835
          %v9840 = vmul.f32 %v9818, %v9835
          %v9841 = vmul.f32 %v9819, %v9835
          %v9842 = vmul.f32 %v9820, %v9835
          %v9843 = vmul.f32 %v9821, %v9835
          %v9844 = vmul.f32 %v9822, %v9835
          %v9845 = vmul.f32 %v9823, %v9835
          %v9846 = vmul.f32 %v9824, %v9835
          %v9847 = vmul.f32 %v9825, %v9835
          %v9848 = vmul.f32 %v9826, %v9835
          %v9849 = vmul.f32 %v9827, %v9835
          %v9850 = vmul.f32 %v9828, %v9835
          %v9851 = vmul.f32 %v9829, %v9835
          %v9852 = vmul.f32 %v9830, %v9835
          %v9853 = vpack.c.bf16 %v9838, %v9837
          %v9854 = vpack.c.bf16 %v9840, %v9839
          %v9855 = vpack.c.bf16 %v9842, %v9841
          %v9856 = vpack.c.bf16 %v9844, %v9843
          %v9857 = vpack.c.bf16 %v9846, %v9845
          %v9858 = vpack.c.bf16 %v9848, %v9847
          %v9859 = vpack.c.bf16 %v9850, %v9849
          %v9860 = vpack.c.bf16 %v9852, %v9851
          %v9869 = vunpack.c.l.b16 %v9853
          %v9870 = vunpack.c.h.b16 %v9853
          %v9871 = vunpack.c.l.b16 %v9854
          %v9872 = vunpack.c.h.b16 %v9854
          %v9873 = vunpack.c.l.b16 %v9855
          %v9874 = vunpack.c.h.b16 %v9855
          %v9875 = vunpack.c.l.b16 %v9856
          %v9876 = vunpack.c.h.b16 %v9856
          %v9877 = vunpack.c.l.b16 %v9857
          %v9878 = vunpack.c.h.b16 %v9857
          %v9879 = vunpack.c.l.b16 %v9858
          %v9880 = vunpack.c.h.b16 %v9858
          %v9881 = vunpack.c.l.b16 %v9859
          %v9882 = vunpack.c.h.b16 %v9859
          %v9883 = vunpack.c.l.b16 %v9860
          %v9884 = vunpack.c.h.b16 %v9860
          %v9885 = vpack.c.b16 %v9869, %v9869
          %v9886 = vpack.c.b16 %v9870, %v9870
          %v9887 = vpack.c.b16 %v9871, %v9871
          %v9888 = vpack.c.b16 %v9872, %v9872
          %v9889 = vpack.c.b16 %v9873, %v9873
          %v9890 = vpack.c.b16 %v9874, %v9874
          %v9891 = vpack.c.b16 %v9875, %v9875
          %v9892 = vpack.c.b16 %v9876, %v9876
          %v9893 = vpack.c.b16 %v9877, %v9877
          %v9894 = vpack.c.b16 %v9878, %v9878
          %v9895 = vpack.c.b16 %v9879, %v9879
          %v9896 = vpack.c.b16 %v9880, %v9880
          %v9897 = vpack.c.b16 %v9881, %v9881
          %v9898 = vpack.c.b16 %v9882, %v9882
          %v9899 = vpack.c.b16 %v9883, %v9883
          %v9900 = vpack.c.b16 %v9884, %v9884
          %9917 = vst [vmem:[#allocation3] sm:$0xf] %v9885
          %9918 = vst [vmem:[#allocation3 + $0x4] sm:$0xf] %v9886
          %9919 = vst [vmem:[#allocation3 + $0x8] sm:$0xf] %v9887
          %9920 = vst [vmem:[#allocation3 + $0xc] sm:$0xf] %v9888
          %9921 = vst [vmem:[#allocation3 + $0x10] sm:$0xf] %v9889
          %9922 = vst [vmem:[#allocation3 + $0x14] sm:$0xf] %v9890
          %9923 = vst [vmem:[#allocation3 + $0x18] sm:$0xf] %v9891
          %9924 = vst [vmem:[#allocation3 + $0x1c] sm:$0xf] %v9892
          %9925 = vst [vmem:[#allocation3 + $0x20] sm:$0xf] %v9893
          %9926 = vst [vmem:[#allocation3 + $0x24] sm:$0xf] %v9894
          %9927 = vst [vmem:[#allocation3 + $0x28] sm:$0xf] %v9895
          %9928 = vst [vmem:[#allocation3 + $0x2c] sm:$0xf] %v9896
          %9929 = vst [vmem:[#allocation3 + $0x30] sm:$0xf] %v9897
          %9930 = vst [vmem:[#allocation3 + $0x34] sm:$0xf] %v9898
          %9931 = vst [vmem:[#allocation3 + $0x38] sm:$0xf] %v9899
          %9932 = vst [vmem:[#allocation3 + $0x3c] sm:$0xf] %v9900
          %9933 = vst [vmem:[#allocation2] sm:$0xff] 0.0
          %9934 = vst [vmem:[#allocation2 + $0x8] sm:$0xff] 0.0
          %9935 = vst [vmem:[#allocation2 + $0x10] sm:$0xff] 0.0
          %9936 = vst [vmem:[#allocation2 + $0x18] sm:$0xff] 0.0
          %9937 = vst [vmem:[#allocation2 + $0x20] sm:$0xff] 0.0
          %9938 = vst [vmem:[#allocation2 + $0x28] sm:$0xff] 0.0
          %9939 = vst [vmem:[#allocation2 + $0x30] sm:$0xff] 0.0
          %9940 = vst [vmem:[#allocation2 + $0x38] sm:$0xff] 0.0
          %9941 = vst [vmem:[#allocation2 + $0x40] sm:$0xff] 0.0
          %9942 = vst [vmem:[#allocation2 + $0x48] sm:$0xff] 0.0
          %9943 = vst [vmem:[#allocation2 + $0x50] sm:$0xff] 0.0
          %9944 = vst [vmem:[#allocation2 + $0x58] sm:$0xff] 0.0
          %9945 = vst [vmem:[#allocation2 + $0x60] sm:$0xff] 0.0
          %9946 = vst [vmem:[#allocation2 + $0x68] sm:$0xff] 0.0
          %9947 = vst [vmem:[#allocation2 + $0x70] sm:$0xff] 0.0
          %9948 = vst [vmem:[#allocation2 + $0x78] sm:$0xff] 0.0
        $region116: #{tpu_custom_call.1} parent=67 // pred_fallthru
          _
        %p9949 = scmp.ge.s32.totalorder %s46, 2
        // Predicated region
        $region117: #{tpu_custom_call.1} parent=67 // pred_check
          %p9950 = pneg %p9949
        $region118: #{tpu_custom_call.1} parent=67 // pred_check_branch
          %9952 = sbr.rel (%p9950) target = $region120
        $region119: #{tpu_custom_call.1} parent=67 // pred_region
          %v9953 = vld [vmem:[#allocation3] sm:$0xf]
          %v9954 = vld [vmem:[#allocation3 + $0x4] sm:$0xf]
          %v9955 = vld [vmem:[#allocation3 + $0x8] sm:$0xf]
          %v9956 = vld [vmem:[#allocation3 + $0xc] sm:$0xf]
          %v9957 = vld [vmem:[#allocation3 + $0x10] sm:$0xf]
          %v9958 = vld [vmem:[#allocation3 + $0x14] sm:$0xf]
          %v9959 = vld [vmem:[#allocation3 + $0x18] sm:$0xf]
          %v9960 = vld [vmem:[#allocation3 + $0x1c] sm:$0xf]
          %v9961 = vld [vmem:[#allocation3 + $0x20] sm:$0xf]
          %v9962 = vld [vmem:[#allocation3 + $0x24] sm:$0xf]
          %v9963 = vld [vmem:[#allocation3 + $0x28] sm:$0xf]
          %v9964 = vld [vmem:[#allocation3 + $0x2c] sm:$0xf]
          %v9965 = vld [vmem:[#allocation3 + $0x30] sm:$0xf]
          %v9966 = vld [vmem:[#allocation3 + $0x34] sm:$0xf]
          %v9967 = vld [vmem:[#allocation3 + $0x38] sm:$0xf]
          %v9968 = vld [vmem:[#allocation3 + $0x3c] sm:$0xf]
          %v9969 = vld [vmem:[%s714] sm:$0xf]
          %v9970 = vld [vmem:[%s714 + $0x4] sm:$0xf]
          %v9971 = vld [vmem:[%s714 + $0x8] sm:$0xf]
          %v9972 = vld [vmem:[%s714 + $0xc] sm:$0xf]
          %v9973 = vld [vmem:[%s714 + $0x10] sm:$0xf]
          %v9974 = vld [vmem:[%s714 + $0x14] sm:$0xf]
          %v9975 = vld [vmem:[%s714 + $0x18] sm:$0xf]
          %v9976 = vld [vmem:[%s714 + $0x1c] sm:$0xf]
          %v9977 = vld [vmem:[%s714 + $0x20] sm:$0xf]
          %v9978 = vld [vmem:[%s714 + $0x24] sm:$0xf]
          %v9979 = vld [vmem:[%s714 + $0x28] sm:$0xf]
          %v9980 = vld [vmem:[%s714 + $0x2c] sm:$0xf]
          %v9981 = vld [vmem:[%s714 + $0x30] sm:$0xf]
          %v9982 = vld [vmem:[%s714 + $0x34] sm:$0xf]
          %v9983 = vld [vmem:[%s714 + $0x38] sm:$0xf]
          %v9984 = vld [vmem:[%s714 + $0x3c] sm:$0xf]
          %v10001 = vunpack.c.l.b16 %v9953
          %v10002 = vunpack.c.l.b16 %v9954
          %v10003 = vunpack.c.l.b16 %v9955
          %v10004 = vunpack.c.l.b16 %v9956
          %v10005 = vunpack.c.l.b16 %v9957
          %v10006 = vunpack.c.l.b16 %v9958
          %v10007 = vunpack.c.l.b16 %v9959
          %v10008 = vunpack.c.l.b16 %v9960
          %v10009 = vunpack.c.l.b16 %v9961
          %v10010 = vunpack.c.l.b16 %v9962
          %v10011 = vunpack.c.l.b16 %v9963
          %v10012 = vunpack.c.l.b16 %v9964
          %v10013 = vunpack.c.l.b16 %v9965
          %v10014 = vunpack.c.l.b16 %v9966
          %v10015 = vunpack.c.l.b16 %v9967
          %v10016 = vunpack.c.l.b16 %v9968
          %v10017 = vpack.c.b16 %v10002, %v10001
          %v10018 = vpack.c.b16 %v10004, %v10003
          %v10019 = vpack.c.b16 %v10006, %v10005
          %v10020 = vpack.c.b16 %v10008, %v10007
          %v10021 = vpack.c.b16 %v10010, %v10009
          %v10022 = vpack.c.b16 %v10012, %v10011
          %v10023 = vpack.c.b16 %v10014, %v10013
          %v10024 = vpack.c.b16 %v10016, %v10015
          %v10049 = vunpack.c.l.b16 %v9969
          %v10050 = vunpack.c.l.b16 %v9970
          %v10051 = vunpack.c.l.b16 %v9971
          %v10052 = vunpack.c.l.b16 %v9972
          %v10053 = vunpack.c.l.b16 %v9973
          %v10054 = vunpack.c.l.b16 %v9974
          %v10055 = vunpack.c.l.b16 %v9975
          %v10056 = vunpack.c.l.b16 %v9976
          %v10057 = vunpack.c.l.b16 %v9977
          %v10058 = vunpack.c.l.b16 %v9978
          %v10059 = vunpack.c.l.b16 %v9979
          %v10060 = vunpack.c.l.b16 %v9980
          %v10061 = vunpack.c.l.b16 %v9981
          %v10062 = vunpack.c.l.b16 %v9982
          %v10063 = vunpack.c.l.b16 %v9983
          %v10064 = vunpack.c.l.b16 %v9984
          %v10065 = vpack.c.b16 %v10050, %v10049
          %v10066 = vpack.c.b16 %v10052, %v10051
          %v10067 = vpack.c.b16 %v10054, %v10053
          %v10068 = vpack.c.b16 %v10056, %v10055
          %v10069 = vpack.c.b16 %v10058, %v10057
          %v10070 = vpack.c.b16 %v10060, %v10059
          %v10071 = vpack.c.b16 %v10062, %v10061
          %v10072 = vpack.c.b16 %v10064, %v10063
          %10081 = vmatprep.subr.bf16.mxu0 0
          %10082 = vmatpush1.bf16.msra.mxu0 %v10072
          %10083 = vmatprep.subr.bf16.mxu0 0
          %10084 = vmatpush1.bf16.msra.mxu0 %v10071
          %10085 = vmatprep.subr.bf16.mxu0 0
          %10086 = vmatpush1.bf16.msra.mxu0 %v10070
          %10087 = vmatprep.subr.bf16.mxu0 0
          %10088 = vmatpush1.bf16.msra.mxu0 %v10069
          %10089 = vmatprep.subr.bf16.mxu0 0
          %10090 = vmatpush1.bf16.msra.mxu0 %v10068
          %10091 = vmatprep.subr.bf16.mxu0 0
          %10092 = vmatpush1.bf16.msra.mxu0 %v10067
          %10093 = vmatprep.subr.bf16.mxu0 0
          %10094 = vmatpush1.bf16.msra.mxu0 %v10066
          %10095 = vmatprep.subr.bf16.mxu0 0
          %10096 = vmatpush1.bf16.msra.mxu0 %v10065
          %10097 = vmatprep.subr.bf16.mxu0 0
          %10098 = vmatpush2.bf16.msra.mxu0 0
          %10099 = vmatprep.subr.bf16.mxu0 0
          %10100 = vmatpush2.bf16.msra.mxu0 0
          %10101 = vmatprep.subr.bf16.mxu0 0
          %10102 = vmatpush2.bf16.msra.mxu0 0
          %10103 = vmatprep.subr.bf16.mxu0 0
          %10104 = vmatpush2.bf16.msra.mxu0 0
          %10105 = vmatprep.subr.bf16.mxu0 0
          %10106 = vmatpush2.bf16.msra.mxu0 0
          %10107 = vmatprep.subr.bf16.mxu0 0
          %10108 = vmatpush2.bf16.msra.mxu0 0
          %10109 = vmatprep.subr.bf16.mxu0 0
          %10110 = vmatpush2.bf16.msra.mxu0 0
          %10111 = vmatprep.subr.bf16.mxu0 0
          %10112 = vmatpush2.bf16.msra.mxu0 0
          %10113 = vmatprep.mubr.bf16.mxu0 0
          %10114 = vmatmul.mubr.bf16.gmra.mxu0 %v10017
          %v10115 = vpop.f32.mrf.mxu0
          %v10116 = vadd.f32 0.0, %v10115
          %v10117 = vpop.f32.mrf.mxu0
          %v10118 = vpop.f32.mrf.mxu0
          %v10119 = vadd.f32 0.0, %v10118
          %v10120 = vpop.f32.mrf.mxu0
          %10121 = vmatprep.mubr.bf16.mxu0 0
          %10122 = vmatmul.mubr.bf16.gmra.mxu0 %v10018
          %v10123 = vpop.f32.mrf.mxu0
          %v10124 = vadd.f32 0.0, %v10123
          %v10125 = vpop.f32.mrf.mxu0
          %v10126 = vpop.f32.mrf.mxu0
          %v10127 = vadd.f32 0.0, %v10126
          %v10128 = vpop.f32.mrf.mxu0
          %10129 = vmatprep.mubr.bf16.mxu0 0
          %10130 = vmatmul.mubr.bf16.gmra.mxu0 %v10019
          %v10131 = vpop.f32.mrf.mxu0
          %v10132 = vadd.f32 0.0, %v10131
          %v10133 = vpop.f32.mrf.mxu0
          %v10134 = vpop.f32.mrf.mxu0
          %v10135 = vadd.f32 0.0, %v10134
          %v10136 = vpop.f32.mrf.mxu0
          %10137 = vmatprep.mubr.bf16.mxu0 0
          %10138 = vmatmul.mubr.bf16.gmra.mxu0 %v10020
          %v10139 = vpop.f32.mrf.mxu0
          %v10140 = vadd.f32 0.0, %v10139
          %v10141 = vpop.f32.mrf.mxu0
          %v10142 = vpop.f32.mrf.mxu0
          %v10143 = vadd.f32 0.0, %v10142
          %v10144 = vpop.f32.mrf.mxu0
          %10145 = vmatprep.mubr.bf16.mxu0 0
          %10146 = vmatmul.mubr.bf16.gmra.mxu0 %v10021
          %v10147 = vpop.f32.mrf.mxu0
          %v10148 = vadd.f32 0.0, %v10147
          %v10149 = vpop.f32.mrf.mxu0
          %v10150 = vpop.f32.mrf.mxu0
          %v10151 = vadd.f32 0.0, %v10150
          %v10152 = vpop.f32.mrf.mxu0
          %10153 = vmatprep.mubr.bf16.mxu0 0
          %10154 = vmatmul.mubr.bf16.gmra.mxu0 %v10022
          %v10155 = vpop.f32.mrf.mxu0
          %v10156 = vadd.f32 0.0, %v10155
          %v10157 = vpop.f32.mrf.mxu0
          %v10158 = vpop.f32.mrf.mxu0
          %v10159 = vadd.f32 0.0, %v10158
          %v10160 = vpop.f32.mrf.mxu0
          %10161 = vmatprep.mubr.bf16.mxu0 0
          %10162 = vmatmul.mubr.bf16.gmra.mxu0 %v10023
          %v10163 = vpop.f32.mrf.mxu0
          %v10164 = vadd.f32 0.0, %v10163
          %v10165 = vpop.f32.mrf.mxu0
          %v10166 = vpop.f32.mrf.mxu0
          %v10167 = vadd.f32 0.0, %v10166
          %v10168 = vpop.f32.mrf.mxu0
          %10169 = vmatprep.mubr.bf16.mxu0 0
          %10170 = vmatmul.mubr.bf16.gmra.mxu0 %v10024
          %v10171 = vpop.f32.mrf.mxu0
          %v10172 = vadd.f32 0.0, %v10171
          %v10173 = vpop.f32.mrf.mxu0
          %v10174 = vpop.f32.mrf.mxu0
          %v10175 = vadd.f32 0.0, %v10174
          %v10176 = vpop.f32.mrf.mxu0
          %10177 = vdwg.mxu0
          %v10178 = vld [vmem:[%s723] sm:$0xf]
          %v10179 = vld [vmem:[%s723 + $0x4] sm:$0xf]
          %v10180 = vld [vmem:[%s723 + $0x8] sm:$0xf]
          %v10181 = vld [vmem:[%s723 + $0xc] sm:$0xf]
          %v10182 = vld [vmem:[%s723 + $0x10] sm:$0xf]
          %v10183 = vld [vmem:[%s723 + $0x14] sm:$0xf]
          %v10184 = vld [vmem:[%s723 + $0x18] sm:$0xf]
          %v10185 = vld [vmem:[%s723 + $0x1c] sm:$0xf]
          %v10186 = vld [vmem:[%s723 + $0x20] sm:$0xf]
          %v10187 = vld [vmem:[%s723 + $0x24] sm:$0xf]
          %v10188 = vld [vmem:[%s723 + $0x28] sm:$0xf]
          %v10189 = vld [vmem:[%s723 + $0x2c] sm:$0xf]
          %v10190 = vld [vmem:[%s723 + $0x30] sm:$0xf]
          %v10191 = vld [vmem:[%s723 + $0x34] sm:$0xf]
          %v10192 = vld [vmem:[%s723 + $0x38] sm:$0xf]
          %v10193 = vld [vmem:[%s723 + $0x3c] sm:$0xf]
          %v10210 = vunpack.c.l.b16 %v10178
          %v10211 = vunpack.c.l.b16 %v10179
          %v10212 = vunpack.c.l.b16 %v10180
          %v10213 = vunpack.c.l.b16 %v10181
          %v10214 = vunpack.c.l.b16 %v10182
          %v10215 = vunpack.c.l.b16 %v10183
          %v10216 = vunpack.c.l.b16 %v10184
          %v10217 = vunpack.c.l.b16 %v10185
          %v10218 = vunpack.c.l.b16 %v10186
          %v10219 = vunpack.c.l.b16 %v10187
          %v10220 = vunpack.c.l.b16 %v10188
          %v10221 = vunpack.c.l.b16 %v10189
          %v10222 = vunpack.c.l.b16 %v10190
          %v10223 = vunpack.c.l.b16 %v10191
          %v10224 = vunpack.c.l.b16 %v10192
          %v10225 = vunpack.c.l.b16 %v10193
          %v10226 = vpack.c.b16 %v10211, %v10210
          %v10227 = vpack.c.b16 %v10213, %v10212
          %v10228 = vpack.c.b16 %v10215, %v10214
          %v10229 = vpack.c.b16 %v10217, %v10216
          %v10230 = vpack.c.b16 %v10219, %v10218
          %v10231 = vpack.c.b16 %v10221, %v10220
          %v10232 = vpack.c.b16 %v10223, %v10222
          %v10233 = vpack.c.b16 %v10225, %v10224
          %10242 = vmatprep.subr.bf16.mxu0 0
          %10243 = vmatpush1.bf16.msra.mxu0 %v10233
          %10244 = vmatprep.subr.bf16.mxu0 0
          %10245 = vmatpush1.bf16.msra.mxu0 %v10232
          %10246 = vmatprep.subr.bf16.mxu0 0
          %10247 = vmatpush1.bf16.msra.mxu0 %v10231
          %10248 = vmatprep.subr.bf16.mxu0 0
          %10249 = vmatpush1.bf16.msra.mxu0 %v10230
          %10250 = vmatprep.subr.bf16.mxu0 0
          %10251 = vmatpush1.bf16.msra.mxu0 %v10229
          %10252 = vmatprep.subr.bf16.mxu0 0
          %10253 = vmatpush1.bf16.msra.mxu0 %v10228
          %10254 = vmatprep.subr.bf16.mxu0 0
          %10255 = vmatpush1.bf16.msra.mxu0 %v10227
          %10256 = vmatprep.subr.bf16.mxu0 0
          %10257 = vmatpush1.bf16.msra.mxu0 %v10226
          %10258 = vmatprep.subr.bf16.mxu0 0
          %10259 = vmatpush2.bf16.msra.mxu0 0
          %10260 = vmatprep.subr.bf16.mxu0 0
          %10261 = vmatpush2.bf16.msra.mxu0 0
          %10262 = vmatprep.subr.bf16.mxu0 0
          %10263 = vmatpush2.bf16.msra.mxu0 0
          %10264 = vmatprep.subr.bf16.mxu0 0
          %10265 = vmatpush2.bf16.msra.mxu0 0
          %10266 = vmatprep.subr.bf16.mxu0 0
          %10267 = vmatpush2.bf16.msra.mxu0 0
          %10268 = vmatprep.subr.bf16.mxu0 0
          %10269 = vmatpush2.bf16.msra.mxu0 0
          %10270 = vmatprep.subr.bf16.mxu0 0
          %10271 = vmatpush2.bf16.msra.mxu0 0
          %10272 = vmatprep.subr.bf16.mxu0 0
          %10273 = vmatpush2.bf16.msra.mxu0 0
          %10274 = vmatprep.mubr.bf16.mxu0 0
          %10275 = vmatmul.mubr.bf16.gmra.mxu0 %v10017
          %v10276 = vpop.f32.mrf.mxu0
          %v10277 = vadd.f32 0.0, %v10276
          %v10278 = vpop.f32.mrf.mxu0
          %v10279 = vpop.f32.mrf.mxu0
          %v10280 = vadd.f32 0.0, %v10279
          %v10281 = vpop.f32.mrf.mxu0
          %10282 = vmatprep.mubr.bf16.mxu0 0
          %10283 = vmatmul.mubr.bf16.gmra.mxu0 %v10018
          %v10284 = vpop.f32.mrf.mxu0
          %v10285 = vadd.f32 0.0, %v10284
          %v10286 = vpop.f32.mrf.mxu0
          %v10287 = vpop.f32.mrf.mxu0
          %v10288 = vadd.f32 0.0, %v10287
          %v10289 = vpop.f32.mrf.mxu0
          %10290 = vmatprep.mubr.bf16.mxu0 0
          %10291 = vmatmul.mubr.bf16.gmra.mxu0 %v10019
          %v10292 = vpop.f32.mrf.mxu0
          %v10293 = vadd.f32 0.0, %v10292
          %v10294 = vpop.f32.mrf.mxu0
          %v10295 = vpop.f32.mrf.mxu0
          %v10296 = vadd.f32 0.0, %v10295
          %v10297 = vpop.f32.mrf.mxu0
          %10298 = vmatprep.mubr.bf16.mxu0 0
          %10299 = vmatmul.mubr.bf16.gmra.mxu0 %v10020
          %v10300 = vpop.f32.mrf.mxu0
          %v10301 = vadd.f32 0.0, %v10300
          %v10302 = vpop.f32.mrf.mxu0
          %v10303 = vpop.f32.mrf.mxu0
          %v10304 = vadd.f32 0.0, %v10303
          %v10305 = vpop.f32.mrf.mxu0
          %10306 = vmatprep.mubr.bf16.mxu0 0
          %10307 = vmatmul.mubr.bf16.gmra.mxu0 %v10021
          %v10308 = vpop.f32.mrf.mxu0
          %v10309 = vadd.f32 0.0, %v10308
          %v10310 = vpop.f32.mrf.mxu0
          %v10311 = vpop.f32.mrf.mxu0
          %v10312 = vadd.f32 0.0, %v10311
          %v10313 = vpop.f32.mrf.mxu0
          %10314 = vmatprep.mubr.bf16.mxu0 0
          %10315 = vmatmul.mubr.bf16.gmra.mxu0 %v10022
          %v10316 = vpop.f32.mrf.mxu0
          %v10317 = vadd.f32 0.0, %v10316
          %v10318 = vpop.f32.mrf.mxu0
          %v10319 = vpop.f32.mrf.mxu0
          %v10320 = vadd.f32 0.0, %v10319
          %v10321 = vpop.f32.mrf.mxu0
          %10322 = vmatprep.mubr.bf16.mxu0 0
          %10323 = vmatmul.mubr.bf16.gmra.mxu0 %v10023
          %v10324 = vpop.f32.mrf.mxu0
          %v10325 = vadd.f32 0.0, %v10324
          %v10326 = vpop.f32.mrf.mxu0
          %v10327 = vpop.f32.mrf.mxu0
          %v10328 = vadd.f32 0.0, %v10327
          %v10329 = vpop.f32.mrf.mxu0
          %10330 = vmatprep.mubr.bf16.mxu0 0
          %10331 = vmatmul.mubr.bf16.gmra.mxu0 %v10024
          %v10332 = vpop.f32.mrf.mxu0
          %v10333 = vadd.f32 0.0, %v10332
          %v10334 = vpop.f32.mrf.mxu0
          %v10335 = vpop.f32.mrf.mxu0
          %v10336 = vadd.f32 0.0, %v10335
          %v10337 = vpop.f32.mrf.mxu0
          %10338 = vdwg.mxu0
          %v10339 = vmul.f32 %v10277, 0.5
          %v10340 = vmul.f32 %v10280, 0.5
          %v10341 = vmul.f32 %v10285, 0.5
          %v10342 = vmul.f32 %v10288, 0.5
          %v10343 = vmul.f32 %v10293, 0.5
          %v10344 = vmul.f32 %v10296, 0.5
          %v10345 = vmul.f32 %v10301, 0.5
          %v10346 = vmul.f32 %v10304, 0.5
          %v10347 = vmul.f32 %v10309, 0.5
          %v10348 = vmul.f32 %v10312, 0.5
          %v10349 = vmul.f32 %v10317, 0.5
          %v10350 = vmul.f32 %v10320, 0.5
          %v10351 = vmul.f32 %v10325, 0.5
          %v10352 = vmul.f32 %v10328, 0.5
          %v10353 = vmul.f32 %v10333, 0.5
          %v10354 = vmul.f32 %v10336, 0.5
          %v10355 = vmul.f32 %v10277, %v10277
          %v10356 = vmul.f32 %v10280, %v10280
          %v10357 = vmul.f32 %v10285, %v10285
          %v10358 = vmul.f32 %v10288, %v10288
          %v10359 = vmul.f32 %v10293, %v10293
          %v10360 = vmul.f32 %v10296, %v10296
          %v10361 = vmul.f32 %v10301, %v10301
          %v10362 = vmul.f32 %v10304, %v10304
          %v10363 = vmul.f32 %v10309, %v10309
          %v10364 = vmul.f32 %v10312, %v10312
          %v10365 = vmul.f32 %v10317, %v10317
          %v10366 = vmul.f32 %v10320, %v10320
          %v10367 = vmul.f32 %v10325, %v10325
          %v10368 = vmul.f32 %v10328, %v10328
          %v10369 = vmul.f32 %v10333, %v10333
          %v10370 = vmul.f32 %v10336, %v10336
          %v10371 = vmul.f32 %v10355, %v10277
          %v10372 = vmul.f32 %v10356, %v10280
          %v10373 = vmul.f32 %v10357, %v10285
          %v10374 = vmul.f32 %v10358, %v10288
          %v10375 = vmul.f32 %v10359, %v10293
          %v10376 = vmul.f32 %v10360, %v10296
          %v10377 = vmul.f32 %v10361, %v10301
          %v10378 = vmul.f32 %v10362, %v10304
          %v10379 = vmul.f32 %v10363, %v10309
          %v10380 = vmul.f32 %v10364, %v10312
          %v10381 = vmul.f32 %v10365, %v10317
          %v10382 = vmul.f32 %v10366, %v10320
          %v10383 = vmul.f32 %v10367, %v10325
          %v10384 = vmul.f32 %v10368, %v10328
          %v10385 = vmul.f32 %v10369, %v10333
          %v10386 = vmul.f32 %v10370, %v10336
          %v10387 = vmul.f32 %v10371, 0.044715
          %v10388 = vmul.f32 %v10372, 0.044715
          %v10389 = vmul.f32 %v10373, 0.044715
          %v10390 = vmul.f32 %v10374, 0.044715
          %v10391 = vmul.f32 %v10375, 0.044715
          %v10392 = vmul.f32 %v10376, 0.044715
          %v10393 = vmul.f32 %v10377, 0.044715
          %v10394 = vmul.f32 %v10378, 0.044715
          %v10395 = vmul.f32 %v10379, 0.044715
          %v10396 = vmul.f32 %v10380, 0.044715
          %v10397 = vmul.f32 %v10381, 0.044715
          %v10398 = vmul.f32 %v10382, 0.044715
          %v10399 = vmul.f32 %v10383, 0.044715
          %v10400 = vmul.f32 %v10384, 0.044715
          %v10401 = vmul.f32 %v10385, 0.044715
          %v10402 = vmul.f32 %v10386, 0.044715
          %v10403 = vadd.f32 %v10277, %v10387
          %v10404 = vadd.f32 %v10280, %v10388
          %v10405 = vadd.f32 %v10285, %v10389
          %v10406 = vadd.f32 %v10288, %v10390
          %v10407 = vadd.f32 %v10293, %v10391
          %v10408 = vadd.f32 %v10296, %v10392
          %v10409 = vadd.f32 %v10301, %v10393
          %v10410 = vadd.f32 %v10304, %v10394
          %v10411 = vadd.f32 %v10309, %v10395
          %v10412 = vadd.f32 %v10312, %v10396
          %v10413 = vadd.f32 %v10317, %v10397
          %v10414 = vadd.f32 %v10320, %v10398
          %v10415 = vadd.f32 %v10325, %v10399
          %v10416 = vadd.f32 %v10328, %v10400
          %v10417 = vadd.f32 %v10333, %v10401
          %v10418 = vadd.f32 %v10336, %v10402
          %v10419 = vmul.f32 %v10403, 0.7978846
          %v10420 = vmul.f32 %v10404, 0.7978846
          %v10421 = vmul.f32 %v10405, 0.7978846
          %v10422 = vmul.f32 %v10406, 0.7978846
          %v10423 = vmul.f32 %v10407, 0.7978846
          %v10424 = vmul.f32 %v10408, 0.7978846
          %v10425 = vmul.f32 %v10409, 0.7978846
          %v10426 = vmul.f32 %v10410, 0.7978846
          %v10427 = vmul.f32 %v10411, 0.7978846
          %v10428 = vmul.f32 %v10412, 0.7978846
          %v10429 = vmul.f32 %v10413, 0.7978846
          %v10430 = vmul.f32 %v10414, 0.7978846
          %v10431 = vmul.f32 %v10415, 0.7978846
          %v10432 = vmul.f32 %v10416, 0.7978846
          %v10433 = vmul.f32 %v10417, 0.7978846
          %v10434 = vmul.f32 %v10418, 0.7978846
          %v10435 = vtanh.pop %v10419
          %v10436 = vtanh.pop %v10420
          %v10437 = vtanh.pop %v10421
          %v10438 = vtanh.pop %v10422
          %v10439 = vtanh.pop %v10423
          %v10440 = vtanh.pop %v10424
          %v10441 = vtanh.pop %v10425
          %v10442 = vtanh.pop %v10426
          %v10443 = vtanh.pop %v10427
          %v10444 = vtanh.pop %v10428
          %v10445 = vtanh.pop %v10429
          %v10446 = vtanh.pop %v10430
          %v10447 = vtanh.pop %v10431
          %v10448 = vtanh.pop %v10432
          %v10449 = vtanh.pop %v10433
          %v10450 = vtanh.pop %v10434
          %v10451 = vadd.f32 %v10435, 1.0
          %v10452 = vadd.f32 %v10436, 1.0
          %v10453 = vadd.f32 %v10437, 1.0
          %v10454 = vadd.f32 %v10438, 1.0
          %v10455 = vadd.f32 %v10439, 1.0
          %v10456 = vadd.f32 %v10440, 1.0
          %v10457 = vadd.f32 %v10441, 1.0
          %v10458 = vadd.f32 %v10442, 1.0
          %v10459 = vadd.f32 %v10443, 1.0
          %v10460 = vadd.f32 %v10444, 1.0
          %v10461 = vadd.f32 %v10445, 1.0
          %v10462 = vadd.f32 %v10446, 1.0
          %v10463 = vadd.f32 %v10447, 1.0
          %v10464 = vadd.f32 %v10448, 1.0
          %v10465 = vadd.f32 %v10449, 1.0
          %v10466 = vadd.f32 %v10450, 1.0
          %v10467 = vmul.f32 %v10339, %v10451
          %v10468 = vmul.f32 %v10340, %v10452
          %v10469 = vmul.f32 %v10341, %v10453
          %v10470 = vmul.f32 %v10342, %v10454
          %v10471 = vmul.f32 %v10343, %v10455
          %v10472 = vmul.f32 %v10344, %v10456
          %v10473 = vmul.f32 %v10345, %v10457
          %v10474 = vmul.f32 %v10346, %v10458
          %v10475 = vmul.f32 %v10347, %v10459
          %v10476 = vmul.f32 %v10348, %v10460
          %v10477 = vmul.f32 %v10349, %v10461
          %v10478 = vmul.f32 %v10350, %v10462
          %v10479 = vmul.f32 %v10351, %v10463
          %v10480 = vmul.f32 %v10352, %v10464
          %v10481 = vmul.f32 %v10353, %v10465
          %v10482 = vmul.f32 %v10354, %v10466
          %v10483 = vmul.f32 %v10116, %v10467
          %v10484 = vmul.f32 %v10119, %v10468
          %v10485 = vmul.f32 %v10124, %v10469
          %v10486 = vmul.f32 %v10127, %v10470
          %v10487 = vmul.f32 %v10132, %v10471
          %v10488 = vmul.f32 %v10135, %v10472
          %v10489 = vmul.f32 %v10140, %v10473
          %v10490 = vmul.f32 %v10143, %v10474
          %v10491 = vmul.f32 %v10148, %v10475
          %v10492 = vmul.f32 %v10151, %v10476
          %v10493 = vmul.f32 %v10156, %v10477
          %v10494 = vmul.f32 %v10159, %v10478
          %v10495 = vmul.f32 %v10164, %v10479
          %v10496 = vmul.f32 %v10167, %v10480
          %v10497 = vmul.f32 %v10172, %v10481
          %v10498 = vmul.f32 %v10175, %v10482
          %v10499 = vpack.c.bf16 %v10484, %v10483
          %v10500 = vpack.c.bf16 %v10486, %v10485
          %v10501 = vpack.c.bf16 %v10488, %v10487
          %v10502 = vpack.c.bf16 %v10490, %v10489
          %v10503 = vpack.c.bf16 %v10492, %v10491
          %v10504 = vpack.c.bf16 %v10494, %v10493
          %v10505 = vpack.c.bf16 %v10496, %v10495
          %v10506 = vpack.c.bf16 %v10498, %v10497
          %v10507 = vld [vmem:[#allocation2] sm:$0xff]
          %v10508 = vld [vmem:[#allocation2 + $0x8] sm:$0xff]
          %v10509 = vld [vmem:[#allocation2 + $0x10] sm:$0xff]
          %v10510 = vld [vmem:[#allocation2 + $0x18] sm:$0xff]
          %v10511 = vld [vmem:[#allocation2 + $0x20] sm:$0xff]
          %v10512 = vld [vmem:[#allocation2 + $0x28] sm:$0xff]
          %v10513 = vld [vmem:[#allocation2 + $0x30] sm:$0xff]
          %v10514 = vld [vmem:[#allocation2 + $0x38] sm:$0xff]
          %v10515 = vld [vmem:[#allocation2 + $0x40] sm:$0xff]
          %v10516 = vld [vmem:[#allocation2 + $0x48] sm:$0xff]
          %v10517 = vld [vmem:[#allocation2 + $0x50] sm:$0xff]
          %v10518 = vld [vmem:[#allocation2 + $0x58] sm:$0xff]
          %v10519 = vld [vmem:[#allocation2 + $0x60] sm:$0xff]
          %v10520 = vld [vmem:[#allocation2 + $0x68] sm:$0xff]
          %v10521 = vld [vmem:[#allocation2 + $0x70] sm:$0xff]
          %v10522 = vld [vmem:[#allocation2 + $0x78] sm:$0xff]
          %v10523 = vld [vmem:[%s732] sm:$0xf]
          %v10524 = vld [vmem:[%s732 + $0x4] sm:$0xf]
          %v10525 = vld [vmem:[%s732 + $0x8] sm:$0xf]
          %v10526 = vld [vmem:[%s732 + $0xc] sm:$0xf]
          %v10527 = vld [vmem:[%s732 + $0x10] sm:$0xf]
          %v10528 = vld [vmem:[%s732 + $0x14] sm:$0xf]
          %v10529 = vld [vmem:[%s732 + $0x18] sm:$0xf]
          %v10530 = vld [vmem:[%s732 + $0x1c] sm:$0xf]
          %v10531 = vld [vmem:[%s732 + $0x20] sm:$0xf]
          %v10532 = vld [vmem:[%s732 + $0x24] sm:$0xf]
          %v10533 = vld [vmem:[%s732 + $0x28] sm:$0xf]
          %v10534 = vld [vmem:[%s732 + $0x2c] sm:$0xf]
          %v10535 = vld [vmem:[%s732 + $0x30] sm:$0xf]
          %v10536 = vld [vmem:[%s732 + $0x34] sm:$0xf]
          %v10537 = vld [vmem:[%s732 + $0x38] sm:$0xf]
          %v10538 = vld [vmem:[%s732 + $0x3c] sm:$0xf]
          %v10555 = vunpack.c.l.b16 %v10523
          %v10556 = vunpack.c.l.b16 %v10524
          %v10557 = vunpack.c.l.b16 %v10525
          %v10558 = vunpack.c.l.b16 %v10526
          %v10559 = vunpack.c.l.b16 %v10527
          %v10560 = vunpack.c.l.b16 %v10528
          %v10561 = vunpack.c.l.b16 %v10529
          %v10562 = vunpack.c.l.b16 %v10530
          %v10563 = vunpack.c.l.b16 %v10531
          %v10564 = vunpack.c.l.b16 %v10532
          %v10565 = vunpack.c.l.b16 %v10533
          %v10566 = vunpack.c.l.b16 %v10534
          %v10567 = vunpack.c.l.b16 %v10535
          %v10568 = vunpack.c.l.b16 %v10536
          %v10569 = vunpack.c.l.b16 %v10537
          %v10570 = vunpack.c.l.b16 %v10538
          %v10571 = vpack.c.b16 %v10556, %v10555
          %v10572 = vpack.c.b16 %v10558, %v10557
          %v10573 = vpack.c.b16 %v10560, %v10559
          %v10574 = vpack.c.b16 %v10562, %v10561
          %v10575 = vpack.c.b16 %v10564, %v10563
          %v10576 = vpack.c.b16 %v10566, %v10565
          %v10577 = vpack.c.b16 %v10568, %v10567
          %v10578 = vpack.c.b16 %v10570, %v10569
          %10587 = vmatprep.subr.bf16.mxu0 0
          %10588 = vmatpush1.bf16.msra.mxu0 %v10578
          %10589 = vmatprep.subr.bf16.mxu0 0
          %10590 = vmatpush1.bf16.msra.mxu0 %v10577
          %10591 = vmatprep.subr.bf16.mxu0 0
          %10592 = vmatpush1.bf16.msra.mxu0 %v10576
          %10593 = vmatprep.subr.bf16.mxu0 0
          %10594 = vmatpush1.bf16.msra.mxu0 %v10575
          %10595 = vmatprep.subr.bf16.mxu0 0
          %10596 = vmatpush1.bf16.msra.mxu0 %v10574
          %10597 = vmatprep.subr.bf16.mxu0 0
          %10598 = vmatpush1.bf16.msra.mxu0 %v10573
          %10599 = vmatprep.subr.bf16.mxu0 0
          %10600 = vmatpush1.bf16.msra.mxu0 %v10572
          %10601 = vmatprep.subr.bf16.mxu0 0
          %10602 = vmatpush1.bf16.msra.mxu0 %v10571
          %10603 = vmatprep.subr.bf16.mxu0 0
          %10604 = vmatpush2.bf16.msra.mxu0 0
          %10605 = vmatprep.subr.bf16.mxu0 0
          %10606 = vmatpush2.bf16.msra.mxu0 0
          %10607 = vmatprep.subr.bf16.mxu0 0
          %10608 = vmatpush2.bf16.msra.mxu0 0
          %10609 = vmatprep.subr.bf16.mxu0 0
          %10610 = vmatpush2.bf16.msra.mxu0 0
          %10611 = vmatprep.subr.bf16.mxu0 0
          %10612 = vmatpush2.bf16.msra.mxu0 0
          %10613 = vmatprep.subr.bf16.mxu0 0
          %10614 = vmatpush2.bf16.msra.mxu0 0
          %10615 = vmatprep.subr.bf16.mxu0 0
          %10616 = vmatpush2.bf16.msra.mxu0 0
          %10617 = vmatprep.subr.bf16.mxu0 0
          %10618 = vmatpush2.bf16.msra.mxu0 0
          %10619 = vmatprep.mubr.bf16.mxu0 0
          %10620 = vmatmul.mubr.bf16.gmra.mxu0 %v10499
          %v10621 = vpop.f32.mrf.mxu0
          %v10622 = vadd.f32 0.0, %v10621
          %v10623 = vpop.f32.mrf.mxu0
          %v10624 = vpop.f32.mrf.mxu0
          %v10625 = vadd.f32 0.0, %v10624
          %v10626 = vpop.f32.mrf.mxu0
          %10627 = vmatprep.mubr.bf16.mxu0 0
          %10628 = vmatmul.mubr.bf16.gmra.mxu0 %v10500
          %v10629 = vpop.f32.mrf.mxu0
          %v10630 = vadd.f32 0.0, %v10629
          %v10631 = vpop.f32.mrf.mxu0
          %v10632 = vpop.f32.mrf.mxu0
          %v10633 = vadd.f32 0.0, %v10632
          %v10634 = vpop.f32.mrf.mxu0
          %10635 = vmatprep.mubr.bf16.mxu0 0
          %10636 = vmatmul.mubr.bf16.gmra.mxu0 %v10501
          %v10637 = vpop.f32.mrf.mxu0
          %v10638 = vadd.f32 0.0, %v10637
          %v10639 = vpop.f32.mrf.mxu0
          %v10640 = vpop.f32.mrf.mxu0
          %v10641 = vadd.f32 0.0, %v10640
          %v10642 = vpop.f32.mrf.mxu0
          %10643 = vmatprep.mubr.bf16.mxu0 0
          %10644 = vmatmul.mubr.bf16.gmra.mxu0 %v10502
          %v10645 = vpop.f32.mrf.mxu0
          %v10646 = vadd.f32 0.0, %v10645
          %v10647 = vpop.f32.mrf.mxu0
          %v10648 = vpop.f32.mrf.mxu0
          %v10649 = vadd.f32 0.0, %v10648
          %v10650 = vpop.f32.mrf.mxu0
          %10651 = vmatprep.mubr.bf16.mxu0 0
          %10652 = vmatmul.mubr.bf16.gmra.mxu0 %v10503
          %v10653 = vpop.f32.mrf.mxu0
          %v10654 = vadd.f32 0.0, %v10653
          %v10655 = vpop.f32.mrf.mxu0
          %v10656 = vpop.f32.mrf.mxu0
          %v10657 = vadd.f32 0.0, %v10656
          %v10658 = vpop.f32.mrf.mxu0
          %10659 = vmatprep.mubr.bf16.mxu0 0
          %10660 = vmatmul.mubr.bf16.gmra.mxu0 %v10504
          %v10661 = vpop.f32.mrf.mxu0
          %v10662 = vadd.f32 0.0, %v10661
          %v10663 = vpop.f32.mrf.mxu0
          %v10664 = vpop.f32.mrf.mxu0
          %v10665 = vadd.f32 0.0, %v10664
          %v10666 = vpop.f32.mrf.mxu0
          %10667 = vmatprep.mubr.bf16.mxu0 0
          %10668 = vmatmul.mubr.bf16.gmra.mxu0 %v10505
          %v10669 = vpop.f32.mrf.mxu0
          %v10670 = vadd.f32 0.0, %v10669
          %v10671 = vpop.f32.mrf.mxu0
          %v10672 = vpop.f32.mrf.mxu0
          %v10673 = vadd.f32 0.0, %v10672
          %v10674 = vpop.f32.mrf.mxu0
          %10675 = vmatprep.mubr.bf16.mxu0 0
          %10676 = vmatmul.mubr.bf16.gmra.mxu0 %v10506
          %v10677 = vpop.f32.mrf.mxu0
          %v10678 = vadd.f32 0.0, %v10677
          %v10679 = vpop.f32.mrf.mxu0
          %v10680 = vpop.f32.mrf.mxu0
          %v10681 = vadd.f32 0.0, %v10680
          %v10682 = vpop.f32.mrf.mxu0
          %10683 = vdwg.mxu0
          %v10684 = vadd.f32 %v10507, %v10622
          %v10685 = vadd.f32 %v10508, %v10625
          %v10686 = vadd.f32 %v10509, %v10630
          %v10687 = vadd.f32 %v10510, %v10633
          %v10688 = vadd.f32 %v10511, %v10638
          %v10689 = vadd.f32 %v10512, %v10641
          %v10690 = vadd.f32 %v10513, %v10646
          %v10691 = vadd.f32 %v10514, %v10649
          %v10692 = vadd.f32 %v10515, %v10654
          %v10693 = vadd.f32 %v10516, %v10657
          %v10694 = vadd.f32 %v10517, %v10662
          %v10695 = vadd.f32 %v10518, %v10665
          %v10696 = vadd.f32 %v10519, %v10670
          %v10697 = vadd.f32 %v10520, %v10673
          %v10698 = vadd.f32 %v10521, %v10678
          %v10699 = vadd.f32 %v10522, %v10681
          %10700 = vst [vmem:[#allocation2] sm:$0xff] %v10684
          %10701 = vst [vmem:[#allocation2 + $0x8] sm:$0xff] %v10685
          %10702 = vst [vmem:[#allocation2 + $0x10] sm:$0xff] %v10686
          %10703 = vst [vmem:[#allocation2 + $0x18] sm:$0xff] %v10687
          %10704 = vst [vmem:[#allocation2 + $0x20] sm:$0xff] %v10688
          %10705 = vst [vmem:[#allocation2 + $0x28] sm:$0xff] %v10689
          %10706 = vst [vmem:[#allocation2 + $0x30] sm:$0xff] %v10690
          %10707 = vst [vmem:[#allocation2 + $0x38] sm:$0xff] %v10691
          %10708 = vst [vmem:[#allocation2 + $0x40] sm:$0xff] %v10692
          %10709 = vst [vmem:[#allocation2 + $0x48] sm:$0xff] %v10693
          %10710 = vst [vmem:[#allocation2 + $0x50] sm:$0xff] %v10694
          %10711 = vst [vmem:[#allocation2 + $0x58] sm:$0xff] %v10695
          %10712 = vst [vmem:[#allocation2 + $0x60] sm:$0xff] %v10696
          %10713 = vst [vmem:[#allocation2 + $0x68] sm:$0xff] %v10697
          %10714 = vst [vmem:[#allocation2 + $0x70] sm:$0xff] %v10698
          %10715 = vst [vmem:[#allocation2 + $0x78] sm:$0xff] %v10699
        $region120: #{tpu_custom_call.1} parent=67 // pred_fallthru
          _
        %p10716 = scmp.eq.s32.totalorder %s46, 3
        // Predicated region
        $region121: #{tpu_custom_call.1} parent=67 // pred_check
          %p10717 = pneg %p10716
        $region122: #{tpu_custom_call.1} parent=67 // pred_check_branch
          %10719 = sbr.rel (%p10717) target = $region124
        $region123: #{tpu_custom_call.1} parent=67 // pred_region
          %v10720 = vld [vmem:[#allocation4] sm:$0xff]
          %v10721 = vld [vmem:[#allocation4 + $0x8] sm:$0xff]
          %v10722 = vld [vmem:[#allocation4 + $0x10] sm:$0xff]
          %v10723 = vld [vmem:[#allocation4 + $0x18] sm:$0xff]
          %v10724 = vld [vmem:[#allocation4 + $0x20] sm:$0xff]
          %v10725 = vld [vmem:[#allocation4 + $0x28] sm:$0xff]
          %v10726 = vld [vmem:[#allocation4 + $0x30] sm:$0xff]
          %v10727 = vld [vmem:[#allocation4 + $0x38] sm:$0xff]
          %v10728 = vld [vmem:[#allocation4 + $0x40] sm:$0xff]
          %v10729 = vld [vmem:[#allocation4 + $0x48] sm:$0xff]
          %v10730 = vld [vmem:[#allocation4 + $0x50] sm:$0xff]
          %v10731 = vld [vmem:[#allocation4 + $0x58] sm:$0xff]
          %v10732 = vld [vmem:[#allocation4 + $0x60] sm:$0xff]
          %v10733 = vld [vmem:[#allocation4 + $0x68] sm:$0xff]
          %v10734 = vld [vmem:[#allocation4 + $0x70] sm:$0xff]
          %v10735 = vld [vmem:[#allocation4 + $0x78] sm:$0xff]
          %v10736 = vld [vmem:[#allocation2] sm:$0xff]
          %v10737 = vld [vmem:[#allocation2 + $0x8] sm:$0xff]
          %v10738 = vld [vmem:[#allocation2 + $0x10] sm:$0xff]
          %v10739 = vld [vmem:[#allocation2 + $0x18] sm:$0xff]
          %v10740 = vld [vmem:[#allocation2 + $0x20] sm:$0xff]
          %v10741 = vld [vmem:[#allocation2 + $0x28] sm:$0xff]
          %v10742 = vld [vmem:[#allocation2 + $0x30] sm:$0xff]
          %v10743 = vld [vmem:[#allocation2 + $0x38] sm:$0xff]
          %v10744 = vld [vmem:[#allocation2 + $0x40] sm:$0xff]
          %v10745 = vld [vmem:[#allocation2 + $0x48] sm:$0xff]
          %v10746 = vld [vmem:[#allocation2 + $0x50] sm:$0xff]
          %v10747 = vld [vmem:[#allocation2 + $0x58] sm:$0xff]
          %v10748 = vld [vmem:[#allocation2 + $0x60] sm:$0xff]
          %v10749 = vld [vmem:[#allocation2 + $0x68] sm:$0xff]
          %v10750 = vld [vmem:[#allocation2 + $0x70] sm:$0xff]
          %v10751 = vld [vmem:[#allocation2 + $0x78] sm:$0xff]
          %v10752 = vadd.f32 %v10720, %v10736
          %v10753 = vadd.f32 %v10721, %v10737
          %v10754 = vadd.f32 %v10722, %v10738
          %v10755 = vadd.f32 %v10723, %v10739
          %v10756 = vadd.f32 %v10724, %v10740
          %v10757 = vadd.f32 %v10725, %v10741
          %v10758 = vadd.f32 %v10726, %v10742
          %v10759 = vadd.f32 %v10727, %v10743
          %v10760 = vadd.f32 %v10728, %v10744
          %v10761 = vadd.f32 %v10729, %v10745
          %v10762 = vadd.f32 %v10730, %v10746
          %v10763 = vadd.f32 %v10731, %v10747
          %v10764 = vadd.f32 %v10732, %v10748
          %v10765 = vadd.f32 %v10733, %v10749
          %v10766 = vadd.f32 %v10734, %v10750
          %v10767 = vadd.f32 %v10735, %v10751
          %10768 = vst [vmem:[%s815] sm:$0xff] %v10752
          %10769 = vst [vmem:[%s815 + $0x8] sm:$0xff] %v10753
          %10770 = vst [vmem:[%s815 + $0x10] sm:$0xff] %v10754
          %10771 = vst [vmem:[%s815 + $0x18] sm:$0xff] %v10755
          %10772 = vst [vmem:[%s815 + $0x20] sm:$0xff] %v10756
          %10773 = vst [vmem:[%s815 + $0x28] sm:$0xff] %v10757
          %10774 = vst [vmem:[%s815 + $0x30] sm:$0xff] %v10758
          %10775 = vst [vmem:[%s815 + $0x38] sm:$0xff] %v10759
          %10776 = vst [vmem:[%s815 + $0x40] sm:$0xff] %v10760
          %10777 = vst [vmem:[%s815 + $0x48] sm:$0xff] %v10761
          %10778 = vst [vmem:[%s815 + $0x50] sm:$0xff] %v10762
          %10779 = vst [vmem:[%s815 + $0x58] sm:$0xff] %v10763
          %10780 = vst [vmem:[%s815 + $0x60] sm:$0xff] %v10764
          %10781 = vst [vmem:[%s815 + $0x68] sm:$0xff] %v10765
          %10782 = vst [vmem:[%s815 + $0x70] sm:$0xff] %v10766
          %10783 = vst [vmem:[%s815 + $0x78] sm:$0xff] %v10767
        $region124: #{tpu_custom_call.1} parent=67 // pred_fallthru
          _
        %s10784 = sand.u32 %s401, 1
        %s10785 = scalar_lea.sflag [#allocation7], %s10784
        %s10786 = sand.u32 %s401, 1
        %s10787 = smul.addr %s10786, 128
        %s10788 = scalar_lea.vmem [#allocation20], %s10787
        // Predicated region
        $region125: #{tpu_custom_call.1} parent=67 // pred_check
          %p10789 = pneg %p411
        $region126: #{tpu_custom_call.1} parent=67 // pred_check_branch
          %10791 = sbr.rel (%p10789) target = $region128
        $region127: #{tpu_custom_call.1} parent=67 // pred_region
          %s10793 = ssub.s32 2048, 2048
          %10794 = vsyncadd %s10785, %s10793
          %s10795 = smul.addr %s45, 16
          %s10796 = smul.addr %s10795, 128
          %s10797 = scalar_lea.hbm %s12, %s10796
          %s10798 = sshll.u32 %s10788, 4
          %s10799 = int_to_ptr.vmem [resolvable:$true] %s10798
          %10804 = dma.vmem_to_hbm [thread:$0]  %s10799, 2048, %s10797, %s10785, 128, 128, 8
        $region128: #{tpu_custom_call.1} parent=67 // pred_fallthru
          _
      $region68: #{tpu_custom_call.1} parent=5 // pred_fallthru
        _
      %p10805 = scmp.le.s32.totalorder 2, %s36
      // Predicated region
      $region129: #{tpu_custom_call.1} parent=5 // pred_check
        %p10806 = pneg %p10805
      $region130: #{tpu_custom_call.1} parent=5 // pred_check_branch
        %10808 = sbr.rel (%p10806) target = $region132
      $region131: #{tpu_custom_call.1} parent=5 // pred_region
        %s10809 = ssub.s32 %s36, 2
        // Predicated region
        $region133: #{tpu_custom_call.1} parent=131 // pred_check
          %p10810 = pneg %p417
        $region134: #{tpu_custom_call.1} parent=131 // pred_check_branch
          %10812 = sbr.rel (%p10810) target = $region136
        $region135: #{tpu_custom_call.1} parent=131 // pred_region
          %s10813 = sand.u32 %s402, 1
          %s10814 = scalar_lea.sflag [#allocation7], %s10813
          %s10815 = sand.u32 %s402, 1
          %s10816 = smul.addr %s10815, 128
          %s10817 = scalar_lea.vmem [#allocation20], %s10816
          %10818 = dma.done %s10814, 2048
        $region136: #{tpu_custom_call.1} parent=131 // pred_fallthru
          _
      $region132: #{tpu_custom_call.1} parent=5 // pred_fallthru
        _
    $region6: #{tpu_custom_call.1} parent=1 // loop_footer
      %s40 = sadd.s32 1, %s36
    $region7: #{tpu_custom_call.1} parent=1 // loop_footer_branch
      %35 = sbr.rel target = $region3
    $region8: #{tpu_custom_call.1} parent=1 // loop_exit
      _
    %10819 = vsyncpa [#allocation6], 1
    %s10820 = scalar_lea.sflag [#allocation6], 1
    %10821 = vsyncpa %s10820, 1
    %10822 = vsyncpa [#allocation9], 1
    %s10823 = scalar_lea.sflag [#allocation9], 1
    %10824 = vsyncpa %s10823, 1
    %10825 = vsyncpa [#allocation12], 1
    %s10826 = scalar_lea.sflag [#allocation12], 1
    %10827 = vsyncpa %s10826, 1
    %10828 = vsyncpa [#allocation15], 1
    %s10829 = scalar_lea.sflag [#allocation15], 1
    %10830 = vsyncpa %s10829, 1
    %10831 = vsyncpa [#allocation18], 1
    %s10832 = scalar_lea.sflag [#allocation18], 1
    %10833 = vsyncpa %s10832, 1
    %10834 = vsyncpa [#allocation7], 1
    %s10835 = scalar_lea.sflag [#allocation7], 1
    %10836 = vsyncpa %s10835, 1

</llo_original>
